<compile_context>
chip_gen: v7x
topology: tpu7x:2x2x1
jax: 0.10.0
libtpu: 0.0.40
codegen_flags: <defaults>
</compile_context>

<pallas_src>
from functools import partial

import jax
import jax.numpy as jnp
from jax.experimental import pallas as pl
from jax.experimental.pallas import tpu as pltpu


# ---------------------------------------------------------------------------
# Pallas kernels
# ---------------------------------------------------------------------------
def _conv3x3_kernel(xp_ref, w_ref, b_ref, o_ref, *, H, W, relu):
    """Fused 3x3 "same" conv + bias (+ReLU) for one image.

    xp_ref: (1, H+2, W+2, Cin) f32   zero-padded NHWC activations
    w_ref : (9, Cin, Cout)     bf16  one weight tap per (dy, dx)
    b_ref : (1, Cout)          f32
    o_ref : (1, H, W, Cout)    f32
    """
    cin = xp_ref.shape[-1]
    cout = o_ref.shape[-1]
    acc = jnp.zeros((H * W, cout), jnp.float32)
    # 9 accumulating MXU matmuls over shifted windows (unrolled).
    for k in range(9):
        dy, dx = k // 3, k % 3
        tap = xp_ref[0, dy:dy + H, dx:dx + W, :].reshape(H * W, cin)
        acc = acc + jnp.dot(tap.astype(jnp.bfloat16), w_ref[k],
                            preferred_element_type=jnp.float32)
    acc = acc + b_ref[...]
    if relu:
        acc = jnp.maximum(acc, 0.0)
    o_ref[0] = acc.reshape(H, W, cout).astype(o_ref.dtype)


def _conv3x3_res_gap_head_kernel(xp_ref, res_ref, w_ref, b_ref,
                                 wh_ref, bh_ref, o_ref, *, H, W):
    """Last residual conv fused with skip-add, ReLU, GAP (neck) and FC head.

    xp_ref : (1, H+2, W+2, C) f32
    res_ref: (1, H, W, C)     f32   residual (skip) input
    w_ref  : (9, C, C)        bf16
    b_ref  : (1, C)           f32
    wh_ref : (C, CLS_PAD)     bf16  head weight (classes padded to 128 lanes)
    bh_ref : (1, CLS_PAD)     f32
    o_ref  : (1, 1, CLS_PAD)  f32   per-image logits
    """
    c = xp_ref.shape[-1]
    acc = jnp.zeros((H * W, c), jnp.float32)
    for k in range(9):
        dy, dx = k // 3, k % 3
        tap = xp_ref[0, dy:dy + H, dx:dx + W, :].reshape(H * W, c)
        acc = acc + jnp.dot(tap.astype(jnp.bfloat16), w_ref[k],
                            preferred_element_type=jnp.float32)
    acc = acc + b_ref[...] + res_ref[0].reshape(H * W, c)
    acc = jnp.maximum(acc, 0.0)                              # body output z

    # Neck + head fused: mean(z) @ Wh + bh == mean(z @ Wh) + bh.
    # Keeps the matmul well-shaped (M = H*W) and avoids writing z to HBM.
    zh = jnp.dot(acc.astype(jnp.bfloat16), wh_ref[...],
                 preferred_element_type=jnp.float32)         # (H*W, CLS_PAD)
    logits = jnp.mean(zh, axis=0, keepdims=True) + bh_ref[...]
    o_ref[0] = logits.astype(o_ref.dtype)


# ---------------------------------------------------------------------------
# pallas_call wrappers
# ---------------------------------------------------------------------------
def conv3x3(xp, w, b, *, relu=True):
    """xp: (N, H+2, W+2, Cin) padded activations -> (N, H, W, Cout)."""
    N, Hp, Wp, cin = xp.shape
    H, W = Hp - 2, Wp - 2
    cout = w.shape[-1]
    return pl.pallas_call(
        partial(_conv3x3_kernel, H=H, W=W, relu=relu),
        out_shape=jax.ShapeDtypeStruct((N, H, W, cout), jnp.float32),
        grid=(N,),
        in_specs=[
            pl.BlockSpec((1, Hp, Wp, cin), lambda n: (n, 0, 0, 0)),
            pl.BlockSpec((9, cin, cout), lambda n: (0, 0, 0)),
            pl.BlockSpec((1, cout), lambda n: (0, 0)),
        ],
        out_specs=pl.BlockSpec((1, H, W, cout), lambda n: (n, 0, 0, 0)),
        compiler_params=pltpu.CompilerParams(
            dimension_semantics=("parallel",)),
    )(xp, w, b)


def conv3x3_res_gap_head(xp, res, w, b, w_head, b_head):
    """Residual conv + GAP + head -> (N, 1, CLS_PAD) logits."""
    N, Hp, Wp, c = xp.shape
    H, W = Hp - 2, Wp - 2
    cls = w_head.shape[-1]
    return pl.pallas_call(
        partial(_conv3x3_res_gap_head_kernel, H=H, W=W),
        out_shape=jax.ShapeDtypeStruct((N, 1, cls), jnp.float32),
        grid=(N,),
        in_specs=[
            pl.BlockSpec((1, Hp, Wp, c), lambda n: (n, 0, 0, 0)),
            pl.BlockSpec((1, H, W, c), lambda n: (n, 0, 0, 0)),
            pl.BlockSpec((9, c, c), lambda n: (0, 0, 0)),
            pl.BlockSpec((1, c), lambda n: (0, 0)),
            pl.BlockSpec((c, cls), lambda n: (0, 0)),
            pl.BlockSpec((1, cls), lambda n: (0, 0)),
        ],
        out_specs=pl.BlockSpec((1, 1, cls), lambda n: (n, 0, 0)),
        compiler_params=pltpu.CompilerParams(
            dimension_semantics=("parallel",)),
    )(xp, res, w, b, w_head, b_head)


# ---------------------------------------------------------------------------
# Params + forward (body -> neck -> head)
# ---------------------------------------------------------------------------
def init_params(key, c_in=4, c_body=128, class_num=10, class_pad=128):
    ks = jax.random.split(key, 8)
    s = 0.1

    def conv_w(k, cin, cout):
        return (s * jax.random.normal(k, (9, cin, cout), jnp.float32)
                ).astype(jnp.bfloat16)

    w_head = s * jax.random.normal(ks[6], (c_body, class_num), jnp.float32)
    b_head = s * jax.random.normal(ks[7], (class_num,), jnp.float32)
    # Pad head to a lane-dense 128-wide output; wrapper slices back to class_num.
    w_head = jnp.pad(w_head, ((0, 0), (0, class_pad - class_num))
                     ).astype(jnp.bfloat16)
    b_head = jnp.pad(b_head, (0, class_pad - class_num)).reshape(1, class_pad)

    return {
        "w_stem": conv_w(ks[0], c_in, c_body),
        "b_stem": s * jax.random.normal(ks[1], (1, c_body), jnp.float32),
        "w1": conv_w(ks[2], c_body, c_body),
        "b1": s * jax.random.normal(ks[3], (1, c_body), jnp.float32),
        "w2": conv_w(ks[4], c_body, c_body),
        "b2": s * jax.random.normal(ks[5], (1, c_body), jnp.float32),
        "w_head": w_head,
        "b_head": b_head,
    }


def model_forward(x_nchw, params, class_num):
    N, Cin, H, W = x_nchw.shape
    x = jnp.transpose(x_nchw, (0, 2, 3, 1)).astype(jnp.float32)   # NCHW->NHWC

    def pad(t):  # 1-pixel zero halo for "same" 3x3 convs
        return jnp.pad(t, ((0, 0), (1, 1), (1, 1), (0, 0)))

    # body: stem conv + ReLU
    y = conv3x3(pad(x), params["w_stem"], params["b_stem"], relu=True)
    # body: residual block, first conv + ReLU
    h = conv3x3(pad(y), params["w1"], params["b1"], relu=True)
    # body conv2 + skip + ReLU, fused with neck (GAP) and head (FC)
    logits_pad = conv3x3_res_gap_head(pad(h), y, params["w2"], params["b2"],
                                      params["w_head"], params["b_head"])
    return logits_pad.reshape(N, -1)[:, :class_num]


if __name__ == "__main__":
    key = jax.random.PRNGKey(0)
    k_x, k_p = jax.random.split(key)

    class_num = 10
    x = jax.random.normal(k_x, (2, 4, 16, 16), jnp.float32)       # NCHW input
    params = init_params(k_p, c_in=4, c_body=128, class_num=class_num)

    fwd = jax.jit(lambda xx, pp: model_forward(xx, pp, class_num))
    out = jax.block_until_ready(fwd(x, params))

    assert out.shape == (2, class_num), out.shape
    assert bool(jnp.all(jnp.isfinite(out)))
    print("KERNEL_OK")
</pallas_src>

<mosaic_0001>
module attributes {stable_mosaic.version = 11 : i64} {
  func.func @_conv3x3_kernel(%arg0: i32, %arg1: memref<1x18x18x4xf32, #tpu.memory_space<vmem>>, %arg2: memref<9x4x128xbf16, #tpu.memory_space<vmem>>, %arg3: memref<1x128xf32, #tpu.memory_space<vmem>>, %arg4: memref<1x16x16x128xf32, #tpu.memory_space<vmem>>) attributes {dimension_semantics = [#tpu.dimension_semantics<parallel>], iteration_bounds = array<i64: 2>, scalar_prefetch = 0 : i64, scratch_operands = 0 : i64, tpu.core_type = #tpu.core_type<tc>, window_params = [{transform_indices = @transform_0, window_bounds = array<i64: 1, 18, 18, 4>}, {pipeline_mode = #tpu.pipeline_mode<synchronous>, transform_indices = @transform_1, window_bounds = array<i64: 9, 4, 128>}, {pipeline_mode = #tpu.pipeline_mode<synchronous>, transform_indices = @transform_2, window_bounds = array<i64: 1, 128>}, {transform_indices = @transform_3, window_bounds = array<i64: 1, 16, 16, 128>}]} {
    %cst = arith.constant 0.000000e+00 : f32
    %0 = vector.broadcast %cst : f32 to vector<256x128xf32>
    %c0 = arith.constant 0 : index
    %c0_0 = arith.constant 0 : index
    %c0_1 = arith.constant 0 : index
    %c0_2 = arith.constant 0 : index
    %1 = vector.load %arg1[%c0, %c0_0, %c0_1, %c0_2] : memref<1x18x18x4xf32, #tpu.memory_space<vmem>>, vector<1x16x16x4xf32>
    %2 = vector.shape_cast %1 : vector<1x16x16x4xf32> to vector<16x16x4xf32>
    %3 = vector.shape_cast %2 : vector<16x16x4xf32> to vector<256x4xf32>
    %4 = arith.truncf %3 : vector<256x4xf32> to vector<256x4xbf16>
    %c0_3 = arith.constant 0 : index
    %c0_4 = arith.constant 0 : index
    %c0_5 = arith.constant 0 : index
    %5 = vector.load %arg2[%c0_3, %c0_4, %c0_5] : memref<9x4x128xbf16, #tpu.memory_space<vmem>>, vector<1x4x128xbf16>
    %6 = vector.shape_cast %5 : vector<1x4x128xbf16> to vector<4x128xbf16>
    %cst_6 = arith.constant dense<0.000000e+00> : vector<256x128xf32>
    %7 = tpu.matmul %4, %6, %cst_6 {dimension_numbers = #tpu.dot_dimension_numbers<[1], [0], [0], [1], [0, 0, 1, 1], [], []>} : vector<256x4xbf16>, vector<4x128xbf16>, vector<256x128xf32> -> vector<256x128xf32>
    %8 = arith.addf %0, %7 : vector<256x128xf32>
    %c0_7 = arith.constant 0 : index
    %c0_8 = arith.constant 0 : index
    %c1 = arith.constant 1 : index
    %c0_9 = arith.constant 0 : index
    %9 = vector.load %arg1[%c0_7, %c0_8, %c1, %c0_9] : memref<1x18x18x4xf32, #tpu.memory_space<vmem>>, vector<1x16x16x4xf32>
    %10 = vector.shape_cast %9 : vector<1x16x16x4xf32> to vector<16x16x4xf32>
    %11 = vector.shape_cast %10 : vector<16x16x4xf32> to vector<256x4xf32>
    %12 = arith.truncf %11 : vector<256x4xf32> to vector<256x4xbf16>
    %c1_10 = arith.constant 1 : index
    %c0_11 = arith.constant 0 : index
    %c0_12 = arith.constant 0 : index
    %13 = vector.load %arg2[%c1_10, %c0_11, %c0_12] : memref<9x4x128xbf16, #tpu.memory_space<vmem>>, vector<1x4x128xbf16>
    %14 = vector.shape_cast %13 : vector<1x4x128xbf16> to vector<4x128xbf16>
    %cst_13 = arith.constant dense<0.000000e+00> : vector<256x128xf32>
    %15 = tpu.matmul %12, %14, %cst_13 {dimension_numbers = #tpu.dot_dimension_numbers<[1], [0], [0], [1], [0, 0, 1, 1], [], []>} : vector<256x4xbf16>, vector<4x128xbf16>, vector<256x128xf32> -> vector<256x128xf32>
    %16 = arith.addf %8, %15 : vector<256x128xf32>
    %c0_14 = arith.constant 0 : index
    %c0_15 = arith.constant 0 : index
    %c2 = arith.constant 2 : index
    %c0_16 = arith.constant 0 : index
    %17 = vector.load %arg1[%c0_14, %c0_15, %c2, %c0_16] : memref<1x18x18x4xf32, #tpu.memory_space<vmem>>, vector<1x16x16x4xf32>
    %18 = vector.shape_cast %17 : vector<1x16x16x4xf32> to vector<16x16x4xf32>
    %19 = vector.shape_cast %18 : vector<16x16x4xf32> to vector<256x4xf32>
    %20 = arith.truncf %19 : vector<256x4xf32> to vector<256x4xbf16>
    %c2_17 = arith.constant 2 : index
    %c0_18 = arith.constant 0 : index
    %c0_19 = arith.constant 0 : index
    %21 = vector.load %arg2[%c2_17, %c0_18, %c0_19] : memref<9x4x128xbf16, #tpu.memory_space<vmem>>, vector<1x4x128xbf16>
    %22 = vector.shape_cast %21 : vector<1x4x128xbf16> to vector<4x128xbf16>
    %cst_20 = arith.constant dense<0.000000e+00> : vector<256x128xf32>
    %23 = tpu.matmul %20, %22, %cst_20 {dimension_numbers = #tpu.dot_dimension_numbers<[1], [0], [0], [1], [0, 0, 1, 1], [], []>} : vector<256x4xbf16>, vector<4x128xbf16>, vector<256x128xf32> -> vector<256x128xf32>
    %24 = arith.addf %16, %23 : vector<256x128xf32>
    %c0_21 = arith.constant 0 : index
    %c1_22 = arith.constant 1 : index
    %c0_23 = arith.constant 0 : index
    %c0_24 = arith.constant 0 : index
    %25 = vector.load %arg1[%c0_21, %c1_22, %c0_23, %c0_24] : memref<1x18x18x4xf32, #tpu.memory_space<vmem>>, vector<1x16x16x4xf32>
    %26 = vector.shape_cast %25 : vector<1x16x16x4xf32> to vector<16x16x4xf32>
    %27 = vector.shape_cast %26 : vector<16x16x4xf32> to vector<256x4xf32>
    %28 = arith.truncf %27 : vector<256x4xf32> to vector<256x4xbf16>
    %c3 = arith.constant 3 : index
    %c0_25 = arith.constant 0 : index
    %c0_26 = arith.constant 0 : index
    %29 = vector.load %arg2[%c3, %c0_25, %c0_26] : memref<9x4x128xbf16, #tpu.memory_space<vmem>>, vector<1x4x128xbf16>
    %30 = vector.shape_cast %29 : vector<1x4x128xbf16> to vector<4x128xbf16>
    %cst_27 = arith.constant dense<0.000000e+00> : vector<256x128xf32>
    %31 = tpu.matmul %28, %30, %cst_27 {dimension_numbers = #tpu.dot_dimension_numbers<[1], [0], [0], [1], [0, 0, 1, 1], [], []>} : vector<256x4xbf16>, vector<4x128xbf16>, vector<256x128xf32> -> vector<256x128xf32>
    %32 = arith.addf %24, %31 : vector<256x128xf32>
    %c0_28 = arith.constant 0 : index
    %c1_29 = arith.constant 1 : index
    %c1_30 = arith.constant 1 : index
    %c0_31 = arith.constant 0 : index
    %33 = vector.load %arg1[%c0_28, %c1_29, %c1_30, %c0_31] : memref<1x18x18x4xf32, #tpu.memory_space<vmem>>, vector<1x16x16x4xf32>
    %34 = vector.shape_cast %33 : vector<1x16x16x4xf32> to vector<16x16x4xf32>
    %35 = vector.shape_cast %34 : vector<16x16x4xf32> to vector<256x4xf32>
    %36 = arith.truncf %35 : vector<256x4xf32> to vector<256x4xbf16>
    %c4 = arith.constant 4 : index
    %c0_32 = arith.constant 0 : index
    %c0_33 = arith.constant 0 : index
    %37 = vector.load %arg2[%c4, %c0_32, %c0_33] : memref<9x4x128xbf16, #tpu.memory_space<vmem>>, vector<1x4x128xbf16>
    %38 = vector.shape_cast %37 : vector<1x4x128xbf16> to vector<4x128xbf16>
    %cst_34 = arith.constant dense<0.000000e+00> : vector<256x128xf32>
    %39 = tpu.matmul %36, %38, %cst_34 {dimension_numbers = #tpu.dot_dimension_numbers<[1], [0], [0], [1], [0, 0, 1, 1], [], []>} : vector<256x4xbf16>, vector<4x128xbf16>, vector<256x128xf32> -> vector<256x128xf32>
    %40 = arith.addf %32, %39 : vector<256x128xf32>
    %c0_35 = arith.constant 0 : index
    %c1_36 = arith.constant 1 : index
    %c2_37 = arith.constant 2 : index
    %c0_38 = arith.constant 0 : index
    %41 = vector.load %arg1[%c0_35, %c1_36, %c2_37, %c0_38] : memref<1x18x18x4xf32, #tpu.memory_space<vmem>>, vector<1x16x16x4xf32>
    %42 = vector.shape_cast %41 : vector<1x16x16x4xf32> to vector<16x16x4xf32>
    %43 = vector.shape_cast %42 : vector<16x16x4xf32> to vector<256x4xf32>
    %44 = arith.truncf %43 : vector<256x4xf32> to vector<256x4xbf16>
    %c5 = arith.constant 5 : index
    %c0_39 = arith.constant 0 : index
    %c0_40 = arith.constant 0 : index
    %45 = vector.load %arg2[%c5, %c0_39, %c0_40] : memref<9x4x128xbf16, #tpu.memory_space<vmem>>, vector<1x4x128xbf16>
    %46 = vector.shape_cast %45 : vector<1x4x128xbf16> to vector<4x128xbf16>
    %cst_41 = arith.constant dense<0.000000e+00> : vector<256x128xf32>
    %47 = tpu.matmul %44, %46, %cst_41 {dimension_numbers = #tpu.dot_dimension_numbers<[1], [0], [0], [1], [0, 0, 1, 1], [], []>} : vector<256x4xbf16>, vector<4x128xbf16>, vector<256x128xf32> -> vector<256x128xf32>
    %48 = arith.addf %40, %47 : vector<256x128xf32>
    %c0_42 = arith.constant 0 : index
    %c2_43 = arith.constant 2 : index
    %c0_44 = arith.constant 0 : index
    %c0_45 = arith.constant 0 : index
    %49 = vector.load %arg1[%c0_42, %c2_43, %c0_44, %c0_45] : memref<1x18x18x4xf32, #tpu.memory_space<vmem>>, vector<1x16x16x4xf32>
    %50 = vector.shape_cast %49 : vector<1x16x16x4xf32> to vector<16x16x4xf32>
    %51 = vector.shape_cast %50 : vector<16x16x4xf32> to vector<256x4xf32>
    %52 = arith.truncf %51 : vector<256x4xf32> to vector<256x4xbf16>
    %c6 = arith.constant 6 : index
    %c0_46 = arith.constant 0 : index
    %c0_47 = arith.constant 0 : index
    %53 = vector.load %arg2[%c6, %c0_46, %c0_47] : memref<9x4x128xbf16, #tpu.memory_space<vmem>>, vector<1x4x128xbf16>
    %54 = vector.shape_cast %53 : vector<1x4x128xbf16> to vector<4x128xbf16>
    %cst_48 = arith.constant dense<0.000000e+00> : vector<256x128xf32>
    %55 = tpu.matmul %52, %54, %cst_48 {dimension_numbers = #tpu.dot_dimension_numbers<[1], [0], [0], [1], [0, 0, 1, 1], [], []>} : vector<256x4xbf16>, vector<4x128xbf16>, vector<256x128xf32> -> vector<256x128xf32>
    %56 = arith.addf %48, %55 : vector<256x128xf32>
    %c0_49 = arith.constant 0 : index
    %c2_50 = arith.constant 2 : index
    %c1_51 = arith.constant 1 : index
    %c0_52 = arith.constant 0 : index
    %57 = vector.load %arg1[%c0_49, %c2_50, %c1_51, %c0_52] : memref<1x18x18x4xf32, #tpu.memory_space<vmem>>, vector<1x16x16x4xf32>
    %58 = vector.shape_cast %57 : vector<1x16x16x4xf32> to vector<16x16x4xf32>
    %59 = vector.shape_cast %58 : vector<16x16x4xf32> to vector<256x4xf32>
    %60 = arith.truncf %59 : vector<256x4xf32> to vector<256x4xbf16>
    %c7 = arith.constant 7 : index
    %c0_53 = arith.constant 0 : index
    %c0_54 = arith.constant 0 : index
    %61 = vector.load %arg2[%c7, %c0_53, %c0_54] : memref<9x4x128xbf16, #tpu.memory_space<vmem>>, vector<1x4x128xbf16>
    %62 = vector.shape_cast %61 : vector<1x4x128xbf16> to vector<4x128xbf16>
    %cst_55 = arith.constant dense<0.000000e+00> : vector<256x128xf32>
    %63 = tpu.matmul %60, %62, %cst_55 {dimension_numbers = #tpu.dot_dimension_numbers<[1], [0], [0], [1], [0, 0, 1, 1], [], []>} : vector<256x4xbf16>, vector<4x128xbf16>, vector<256x128xf32> -> vector<256x128xf32>
    %64 = arith.addf %56, %63 : vector<256x128xf32>
    %c0_56 = arith.constant 0 : index
    %c2_57 = arith.constant 2 : index
    %c2_58 = arith.constant 2 : index
    %c0_59 = arith.constant 0 : index
    %65 = vector.load %arg1[%c0_56, %c2_57, %c2_58, %c0_59] : memref<1x18x18x4xf32, #tpu.memory_space<vmem>>, vector<1x16x16x4xf32>
    %66 = vector.shape_cast %65 : vector<1x16x16x4xf32> to vector<16x16x4xf32>
    %67 = vector.shape_cast %66 : vector<16x16x4xf32> to vector<256x4xf32>
    %68 = arith.truncf %67 : vector<256x4xf32> to vector<256x4xbf16>
    %c8 = arith.constant 8 : index
    %c0_60 = arith.constant 0 : index
    %c0_61 = arith.constant 0 : index
    %69 = vector.load %arg2[%c8, %c0_60, %c0_61] : memref<9x4x128xbf16, #tpu.memory_space<vmem>>, vector<1x4x128xbf16>
    %70 = vector.shape_cast %69 : vector<1x4x128xbf16> to vector<4x128xbf16>
    %cst_62 = arith.constant dense<0.000000e+00> : vector<256x128xf32>
    %71 = tpu.matmul %68, %70, %cst_62 {dimension_numbers = #tpu.dot_dimension_numbers<[1], [0], [0], [1], [0, 0, 1, 1], [], []>} : vector<256x4xbf16>, vector<4x128xbf16>, vector<256x128xf32> -> vector<256x128xf32>
    %72 = arith.addf %64, %71 : vector<256x128xf32>
    %c0_63 = arith.constant 0 : index
    %c0_64 = arith.constant 0 : index
    %73 = vector.load %arg3[%c0_63, %c0_64] : memref<1x128xf32, #tpu.memory_space<vmem>>, vector<1x128xf32>
    %74 = vector.broadcast %73 : vector<1x128xf32> to vector<256x128xf32>
    %75 = arith.addf %72, %74 : vector<256x128xf32>
    %cst_65 = arith.constant 0.000000e+00 : f32
    %76 = vector.broadcast %cst_65 : f32 to vector<256x128xf32>
    %77 = arith.maximumf %75, %76 : vector<256x128xf32>
    %78 = vector.shape_cast %77 : vector<256x128xf32> to vector<16x16x128xf32>
    %c0_66 = arith.constant 0 : index
    %c0_67 = arith.constant 0 : index
    %c0_68 = arith.constant 0 : index
    %c0_69 = arith.constant 0 : index
    %79 = vector.load %arg4[%c0_66, %c0_67, %c0_68, %c0_69] : memref<1x16x16x128xf32, #tpu.memory_space<vmem>>, vector<1x16x16x128xf32>
    %80 = vector.shape_cast %79 : vector<1x16x16x128xf32> to vector<16x16x128xf32>
    %81 = vector.shape_cast %78 : vector<16x16x128xf32> to vector<1x16x16x128xf32>
    tpu.vector_store %arg4[%c0_66, %c0_67, %c0_68, %c0_69], %81 {strides = array<i32>} : memref<1x16x16x128xf32, #tpu.memory_space<vmem>>, vector<1x16x16x128xf32>,
    return
  }
  func.func @transform_0(%arg0: i32) -> (i32, i32, i32, i32) {
    %c0_i32 = arith.constant 0 : i32
    %c0_i32_0 = arith.constant 0 : i32
    %c0_i32_1 = arith.constant 0 : i32
    %c0_i32_2 = arith.constant 0 : i32
    return %arg0, %c0_i32, %c0_i32_0, %c0_i32_1 : i32, i32, i32, i32
  }
  func.func @transform_1(%arg0: i32) -> (i32, i32, i32) {
    %c0_i32 = arith.constant 0 : i32
    %c0_i32_0 = arith.constant 0 : i32
    %c0_i32_1 = arith.constant 0 : i32
    %c0_i32_2 = arith.constant 0 : i32
    return %c0_i32, %c0_i32_0, %c0_i32_1 : i32, i32, i32
  }
  func.func @transform_2(%arg0: i32) -> (i32, i32) {
    %c0_i32 = arith.constant 0 : i32
    %c0_i32_0 = arith.constant 0 : i32
    %c0_i32_1 = arith.constant 0 : i32
    return %c0_i32, %c0_i32_0 : i32, i32
  }
  func.func @transform_3(%arg0: i32) -> (i32, i32, i32, i32) {
    %c0_i32 = arith.constant 0 : i32
    %c0_i32_0 = arith.constant 0 : i32
    %c0_i32_1 = arith.constant 0 : i32
    %c0_i32_2 = arith.constant 0 : i32
    return %arg0, %c0_i32, %c0_i32_0, %c0_i32_1 : i32, i32, i32, i32
  }
}

module attributes {stable_mosaic.version = 11 : i64} {
  func.func @_conv3x3_kernel(%arg0: i32, %arg1: memref<1x18x18x128xf32, #tpu.memory_space<vmem>>, %arg2: memref<9x128x128xbf16, #tpu.memory_space<vmem>>, %arg3: memref<1x128xf32, #tpu.memory_space<vmem>>, %arg4: memref<1x16x16x128xf32, #tpu.memory_space<vmem>>) attributes {dimension_semantics = [#tpu.dimension_semantics<parallel>], iteration_bounds = array<i64: 2>, scalar_prefetch = 0 : i64, scratch_operands = 0 : i64, tpu.core_type = #tpu.core_type<tc>, window_params = [{transform_indices = @transform_0, window_bounds = array<i64: 1, 18, 18, 128>}, {pipeline_mode = #tpu.pipeline_mode<synchronous>, transform_indices = @transform_1, window_bounds = array<i64: 9, 128, 128>}, {pipeline_mode = #tpu.pipeline_mode<synchronous>, transform_indices = @transform_2, window_bounds = array<i64: 1, 128>}, {transform_indices = @transform_3, window_bounds = array<i64: 1, 16, 16, 128>}]} {
    %cst = arith.constant 0.000000e+00 : f32
    %0 = vector.broadcast %cst : f32 to vector<256x128xf32>
    %c0 = arith.constant 0 : index
    %c0_0 = arith.constant 0 : index
    %c0_1 = arith.constant 0 : index
    %c0_2 = arith.constant 0 : index
    %1 = vector.load %arg1[%c0, %c0_0, %c0_1, %c0_2] : memref<1x18x18x128xf32, #tpu.memory_space<vmem>>, vector<1x16x16x128xf32>
    %2 = vector.shape_cast %1 : vector<1x16x16x128xf32> to vector<16x16x128xf32>
    %3 = vector.shape_cast %2 : vector<16x16x128xf32> to vector<256x128xf32>
    %4 = arith.truncf %3 : vector<256x128xf32> to vector<256x128xbf16>
    %c0_3 = arith.constant 0 : index
    %c0_4 = arith.constant 0 : index
    %c0_5 = arith.constant 0 : index
    %5 = vector.load %arg2[%c0_3, %c0_4, %c0_5] : memref<9x128x128xbf16, #tpu.memory_space<vmem>>, vector<1x128x128xbf16>
    %6 = vector.shape_cast %5 : vector<1x128x128xbf16> to vector<128x128xbf16>
    %cst_6 = arith.constant dense<0.000000e+00> : vector<256x128xf32>
    %7 = tpu.matmul %4, %6, %cst_6 {dimension_numbers = #tpu.dot_dimension_numbers<[1], [0], [0], [1], [0, 0, 1, 1], [], []>} : vector<256x128xbf16>, vector<128x128xbf16>, vector<256x128xf32> -> vector<256x128xf32>
    %8 = arith.addf %0, %7 : vector<256x128xf32>
    %c0_7 = arith.constant 0 : index
    %c0_8 = arith.constant 0 : index
    %c1 = arith.constant 1 : index
    %c0_9 = arith.constant 0 : index
    %9 = vector.load %arg1[%c0_7, %c0_8, %c1, %c0_9] : memref<1x18x18x128xf32, #tpu.memory_space<vmem>>, vector<1x16x16x128xf32>
    %10 = vector.shape_cast %9 : vector<1x16x16x128xf32> to vector<16x16x128xf32>
    %11 = vector.shape_cast %10 : vector<16x16x128xf32> to vector<256x128xf32>
    %12 = arith.truncf %11 : vector<256x128xf32> to vector<256x128xbf16>
    %c1_10 = arith.constant 1 : index
    %c0_11 = arith.constant 0 : index
    %c0_12 = arith.constant 0 : index
    %13 = vector.load %arg2[%c1_10, %c0_11, %c0_12] : memref<9x128x128xbf16, #tpu.memory_space<vmem>>, vector<1x128x128xbf16>
    %14 = vector.shape_cast %13 : vector<1x128x128xbf16> to vector<128x128xbf16>
    %cst_13 = arith.constant dense<0.000000e+00> : vector<256x128xf32>
    %15 = tpu.matmul %12, %14, %cst_13 {dimension_numbers = #tpu.dot_dimension_numbers<[1], [0], [0], [1], [0, 0, 1, 1], [], []>} : vector<256x128xbf16>, vector<128x128xbf16>, vector<256x128xf32> -> vector<256x128xf32>
    %16 = arith.addf %8, %15 : vector<256x128xf32>
    %c0_14 = arith.constant 0 : index
    %c0_15 = arith.constant 0 : index
    %c2 = arith.constant 2 : index
    %c0_16 = arith.constant 0 : index
    %17 = vector.load %arg1[%c0_14, %c0_15, %c2, %c0_16] : memref<1x18x18x128xf32, #tpu.memory_space<vmem>>, vector<1x16x16x128xf32>
    %18 = vector.shape_cast %17 : vector<1x16x16x128xf32> to vector<16x16x128xf32>
    %19 = vector.shape_cast %18 : vector<16x16x128xf32> to vector<256x128xf32>
    %20 = arith.truncf %19 : vector<256x128xf32> to vector<256x128xbf16>
    %c2_17 = arith.constant 2 : index
    %c0_18 = arith.constant 0 : index
    %c0_19 = arith.constant 0 : index
    %21 = vector.load %arg2[%c2_17, %c0_18, %c0_19] : memref<9x128x128xbf16, #tpu.memory_space<vmem>>, vector<1x128x128xbf16>
    %22 = vector.shape_cast %21 : vector<1x128x128xbf16> to vector<128x128xbf16>
    %cst_20 = arith.constant dense<0.000000e+00> : vector<256x128xf32>
    %23 = tpu.matmul %20, %22, %cst_20 {dimension_numbers = #tpu.dot_dimension_numbers<[1], [0], [0], [1], [0, 0, 1, 1], [], []>} : vector<256x128xbf16>, vector<128x128xbf16>, vector<256x128xf32> -> vector<256x128xf32>
    %24 = arith.addf %16, %23 : vector<256x128xf32>
    %c0_21 = arith.constant 0 : index
    %c1_22 = arith.constant 1 : index
    %c0_23 = arith.constant 0 : index
    %c0_24 = arith.constant 0 : index
    %25 = vector.load %arg1[%c0_21, %c1_22, %c0_23, %c0_24] : memref<1x18x18x128xf32, #tpu.memory_space<vmem>>, vector<1x16x16x128xf32>
    %26 = vector.shape_cast %25 : vector<1x16x16x128xf32> to vector<16x16x128xf32>
    %27 = vector.shape_cast %26 : vector<16x16x128xf32> to vector<256x128xf32>
    %28 = arith.truncf %27 : vector<256x128xf32> to vector<256x128xbf16>
    %c3 = arith.constant 3 : index
    %c0_25 = arith.constant 0 : index
    %c0_26 = arith.constant 0 : index
    %29 = vector.load %arg2[%c3, %c0_25, %c0_26] : memref<9x128x128xbf16, #tpu.memory_space<vmem>>, vector<1x128x128xbf16>
    %30 = vector.shape_cast %29 : vector<1x128x128xbf16> to vector<128x128xbf16>
    %cst_27 = arith.constant dense<0.000000e+00> : vector<256x128xf32>
    %31 = tpu.matmul %28, %30, %cst_27 {dimension_numbers = #tpu.dot_dimension_numbers<[1], [0], [0], [1], [0, 0, 1, 1], [], []>} : vector<256x128xbf16>, vector<128x128xbf16>, vector<256x128xf32> -> vector<256x128xf32>
    %32 = arith.addf %24, %31 : vector<256x128xf32>
    %c0_28 = arith.constant 0 : index
    %c1_29 = arith.constant 1 : index
    %c1_30 = arith.constant 1 : index
    %c0_31 = arith.constant 0 : index
    %33 = vector.load %arg1[%c0_28, %c1_29, %c1_30, %c0_31] : memref<1x18x18x128xf32, #tpu.memory_space<vmem>>, vector<1x16x16x128xf32>
    %34 = vector.shape_cast %33 : vector<1x16x16x128xf32> to vector<16x16x128xf32>
    %35 = vector.shape_cast %34 : vector<16x16x128xf32> to vector<256x128xf32>
    %36 = arith.truncf %35 : vector<256x128xf32> to vector<256x128xbf16>
    %c4 = arith.constant 4 : index
    %c0_32 = arith.constant 0 : index
    %c0_33 = arith.constant 0 : index
    %37 = vector.load %arg2[%c4, %c0_32, %c0_33] : memref<9x128x128xbf16, #tpu.memory_space<vmem>>, vector<1x128x128xbf16>
    %38 = vector.shape_cast %37 : vector<1x128x128xbf16> to vector<128x128xbf16>
    %cst_34 = arith.constant dense<0.000000e+00> : vector<256x128xf32>
    %39 = tpu.matmul %36, %38, %cst_34 {dimension_numbers = #tpu.dot_dimension_numbers<[1], [0], [0], [1], [0, 0, 1, 1], [], []>} : vector<256x128xbf16>, vector<128x128xbf16>, vector<256x128xf32> -> vector<256x128xf32>
    %40 = arith.addf %32, %39 : vector<256x128xf32>
    %c0_35 = arith.constant 0 : index
    %c1_36 = arith.constant 1 : index
    %c2_37 = arith.constant 2 : index
    %c0_38 = arith.constant 0 : index
    %41 = vector.load %arg1[%c0_35, %c1_36, %c2_37, %c0_38] : memref<1x18x18x128xf32, #tpu.memory_space<vmem>>, vector<1x16x16x128xf32>
    %42 = vector.shape_cast %41 : vector<1x16x16x128xf32> to vector<16x16x128xf32>
    %43 = vector.shape_cast %42 : vector<16x16x128xf32> to vector<256x128xf32>
    %44 = arith.truncf %43 : vector<256x128xf32> to vector<256x128xbf16>
    %c5 = arith.constant 5 : index
    %c0_39 = arith.constant 0 : index
    %c0_40 = arith.constant 0 : index
    %45 = vector.load %arg2[%c5, %c0_39, %c0_40] : memref<9x128x128xbf16, #tpu.memory_space<vmem>>, vector<1x128x128xbf16>
    %46 = vector.shape_cast %45 : vector<1x128x128xbf16> to vector<128x128xbf16>
    %cst_41 = arith.constant dense<0.000000e+00> : vector<256x128xf32>
    %47 = tpu.matmul %44, %46, %cst_41 {dimension_numbers = #tpu.dot_dimension_numbers<[1], [0], [0], [1], [0, 0, 1, 1], [], []>} : vector<256x128xbf16>, vector<128x128xbf16>, vector<256x128xf32> -> vector<256x128xf32>
    %48 = arith.addf %40, %47 : vector<256x128xf32>
    %c0_42 = arith.constant 0 : index
    %c2_43 = arith.constant 2 : index
    %c0_44 = arith.constant 0 : index
    %c0_45 = arith.constant 0 : index
    %49 = vector.load %arg1[%c0_42, %c2_43, %c0_44, %c0_45] : memref<1x18x18x128xf32, #tpu.memory_space<vmem>>, vector<1x16x16x128xf32>
    %50 = vector.shape_cast %49 : vector<1x16x16x128xf32> to vector<16x16x128xf32>
    %51 = vector.shape_cast %50 : vector<16x16x128xf32> to vector<256x128xf32>
    %52 = arith.truncf %51 : vector<256x128xf32> to vector<256x128xbf16>
    %c6 = arith.constant 6 : index
    %c0_46 = arith.constant 0 : index
    %c0_47 = arith.constant 0 : index
    %53 = vector.load %arg2[%c6, %c0_46, %c0_47] : memref<9x128x128xbf16, #tpu.memory_space<vmem>>, vector<1x128x128xbf16>
    %54 = vector.shape_cast %53 : vector<1x128x128xbf16> to vector<128x128xbf16>
    %cst_48 = arith.constant dense<0.000000e+00> : vector<256x128xf32>
    %55 = tpu.matmul %52, %54, %cst_48 {dimension_numbers = #tpu.dot_dimension_numbers<[1], [0], [0], [1], [0, 0, 1, 1], [], []>} : vector<256x128xbf16>, vector<128x128xbf16>, vector<256x128xf32> -> vector<256x128xf32>
    %56 = arith.addf %48, %55 : vector<256x128xf32>
    %c0_49 = arith.constant 0 : index
    %c2_50 = arith.constant 2 : index
    %c1_51 = arith.constant 1 : index
    %c0_52 = arith.constant 0 : index
    %57 = vector.load %arg1[%c0_49, %c2_50, %c1_51, %c0_52] : memref<1x18x18x128xf32, #tpu.memory_space<vmem>>, vector<1x16x16x128xf32>
    %58 = vector.shape_cast %57 : vector<1x16x16x128xf32> to vector<16x16x128xf32>
    %59 = vector.shape_cast %58 : vector<16x16x128xf32> to vector<256x128xf32>
    %60 = arith.truncf %59 : vector<256x128xf32> to vector<256x128xbf16>
    %c7 = arith.constant 7 : index
    %c0_53 = arith.constant 0 : index
    %c0_54 = arith.constant 0 : index
    %61 = vector.load %arg2[%c7, %c0_53, %c0_54] : memref<9x128x128xbf16, #tpu.memory_space<vmem>>, vector<1x128x128xbf16>
    %62 = vector.shape_cast %61 : vector<1x128x128xbf16> to vector<128x128xbf16>
    %cst_55 = arith.constant dense<0.000000e+00> : vector<256x128xf32>
    %63 = tpu.matmul %60, %62, %cst_55 {dimension_numbers = #tpu.dot_dimension_numbers<[1], [0], [0], [1], [0, 0, 1, 1], [], []>} : vector<256x128xbf16>, vector<128x128xbf16>, vector<256x128xf32> -> vector<256x128xf32>
    %64 = arith.addf %56, %63 : vector<256x128xf32>
    %c0_56 = arith.constant 0 : index
    %c2_57 = arith.constant 2 : index
    %c2_58 = arith.constant 2 : index
    %c0_59 = arith.constant 0 : index
    %65 = vector.load %arg1[%c0_56, %c2_57, %c2_58, %c0_59] : memref<1x18x18x128xf32, #tpu.memory_space<vmem>>, vector<1x16x16x128xf32>
    %66 = vector.shape_cast %65 : vector<1x16x16x128xf32> to vector<16x16x128xf32>
    %67 = vector.shape_cast %66 : vector<16x16x128xf32> to vector<256x128xf32>
    %68 = arith.truncf %67 : vector<256x128xf32> to vector<256x128xbf16>
    %c8 = arith.constant 8 : index
    %c0_60 = arith.constant 0 : index
    %c0_61 = arith.constant 0 : index
    %69 = vector.load %arg2[%c8, %c0_60, %c0_61] : memref<9x128x128xbf16, #tpu.memory_space<vmem>>, vector<1x128x128xbf16>
    %70 = vector.shape_cast %69 : vector<1x128x128xbf16> to vector<128x128xbf16>
    %cst_62 = arith.constant dense<0.000000e+00> : vector<256x128xf32>
    %71 = tpu.matmul %68, %70, %cst_62 {dimension_numbers = #tpu.dot_dimension_numbers<[1], [0], [0], [1], [0, 0, 1, 1], [], []>} : vector<256x128xbf16>, vector<128x128xbf16>, vector<256x128xf32> -> vector<256x128xf32>
    %72 = arith.addf %64, %71 : vector<256x128xf32>
    %c0_63 = arith.constant 0 : index
    %c0_64 = arith.constant 0 : index
    %73 = vector.load %arg3[%c0_63, %c0_64] : memref<1x128xf32, #tpu.memory_space<vmem>>, vector<1x128xf32>
    %74 = vector.broadcast %73 : vector<1x128xf32> to vector<256x128xf32>
    %75 = arith.addf %72, %74 : vector<256x128xf32>
    %cst_65 = arith.constant 0.000000e+00 : f32
    %76 = vector.broadcast %cst_65 : f32 to vector<256x128xf32>
    %77 = arith.maximumf %75, %76 : vector<256x128xf32>
    %78 = vector.shape_cast %77 : vector<256x128xf32> to vector<16x16x128xf32>
    %c0_66 = arith.constant 0 : index
    %c0_67 = arith.constant 0 : index
    %c0_68 = arith.constant 0 : index
    %c0_69 = arith.constant 0 : index
    %79 = vector.load %arg4[%c0_66, %c0_67, %c0_68, %c0_69] : memref<1x16x16x128xf32, #tpu.memory_space<vmem>>, vector<1x16x16x128xf32>
    %80 = vector.shape_cast %79 : vector<1x16x16x128xf32> to vector<16x16x128xf32>
    %81 = vector.shape_cast %78 : vector<16x16x128xf32> to vector<1x16x16x128xf32>
    tpu.vector_store %arg4[%c0_66, %c0_67, %c0_68, %c0_69], %81 {strides = array<i32>} : memref<1x16x16x128xf32, #tpu.memory_space<vmem>>, vector<1x16x16x128xf32>,
    return
  }
  func.func @transform_0(%arg0: i32) -> (i32, i32, i32, i32) {
    %c0_i32 = arith.constant 0 : i32
    %c0_i32_0 = arith.constant 0 : i32
    %c0_i32_1 = arith.constant 0 : i32
    %c0_i32_2 = arith.constant 0 : i32
    return %arg0, %c0_i32, %c0_i32_0, %c0_i32_1 : i32, i32, i32, i32
  }
  func.func @transform_1(%arg0: i32) -> (i32, i32, i32) {
    %c0_i32 = arith.constant 0 : i32
    %c0_i32_0 = arith.constant 0 : i32
    %c0_i32_1 = arith.constant 0 : i32
    %c0_i32_2 = arith.constant 0 : i32
    return %c0_i32, %c0_i32_0, %c0_i32_1 : i32, i32, i32
  }
  func.func @transform_2(%arg0: i32) -> (i32, i32) {
    %c0_i32 = arith.constant 0 : i32
    %c0_i32_0 = arith.constant 0 : i32
    %c0_i32_1 = arith.constant 0 : i32
    return %c0_i32, %c0_i32_0 : i32, i32
  }
  func.func @transform_3(%arg0: i32) -> (i32, i32, i32, i32) {
    %c0_i32 = arith.constant 0 : i32
    %c0_i32_0 = arith.constant 0 : i32
    %c0_i32_1 = arith.constant 0 : i32
    %c0_i32_2 = arith.constant 0 : i32
    return %arg0, %c0_i32, %c0_i32_0, %c0_i32_1 : i32, i32, i32, i32
  }
}

module attributes {stable_mosaic.version = 11 : i64} {
  func.func @_conv3x3_res_gap_head_kernel(%arg0: i32, %arg1: memref<1x18x18x128xf32, #tpu.memory_space<vmem>>, %arg2: memref<1x16x16x128xf32, #tpu.memory_space<vmem>>, %arg3: memref<9x128x128xbf16, #tpu.memory_space<vmem>>, %arg4: memref<1x128xf32, #tpu.memory_space<vmem>>, %arg5: memref<128x128xbf16, #tpu.memory_space<vmem>>, %arg6: memref<1x128xf32, #tpu.memory_space<vmem>>, %arg7: memref<1x1x128xf32, #tpu.memory_space<vmem>>) attributes {dimension_semantics = [#tpu.dimension_semantics<parallel>], iteration_bounds = array<i64: 2>, scalar_prefetch = 0 : i64, scratch_operands = 0 : i64, tpu.core_type = #tpu.core_type<tc>, window_params = [{transform_indices = @transform_0, window_bounds = array<i64: 1, 18, 18, 128>}, {transform_indices = @transform_1, window_bounds = array<i64: 1, 16, 16, 128>}, {pipeline_mode = #tpu.pipeline_mode<synchronous>, transform_indices = @transform_2, window_bounds = array<i64: 9, 128, 128>}, {pipeline_mode = #tpu.pipeline_mode<synchronous>, transform_indices = @transform_3, window_bounds = array<i64: 1, 128>}, {pipeline_mode = #tpu.pipeline_mode<synchronous>, transform_indices = @transform_4, window_bounds = array<i64: 128, 128>}, {pipeline_mode = #tpu.pipeline_mode<synchronous>, transform_indices = @transform_5, window_bounds = array<i64: 1, 128>}, {transform_indices = @transform_6, window_bounds = array<i64: 1, 1, 128>}]} {
    %cst = arith.constant 0.000000e+00 : f32
    %0 = vector.broadcast %cst : f32 to vector<256x128xf32>
    %c0 = arith.constant 0 : index
    %c0_0 = arith.constant 0 : index
    %c0_1 = arith.constant 0 : index
    %c0_2 = arith.constant 0 : index
    %1 = vector.load %arg1[%c0, %c0_0, %c0_1, %c0_2] : memref<1x18x18x128xf32, #tpu.memory_space<vmem>>, vector<1x16x16x128xf32>
    %2 = vector.shape_cast %1 : vector<1x16x16x128xf32> to vector<16x16x128xf32>
    %3 = vector.shape_cast %2 : vector<16x16x128xf32> to vector<256x128xf32>
    %4 = arith.truncf %3 : vector<256x128xf32> to vector<256x128xbf16>
    %c0_3 = arith.constant 0 : index
    %c0_4 = arith.constant 0 : index
    %c0_5 = arith.constant 0 : index
    %5 = vector.load %arg3[%c0_3, %c0_4, %c0_5] : memref<9x128x128xbf16, #tpu.memory_space<vmem>>, vector<1x128x128xbf16>
    %6 = vector.shape_cast %5 : vector<1x128x128xbf16> to vector<128x128xbf16>
    %cst_6 = arith.constant dense<0.000000e+00> : vector<256x128xf32>
    %7 = tpu.matmul %4, %6, %cst_6 {dimension_numbers = #tpu.dot_dimension_numbers<[1], [0], [0], [1], [0, 0, 1, 1], [], []>} : vector<256x128xbf16>, vector<128x128xbf16>, vector<256x128xf32> -> vector<256x128xf32>
    %8 = arith.addf %0, %7 : vector<256x128xf32>
    %c0_7 = arith.constant 0 : index
    %c0_8 = arith.constant 0 : index
    %c1 = arith.constant 1 : index
    %c0_9 = arith.constant 0 : index
    %9 = vector.load %arg1[%c0_7, %c0_8, %c1, %c0_9] : memref<1x18x18x128xf32, #tpu.memory_space<vmem>>, vector<1x16x16x128xf32>
    %10 = vector.shape_cast %9 : vector<1x16x16x128xf32> to vector<16x16x128xf32>
    %11 = vector.shape_cast %10 : vector<16x16x128xf32> to vector<256x128xf32>
    %12 = arith.truncf %11 : vector<256x128xf32> to vector<256x128xbf16>
    %c1_10 = arith.constant 1 : index
    %c0_11 = arith.constant 0 : index
    %c0_12 = arith.constant 0 : index
    %13 = vector.load %arg3[%c1_10, %c0_11, %c0_12] : memref<9x128x128xbf16, #tpu.memory_space<vmem>>, vector<1x128x128xbf16>
    %14 = vector.shape_cast %13 : vector<1x128x128xbf16> to vector<128x128xbf16>
    %cst_13 = arith.constant dense<0.000000e+00> : vector<256x128xf32>
    %15 = tpu.matmul %12, %14, %cst_13 {dimension_numbers = #tpu.dot_dimension_numbers<[1], [0], [0], [1], [0, 0, 1, 1], [], []>} : vector<256x128xbf16>, vector<128x128xbf16>, vector<256x128xf32> -> vector<256x128xf32>
    %16 = arith.addf %8, %15 : vector<256x128xf32>
    %c0_14 = arith.constant 0 : index
    %c0_15 = arith.constant 0 : index
    %c2 = arith.constant 2 : index
    %c0_16 = arith.constant 0 : index
    %17 = vector.load %arg1[%c0_14, %c0_15, %c2, %c0_16] : memref<1x18x18x128xf32, #tpu.memory_space<vmem>>, vector<1x16x16x128xf32>
    %18 = vector.shape_cast %17 : vector<1x16x16x128xf32> to vector<16x16x128xf32>
    %19 = vector.shape_cast %18 : vector<16x16x128xf32> to vector<256x128xf32>
    %20 = arith.truncf %19 : vector<256x128xf32> to vector<256x128xbf16>
    %c2_17 = arith.constant 2 : index
    %c0_18 = arith.constant 0 : index
    %c0_19 = arith.constant 0 : index
    %21 = vector.load %arg3[%c2_17, %c0_18, %c0_19] : memref<9x128x128xbf16, #tpu.memory_space<vmem>>, vector<1x128x128xbf16>
    %22 = vector.shape_cast %21 : vector<1x128x128xbf16> to vector<128x128xbf16>
    %cst_20 = arith.constant dense<0.000000e+00> : vector<256x128xf32>
    %23 = tpu.matmul %20, %22, %cst_20 {dimension_numbers = #tpu.dot_dimension_numbers<[1], [0], [0], [1], [0, 0, 1, 1], [], []>} : vector<256x128xbf16>, vector<128x128xbf16>, vector<256x128xf32> -> vector<256x128xf32>
    %24 = arith.addf %16, %23 : vector<256x128xf32>
    %c0_21 = arith.constant 0 : index
    %c1_22 = arith.constant 1 : index
    %c0_23 = arith.constant 0 : index
    %c0_24 = arith.constant 0 : index
    %25 = vector.load %arg1[%c0_21, %c1_22, %c0_23, %c0_24] : memref<1x18x18x128xf32, #tpu.memory_space<vmem>>, vector<1x16x16x128xf32>
    %26 = vector.shape_cast %25 : vector<1x16x16x128xf32> to vector<16x16x128xf32>
    %27 = vector.shape_cast %26 : vector<16x16x128xf32> to vector<256x128xf32>
    %28 = arith.truncf %27 : vector<256x128xf32> to vector<256x128xbf16>
    %c3 = arith.constant 3 : index
    %c0_25 = arith.constant 0 : index
    %c0_26 = arith.constant 0 : index
    %29 = vector.load %arg3[%c3, %c0_25, %c0_26] : memref<9x128x128xbf16, #tpu.memory_space<vmem>>, vector<1x128x128xbf16>
    %30 = vector.shape_cast %29 : vector<1x128x128xbf16> to vector<128x128xbf16>
    %cst_27 = arith.constant dense<0.000000e+00> : vector<256x128xf32>
    %31 = tpu.matmul %28, %30, %cst_27 {dimension_numbers = #tpu.dot_dimension_numbers<[1], [0], [0], [1], [0, 0, 1, 1], [], []>} : vector<256x128xbf16>, vector<128x128xbf16>, vector<256x128xf32> -> vector<256x128xf32>
    %32 = arith.addf %24, %31 : vector<256x128xf32>
    %c0_28 = arith.constant 0 : index
    %c1_29 = arith.constant 1 : index
    %c1_30 = arith.constant 1 : index
    %c0_31 = arith.constant 0 : index
    %33 = vector.load %arg1[%c0_28, %c1_29, %c1_30, %c0_31] : memref<1x18x18x128xf32, #tpu.memory_space<vmem>>, vector<1x16x16x128xf32>
    %34 = vector.shape_cast %33 : vector<1x16x16x128xf32> to vector<16x16x128xf32>
    %35 = vector.shape_cast %34 : vector<16x16x128xf32> to vector<256x128xf32>
    %36 = arith.truncf %35 : vector<256x128xf32> to vector<256x128xbf16>
    %c4 = arith.constant 4 : index
    %c0_32 = arith.constant 0 : index
    %c0_33 = arith.constant 0 : index
    %37 = vector.load %arg3[%c4, %c0_32, %c0_33] : memref<9x128x128xbf16, #tpu.memory_space<vmem>>, vector<1x128x128xbf16>
    %38 = vector.shape_cast %37 : vector<1x128x128xbf16> to vector<128x128xbf16>
    %cst_34 = arith.constant dense<0.000000e+00> : vector<256x128xf32>
    %39 = tpu.matmul %36, %38, %cst_34 {dimension_numbers = #tpu.dot_dimension_numbers<[1], [0], [0], [1], [0, 0, 1, 1], [], []>} : vector<256x128xbf16>, vector<128x128xbf16>, vector<256x128xf32> -> vector<256x128xf32>
    %40 = arith.addf %32, %39 : vector<256x128xf32>
    %c0_35 = arith.constant 0 : index
    %c1_36 = arith.constant 1 : index
    %c2_37 = arith.constant 2 : index
    %c0_38 = arith.constant 0 : index
    %41 = vector.load %arg1[%c0_35, %c1_36, %c2_37, %c0_38] : memref<1x18x18x128xf32, #tpu.memory_space<vmem>>, vector<1x16x16x128xf32>
    %42 = vector.shape_cast %41 : vector<1x16x16x128xf32> to vector<16x16x128xf32>
    %43 = vector.shape_cast %42 : vector<16x16x128xf32> to vector<256x128xf32>
    %44 = arith.truncf %43 : vector<256x128xf32> to vector<256x128xbf16>
    %c5 = arith.constant 5 : index
    %c0_39 = arith.constant 0 : index
    %c0_40 = arith.constant 0 : index
    %45 = vector.load %arg3[%c5, %c0_39, %c0_40] : memref<9x128x128xbf16, #tpu.memory_space<vmem>>, vector<1x128x128xbf16>
    %46 = vector.shape_cast %45 : vector<1x128x128xbf16> to vector<128x128xbf16>
    %cst_41 = arith.constant dense<0.000000e+00> : vector<256x128xf32>
    %47 = tpu.matmul %44, %46, %cst_41 {dimension_numbers = #tpu.dot_dimension_numbers<[1], [0], [0], [1], [0, 0, 1, 1], [], []>} : vector<256x128xbf16>, vector<128x128xbf16>, vector<256x128xf32> -> vector<256x128xf32>
    %48 = arith.addf %40, %47 : vector<256x128xf32>
    %c0_42 = arith.constant 0 : index
    %c2_43 = arith.constant 2 : index
    %c0_44 = arith.constant 0 : index
    %c0_45 = arith.constant 0 : index
    %49 = vector.load %arg1[%c0_42, %c2_43, %c0_44, %c0_45] : memref<1x18x18x128xf32, #tpu.memory_space<vmem>>, vector<1x16x16x128xf32>
    %50 = vector.shape_cast %49 : vector<1x16x16x128xf32> to vector<16x16x128xf32>
    %51 = vector.shape_cast %50 : vector<16x16x128xf32> to vector<256x128xf32>
    %52 = arith.truncf %51 : vector<256x128xf32> to vector<256x128xbf16>
    %c6 = arith.constant 6 : index
    %c0_46 = arith.constant 0 : index
    %c0_47 = arith.constant 0 : index
    %53 = vector.load %arg3[%c6, %c0_46, %c0_47] : memref<9x128x128xbf16, #tpu.memory_space<vmem>>, vector<1x128x128xbf16>
    %54 = vector.shape_cast %53 : vector<1x128x128xbf16> to vector<128x128xbf16>
    %cst_48 = arith.constant dense<0.000000e+00> : vector<256x128xf32>
    %55 = tpu.matmul %52, %54, %cst_48 {dimension_numbers = #tpu.dot_dimension_numbers<[1], [0], [0], [1], [0, 0, 1, 1], [], []>} : vector<256x128xbf16>, vector<128x128xbf16>, vector<256x128xf32> -> vector<256x128xf32>
    %56 = arith.addf %48, %55 : vector<256x128xf32>
    %c0_49 = arith.constant 0 : index
    %c2_50 = arith.constant 2 : index
    %c1_51 = arith.constant 1 : index
    %c0_52 = arith.constant 0 : index
    %57 = vector.load %arg1[%c0_49, %c2_50, %c1_51, %c0_52] : memref<1x18x18x128xf32, #tpu.memory_space<vmem>>, vector<1x16x16x128xf32>
    %58 = vector.shape_cast %57 : vector<1x16x16x128xf32> to vector<16x16x128xf32>
    %59 = vector.shape_cast %58 : vector<16x16x128xf32> to vector<256x128xf32>
    %60 = arith.truncf %59 : vector<256x128xf32> to vector<256x128xbf16>
    %c7 = arith.constant 7 : index
    %c0_53 = arith.constant 0 : index
    %c0_54 = arith.constant 0 : index
    %61 = vector.load %arg3[%c7, %c0_53, %c0_54] : memref<9x128x128xbf16, #tpu.memory_space<vmem>>, vector<1x128x128xbf16>
    %62 = vector.shape_cast %61 : vector<1x128x128xbf16> to vector<128x128xbf16>
    %cst_55 = arith.constant dense<0.000000e+00> : vector<256x128xf32>
    %63 = tpu.matmul %60, %62, %cst_55 {dimension_numbers = #tpu.dot_dimension_numbers<[1], [0], [0], [1], [0, 0, 1, 1], [], []>} : vector<256x128xbf16>, vector<128x128xbf16>, vector<256x128xf32> -> vector<256x128xf32>
    %64 = arith.addf %56, %63 : vector<256x128xf32>
    %c0_56 = arith.constant 0 : index
    %c2_57 = arith.constant 2 : index
    %c2_58 = arith.constant 2 : index
    %c0_59 = arith.constant 0 : index
    %65 = vector.load %arg1[%c0_56, %c2_57, %c2_58, %c0_59] : memref<1x18x18x128xf32, #tpu.memory_space<vmem>>, vector<1x16x16x128xf32>
    %66 = vector.shape_cast %65 : vector<1x16x16x128xf32> to vector<16x16x128xf32>
    %67 = vector.shape_cast %66 : vector<16x16x128xf32> to vector<256x128xf32>
    %68 = arith.truncf %67 : vector<256x128xf32> to vector<256x128xbf16>
    %c8 = arith.constant 8 : index
    %c0_60 = arith.constant 0 : index
    %c0_61 = arith.constant 0 : index
    %69 = vector.load %arg3[%c8, %c0_60, %c0_61] : memref<9x128x128xbf16, #tpu.memory_space<vmem>>, vector<1x128x128xbf16>
    %70 = vector.shape_cast %69 : vector<1x128x128xbf16> to vector<128x128xbf16>
    %cst_62 = arith.constant dense<0.000000e+00> : vector<256x128xf32>
    %71 = tpu.matmul %68, %70, %cst_62 {dimension_numbers = #tpu.dot_dimension_numbers<[1], [0], [0], [1], [0, 0, 1, 1], [], []>} : vector<256x128xbf16>, vector<128x128xbf16>, vector<256x128xf32> -> vector<256x128xf32>
    %72 = arith.addf %64, %71 : vector<256x128xf32>
    %c0_63 = arith.constant 0 : index
    %c0_64 = arith.constant 0 : index
    %73 = vector.load %arg4[%c0_63, %c0_64] : memref<1x128xf32, #tpu.memory_space<vmem>>, vector<1x128xf32>
    %74 = vector.broadcast %73 : vector<1x128xf32> to vector<256x128xf32>
    %75 = arith.addf %72, %74 : vector<256x128xf32>
    %c0_65 = arith.constant 0 : index
    %c0_66 = arith.constant 0 : index
    %c0_67 = arith.constant 0 : index
    %c0_68 = arith.constant 0 : index
    %76 = vector.load %arg2[%c0_65, %c0_66, %c0_67, %c0_68] : memref<1x16x16x128xf32, #tpu.memory_space<vmem>>, vector<1x16x16x128xf32>
    %77 = vector.shape_cast %76 : vector<1x16x16x128xf32> to vector<16x16x128xf32>
    %78 = vector.shape_cast %77 : vector<16x16x128xf32> to vector<256x128xf32>
    %79 = arith.addf %75, %78 : vector<256x128xf32>
    %cst_69 = arith.constant 0.000000e+00 : f32
    %80 = vector.broadcast %cst_69 : f32 to vector<256x128xf32>
    %81 = arith.maximumf %79, %80 : vector<256x128xf32>
    %82 = arith.truncf %81 : vector<256x128xf32> to vector<256x128xbf16>
    %c0_70 = arith.constant 0 : index
    %c0_71 = arith.constant 0 : index
    %83 = vector.load %arg5[%c0_70, %c0_71] : memref<128x128xbf16, #tpu.memory_space<vmem>>, vector<128x128xbf16>
    %cst_72 = arith.constant dense<0.000000e+00> : vector<256x128xf32>
    %84 = tpu.matmul %82, %83, %cst_72 {dimension_numbers = #tpu.dot_dimension_numbers<[1], [0], [0], [1], [0, 0, 1, 1], [], []>} : vector<256x128xbf16>, vector<128x128xbf16>, vector<256x128xf32> -> vector<256x128xf32>
    %cst_73 = arith.constant dense<0.000000e+00> : vector<128xf32>
    %85 = vector.multi_reduction <add>, %84, %cst_73 [0] : vector<256x128xf32> to vector<128xf32>
    %86 = vector.shape_cast %85 : vector<128xf32> to vector<1x128xf32>
    %cst_74 = arith.constant 2.560000e+02 : f32
    %87 = vector.broadcast %cst_74 : f32 to vector<1x128xf32>
    %88 = arith.divf %86, %87 : vector<1x128xf32>
    %c0_75 = arith.constant 0 : index
    %c0_76 = arith.constant 0 : index
    %89 = vector.load %arg6[%c0_75, %c0_76] : memref<1x128xf32, #tpu.memory_space<vmem>>, vector<1x128xf32>
    %90 = arith.addf %88, %89 : vector<1x128xf32>
    %c0_77 = arith.constant 0 : index
    %c0_78 = arith.constant 0 : index
    %c0_79 = arith.constant 0 : index
    %91 = vector.load %arg7[%c0_77, %c0_78, %c0_79] : memref<1x1x128xf32, #tpu.memory_space<vmem>>, vector<1x1x128xf32>
    %92 = vector.shape_cast %91 : vector<1x1x128xf32> to vector<1x128xf32>
    %93 = vector.shape_cast %90 : vector<1x128xf32> to vector<1x1x128xf32>
    tpu.vector_store %arg7[%c0_77, %c0_78, %c0_79], %93 {strides = array<i32>} : memref<1x1x128xf32, #tpu.memory_space<vmem>>, vector<1x1x128xf32>,
    return
  }
  func.func @transform_0(%arg0: i32) -> (i32, i32, i32, i32) {
    %c0_i32 = arith.constant 0 : i32
    %c0_i32_0 = arith.constant 0 : i32
    %c0_i32_1 = arith.constant 0 : i32
    %c0_i32_2 = arith.constant 0 : i32
    return %arg0, %c0_i32, %c0_i32_0, %c0_i32_1 : i32, i32, i32, i32
  }
  func.func @transform_1(%arg0: i32) -> (i32, i32, i32, i32) {
    %c0_i32 = arith.constant 0 : i32
    %c0_i32_0 = arith.constant 0 : i32
    %c0_i32_1 = arith.constant 0 : i32
    %c0_i32_2 = arith.constant 0 : i32
    return %arg0, %c0_i32, %c0_i32_0, %c0_i32_1 : i32, i32, i32, i32
  }
  func.func @transform_2(%arg0: i32) -> (i32, i32, i32) {
    %c0_i32 = arith.constant 0 : i32
    %c0_i32_0 = arith.constant 0 : i32
    %c0_i32_1 = arith.constant 0 : i32
    %c0_i32_2 = arith.constant 0 : i32
    return %c0_i32, %c0_i32_0, %c0_i32_1 : i32, i32, i32
  }
  func.func @transform_3(%arg0: i32) -> (i32, i32) {
    %c0_i32 = arith.constant 0 : i32
    %c0_i32_0 = arith.constant 0 : i32
    %c0_i32_1 = arith.constant 0 : i32
    return %c0_i32, %c0_i32_0 : i32, i32
  }
  func.func @transform_4(%arg0: i32) -> (i32, i32) {
    %c0_i32 = arith.constant 0 : i32
    %c0_i32_0 = arith.constant 0 : i32
    %c0_i32_1 = arith.constant 0 : i32
    return %c0_i32, %c0_i32_0 : i32, i32
  }
  func.func @transform_5(%arg0: i32) -> (i32, i32) {
    %c0_i32 = arith.constant 0 : i32
    %c0_i32_0 = arith.constant 0 : i32
    %c0_i32_1 = arith.constant 0 : i32
    return %c0_i32, %c0_i32_0 : i32, i32
  }
  func.func @transform_6(%arg0: i32) -> (i32, i32, i32) {
    %c0_i32 = arith.constant 0 : i32
    %c0_i32_0 = arith.constant 0 : i32
    %c0_i32_1 = arith.constant 0 : i32
    return %arg0, %c0_i32, %c0_i32_0 : i32, i32, i32
  }
}

</mosaic_0001>

<llo_original>
// kernel: _lambda_.3
$region0: #{_lambda_.3}
  #allocation0 [shape = 'u32[]', space=smem, size = 0x4, offset = 0x4, fixed_abs, tag = 'smem constant byte address 0x4 - core index']
  #allocation1 [shape = 'u32[144,128]{1,0:T(1,128)}', space=vmem, size = 0x12000, scoped, tag = 'internal scratch']
  %s0 = inlined_call_operand.vmem [shape: f32[2,18,18,4], index: 0, kind: input, shape index: {}]
  %s1 = inlined_call_operand.vmem [shape: bf16[9,4,128], index: 1, kind: input, shape index: {}]
  %s2 = inlined_call_operand.vmem [shape: f32[1,128], index: 2, kind: input, shape index: {}]
  %s3 = inlined_call_operand.vmem [shape: f32[2,16,16,128], index: 3, kind: output, shape index: {}]
  %s4 = sld [smem:[#allocation0]]
  $region45: #{_lambda_.3} parent=0
    _
  %s6 = ssub.s32 1, %s4
  %s7 = scalar_select 0, %s6, %s4
  loop: start=0, step=1, limit=4
  $region2: #{_lambda_.3} parent=0 // loop_pre_header
    _
  $region3: #{_lambda_.3} parent=0 // loop_header
    %s9 = sphi 0, %s13
    %p10 = scmp.ge.s32.totalorder %s9, 4
    %s19 = sphi 0, %s21
    %s22 = sphi 0, %s19
    %s23 = sphi 0, %s22
    %s39 = sphi 0, %s23
    %s43 = sphi 0, %s43
    %s45 = sphi 0, %s43
    %s46 = sphi 0, %s45
    %s60 = sphi 0, %s46
    %s64 = sphi 0, %s64
    %s66 = sphi 0, %s64
    %s67 = sphi 0, %s66
    %s81 = sphi 0, %s67
    %s87 = sphi 0, %s89
    %s90 = sphi 0, %s87
    %s91 = sphi 0, %s90
    %s107 = sphi 0, %s91
  $region4: #{_lambda_.3} parent=0 // loop_header_branch
    %12 = sbr.rel (%p10) target = $region8
  $region5: #{_lambda_.3} parent=0 // loop_body
    %s14 = ssub.s32 %s9, 1
    %s15 = ssub.s32 %s9, 2
    %s16 = sadd.s32 %s9, 1
    %s17 = ssub.s32 %s9, %s16
    %p18 = scmp.eq.s32.totalorder %s17, 0
    %s20 = sadd.s32 %s19, 1
    %s21 = scalar_select %p18, %s19, %s20
    %p24 = pneg %p18
    %p25 = scmp.eq.s32.totalorder %s9, 1
    %p26 = por %p24, %p25
    %p27 = scmp.ne.s32.totalorder %s19, %s22
    %p28 = scmp.eq.s32.totalorder %s9, 0
    %p29 = por %p27, %p28
    %p30 = scmp.ne.s32.totalorder %s19, %s22
    %p31 = scmp.eq.s32.totalorder %s14, 1
    %p32 = por %p30, %p31
    %p33 = scmp.ne.s32.totalorder %s22, %s23
    %p34 = scmp.eq.s32.totalorder %s14, 0
    %p35 = por %p33, %p34
    %p36 = scmp.ne.s32.totalorder %s22, %s23
    %p37 = scmp.eq.s32.totalorder %s15, 1
    %p38 = por %p36, %p37
    %p40 = scmp.ne.s32.totalorder %s23, %s39
    %p41 = scmp.eq.s32.totalorder %s15, 0
    %p42 = por %p40, %p41
    %s44 = sadd.s32 %s43, 1
    %p47 = scmp.eq.s32.totalorder %s9, 1
    %p48 = scmp.ne.s32.totalorder %s43, %s45
    %p49 = scmp.eq.s32.totalorder %s9, 0
    %p50 = por %p48, %p49
    %p51 = scmp.ne.s32.totalorder %s43, %s45
    %p52 = scmp.eq.s32.totalorder %s14, 1
    %p53 = por %p51, %p52
    %p54 = scmp.ne.s32.totalorder %s45, %s46
    %p55 = scmp.eq.s32.totalorder %s14, 0
    %p56 = por %p54, %p55
    %p57 = scmp.ne.s32.totalorder %s45, %s46
    %p58 = scmp.eq.s32.totalorder %s15, 1
    %p59 = por %p57, %p58
    %p61 = scmp.ne.s32.totalorder %s46, %s60
    %p62 = scmp.eq.s32.totalorder %s15, 0
    %p63 = por %p61, %p62
    %s65 = sadd.s32 %s64, 1
    %p68 = scmp.eq.s32.totalorder %s9, 1
    %p69 = scmp.ne.s32.totalorder %s64, %s66
    %p70 = scmp.eq.s32.totalorder %s9, 0
    %p71 = por %p69, %p70
    %p72 = scmp.ne.s32.totalorder %s64, %s66
    %p73 = scmp.eq.s32.totalorder %s14, 1
    %p74 = por %p72, %p73
    %p75 = scmp.ne.s32.totalorder %s66, %s67
    %p76 = scmp.eq.s32.totalorder %s14, 0
    %p77 = por %p75, %p76
    %p78 = scmp.ne.s32.totalorder %s66, %s67
    %p79 = scmp.eq.s32.totalorder %s15, 1
    %p80 = por %p78, %p79
    %p82 = scmp.ne.s32.totalorder %s67, %s81
    %p83 = scmp.eq.s32.totalorder %s15, 0
    %p84 = por %p82, %p83
    %s85 = ssub.s32 %s9, %s16
    %p86 = scmp.eq.s32.totalorder %s85, 0
    %s88 = sadd.s32 %s87, 1
    %s89 = scalar_select %p86, %s87, %s88
    %p92 = pneg %p86
    %p93 = scmp.eq.s32.totalorder %s9, 1
    %p94 = por %p92, %p93
    %p95 = scmp.ne.s32.totalorder %s87, %s90
    %p96 = scmp.eq.s32.totalorder %s9, 0
    %p97 = por %p95, %p96
    %p98 = scmp.ne.s32.totalorder %s87, %s90
    %p99 = scmp.eq.s32.totalorder %s14, 1
    %p100 = por %p98, %p99
    %p101 = scmp.ne.s32.totalorder %s90, %s91
    %p102 = scmp.eq.s32.totalorder %s14, 0
    %p103 = por %p101, %p102
    %p104 = scmp.ne.s32.totalorder %s90, %s91
    %p105 = scmp.eq.s32.totalorder %s15, 1
    %p106 = por %p104, %p105
    %p108 = scmp.ne.s32.totalorder %s91, %s107
    %p109 = scmp.eq.s32.totalorder %s15, 0
    %p110 = por %p108, %p109
    %p111 = scmp.le.s32.totalorder 1, %s9
    %p112 = scmp.lt.s32.totalorder %s9, 3
    %p113 = pnand %p111, %p112
    %p114 = pneg %p113
    // Predicated region
    $region9: #{_lambda_.3} parent=5 // pred_check
      _
    $region10: #{_lambda_.3} parent=5 // pred_check_branch
      %116 = sbr.rel (%p113) target = $region12
    $region11: #{_lambda_.3} parent=5 // pred_region
      %s117 = ssub.s32 %s9, 1
      // Predicated region
      $region13: #{_lambda_.3} parent=11 // pred_check
        %p118 = pneg %p56
      $region14: #{_lambda_.3} parent=11 // pred_check_branch
        %120 = sbr.rel (%p118) target = $region16
      $region15: #{_lambda_.3} parent=11 // pred_region
        _
      $region16: #{_lambda_.3} parent=11 // pred_fallthru
        _
      // Predicated region
      $region17: #{_lambda_.3} parent=11 // pred_check
        %p121 = pneg %p77
      $region18: #{_lambda_.3} parent=11 // pred_check_branch
        %123 = sbr.rel (%p121) target = $region20
      $region19: #{_lambda_.3} parent=11 // pred_region
        _
      $region20: #{_lambda_.3} parent=11 // pred_fallthru
        _
    $region12: #{_lambda_.3} parent=5 // pred_fallthru
      _
    %p124 = scmp.lt.s32.totalorder %s9, 2
    // Predicated region
    $region21: #{_lambda_.3} parent=5 // pred_check
      %p125 = pneg %p124
    $region22: #{_lambda_.3} parent=5 // pred_check_branch
      %127 = sbr.rel (%p125) target = $region24
    $region23: #{_lambda_.3} parent=5 // pred_region
      // Predicated region
      $region25: #{_lambda_.3} parent=23 // pred_check
        %p128 = pneg %p29
      $region26: #{_lambda_.3} parent=23 // pred_check_branch
        %130 = sbr.rel (%p128) target = $region28
      $region27: #{_lambda_.3} parent=23 // pred_region
        %p131 = scmp.lt.s32.totalorder %s9, 1
        %s132 = scalar_select %p131, %s9, 1
        %s133 = smul.addr %s132, 54
        %s134 = smul.addr %s133, 8
        %s135 = scalar_lea.vmem %s0, %s134
      $region28: #{_lambda_.3} parent=23 // pred_fallthru
        _
    $region24: #{_lambda_.3} parent=5 // pred_fallthru
      _
    %p136 = scmp.le.s32.totalorder 1, %s9
    %p137 = scmp.lt.s32.totalorder %s9, 3
    %p138 = pnand %p136, %p137
    %p139 = pneg %p138
    // Predicated region
    $region29: #{_lambda_.3} parent=5 // pred_check
      _
    $region30: #{_lambda_.3} parent=5 // pred_check_branch
      %141 = sbr.rel (%p138) target = $region32
    $region31: #{_lambda_.3} parent=5 // pred_region
      %s142 = ssub.s32 %s9, 1
      %p143 = scmp.lt.s32.totalorder %s14, 1
      %s144 = scalar_select %p143, %s14, 1
      %s145 = smul.addr %s144, 54
      %s146 = smul.addr %s145, 8
      %s147 = scalar_lea.vmem %s0, %s146
      %p148 = pneg %p35
      %p149 = pneg %p32
      %p150 = pneg %p56
      %p151 = pneg %p53
      %p152 = pneg %p77
      %p153 = pneg %p74
      %p154 = pneg %p103
      %p155 = pneg %p100
      %p156 = scmp.lt.s32.totalorder %s14, 1
      %s157 = scalar_select %p156, %s14, 1
      %s158 = smul.addr %s157, 32
      %s159 = smul.addr %s158, 8
      %s160 = scalar_lea.vmem %s3, %s159
      %p161 = scmp.lt.s32.totalorder %s14, 1
      %s162 = scalar_select %p161, %s14, 1
      %s163 = smul.addr %s162, 54
      %s164 = smul.addr %s163, 8
      %s165 = scalar_lea.vmem %s0, %s164
      %p166 = scmp.lt.s32.totalorder %s14, 1
      %s167 = scalar_select %p166, %s14, 1
      %s168 = smul.addr %s167, 32
      %s169 = smul.addr %s168, 8
      %s170 = scalar_lea.vmem %s3, %s169
      %v172 = vld [vmem:[%s165] sm:$0xff]
      %v173 = vld [vmem:[%s165 + $0x8] sm:$0xff]
      %v174 = vld [vmem:[%s165 + $0x18] sm:$0xff]
      %v175 = vld [vmem:[%s165 + $0x20] sm:$0xff]
      %v176 = vld [vmem:[%s165 + $0x30] sm:$0xff]
      %v177 = vld [vmem:[%s165 + $0x38] sm:$0xff]
      %v178 = vld [vmem:[%s165 + $0x48] sm:$0xff]
      %v179 = vld [vmem:[%s165 + $0x50] sm:$0xff]
      %v180 = vld [vmem:[%s165 + $0x60] sm:$0xff]
      %v181 = vld [vmem:[%s165 + $0x68] sm:$0xff]
      %v182 = vld [vmem:[%s165 + $0x78] sm:$0xff]
      %v183 = vld [vmem:[%s165 + $0x80] sm:$0xff]
      %v184 = vld [vmem:[%s165 + $0x90] sm:$0xff]
      %v185 = vld [vmem:[%s165 + $0x98] sm:$0xff]
      %v186 = vld [vmem:[%s165 + $0xa8] sm:$0xff]
      %v187 = vld [vmem:[%s165 + $0xb0] sm:$0xff]
      %v188 = vld [vmem:[%s165 + $0xc0] sm:$0xff]
      %v189 = vld [vmem:[%s165 + $0xc8] sm:$0xff]
      %v190 = vld [vmem:[%s165 + $0xd8] sm:$0xff]
      %v191 = vld [vmem:[%s165 + $0xe0] sm:$0xff]
      %v192 = vld [vmem:[%s165 + $0xf0] sm:$0xff]
      %v193 = vld [vmem:[%s165 + $0xf8] sm:$0xff]
      %v194 = vld [vmem:[%s165 + $0x108] sm:$0xff]
      %v195 = vld [vmem:[%s165 + $0x110] sm:$0xff]
      %v196 = vld [vmem:[%s165 + $0x120] sm:$0xff]
      %v197 = vld [vmem:[%s165 + $0x128] sm:$0xff]
      %v198 = vld [vmem:[%s165 + $0x138] sm:$0xff]
      %v199 = vld [vmem:[%s165 + $0x140] sm:$0xff]
      %v200 = vld [vmem:[%s165 + $0x150] sm:$0xff]
      %v201 = vld [vmem:[%s165 + $0x158] sm:$0xff]
      %v202 = vld [vmem:[%s165 + $0x168] sm:$0xff]
      %v203 = vld [vmem:[%s165 + $0x170] sm:$0xff]
      %v204 = vpack.c.bf16 %v173, %v172
      %v205 = vpack.c.bf16 %v175, %v174
      %v206 = vpack.c.bf16 %v177, %v176
      %v207 = vpack.c.bf16 %v179, %v178
      %v208 = vpack.c.bf16 %v181, %v180
      %v209 = vpack.c.bf16 %v183, %v182
      %v210 = vpack.c.bf16 %v185, %v184
      %v211 = vpack.c.bf16 %v187, %v186
      %v212 = vpack.c.bf16 %v189, %v188
      %v213 = vpack.c.bf16 %v191, %v190
      %v214 = vpack.c.bf16 %v193, %v192
      %v215 = vpack.c.bf16 %v195, %v194
      %v216 = vpack.c.bf16 %v197, %v196
      %v217 = vpack.c.bf16 %v199, %v198
      %v218 = vpack.c.bf16 %v201, %v200
      %v219 = vpack.c.bf16 %v203, %v202
      %v220 = vld [vmem:[%s1] sm:$0x3]
      %v221 = vld [vmem:[%s165 + $0x1] sm:$0xff]
      %v222 = vld [vmem:[%s165 + $0x9] sm:$0xff]
      %v223 = vld [vmem:[%s165 + $0x19] sm:$0xff]
      %v224 = vld [vmem:[%s165 + $0x21] sm:$0xff]
      %v225 = vld [vmem:[%s165 + $0x31] sm:$0xff]
      %v226 = vld [vmem:[%s165 + $0x39] sm:$0xff]
      %v227 = vld [vmem:[%s165 + $0x49] sm:$0xff]
      %v228 = vld [vmem:[%s165 + $0x51] sm:$0xff]
      %v229 = vld [vmem:[%s165 + $0x61] sm:$0xff]
      %v230 = vld [vmem:[%s165 + $0x69] sm:$0xff]
      %v231 = vld [vmem:[%s165 + $0x79] sm:$0xff]
      %v232 = vld [vmem:[%s165 + $0x81] sm:$0xff]
      %v233 = vld [vmem:[%s165 + $0x91] sm:$0xff]
      %v234 = vld [vmem:[%s165 + $0x99] sm:$0xff]
      %v235 = vld [vmem:[%s165 + $0xa9] sm:$0xff]
      %v236 = vld [vmem:[%s165 + $0xb1] sm:$0xff]
      %v237 = vld [vmem:[%s165 + $0xc1] sm:$0xff]
      %v238 = vld [vmem:[%s165 + $0xc9] sm:$0xff]
      %v239 = vld [vmem:[%s165 + $0xd9] sm:$0xff]
      %v240 = vld [vmem:[%s165 + $0xe1] sm:$0xff]
      %v241 = vld [vmem:[%s165 + $0xf1] sm:$0xff]
      %v242 = vld [vmem:[%s165 + $0xf9] sm:$0xff]
      %v243 = vld [vmem:[%s165 + $0x109] sm:$0xff]
      %v244 = vld [vmem:[%s165 + $0x111] sm:$0xff]
      %v245 = vld [vmem:[%s165 + $0x121] sm:$0xff]
      %v246 = vld [vmem:[%s165 + $0x129] sm:$0xff]
      %v247 = vld [vmem:[%s165 + $0x139] sm:$0xff]
      %v248 = vld [vmem:[%s165 + $0x141] sm:$0xff]
      %v249 = vld [vmem:[%s165 + $0x151] sm:$0xff]
      %v250 = vld [vmem:[%s165 + $0x159] sm:$0xff]
      %v251 = vld [vmem:[%s165 + $0x169] sm:$0xff]
      %v252 = vld [vmem:[%s165 + $0x171] sm:$0xff]
      %v253 = vpack.c.bf16 %v222, %v221
      %v254 = vpack.c.bf16 %v224, %v223
      %v255 = vpack.c.bf16 %v226, %v225
      %v256 = vpack.c.bf16 %v228, %v227
      %v257 = vpack.c.bf16 %v230, %v229
      %v258 = vpack.c.bf16 %v232, %v231
      %v259 = vpack.c.bf16 %v234, %v233
      %v260 = vpack.c.bf16 %v236, %v235
      %v261 = vpack.c.bf16 %v238, %v237
      %v262 = vpack.c.bf16 %v240, %v239
      %v263 = vpack.c.bf16 %v242, %v241
      %v264 = vpack.c.bf16 %v244, %v243
      %v265 = vpack.c.bf16 %v246, %v245
      %v266 = vpack.c.bf16 %v248, %v247
      %v267 = vpack.c.bf16 %v250, %v249
      %v268 = vpack.c.bf16 %v252, %v251
      %s269 = scalar_lea.vmem %s1, 2
      %v270 = vld [vmem:[%s269] sm:$0x3]
      %vm271 = vcmask 31744
      %v273 = vsel %vm271, %v253, 0
      %v276 = vsel %vm271, %v254, 0
      %v279 = vsel %vm271, %v255, 0
      %v282 = vsel %vm271, %v256, 0
      %v285 = vsel %vm271, %v257, 0
      %v288 = vsel %vm271, %v258, 0
      %v291 = vsel %vm271, %v259, 0
      %v294 = vsel %vm271, %v260, 0
      %v297 = vsel %vm271, %v261, 0
      %v300 = vsel %vm271, %v262, 0
      %v303 = vsel %vm271, %v263, 0
      %v306 = vsel %vm271, %v264, 0
      %v309 = vsel %vm271, %v265, 0
      %v312 = vsel %vm271, %v266, 0
      %v315 = vsel %vm271, %v267, 0
      %v318 = vsel %vm271, %v268, 0
      %vm320 = vcmask 1041408
      %v322 = vsel %vm320, %v270, 0
      %324 = vmatprep.subr.bf16.mxu0 0
      %325 = vmatpush1.bf16.msra.mxu0 %v322
      %326 = vmatprep.subr.bf16.mxu0 0
      %327 = vmatpush1.bf16.msra.mxu0 0
      %328 = vmatprep.subr.bf16.mxu0 0
      %329 = vmatpush1.bf16.msra.mxu0 0
      %330 = vmatprep.subr.bf16.mxu0 0
      %331 = vmatpush1.bf16.msra.mxu0 0
      %332 = vmatprep.subr.bf16.mxu0 0
      %333 = vmatpush1.bf16.msra.mxu0 0
      %334 = vmatprep.subr.bf16.mxu0 0
      %335 = vmatpush1.bf16.msra.mxu0 0
      %336 = vmatprep.subr.bf16.mxu0 0
      %337 = vmatpush1.bf16.msra.mxu0 0
      %338 = vmatprep.subr.bf16.mxu0 0
      %339 = vmatpush1.bf16.msra.mxu0 0
      %340 = vmatprep.subr.bf16.mxu0 0
      %341 = vmatpush1.bf16.msra.mxu0 0
      %342 = vmatprep.subr.bf16.mxu0 0
      %343 = vmatpush1.bf16.msra.mxu0 0
      %344 = vmatprep.subr.bf16.mxu0 0
      %345 = vmatpush1.bf16.msra.mxu0 0
      %346 = vmatprep.subr.bf16.mxu0 0
      %347 = vmatpush1.bf16.msra.mxu0 0
      %348 = vmatprep.subr.bf16.mxu0 0
      %349 = vmatpush1.bf16.msra.mxu0 0
      %350 = vmatprep.subr.bf16.mxu0 0
      %351 = vmatpush1.bf16.msra.mxu0 0
      %352 = vmatprep.subr.bf16.mxu0 0
      %353 = vmatpush1.bf16.msra.mxu0 0
      %354 = vmatprep.subr.bf16.mxu0 0
      %355 = vmatpush1.bf16.msra.mxu0 0
      %356 = vmatprep.mubr.bf16.mxu0 0
      %357 = vmatmul.mubr.bf16.gmra.mrb[0].mxu0 %v273
      %v358 = vpop.f32.mrb[0].mxu0
      %v359 = vadd.f32 0.0, %v358
      %v360 = vpop.f32.mrb[0].mxu0
      %v361 = vpop.f32.mrb[0].mxu0
      %v362 = vadd.f32 0.0, %v361
      %v363 = vpop.f32.mrb[0].mxu0
      %364 = vmatprep.mubr.bf16.mxu0 0
      %365 = vmatmul.mubr.bf16.gmra.mrb[0].mxu0 %v276
      %v366 = vpop.f32.mrb[0].mxu0
      %v367 = vadd.f32 0.0, %v366
      %v368 = vpop.f32.mrb[0].mxu0
      %v369 = vpop.f32.mrb[0].mxu0
      %v370 = vadd.f32 0.0, %v369
      %v371 = vpop.f32.mrb[0].mxu0
      %372 = vmatprep.mubr.bf16.mxu0 0
      %373 = vmatmul.mubr.bf16.gmra.mrb[0].mxu0 %v279
      %v374 = vpop.f32.mrb[0].mxu0
      %v375 = vadd.f32 0.0, %v374
      %v376 = vpop.f32.mrb[0].mxu0
      %v377 = vpop.f32.mrb[0].mxu0
      %v378 = vadd.f32 0.0, %v377
      %v379 = vpop.f32.mrb[0].mxu0
      %380 = vmatprep.mubr.bf16.mxu0 0
      %381 = vmatmul.mubr.bf16.gmra.mrb[0].mxu0 %v282
      %v382 = vpop.f32.mrb[0].mxu0
      %v383 = vadd.f32 0.0, %v382
      %v384 = vpop.f32.mrb[0].mxu0
      %v385 = vpop.f32.mrb[0].mxu0
      %v386 = vadd.f32 0.0, %v385
      %v387 = vpop.f32.mrb[0].mxu0
      %388 = vmatprep.mubr.bf16.mxu0 0
      %389 = vmatmul.mubr.bf16.gmra.mrb[0].mxu0 %v285
      %v390 = vpop.f32.mrb[0].mxu0
      %v391 = vadd.f32 0.0, %v390
      %v392 = vpop.f32.mrb[0].mxu0
      %v393 = vpop.f32.mrb[0].mxu0
      %v394 = vadd.f32 0.0, %v393
      %v395 = vpop.f32.mrb[0].mxu0
      %396 = vmatprep.mubr.bf16.mxu0 0
      %397 = vmatmul.mubr.bf16.gmra.mrb[0].mxu0 %v288
      %v398 = vpop.f32.mrb[0].mxu0
      %v399 = vadd.f32 0.0, %v398
      %v400 = vpop.f32.mrb[0].mxu0
      %v401 = vpop.f32.mrb[0].mxu0
      %v402 = vadd.f32 0.0, %v401
      %v403 = vpop.f32.mrb[0].mxu0
      %404 = vmatprep.mubr.bf16.mxu0 0
      %405 = vmatmul.mubr.bf16.gmra.mrb[0].mxu0 %v291
      %v406 = vpop.f32.mrb[0].mxu0
      %v407 = vadd.f32 0.0, %v406
      %v408 = vpop.f32.mrb[0].mxu0
      %v409 = vpop.f32.mrb[0].mxu0
      %v410 = vadd.f32 0.0, %v409
      %v411 = vpop.f32.mrb[0].mxu0
      %412 = vmatprep.mubr.bf16.mxu0 0
      %413 = vmatmul.mubr.bf16.gmra.mrb[0].mxu0 %v294
      %v414 = vpop.f32.mrb[0].mxu0
      %v415 = vadd.f32 0.0, %v414
      %v416 = vpop.f32.mrb[0].mxu0
      %v417 = vpop.f32.mrb[0].mxu0
      %v418 = vadd.f32 0.0, %v417
      %v419 = vpop.f32.mrb[0].mxu0
      %420 = vmatprep.mubr.bf16.mxu0 0
      %421 = vmatmul.mubr.bf16.gmra.mrb[0].mxu0 %v297
      %v422 = vpop.f32.mrb[0].mxu0
      %v423 = vadd.f32 0.0, %v422
      %v424 = vpop.f32.mrb[0].mxu0
      %v425 = vpop.f32.mrb[0].mxu0
      %v426 = vadd.f32 0.0, %v425
      %v427 = vpop.f32.mrb[0].mxu0
      %428 = vmatprep.mubr.bf16.mxu0 0
      %429 = vmatmul.mubr.bf16.gmra.mrb[0].mxu0 %v300
      %v430 = vpop.f32.mrb[0].mxu0
      %v431 = vadd.f32 0.0, %v430
      %v432 = vpop.f32.mrb[0].mxu0
      %v433 = vpop.f32.mrb[0].mxu0
      %v434 = vadd.f32 0.0, %v433
      %v435 = vpop.f32.mrb[0].mxu0
      %436 = vmatprep.mubr.bf16.mxu0 0
      %437 = vmatmul.mubr.bf16.gmra.mrb[0].mxu0 %v303
      %v438 = vpop.f32.mrb[0].mxu0
      %v439 = vadd.f32 0.0, %v438
      %v440 = vpop.f32.mrb[0].mxu0
      %v441 = vpop.f32.mrb[0].mxu0
      %v442 = vadd.f32 0.0, %v441
      %v443 = vpop.f32.mrb[0].mxu0
      %444 = vmatprep.mubr.bf16.mxu0 0
      %445 = vmatmul.mubr.bf16.gmra.mrb[0].mxu0 %v306
      %v446 = vpop.f32.mrb[0].mxu0
      %v447 = vadd.f32 0.0, %v446
      %v448 = vpop.f32.mrb[0].mxu0
      %v449 = vpop.f32.mrb[0].mxu0
      %v450 = vadd.f32 0.0, %v449
      %v451 = vpop.f32.mrb[0].mxu0
      %452 = vmatprep.mubr.bf16.mxu0 0
      %453 = vmatmul.mubr.bf16.gmra.mrb[0].mxu0 %v309
      %v454 = vpop.f32.mrb[0].mxu0
      %v455 = vadd.f32 0.0, %v454
      %v456 = vpop.f32.mrb[0].mxu0
      %v457 = vpop.f32.mrb[0].mxu0
      %v458 = vadd.f32 0.0, %v457
      %v459 = vpop.f32.mrb[0].mxu0
      %460 = vmatprep.mubr.bf16.mxu0 0
      %461 = vmatmul.mubr.bf16.gmra.mrb[0].mxu0 %v312
      %v462 = vpop.f32.mrb[0].mxu0
      %v463 = vadd.f32 0.0, %v462
      %v464 = vpop.f32.mrb[0].mxu0
      %v465 = vpop.f32.mrb[0].mxu0
      %v466 = vadd.f32 0.0, %v465
      %v467 = vpop.f32.mrb[0].mxu0
      %468 = vmatprep.mubr.bf16.mxu0 0
      %469 = vmatmul.mubr.bf16.gmra.mrb[0].mxu0 %v315
      %v470 = vpop.f32.mrb[0].mxu0
      %v471 = vadd.f32 0.0, %v470
      %v472 = vpop.f32.mrb[0].mxu0
      %v473 = vpop.f32.mrb[0].mxu0
      %v474 = vadd.f32 0.0, %v473
      %v475 = vpop.f32.mrb[0].mxu0
      %476 = vmatprep.mubr.bf16.mxu0 0
      %477 = vmatmul.mubr.bf16.gmra.mrb[0].mxu0 %v318
      %v478 = vpop.f32.mrb[0].mxu0
      %v479 = vadd.f32 0.0, %v478
      %v480 = vpop.f32.mrb[0].mxu0
      %v481 = vpop.f32.mrb[0].mxu0
      %v482 = vadd.f32 0.0, %v481
      %v483 = vpop.f32.mrb[0].mxu0
      %484 = vdwg.mxu0
      %v486 = vsel %vm271, %v204, 0
      %v489 = vsel %vm271, %v205, 0
      %v492 = vsel %vm271, %v206, 0
      %v495 = vsel %vm271, %v207, 0
      %v498 = vsel %vm271, %v208, 0
      %v501 = vsel %vm271, %v209, 0
      %v504 = vsel %vm271, %v210, 0
      %v507 = vsel %vm271, %v211, 0
      %v510 = vsel %vm271, %v212, 0
      %v513 = vsel %vm271, %v213, 0
      %v516 = vsel %vm271, %v214, 0
      %v519 = vsel %vm271, %v215, 0
      %v522 = vsel %vm271, %v216, 0
      %v525 = vsel %vm271, %v217, 0
      %v528 = vsel %vm271, %v218, 0
      %v531 = vsel %vm271, %v219, 0
      %v534 = vsel %vm320, %v220, 0
      %536 = vmatprep.subr.bf16.mxu0 0
      %537 = vmatpush1.bf16.msra.mxu0 %v534
      %538 = vmatprep.subr.bf16.mxu0 0
      %539 = vmatpush1.bf16.msra.mxu0 0
      %540 = vmatprep.subr.bf16.mxu0 0
      %541 = vmatpush1.bf16.msra.mxu0 0
      %542 = vmatprep.subr.bf16.mxu0 0
      %543 = vmatpush1.bf16.msra.mxu0 0
      %544 = vmatprep.subr.bf16.mxu0 0
      %545 = vmatpush1.bf16.msra.mxu0 0
      %546 = vmatprep.subr.bf16.mxu0 0
      %547 = vmatpush1.bf16.msra.mxu0 0
      %548 = vmatprep.subr.bf16.mxu0 0
      %549 = vmatpush1.bf16.msra.mxu0 0
      %550 = vmatprep.subr.bf16.mxu0 0
      %551 = vmatpush1.bf16.msra.mxu0 0
      %552 = vmatprep.subr.bf16.mxu0 0
      %553 = vmatpush1.bf16.msra.mxu0 0
      %554 = vmatprep.subr.bf16.mxu0 0
      %555 = vmatpush1.bf16.msra.mxu0 0
      %556 = vmatprep.subr.bf16.mxu0 0
      %557 = vmatpush1.bf16.msra.mxu0 0
      %558 = vmatprep.subr.bf16.mxu0 0
      %559 = vmatpush1.bf16.msra.mxu0 0
      %560 = vmatprep.subr.bf16.mxu0 0
      %561 = vmatpush1.bf16.msra.mxu0 0
      %562 = vmatprep.subr.bf16.mxu0 0
      %563 = vmatpush1.bf16.msra.mxu0 0
      %564 = vmatprep.subr.bf16.mxu0 0
      %565 = vmatpush1.bf16.msra.mxu0 0
      %566 = vmatprep.subr.bf16.mxu0 0
      %567 = vmatpush1.bf16.msra.mxu0 0
      %568 = vmatprep.mubr.bf16.mxu0 0
      %569 = vmatmul.mubr.bf16.gmra.mrb[0].mxu0 %v486
      %v570 = vpop.f32.mrb[0].mxu0
      %v571 = vadd.f32 %v359, %v570
      %v572 = vpop.f32.mrb[0].mxu0
      %v573 = vpop.f32.mrb[0].mxu0
      %v574 = vadd.f32 %v362, %v573
      %v575 = vpop.f32.mrb[0].mxu0
      %576 = vmatprep.mubr.bf16.mxu0 0
      %577 = vmatmul.mubr.bf16.gmra.mrb[0].mxu0 %v489
      %v578 = vpop.f32.mrb[0].mxu0
      %v579 = vadd.f32 %v367, %v578
      %v580 = vpop.f32.mrb[0].mxu0
      %v581 = vpop.f32.mrb[0].mxu0
      %v582 = vadd.f32 %v370, %v581
      %v583 = vpop.f32.mrb[0].mxu0
      %584 = vmatprep.mubr.bf16.mxu0 0
      %585 = vmatmul.mubr.bf16.gmra.mrb[0].mxu0 %v492
      %v586 = vpop.f32.mrb[0].mxu0
      %v587 = vadd.f32 %v375, %v586
      %v588 = vpop.f32.mrb[0].mxu0
      %v589 = vpop.f32.mrb[0].mxu0
      %v590 = vadd.f32 %v378, %v589
      %v591 = vpop.f32.mrb[0].mxu0
      %592 = vmatprep.mubr.bf16.mxu0 0
      %593 = vmatmul.mubr.bf16.gmra.mrb[0].mxu0 %v495
      %v594 = vpop.f32.mrb[0].mxu0
      %v595 = vadd.f32 %v383, %v594
      %v596 = vpop.f32.mrb[0].mxu0
      %v597 = vpop.f32.mrb[0].mxu0
      %v598 = vadd.f32 %v386, %v597
      %v599 = vpop.f32.mrb[0].mxu0
      %600 = vmatprep.mubr.bf16.mxu0 0
      %601 = vmatmul.mubr.bf16.gmra.mrb[0].mxu0 %v498
      %v602 = vpop.f32.mrb[0].mxu0
      %v603 = vadd.f32 %v391, %v602
      %v604 = vpop.f32.mrb[0].mxu0
      %v605 = vpop.f32.mrb[0].mxu0
      %v606 = vadd.f32 %v394, %v605
      %v607 = vpop.f32.mrb[0].mxu0
      %608 = vmatprep.mubr.bf16.mxu0 0
      %609 = vmatmul.mubr.bf16.gmra.mrb[0].mxu0 %v501
      %v610 = vpop.f32.mrb[0].mxu0
      %v611 = vadd.f32 %v399, %v610
      %v612 = vpop.f32.mrb[0].mxu0
      %v613 = vpop.f32.mrb[0].mxu0
      %v614 = vadd.f32 %v402, %v613
      %v615 = vpop.f32.mrb[0].mxu0
      %616 = vmatprep.mubr.bf16.mxu0 0
      %617 = vmatmul.mubr.bf16.gmra.mrb[0].mxu0 %v504
      %v618 = vpop.f32.mrb[0].mxu0
      %v619 = vadd.f32 %v407, %v618
      %v620 = vpop.f32.mrb[0].mxu0
      %v621 = vpop.f32.mrb[0].mxu0
      %v622 = vadd.f32 %v410, %v621
      %v623 = vpop.f32.mrb[0].mxu0
      %624 = vmatprep.mubr.bf16.mxu0 0
      %625 = vmatmul.mubr.bf16.gmra.mrb[0].mxu0 %v507
      %v626 = vpop.f32.mrb[0].mxu0
      %v627 = vadd.f32 %v415, %v626
      %v628 = vpop.f32.mrb[0].mxu0
      %v629 = vpop.f32.mrb[0].mxu0
      %v630 = vadd.f32 %v418, %v629
      %v631 = vpop.f32.mrb[0].mxu0
      %632 = vmatprep.mubr.bf16.mxu0 0
      %633 = vmatmul.mubr.bf16.gmra.mrb[0].mxu0 %v510
      %v634 = vpop.f32.mrb[0].mxu0
      %v635 = vadd.f32 %v423, %v634
      %v636 = vpop.f32.mrb[0].mxu0
      %v637 = vpop.f32.mrb[0].mxu0
      %v638 = vadd.f32 %v426, %v637
      %v639 = vpop.f32.mrb[0].mxu0
      %640 = vmatprep.mubr.bf16.mxu0 0
      %641 = vmatmul.mubr.bf16.gmra.mrb[0].mxu0 %v513
      %v642 = vpop.f32.mrb[0].mxu0
      %v643 = vadd.f32 %v431, %v642
      %v644 = vpop.f32.mrb[0].mxu0
      %v645 = vpop.f32.mrb[0].mxu0
      %v646 = vadd.f32 %v434, %v645
      %v647 = vpop.f32.mrb[0].mxu0
      %648 = vmatprep.mubr.bf16.mxu0 0
      %649 = vmatmul.mubr.bf16.gmra.mrb[0].mxu0 %v516
      %v650 = vpop.f32.mrb[0].mxu0
      %v651 = vadd.f32 %v439, %v650
      %v652 = vpop.f32.mrb[0].mxu0
      %v653 = vpop.f32.mrb[0].mxu0
      %v654 = vadd.f32 %v442, %v653
      %v655 = vpop.f32.mrb[0].mxu0
      %656 = vmatprep.mubr.bf16.mxu0 0
      %657 = vmatmul.mubr.bf16.gmra.mrb[0].mxu0 %v519
      %v658 = vpop.f32.mrb[0].mxu0
      %v659 = vadd.f32 %v447, %v658
      %v660 = vpop.f32.mrb[0].mxu0
      %v661 = vpop.f32.mrb[0].mxu0
      %v662 = vadd.f32 %v450, %v661
      %v663 = vpop.f32.mrb[0].mxu0
      %664 = vmatprep.mubr.bf16.mxu0 0
      %665 = vmatmul.mubr.bf16.gmra.mrb[0].mxu0 %v522
      %v666 = vpop.f32.mrb[0].mxu0
      %v667 = vadd.f32 %v455, %v666
      %v668 = vpop.f32.mrb[0].mxu0
      %v669 = vpop.f32.mrb[0].mxu0
      %v670 = vadd.f32 %v458, %v669
      %v671 = vpop.f32.mrb[0].mxu0
      %672 = vmatprep.mubr.bf16.mxu0 0
      %673 = vmatmul.mubr.bf16.gmra.mrb[0].mxu0 %v525
      %v674 = vpop.f32.mrb[0].mxu0
      %v675 = vadd.f32 %v463, %v674
      %v676 = vpop.f32.mrb[0].mxu0
      %v677 = vpop.f32.mrb[0].mxu0
      %v678 = vadd.f32 %v466, %v677
      %v679 = vpop.f32.mrb[0].mxu0
      %680 = vmatprep.mubr.bf16.mxu0 0
      %681 = vmatmul.mubr.bf16.gmra.mrb[0].mxu0 %v528
      %v682 = vpop.f32.mrb[0].mxu0
      %v683 = vadd.f32 %v471, %v682
      %v684 = vpop.f32.mrb[0].mxu0
      %v685 = vpop.f32.mrb[0].mxu0
      %v686 = vadd.f32 %v474, %v685
      %v687 = vpop.f32.mrb[0].mxu0
      %688 = vmatprep.mubr.bf16.mxu0 0
      %689 = vmatmul.mubr.bf16.gmra.mrb[0].mxu0 %v531
      %v690 = vpop.f32.mrb[0].mxu0
      %v691 = vadd.f32 %v479, %v690
      %v692 = vpop.f32.mrb[0].mxu0
      %v693 = vpop.f32.mrb[0].mxu0
      %v694 = vadd.f32 %v482, %v693
      %v695 = vpop.f32.mrb[0].mxu0
      %696 = vdwg.mxu0
      %v697 = vld [vmem:[%s165 + $0x2] sm:$0xff]
      %v698 = vld [vmem:[%s165 + $0xa] sm:$0xff]
      %v699 = vld [vmem:[%s165 + $0x1a] sm:$0xff]
      %v700 = vld [vmem:[%s165 + $0x22] sm:$0xff]
      %v701 = vld [vmem:[%s165 + $0x32] sm:$0xff]
      %v702 = vld [vmem:[%s165 + $0x3a] sm:$0xff]
      %v703 = vld [vmem:[%s165 + $0x4a] sm:$0xff]
      %v704 = vld [vmem:[%s165 + $0x52] sm:$0xff]
      %v705 = vld [vmem:[%s165 + $0x62] sm:$0xff]
      %v706 = vld [vmem:[%s165 + $0x6a] sm:$0xff]
      %v707 = vld [vmem:[%s165 + $0x7a] sm:$0xff]
      %v708 = vld [vmem:[%s165 + $0x82] sm:$0xff]
      %v709 = vld [vmem:[%s165 + $0x92] sm:$0xff]
      %v710 = vld [vmem:[%s165 + $0x9a] sm:$0xff]
      %v711 = vld [vmem:[%s165 + $0xaa] sm:$0xff]
      %v712 = vld [vmem:[%s165 + $0xb2] sm:$0xff]
      %v713 = vld [vmem:[%s165 + $0xc2] sm:$0xff]
      %v714 = vld [vmem:[%s165 + $0xca] sm:$0xff]
      %v715 = vld [vmem:[%s165 + $0xda] sm:$0xff]
      %v716 = vld [vmem:[%s165 + $0xe2] sm:$0xff]
      %v717 = vld [vmem:[%s165 + $0xf2] sm:$0xff]
      %v718 = vld [vmem:[%s165 + $0xfa] sm:$0xff]
      %v719 = vld [vmem:[%s165 + $0x10a] sm:$0xff]
      %v720 = vld [vmem:[%s165 + $0x112] sm:$0xff]
      %v721 = vld [vmem:[%s165 + $0x122] sm:$0xff]
      %v722 = vld [vmem:[%s165 + $0x12a] sm:$0xff]
      %v723 = vld [vmem:[%s165 + $0x13a] sm:$0xff]
      %v724 = vld [vmem:[%s165 + $0x142] sm:$0xff]
      %v725 = vld [vmem:[%s165 + $0x152] sm:$0xff]
      %v726 = vld [vmem:[%s165 + $0x15a] sm:$0xff]
      %v727 = vld [vmem:[%s165 + $0x16a] sm:$0xff]
      %v728 = vld [vmem:[%s165 + $0x172] sm:$0xff]
      %v729 = vpack.c.bf16 %v698, %v697
      %v730 = vpack.c.bf16 %v700, %v699
      %v731 = vpack.c.bf16 %v702, %v701
      %v732 = vpack.c.bf16 %v704, %v703
      %v733 = vpack.c.bf16 %v706, %v705
      %v734 = vpack.c.bf16 %v708, %v707
      %v735 = vpack.c.bf16 %v710, %v709
      %v736 = vpack.c.bf16 %v712, %v711
      %v737 = vpack.c.bf16 %v714, %v713
      %v738 = vpack.c.bf16 %v716, %v715
      %v739 = vpack.c.bf16 %v718, %v717
      %v740 = vpack.c.bf16 %v720, %v719
      %v741 = vpack.c.bf16 %v722, %v721
      %v742 = vpack.c.bf16 %v724, %v723
      %v743 = vpack.c.bf16 %v726, %v725
      %v744 = vpack.c.bf16 %v728, %v727
      %s745 = scalar_lea.vmem %s1, 4
      %v746 = vld [vmem:[%s745] sm:$0x3]
      %v748 = vsel %vm271, %v729, 0
      %v751 = vsel %vm271, %v730, 0
      %v754 = vsel %vm271, %v731, 0
      %v757 = vsel %vm271, %v732, 0
      %v760 = vsel %vm271, %v733, 0
      %v763 = vsel %vm271, %v734, 0
      %v766 = vsel %vm271, %v735, 0
      %v769 = vsel %vm271, %v736, 0
      %v772 = vsel %vm271, %v737, 0
      %v775 = vsel %vm271, %v738, 0
      %v778 = vsel %vm271, %v739, 0
      %v781 = vsel %vm271, %v740, 0
      %v784 = vsel %vm271, %v741, 0
      %v787 = vsel %vm271, %v742, 0
      %v790 = vsel %vm271, %v743, 0
      %v793 = vsel %vm271, %v744, 0
      %v796 = vsel %vm320, %v746, 0
      %798 = vmatprep.subr.bf16.mxu0 0
      %799 = vmatpush1.bf16.msra.mxu0 %v796
      %800 = vmatprep.subr.bf16.mxu0 0
      %801 = vmatpush1.bf16.msra.mxu0 0
      %802 = vmatprep.subr.bf16.mxu0 0
      %803 = vmatpush1.bf16.msra.mxu0 0
      %804 = vmatprep.subr.bf16.mxu0 0
      %805 = vmatpush1.bf16.msra.mxu0 0
      %806 = vmatprep.subr.bf16.mxu0 0
      %807 = vmatpush1.bf16.msra.mxu0 0
      %808 = vmatprep.subr.bf16.mxu0 0
      %809 = vmatpush1.bf16.msra.mxu0 0
      %810 = vmatprep.subr.bf16.mxu0 0
      %811 = vmatpush1.bf16.msra.mxu0 0
      %812 = vmatprep.subr.bf16.mxu0 0
      %813 = vmatpush1.bf16.msra.mxu0 0
      %814 = vmatprep.subr.bf16.mxu0 0
      %815 = vmatpush1.bf16.msra.mxu0 0
      %816 = vmatprep.subr.bf16.mxu0 0
      %817 = vmatpush1.bf16.msra.mxu0 0
      %818 = vmatprep.subr.bf16.mxu0 0
      %819 = vmatpush1.bf16.msra.mxu0 0
      %820 = vmatprep.subr.bf16.mxu0 0
      %821 = vmatpush1.bf16.msra.mxu0 0
      %822 = vmatprep.subr.bf16.mxu0 0
      %823 = vmatpush1.bf16.msra.mxu0 0
      %824 = vmatprep.subr.bf16.mxu0 0
      %825 = vmatpush1.bf16.msra.mxu0 0
      %826 = vmatprep.subr.bf16.mxu0 0
      %827 = vmatpush1.bf16.msra.mxu0 0
      %828 = vmatprep.subr.bf16.mxu0 0
      %829 = vmatpush1.bf16.msra.mxu0 0
      %830 = vmatprep.mubr.bf16.mxu0 0
      %831 = vmatmul.mubr.bf16.gmra.mrb[0].mxu0 %v748
      %v832 = vpop.f32.mrb[0].mxu0
      %v833 = vadd.f32 0.0, %v832
      %v834 = vpop.f32.mrb[0].mxu0
      %v835 = vpop.f32.mrb[0].mxu0
      %v836 = vadd.f32 0.0, %v835
      %v837 = vpop.f32.mrb[0].mxu0
      %838 = vmatprep.mubr.bf16.mxu0 0
      %839 = vmatmul.mubr.bf16.gmra.mrb[0].mxu0 %v751
      %v840 = vpop.f32.mrb[0].mxu0
      %v841 = vadd.f32 0.0, %v840
      %v842 = vpop.f32.mrb[0].mxu0
      %v843 = vpop.f32.mrb[0].mxu0
      %v844 = vadd.f32 0.0, %v843
      %v845 = vpop.f32.mrb[0].mxu0
      %846 = vmatprep.mubr.bf16.mxu0 0
      %847 = vmatmul.mubr.bf16.gmra.mrb[0].mxu0 %v754
      %v848 = vpop.f32.mrb[0].mxu0
      %v849 = vadd.f32 0.0, %v848
      %v850 = vpop.f32.mrb[0].mxu0
      %v851 = vpop.f32.mrb[0].mxu0
      %v852 = vadd.f32 0.0, %v851
      %v853 = vpop.f32.mrb[0].mxu0
      %854 = vmatprep.mubr.bf16.mxu0 0
      %855 = vmatmul.mubr.bf16.gmra.mrb[0].mxu0 %v757
      %v856 = vpop.f32.mrb[0].mxu0
      %v857 = vadd.f32 0.0, %v856
      %v858 = vpop.f32.mrb[0].mxu0
      %v859 = vpop.f32.mrb[0].mxu0
      %v860 = vadd.f32 0.0, %v859
      %v861 = vpop.f32.mrb[0].mxu0
      %862 = vmatprep.mubr.bf16.mxu0 0
      %863 = vmatmul.mubr.bf16.gmra.mrb[0].mxu0 %v760
      %v864 = vpop.f32.mrb[0].mxu0
      %v865 = vadd.f32 0.0, %v864
      %v866 = vpop.f32.mrb[0].mxu0
      %v867 = vpop.f32.mrb[0].mxu0
      %v868 = vadd.f32 0.0, %v867
      %v869 = vpop.f32.mrb[0].mxu0
      %870 = vmatprep.mubr.bf16.mxu0 0
      %871 = vmatmul.mubr.bf16.gmra.mrb[0].mxu0 %v763
      %v872 = vpop.f32.mrb[0].mxu0
      %v873 = vadd.f32 0.0, %v872
      %v874 = vpop.f32.mrb[0].mxu0
      %v875 = vpop.f32.mrb[0].mxu0
      %v876 = vadd.f32 0.0, %v875
      %v877 = vpop.f32.mrb[0].mxu0
      %878 = vmatprep.mubr.bf16.mxu0 0
      %879 = vmatmul.mubr.bf16.gmra.mrb[0].mxu0 %v766
      %v880 = vpop.f32.mrb[0].mxu0
      %v881 = vadd.f32 0.0, %v880
      %v882 = vpop.f32.mrb[0].mxu0
      %v883 = vpop.f32.mrb[0].mxu0
      %v884 = vadd.f32 0.0, %v883
      %v885 = vpop.f32.mrb[0].mxu0
      %886 = vmatprep.mubr.bf16.mxu0 0
      %887 = vmatmul.mubr.bf16.gmra.mrb[0].mxu0 %v769
      %v888 = vpop.f32.mrb[0].mxu0
      %v889 = vadd.f32 0.0, %v888
      %v890 = vpop.f32.mrb[0].mxu0
      %v891 = vpop.f32.mrb[0].mxu0
      %v892 = vadd.f32 0.0, %v891
      %v893 = vpop.f32.mrb[0].mxu0
      %894 = vmatprep.mubr.bf16.mxu0 0
      %895 = vmatmul.mubr.bf16.gmra.mrb[0].mxu0 %v772
      %v896 = vpop.f32.mrb[0].mxu0
      %v897 = vadd.f32 0.0, %v896
      %v898 = vpop.f32.mrb[0].mxu0
      %v899 = vpop.f32.mrb[0].mxu0
      %v900 = vadd.f32 0.0, %v899
      %v901 = vpop.f32.mrb[0].mxu0
      %902 = vmatprep.mubr.bf16.mxu0 0
      %903 = vmatmul.mubr.bf16.gmra.mrb[0].mxu0 %v775
      %v904 = vpop.f32.mrb[0].mxu0
      %v905 = vadd.f32 0.0, %v904
      %v906 = vpop.f32.mrb[0].mxu0
      %v907 = vpop.f32.mrb[0].mxu0
      %v908 = vadd.f32 0.0, %v907
      %v909 = vpop.f32.mrb[0].mxu0
      %910 = vmatprep.mubr.bf16.mxu0 0
      %911 = vmatmul.mubr.bf16.gmra.mrb[0].mxu0 %v778
      %v912 = vpop.f32.mrb[0].mxu0
      %v913 = vadd.f32 0.0, %v912
      %v914 = vpop.f32.mrb[0].mxu0
      %v915 = vpop.f32.mrb[0].mxu0
      %v916 = vadd.f32 0.0, %v915
      %v917 = vpop.f32.mrb[0].mxu0
      %918 = vmatprep.mubr.bf16.mxu0 0
      %919 = vmatmul.mubr.bf16.gmra.mrb[0].mxu0 %v781
      %v920 = vpop.f32.mrb[0].mxu0
      %v921 = vadd.f32 0.0, %v920
      %v922 = vpop.f32.mrb[0].mxu0
      %v923 = vpop.f32.mrb[0].mxu0
      %v924 = vadd.f32 0.0, %v923
      %v925 = vpop.f32.mrb[0].mxu0
      %926 = vmatprep.mubr.bf16.mxu0 0
      %927 = vmatmul.mubr.bf16.gmra.mrb[0].mxu0 %v784
      %v928 = vpop.f32.mrb[0].mxu0
      %v929 = vadd.f32 0.0, %v928
      %v930 = vpop.f32.mrb[0].mxu0
      %v931 = vpop.f32.mrb[0].mxu0
      %v932 = vadd.f32 0.0, %v931
      %v933 = vpop.f32.mrb[0].mxu0
      %934 = vmatprep.mubr.bf16.mxu0 0
      %935 = vmatmul.mubr.bf16.gmra.mrb[0].mxu0 %v787
      %v936 = vpop.f32.mrb[0].mxu0
      %v937 = vadd.f32 0.0, %v936
      %v938 = vpop.f32.mrb[0].mxu0
      %v939 = vpop.f32.mrb[0].mxu0
      %v940 = vadd.f32 0.0, %v939
      %v941 = vpop.f32.mrb[0].mxu0
      %942 = vmatprep.mubr.bf16.mxu0 0
      %943 = vmatmul.mubr.bf16.gmra.mrb[0].mxu0 %v790
      %v944 = vpop.f32.mrb[0].mxu0
      %v945 = vadd.f32 0.0, %v944
      %v946 = vpop.f32.mrb[0].mxu0
      %v947 = vpop.f32.mrb[0].mxu0
      %v948 = vadd.f32 0.0, %v947
      %v949 = vpop.f32.mrb[0].mxu0
      %950 = vmatprep.mubr.bf16.mxu0 0
      %951 = vmatmul.mubr.bf16.gmra.mrb[0].mxu0 %v793
      %v952 = vpop.f32.mrb[0].mxu0
      %v953 = vadd.f32 0.0, %v952
      %v954 = vpop.f32.mrb[0].mxu0
      %v955 = vpop.f32.mrb[0].mxu0
      %v956 = vadd.f32 0.0, %v955
      %v957 = vpop.f32.mrb[0].mxu0
      %958 = vdwg.mxu0
      %v959 = vadd.f32 %v571, %v833
      %v960 = vadd.f32 %v574, %v836
      %v961 = vadd.f32 %v579, %v841
      %v962 = vadd.f32 %v582, %v844
      %v963 = vadd.f32 %v587, %v849
      %v964 = vadd.f32 %v590, %v852
      %v965 = vadd.f32 %v595, %v857
      %v966 = vadd.f32 %v598, %v860
      %v967 = vadd.f32 %v603, %v865
      %v968 = vadd.f32 %v606, %v868
      %v969 = vadd.f32 %v611, %v873
      %v970 = vadd.f32 %v614, %v876
      %v971 = vadd.f32 %v619, %v881
      %v972 = vadd.f32 %v622, %v884
      %v973 = vadd.f32 %v627, %v889
      %v974 = vadd.f32 %v630, %v892
      %v975 = vadd.f32 %v635, %v897
      %v976 = vadd.f32 %v638, %v900
      %v977 = vadd.f32 %v643, %v905
      %v978 = vadd.f32 %v646, %v908
      %v979 = vadd.f32 %v651, %v913
      %v980 = vadd.f32 %v654, %v916
      %v981 = vadd.f32 %v659, %v921
      %v982 = vadd.f32 %v662, %v924
      %v983 = vadd.f32 %v667, %v929
      %v984 = vadd.f32 %v670, %v932
      %v985 = vadd.f32 %v675, %v937
      %v986 = vadd.f32 %v678, %v940
      %v987 = vadd.f32 %v683, %v945
      %v988 = vadd.f32 %v686, %v948
      %v989 = vadd.f32 %v691, %v953
      %v990 = vadd.f32 %v694, %v956
      %s991 = scalar_lea.vmem %s165, 24
      %v992 = vld [vmem:[%s991] sm:$0xff]
      %v993 = vld [vmem:[%s991 + $0x8] sm:$0xff]
      %v994 = vld [vmem:[%s991 + $0x18] sm:$0xff]
      %v995 = vld [vmem:[%s991 + $0x20] sm:$0xff]
      %v996 = vld [vmem:[%s991 + $0x30] sm:$0xff]
      %v997 = vld [vmem:[%s991 + $0x38] sm:$0xff]
      %v998 = vld [vmem:[%s991 + $0x48] sm:$0xff]
      %v999 = vld [vmem:[%s991 + $0x50] sm:$0xff]
      %v1000 = vld [vmem:[%s991 + $0x60] sm:$0xff]
      %v1001 = vld [vmem:[%s991 + $0x68] sm:$0xff]
      %v1002 = vld [vmem:[%s991 + $0x78] sm:$0xff]
      %v1003 = vld [vmem:[%s991 + $0x80] sm:$0xff]
      %v1004 = vld [vmem:[%s991 + $0x90] sm:$0xff]
      %v1005 = vld [vmem:[%s991 + $0x98] sm:$0xff]
      %v1006 = vld [vmem:[%s991 + $0xa8] sm:$0xff]
      %v1007 = vld [vmem:[%s991 + $0xb0] sm:$0xff]
      %v1008 = vld [vmem:[%s991 + $0xc0] sm:$0xff]
      %v1009 = vld [vmem:[%s991 + $0xc8] sm:$0xff]
      %v1010 = vld [vmem:[%s991 + $0xd8] sm:$0xff]
      %v1011 = vld [vmem:[%s991 + $0xe0] sm:$0xff]
      %v1012 = vld [vmem:[%s991 + $0xf0] sm:$0xff]
      %v1013 = vld [vmem:[%s991 + $0xf8] sm:$0xff]
      %v1014 = vld [vmem:[%s991 + $0x108] sm:$0xff]
      %v1015 = vld [vmem:[%s991 + $0x110] sm:$0xff]
      %v1016 = vld [vmem:[%s991 + $0x120] sm:$0xff]
      %v1017 = vld [vmem:[%s991 + $0x128] sm:$0xff]
      %v1018 = vld [vmem:[%s991 + $0x138] sm:$0xff]
      %v1019 = vld [vmem:[%s991 + $0x140] sm:$0xff]
      %v1020 = vld [vmem:[%s991 + $0x150] sm:$0xff]
      %v1021 = vld [vmem:[%s991 + $0x158] sm:$0xff]
      %v1022 = vld [vmem:[%s991 + $0x168] sm:$0xff]
      %v1023 = vld [vmem:[%s991 + $0x170] sm:$0xff]
      %v1024 = vpack.c.bf16 %v993, %v992
      %v1025 = vpack.c.bf16 %v995, %v994
      %v1026 = vpack.c.bf16 %v997, %v996
      %v1027 = vpack.c.bf16 %v999, %v998
      %v1028 = vpack.c.bf16 %v1001, %v1000
      %v1029 = vpack.c.bf16 %v1003, %v1002
      %v1030 = vpack.c.bf16 %v1005, %v1004
      %v1031 = vpack.c.bf16 %v1007, %v1006
      %v1032 = vpack.c.bf16 %v1009, %v1008
      %v1033 = vpack.c.bf16 %v1011, %v1010
      %v1034 = vpack.c.bf16 %v1013, %v1012
      %v1035 = vpack.c.bf16 %v1015, %v1014
      %v1036 = vpack.c.bf16 %v1017, %v1016
      %v1037 = vpack.c.bf16 %v1019, %v1018
      %v1038 = vpack.c.bf16 %v1021, %v1020
      %v1039 = vpack.c.bf16 %v1023, %v1022
      %s1040 = scalar_lea.vmem %s1, 6
      %v1041 = vld [vmem:[%s1040] sm:$0x3]
      %v1043 = vsel %vm271, %v1024, 0
      %v1046 = vsel %vm271, %v1025, 0
      %v1049 = vsel %vm271, %v1026, 0
      %v1052 = vsel %vm271, %v1027, 0
      %v1055 = vsel %vm271, %v1028, 0
      %v1058 = vsel %vm271, %v1029, 0
      %v1061 = vsel %vm271, %v1030, 0
      %v1064 = vsel %vm271, %v1031, 0
      %v1067 = vsel %vm271, %v1032, 0
      %v1070 = vsel %vm271, %v1033, 0
      %v1073 = vsel %vm271, %v1034, 0
      %v1076 = vsel %vm271, %v1035, 0
      %v1079 = vsel %vm271, %v1036, 0
      %v1082 = vsel %vm271, %v1037, 0
      %v1085 = vsel %vm271, %v1038, 0
      %v1088 = vsel %vm271, %v1039, 0
      %v1091 = vsel %vm320, %v1041, 0
      %1093 = vmatprep.subr.bf16.mxu0 0
      %1094 = vmatpush1.bf16.msra.mxu0 %v1091
      %1095 = vmatprep.subr.bf16.mxu0 0
      %1096 = vmatpush1.bf16.msra.mxu0 0
      %1097 = vmatprep.subr.bf16.mxu0 0
      %1098 = vmatpush1.bf16.msra.mxu0 0
      %1099 = vmatprep.subr.bf16.mxu0 0
      %1100 = vmatpush1.bf16.msra.mxu0 0
      %1101 = vmatprep.subr.bf16.mxu0 0
      %1102 = vmatpush1.bf16.msra.mxu0 0
      %1103 = vmatprep.subr.bf16.mxu0 0
      %1104 = vmatpush1.bf16.msra.mxu0 0
      %1105 = vmatprep.subr.bf16.mxu0 0
      %1106 = vmatpush1.bf16.msra.mxu0 0
      %1107 = vmatprep.subr.bf16.mxu0 0
      %1108 = vmatpush1.bf16.msra.mxu0 0
      %1109 = vmatprep.subr.bf16.mxu0 0
      %1110 = vmatpush1.bf16.msra.mxu0 0
      %1111 = vmatprep.subr.bf16.mxu0 0
      %1112 = vmatpush1.bf16.msra.mxu0 0
      %1113 = vmatprep.subr.bf16.mxu0 0
      %1114 = vmatpush1.bf16.msra.mxu0 0
      %1115 = vmatprep.subr.bf16.mxu0 0
      %1116 = vmatpush1.bf16.msra.mxu0 0
      %1117 = vmatprep.subr.bf16.mxu0 0
      %1118 = vmatpush1.bf16.msra.mxu0 0
      %1119 = vmatprep.subr.bf16.mxu0 0
      %1120 = vmatpush1.bf16.msra.mxu0 0
      %1121 = vmatprep.subr.bf16.mxu0 0
      %1122 = vmatpush1.bf16.msra.mxu0 0
      %1123 = vmatprep.subr.bf16.mxu0 0
      %1124 = vmatpush1.bf16.msra.mxu0 0
      %1125 = vmatprep.mubr.bf16.mxu0 0
      %1126 = vmatmul.mubr.bf16.gmra.mrb[0].mxu0 %v1043
      %v1127 = vpop.f32.mrb[0].mxu0
      %v1128 = vadd.f32 0.0, %v1127
      %v1129 = vpop.f32.mrb[0].mxu0
      %v1130 = vpop.f32.mrb[0].mxu0
      %v1131 = vadd.f32 0.0, %v1130
      %v1132 = vpop.f32.mrb[0].mxu0
      %1133 = vmatprep.mubr.bf16.mxu0 0
      %1134 = vmatmul.mubr.bf16.gmra.mrb[0].mxu0 %v1046
      %v1135 = vpop.f32.mrb[0].mxu0
      %v1136 = vadd.f32 0.0, %v1135
      %v1137 = vpop.f32.mrb[0].mxu0
      %v1138 = vpop.f32.mrb[0].mxu0
      %v1139 = vadd.f32 0.0, %v1138
      %v1140 = vpop.f32.mrb[0].mxu0
      %1141 = vmatprep.mubr.bf16.mxu0 0
      %1142 = vmatmul.mubr.bf16.gmra.mrb[0].mxu0 %v1049
      %v1143 = vpop.f32.mrb[0].mxu0
      %v1144 = vadd.f32 0.0, %v1143
      %v1145 = vpop.f32.mrb[0].mxu0
      %v1146 = vpop.f32.mrb[0].mxu0
      %v1147 = vadd.f32 0.0, %v1146
      %v1148 = vpop.f32.mrb[0].mxu0
      %1149 = vmatprep.mubr.bf16.mxu0 0
      %1150 = vmatmul.mubr.bf16.gmra.mrb[0].mxu0 %v1052
      %v1151 = vpop.f32.mrb[0].mxu0
      %v1152 = vadd.f32 0.0, %v1151
      %v1153 = vpop.f32.mrb[0].mxu0
      %v1154 = vpop.f32.mrb[0].mxu0
      %v1155 = vadd.f32 0.0, %v1154
      %v1156 = vpop.f32.mrb[0].mxu0
      %1157 = vmatprep.mubr.bf16.mxu0 0
      %1158 = vmatmul.mubr.bf16.gmra.mrb[0].mxu0 %v1055
      %v1159 = vpop.f32.mrb[0].mxu0
      %v1160 = vadd.f32 0.0, %v1159
      %v1161 = vpop.f32.mrb[0].mxu0
      %v1162 = vpop.f32.mrb[0].mxu0
      %v1163 = vadd.f32 0.0, %v1162
      %v1164 = vpop.f32.mrb[0].mxu0
      %1165 = vmatprep.mubr.bf16.mxu0 0
      %1166 = vmatmul.mubr.bf16.gmra.mrb[0].mxu0 %v1058
      %v1167 = vpop.f32.mrb[0].mxu0
      %v1168 = vadd.f32 0.0, %v1167
      %v1169 = vpop.f32.mrb[0].mxu0
      %v1170 = vpop.f32.mrb[0].mxu0
      %v1171 = vadd.f32 0.0, %v1170
      %v1172 = vpop.f32.mrb[0].mxu0
      %1173 = vmatprep.mubr.bf16.mxu0 0
      %1174 = vmatmul.mubr.bf16.gmra.mrb[0].mxu0 %v1061
      %v1175 = vpop.f32.mrb[0].mxu0
      %v1176 = vadd.f32 0.0, %v1175
      %v1177 = vpop.f32.mrb[0].mxu0
      %v1178 = vpop.f32.mrb[0].mxu0
      %v1179 = vadd.f32 0.0, %v1178
      %v1180 = vpop.f32.mrb[0].mxu0
      %1181 = vmatprep.mubr.bf16.mxu0 0
      %1182 = vmatmul.mubr.bf16.gmra.mrb[0].mxu0 %v1064
      %v1183 = vpop.f32.mrb[0].mxu0
      %v1184 = vadd.f32 0.0, %v1183
      %v1185 = vpop.f32.mrb[0].mxu0
      %v1186 = vpop.f32.mrb[0].mxu0
      %v1187 = vadd.f32 0.0, %v1186
      %v1188 = vpop.f32.mrb[0].mxu0
      %1189 = vmatprep.mubr.bf16.mxu0 0
      %1190 = vmatmul.mubr.bf16.gmra.mrb[0].mxu0 %v1067
      %v1191 = vpop.f32.mrb[0].mxu0
      %v1192 = vadd.f32 0.0, %v1191
      %v1193 = vpop.f32.mrb[0].mxu0
      %v1194 = vpop.f32.mrb[0].mxu0
      %v1195 = vadd.f32 0.0, %v1194
      %v1196 = vpop.f32.mrb[0].mxu0
      %1197 = vmatprep.mubr.bf16.mxu0 0
      %1198 = vmatmul.mubr.bf16.gmra.mrb[0].mxu0 %v1070
      %v1199 = vpop.f32.mrb[0].mxu0
      %v1200 = vadd.f32 0.0, %v1199
      %v1201 = vpop.f32.mrb[0].mxu0
      %v1202 = vpop.f32.mrb[0].mxu0
      %v1203 = vadd.f32 0.0, %v1202
      %v1204 = vpop.f32.mrb[0].mxu0
      %1205 = vmatprep.mubr.bf16.mxu0 0
      %1206 = vmatmul.mubr.bf16.gmra.mrb[0].mxu0 %v1073
      %v1207 = vpop.f32.mrb[0].mxu0
      %v1208 = vadd.f32 0.0, %v1207
      %v1209 = vpop.f32.mrb[0].mxu0
      %v1210 = vpop.f32.mrb[0].mxu0
      %v1211 = vadd.f32 0.0, %v1210
      %v1212 = vpop.f32.mrb[0].mxu0
      %1213 = vmatprep.mubr.bf16.mxu0 0
      %1214 = vmatmul.mubr.bf16.gmra.mrb[0].mxu0 %v1076
      %v1215 = vpop.f32.mrb[0].mxu0
      %v1216 = vadd.f32 0.0, %v1215
      %v1217 = vpop.f32.mrb[0].mxu0
      %v1218 = vpop.f32.mrb[0].mxu0
      %v1219 = vadd.f32 0.0, %v1218
      %v1220 = vpop.f32.mrb[0].mxu0
      %1221 = vmatprep.mubr.bf16.mxu0 0
      %1222 = vmatmul.mubr.bf16.gmra.mrb[0].mxu0 %v1079
      %v1223 = vpop.f32.mrb[0].mxu0
      %v1224 = vadd.f32 0.0, %v1223
      %v1225 = vpop.f32.mrb[0].mxu0
      %v1226 = vpop.f32.mrb[0].mxu0
      %v1227 = vadd.f32 0.0, %v1226
      %v1228 = vpop.f32.mrb[0].mxu0
      %1229 = vmatprep.mubr.bf16.mxu0 0
      %1230 = vmatmul.mubr.bf16.gmra.mrb[0].mxu0 %v1082
      %v1231 = vpop.f32.mrb[0].mxu0
      %v1232 = vadd.f32 0.0, %v1231
      %v1233 = vpop.f32.mrb[0].mxu0
      %v1234 = vpop.f32.mrb[0].mxu0
      %v1235 = vadd.f32 0.0, %v1234
      %v1236 = vpop.f32.mrb[0].mxu0
      %1237 = vmatprep.mubr.bf16.mxu0 0
      %1238 = vmatmul.mubr.bf16.gmra.mrb[0].mxu0 %v1085
      %v1239 = vpop.f32.mrb[0].mxu0
      %v1240 = vadd.f32 0.0, %v1239
      %v1241 = vpop.f32.mrb[0].mxu0
      %v1242 = vpop.f32.mrb[0].mxu0
      %v1243 = vadd.f32 0.0, %v1242
      %v1244 = vpop.f32.mrb[0].mxu0
      %1245 = vmatprep.mubr.bf16.mxu0 0
      %1246 = vmatmul.mubr.bf16.gmra.mrb[0].mxu0 %v1088
      %v1247 = vpop.f32.mrb[0].mxu0
      %v1248 = vadd.f32 0.0, %v1247
      %v1249 = vpop.f32.mrb[0].mxu0
      %v1250 = vpop.f32.mrb[0].mxu0
      %v1251 = vadd.f32 0.0, %v1250
      %v1252 = vpop.f32.mrb[0].mxu0
      %1253 = vdwg.mxu0
      %v1254 = vadd.f32 %v959, %v1128
      %v1255 = vadd.f32 %v960, %v1131
      %v1256 = vadd.f32 %v961, %v1136
      %v1257 = vadd.f32 %v962, %v1139
      %v1258 = vadd.f32 %v963, %v1144
      %v1259 = vadd.f32 %v964, %v1147
      %v1260 = vadd.f32 %v965, %v1152
      %v1261 = vadd.f32 %v966, %v1155
      %v1262 = vadd.f32 %v967, %v1160
      %v1263 = vadd.f32 %v968, %v1163
      %v1264 = vadd.f32 %v969, %v1168
      %v1265 = vadd.f32 %v970, %v1171
      %v1266 = vadd.f32 %v971, %v1176
      %v1267 = vadd.f32 %v972, %v1179
      %v1268 = vadd.f32 %v973, %v1184
      %v1269 = vadd.f32 %v974, %v1187
      %v1270 = vadd.f32 %v975, %v1192
      %v1271 = vadd.f32 %v976, %v1195
      %v1272 = vadd.f32 %v977, %v1200
      %v1273 = vadd.f32 %v978, %v1203
      %v1274 = vadd.f32 %v979, %v1208
      %v1275 = vadd.f32 %v980, %v1211
      %v1276 = vadd.f32 %v981, %v1216
      %v1277 = vadd.f32 %v982, %v1219
      %v1278 = vadd.f32 %v983, %v1224
      %v1279 = vadd.f32 %v984, %v1227
      %v1280 = vadd.f32 %v985, %v1232
      %v1281 = vadd.f32 %v986, %v1235
      %v1282 = vadd.f32 %v987, %v1240
      %v1283 = vadd.f32 %v988, %v1243
      %v1284 = vadd.f32 %v989, %v1248
      %v1285 = vadd.f32 %v990, %v1251
      %v1286 = vld [vmem:[%s991 + $0x1] sm:$0xff]
      %v1287 = vld [vmem:[%s991 + $0x9] sm:$0xff]
      %v1288 = vld [vmem:[%s991 + $0x19] sm:$0xff]
      %v1289 = vld [vmem:[%s991 + $0x21] sm:$0xff]
      %v1290 = vld [vmem:[%s991 + $0x31] sm:$0xff]
      %v1291 = vld [vmem:[%s991 + $0x39] sm:$0xff]
      %v1292 = vld [vmem:[%s991 + $0x49] sm:$0xff]
      %v1293 = vld [vmem:[%s991 + $0x51] sm:$0xff]
      %v1294 = vld [vmem:[%s991 + $0x61] sm:$0xff]
      %v1295 = vld [vmem:[%s991 + $0x69] sm:$0xff]
      %v1296 = vld [vmem:[%s991 + $0x79] sm:$0xff]
      %v1297 = vld [vmem:[%s991 + $0x81] sm:$0xff]
      %v1298 = vld [vmem:[%s991 + $0x91] sm:$0xff]
      %v1299 = vld [vmem:[%s991 + $0x99] sm:$0xff]
      %v1300 = vld [vmem:[%s991 + $0xa9] sm:$0xff]
      %v1301 = vld [vmem:[%s991 + $0xb1] sm:$0xff]
      %v1302 = vld [vmem:[%s991 + $0xc1] sm:$0xff]
      %v1303 = vld [vmem:[%s991 + $0xc9] sm:$0xff]
      %v1304 = vld [vmem:[%s991 + $0xd9] sm:$0xff]
      %v1305 = vld [vmem:[%s991 + $0xe1] sm:$0xff]
      %v1306 = vld [vmem:[%s991 + $0xf1] sm:$0xff]
      %v1307 = vld [vmem:[%s991 + $0xf9] sm:$0xff]
      %v1308 = vld [vmem:[%s991 + $0x109] sm:$0xff]
      %v1309 = vld [vmem:[%s991 + $0x111] sm:$0xff]
      %v1310 = vld [vmem:[%s991 + $0x121] sm:$0xff]
      %v1311 = vld [vmem:[%s991 + $0x129] sm:$0xff]
      %v1312 = vld [vmem:[%s991 + $0x139] sm:$0xff]
      %v1313 = vld [vmem:[%s991 + $0x141] sm:$0xff]
      %v1314 = vld [vmem:[%s991 + $0x151] sm:$0xff]
      %v1315 = vld [vmem:[%s991 + $0x159] sm:$0xff]
      %v1316 = vld [vmem:[%s991 + $0x169] sm:$0xff]
      %v1317 = vld [vmem:[%s991 + $0x171] sm:$0xff]
      %v1318 = vpack.c.bf16 %v1287, %v1286
      %v1319 = vpack.c.bf16 %v1289, %v1288
      %v1320 = vpack.c.bf16 %v1291, %v1290
      %v1321 = vpack.c.bf16 %v1293, %v1292
      %v1322 = vpack.c.bf16 %v1295, %v1294
      %v1323 = vpack.c.bf16 %v1297, %v1296
      %v1324 = vpack.c.bf16 %v1299, %v1298
      %v1325 = vpack.c.bf16 %v1301, %v1300
      %v1326 = vpack.c.bf16 %v1303, %v1302
      %v1327 = vpack.c.bf16 %v1305, %v1304
      %v1328 = vpack.c.bf16 %v1307, %v1306
      %v1329 = vpack.c.bf16 %v1309, %v1308
      %v1330 = vpack.c.bf16 %v1311, %v1310
      %v1331 = vpack.c.bf16 %v1313, %v1312
      %v1332 = vpack.c.bf16 %v1315, %v1314
      %v1333 = vpack.c.bf16 %v1317, %v1316
      %s1334 = scalar_lea.vmem %s1, 8
      %v1335 = vld [vmem:[%s1334] sm:$0x3]
      %v1337 = vsel %vm271, %v1318, 0
      %v1340 = vsel %vm271, %v1319, 0
      %v1343 = vsel %vm271, %v1320, 0
      %v1346 = vsel %vm271, %v1321, 0
      %v1349 = vsel %vm271, %v1322, 0
      %v1352 = vsel %vm271, %v1323, 0
      %v1355 = vsel %vm271, %v1324, 0
      %v1358 = vsel %vm271, %v1325, 0
      %v1361 = vsel %vm271, %v1326, 0
      %v1364 = vsel %vm271, %v1327, 0
      %v1367 = vsel %vm271, %v1328, 0
      %v1370 = vsel %vm271, %v1329, 0
      %v1373 = vsel %vm271, %v1330, 0
      %v1376 = vsel %vm271, %v1331, 0
      %v1379 = vsel %vm271, %v1332, 0
      %v1382 = vsel %vm271, %v1333, 0
      %v1385 = vsel %vm320, %v1335, 0
      %1387 = vmatprep.subr.bf16.mxu0 0
      %1388 = vmatpush1.bf16.msra.mxu0 %v1385
      %1389 = vmatprep.subr.bf16.mxu0 0
      %1390 = vmatpush1.bf16.msra.mxu0 0
      %1391 = vmatprep.subr.bf16.mxu0 0
      %1392 = vmatpush1.bf16.msra.mxu0 0
      %1393 = vmatprep.subr.bf16.mxu0 0
      %1394 = vmatpush1.bf16.msra.mxu0 0
      %1395 = vmatprep.subr.bf16.mxu0 0
      %1396 = vmatpush1.bf16.msra.mxu0 0
      %1397 = vmatprep.subr.bf16.mxu0 0
      %1398 = vmatpush1.bf16.msra.mxu0 0
      %1399 = vmatprep.subr.bf16.mxu0 0
      %1400 = vmatpush1.bf16.msra.mxu0 0
      %1401 = vmatprep.subr.bf16.mxu0 0
      %1402 = vmatpush1.bf16.msra.mxu0 0
      %1403 = vmatprep.subr.bf16.mxu0 0
      %1404 = vmatpush1.bf16.msra.mxu0 0
      %1405 = vmatprep.subr.bf16.mxu0 0
      %1406 = vmatpush1.bf16.msra.mxu0 0
      %1407 = vmatprep.subr.bf16.mxu0 0
      %1408 = vmatpush1.bf16.msra.mxu0 0
      %1409 = vmatprep.subr.bf16.mxu0 0
      %1410 = vmatpush1.bf16.msra.mxu0 0
      %1411 = vmatprep.subr.bf16.mxu0 0
      %1412 = vmatpush1.bf16.msra.mxu0 0
      %1413 = vmatprep.subr.bf16.mxu0 0
      %1414 = vmatpush1.bf16.msra.mxu0 0
      %1415 = vmatprep.subr.bf16.mxu0 0
      %1416 = vmatpush1.bf16.msra.mxu0 0
      %1417 = vmatprep.subr.bf16.mxu0 0
      %1418 = vmatpush1.bf16.msra.mxu0 0
      %1419 = vmatprep.mubr.bf16.mxu0 0
      %1420 = vmatmul.mubr.bf16.gmra.mrb[0].mxu0 %v1337
      %v1421 = vpop.f32.mrb[0].mxu0
      %v1422 = vadd.f32 0.0, %v1421
      %v1423 = vpop.f32.mrb[0].mxu0
      %v1424 = vpop.f32.mrb[0].mxu0
      %v1425 = vadd.f32 0.0, %v1424
      %v1426 = vpop.f32.mrb[0].mxu0
      %1427 = vmatprep.mubr.bf16.mxu0 0
      %1428 = vmatmul.mubr.bf16.gmra.mrb[0].mxu0 %v1340
      %v1429 = vpop.f32.mrb[0].mxu0
      %v1430 = vadd.f32 0.0, %v1429
      %v1431 = vpop.f32.mrb[0].mxu0
      %v1432 = vpop.f32.mrb[0].mxu0
      %v1433 = vadd.f32 0.0, %v1432
      %v1434 = vpop.f32.mrb[0].mxu0
      %1435 = vmatprep.mubr.bf16.mxu0 0
      %1436 = vmatmul.mubr.bf16.gmra.mrb[0].mxu0 %v1343
      %v1437 = vpop.f32.mrb[0].mxu0
      %v1438 = vadd.f32 0.0, %v1437
      %v1439 = vpop.f32.mrb[0].mxu0
      %v1440 = vpop.f32.mrb[0].mxu0
      %v1441 = vadd.f32 0.0, %v1440
      %v1442 = vpop.f32.mrb[0].mxu0
      %1443 = vmatprep.mubr.bf16.mxu0 0
      %1444 = vmatmul.mubr.bf16.gmra.mrb[0].mxu0 %v1346
      %v1445 = vpop.f32.mrb[0].mxu0
      %v1446 = vadd.f32 0.0, %v1445
      %v1447 = vpop.f32.mrb[0].mxu0
      %v1448 = vpop.f32.mrb[0].mxu0
      %v1449 = vadd.f32 0.0, %v1448
      %v1450 = vpop.f32.mrb[0].mxu0
      %1451 = vmatprep.mubr.bf16.mxu0 0
      %1452 = vmatmul.mubr.bf16.gmra.mrb[0].mxu0 %v1349
      %v1453 = vpop.f32.mrb[0].mxu0
      %v1454 = vadd.f32 0.0, %v1453
      %v1455 = vpop.f32.mrb[0].mxu0
      %v1456 = vpop.f32.mrb[0].mxu0
      %v1457 = vadd.f32 0.0, %v1456
      %v1458 = vpop.f32.mrb[0].mxu0
      %1459 = vmatprep.mubr.bf16.mxu0 0
      %1460 = vmatmul.mubr.bf16.gmra.mrb[0].mxu0 %v1352
      %v1461 = vpop.f32.mrb[0].mxu0
      %v1462 = vadd.f32 0.0, %v1461
      %v1463 = vpop.f32.mrb[0].mxu0
      %v1464 = vpop.f32.mrb[0].mxu0
      %v1465 = vadd.f32 0.0, %v1464
      %v1466 = vpop.f32.mrb[0].mxu0
      %1467 = vmatprep.mubr.bf16.mxu0 0
      %1468 = vmatmul.mubr.bf16.gmra.mrb[0].mxu0 %v1355
      %v1469 = vpop.f32.mrb[0].mxu0
      %v1470 = vadd.f32 0.0, %v1469
      %v1471 = vpop.f32.mrb[0].mxu0
      %v1472 = vpop.f32.mrb[0].mxu0
      %v1473 = vadd.f32 0.0, %v1472
      %v1474 = vpop.f32.mrb[0].mxu0
      %1475 = vmatprep.mubr.bf16.mxu0 0
      %1476 = vmatmul.mubr.bf16.gmra.mrb[0].mxu0 %v1358
      %v1477 = vpop.f32.mrb[0].mxu0
      %v1478 = vadd.f32 0.0, %v1477
      %v1479 = vpop.f32.mrb[0].mxu0
      %v1480 = vpop.f32.mrb[0].mxu0
      %v1481 = vadd.f32 0.0, %v1480
      %v1482 = vpop.f32.mrb[0].mxu0
      %1483 = vmatprep.mubr.bf16.mxu0 0
      %1484 = vmatmul.mubr.bf16.gmra.mrb[0].mxu0 %v1361
      %v1485 = vpop.f32.mrb[0].mxu0
      %v1486 = vadd.f32 0.0, %v1485
      %v1487 = vpop.f32.mrb[0].mxu0
      %v1488 = vpop.f32.mrb[0].mxu0
      %v1489 = vadd.f32 0.0, %v1488
      %v1490 = vpop.f32.mrb[0].mxu0
      %1491 = vmatprep.mubr.bf16.mxu0 0
      %1492 = vmatmul.mubr.bf16.gmra.mrb[0].mxu0 %v1364
      %v1493 = vpop.f32.mrb[0].mxu0
      %v1494 = vadd.f32 0.0, %v1493
      %v1495 = vpop.f32.mrb[0].mxu0
      %v1496 = vpop.f32.mrb[0].mxu0
      %v1497 = vadd.f32 0.0, %v1496
      %v1498 = vpop.f32.mrb[0].mxu0
      %1499 = vmatprep.mubr.bf16.mxu0 0
      %1500 = vmatmul.mubr.bf16.gmra.mrb[0].mxu0 %v1367
      %v1501 = vpop.f32.mrb[0].mxu0
      %v1502 = vadd.f32 0.0, %v1501
      %v1503 = vpop.f32.mrb[0].mxu0
      %v1504 = vpop.f32.mrb[0].mxu0
      %v1505 = vadd.f32 0.0, %v1504
      %v1506 = vpop.f32.mrb[0].mxu0
      %1507 = vmatprep.mubr.bf16.mxu0 0
      %1508 = vmatmul.mubr.bf16.gmra.mrb[0].mxu0 %v1370
      %v1509 = vpop.f32.mrb[0].mxu0
      %v1510 = vadd.f32 0.0, %v1509
      %v1511 = vpop.f32.mrb[0].mxu0
      %v1512 = vpop.f32.mrb[0].mxu0
      %v1513 = vadd.f32 0.0, %v1512
      %v1514 = vpop.f32.mrb[0].mxu0
      %1515 = vmatprep.mubr.bf16.mxu0 0
      %1516 = vmatmul.mubr.bf16.gmra.mrb[0].mxu0 %v1373
      %v1517 = vpop.f32.mrb[0].mxu0
      %v1518 = vadd.f32 0.0, %v1517
      %v1519 = vpop.f32.mrb[0].mxu0
      %v1520 = vpop.f32.mrb[0].mxu0
      %v1521 = vadd.f32 0.0, %v1520
      %v1522 = vpop.f32.mrb[0].mxu0
      %1523 = vmatprep.mubr.bf16.mxu0 0
      %1524 = vmatmul.mubr.bf16.gmra.mrb[0].mxu0 %v1376
      %v1525 = vpop.f32.mrb[0].mxu0
      %v1526 = vadd.f32 0.0, %v1525
      %v1527 = vpop.f32.mrb[0].mxu0
      %v1528 = vpop.f32.mrb[0].mxu0
      %v1529 = vadd.f32 0.0, %v1528
      %v1530 = vpop.f32.mrb[0].mxu0
      %1531 = vmatprep.mubr.bf16.mxu0 0
      %1532 = vmatmul.mubr.bf16.gmra.mrb[0].mxu0 %v1379
      %v1533 = vpop.f32.mrb[0].mxu0
      %v1534 = vadd.f32 0.0, %v1533
      %v1535 = vpop.f32.mrb[0].mxu0
      %v1536 = vpop.f32.mrb[0].mxu0
      %v1537 = vadd.f32 0.0, %v1536
      %v1538 = vpop.f32.mrb[0].mxu0
      %1539 = vmatprep.mubr.bf16.mxu0 0
      %1540 = vmatmul.mubr.bf16.gmra.mrb[0].mxu0 %v1382
      %v1541 = vpop.f32.mrb[0].mxu0
      %v1542 = vadd.f32 0.0, %v1541
      %v1543 = vpop.f32.mrb[0].mxu0
      %v1544 = vpop.f32.mrb[0].mxu0
      %v1545 = vadd.f32 0.0, %v1544
      %v1546 = vpop.f32.mrb[0].mxu0
      %1547 = vdwg.mxu0
      %v1548 = vadd.f32 %v1254, %v1422
      %v1549 = vadd.f32 %v1255, %v1425
      %v1550 = vadd.f32 %v1256, %v1430
      %v1551 = vadd.f32 %v1257, %v1433
      %v1552 = vadd.f32 %v1258, %v1438
      %v1553 = vadd.f32 %v1259, %v1441
      %v1554 = vadd.f32 %v1260, %v1446
      %v1555 = vadd.f32 %v1261, %v1449
      %v1556 = vadd.f32 %v1262, %v1454
      %v1557 = vadd.f32 %v1263, %v1457
      %v1558 = vadd.f32 %v1264, %v1462
      %v1559 = vadd.f32 %v1265, %v1465
      %v1560 = vadd.f32 %v1266, %v1470
      %v1561 = vadd.f32 %v1267, %v1473
      %v1562 = vadd.f32 %v1268, %v1478
      %v1563 = vadd.f32 %v1269, %v1481
      %v1564 = vadd.f32 %v1270, %v1486
      %v1565 = vadd.f32 %v1271, %v1489
      %v1566 = vadd.f32 %v1272, %v1494
      %v1567 = vadd.f32 %v1273, %v1497
      %v1568 = vadd.f32 %v1274, %v1502
      %v1569 = vadd.f32 %v1275, %v1505
      %v1570 = vadd.f32 %v1276, %v1510
      %v1571 = vadd.f32 %v1277, %v1513
      %v1572 = vadd.f32 %v1278, %v1518
      %v1573 = vadd.f32 %v1279, %v1521
      %v1574 = vadd.f32 %v1280, %v1526
      %v1575 = vadd.f32 %v1281, %v1529
      %v1576 = vadd.f32 %v1282, %v1534
      %v1577 = vadd.f32 %v1283, %v1537
      %v1578 = vadd.f32 %v1284, %v1542
      %v1579 = vadd.f32 %v1285, %v1545
      %v1580 = vld [vmem:[%s991 + $0x2] sm:$0xff]
      %v1581 = vld [vmem:[%s991 + $0xa] sm:$0xff]
      %v1582 = vld [vmem:[%s991 + $0x1a] sm:$0xff]
      %v1583 = vld [vmem:[%s991 + $0x22] sm:$0xff]
      %v1584 = vld [vmem:[%s991 + $0x32] sm:$0xff]
      %v1585 = vld [vmem:[%s991 + $0x3a] sm:$0xff]
      %v1586 = vld [vmem:[%s991 + $0x4a] sm:$0xff]
      %v1587 = vld [vmem:[%s991 + $0x52] sm:$0xff]
      %v1588 = vld [vmem:[%s991 + $0x62] sm:$0xff]
      %v1589 = vld [vmem:[%s991 + $0x6a] sm:$0xff]
      %v1590 = vld [vmem:[%s991 + $0x7a] sm:$0xff]
      %v1591 = vld [vmem:[%s991 + $0x82] sm:$0xff]
      %v1592 = vld [vmem:[%s991 + $0x92] sm:$0xff]
      %v1593 = vld [vmem:[%s991 + $0x9a] sm:$0xff]
      %v1594 = vld [vmem:[%s991 + $0xaa] sm:$0xff]
      %v1595 = vld [vmem:[%s991 + $0xb2] sm:$0xff]
      %v1596 = vld [vmem:[%s991 + $0xc2] sm:$0xff]
      %v1597 = vld [vmem:[%s991 + $0xca] sm:$0xff]
      %v1598 = vld [vmem:[%s991 + $0xda] sm:$0xff]
      %v1599 = vld [vmem:[%s991 + $0xe2] sm:$0xff]
      %v1600 = vld [vmem:[%s991 + $0xf2] sm:$0xff]
      %v1601 = vld [vmem:[%s991 + $0xfa] sm:$0xff]
      %v1602 = vld [vmem:[%s991 + $0x10a] sm:$0xff]
      %v1603 = vld [vmem:[%s991 + $0x112] sm:$0xff]
      %v1604 = vld [vmem:[%s991 + $0x122] sm:$0xff]
      %v1605 = vld [vmem:[%s991 + $0x12a] sm:$0xff]
      %v1606 = vld [vmem:[%s991 + $0x13a] sm:$0xff]
      %v1607 = vld [vmem:[%s991 + $0x142] sm:$0xff]
      %v1608 = vld [vmem:[%s991 + $0x152] sm:$0xff]
      %v1609 = vld [vmem:[%s991 + $0x15a] sm:$0xff]
      %v1610 = vld [vmem:[%s991 + $0x16a] sm:$0xff]
      %v1611 = vld [vmem:[%s991 + $0x172] sm:$0xff]
      %v1612 = vpack.c.bf16 %v1581, %v1580
      %v1613 = vpack.c.bf16 %v1583, %v1582
      %v1614 = vpack.c.bf16 %v1585, %v1584
      %v1615 = vpack.c.bf16 %v1587, %v1586
      %v1616 = vpack.c.bf16 %v1589, %v1588
      %v1617 = vpack.c.bf16 %v1591, %v1590
      %v1618 = vpack.c.bf16 %v1593, %v1592
      %v1619 = vpack.c.bf16 %v1595, %v1594
      %v1620 = vpack.c.bf16 %v1597, %v1596
      %v1621 = vpack.c.bf16 %v1599, %v1598
      %v1622 = vpack.c.bf16 %v1601, %v1600
      %v1623 = vpack.c.bf16 %v1603, %v1602
      %v1624 = vpack.c.bf16 %v1605, %v1604
      %v1625 = vpack.c.bf16 %v1607, %v1606
      %v1626 = vpack.c.bf16 %v1609, %v1608
      %v1627 = vpack.c.bf16 %v1611, %v1610
      %s1628 = scalar_lea.vmem %s1, 10
      %v1629 = vld [vmem:[%s1628] sm:$0x3]
      %v1631 = vsel %vm271, %v1612, 0
      %v1634 = vsel %vm271, %v1613, 0
      %v1637 = vsel %vm271, %v1614, 0
      %v1640 = vsel %vm271, %v1615, 0
      %v1643 = vsel %vm271, %v1616, 0
      %v1646 = vsel %vm271, %v1617, 0
      %v1649 = vsel %vm271, %v1618, 0
      %v1652 = vsel %vm271, %v1619, 0
      %v1655 = vsel %vm271, %v1620, 0
      %v1658 = vsel %vm271, %v1621, 0
      %v1661 = vsel %vm271, %v1622, 0
      %v1664 = vsel %vm271, %v1623, 0
      %v1667 = vsel %vm271, %v1624, 0
      %v1670 = vsel %vm271, %v1625, 0
      %v1673 = vsel %vm271, %v1626, 0
      %v1676 = vsel %vm271, %v1627, 0
      %v1679 = vsel %vm320, %v1629, 0
      %1681 = vmatprep.subr.bf16.mxu0 0
      %1682 = vmatpush1.bf16.msra.mxu0 %v1679
      %1683 = vmatprep.subr.bf16.mxu0 0
      %1684 = vmatpush1.bf16.msra.mxu0 0
      %1685 = vmatprep.subr.bf16.mxu0 0
      %1686 = vmatpush1.bf16.msra.mxu0 0
      %1687 = vmatprep.subr.bf16.mxu0 0
      %1688 = vmatpush1.bf16.msra.mxu0 0
      %1689 = vmatprep.subr.bf16.mxu0 0
      %1690 = vmatpush1.bf16.msra.mxu0 0
      %1691 = vmatprep.subr.bf16.mxu0 0
      %1692 = vmatpush1.bf16.msra.mxu0 0
      %1693 = vmatprep.subr.bf16.mxu0 0
      %1694 = vmatpush1.bf16.msra.mxu0 0
      %1695 = vmatprep.subr.bf16.mxu0 0
      %1696 = vmatpush1.bf16.msra.mxu0 0
      %1697 = vmatprep.subr.bf16.mxu0 0
      %1698 = vmatpush1.bf16.msra.mxu0 0
      %1699 = vmatprep.subr.bf16.mxu0 0
      %1700 = vmatpush1.bf16.msra.mxu0 0
      %1701 = vmatprep.subr.bf16.mxu0 0
      %1702 = vmatpush1.bf16.msra.mxu0 0
      %1703 = vmatprep.subr.bf16.mxu0 0
      %1704 = vmatpush1.bf16.msra.mxu0 0
      %1705 = vmatprep.subr.bf16.mxu0 0
      %1706 = vmatpush1.bf16.msra.mxu0 0
      %1707 = vmatprep.subr.bf16.mxu0 0
      %1708 = vmatpush1.bf16.msra.mxu0 0
      %1709 = vmatprep.subr.bf16.mxu0 0
      %1710 = vmatpush1.bf16.msra.mxu0 0
      %1711 = vmatprep.subr.bf16.mxu0 0
      %1712 = vmatpush1.bf16.msra.mxu0 0
      %1713 = vmatprep.mubr.bf16.mxu0 0
      %1714 = vmatmul.mubr.bf16.gmra.mrb[0].mxu0 %v1631
      %v1715 = vpop.f32.mrb[0].mxu0
      %v1716 = vadd.f32 0.0, %v1715
      %v1717 = vpop.f32.mrb[0].mxu0
      %v1718 = vpop.f32.mrb[0].mxu0
      %v1719 = vadd.f32 0.0, %v1718
      %v1720 = vpop.f32.mrb[0].mxu0
      %1721 = vmatprep.mubr.bf16.mxu0 0
      %1722 = vmatmul.mubr.bf16.gmra.mrb[0].mxu0 %v1634
      %v1723 = vpop.f32.mrb[0].mxu0
      %v1724 = vadd.f32 0.0, %v1723
      %v1725 = vpop.f32.mrb[0].mxu0
      %v1726 = vpop.f32.mrb[0].mxu0
      %v1727 = vadd.f32 0.0, %v1726
      %v1728 = vpop.f32.mrb[0].mxu0
      %1729 = vmatprep.mubr.bf16.mxu0 0
      %1730 = vmatmul.mubr.bf16.gmra.mrb[0].mxu0 %v1637
      %v1731 = vpop.f32.mrb[0].mxu0
      %v1732 = vadd.f32 0.0, %v1731
      %v1733 = vpop.f32.mrb[0].mxu0
      %v1734 = vpop.f32.mrb[0].mxu0
      %v1735 = vadd.f32 0.0, %v1734
      %v1736 = vpop.f32.mrb[0].mxu0
      %1737 = vmatprep.mubr.bf16.mxu0 0
      %1738 = vmatmul.mubr.bf16.gmra.mrb[0].mxu0 %v1640
      %v1739 = vpop.f32.mrb[0].mxu0
      %v1740 = vadd.f32 0.0, %v1739
      %v1741 = vpop.f32.mrb[0].mxu0
      %v1742 = vpop.f32.mrb[0].mxu0
      %v1743 = vadd.f32 0.0, %v1742
      %v1744 = vpop.f32.mrb[0].mxu0
      %1745 = vmatprep.mubr.bf16.mxu0 0
      %1746 = vmatmul.mubr.bf16.gmra.mrb[0].mxu0 %v1643
      %v1747 = vpop.f32.mrb[0].mxu0
      %v1748 = vadd.f32 0.0, %v1747
      %v1749 = vpop.f32.mrb[0].mxu0
      %v1750 = vpop.f32.mrb[0].mxu0
      %v1751 = vadd.f32 0.0, %v1750
      %v1752 = vpop.f32.mrb[0].mxu0
      %1753 = vmatprep.mubr.bf16.mxu0 0
      %1754 = vmatmul.mubr.bf16.gmra.mrb[0].mxu0 %v1646
      %v1755 = vpop.f32.mrb[0].mxu0
      %v1756 = vadd.f32 0.0, %v1755
      %v1757 = vpop.f32.mrb[0].mxu0
      %v1758 = vpop.f32.mrb[0].mxu0
      %v1759 = vadd.f32 0.0, %v1758
      %v1760 = vpop.f32.mrb[0].mxu0
      %1761 = vmatprep.mubr.bf16.mxu0 0
      %1762 = vmatmul.mubr.bf16.gmra.mrb[0].mxu0 %v1649
      %v1763 = vpop.f32.mrb[0].mxu0
      %v1764 = vadd.f32 0.0, %v1763
      %v1765 = vpop.f32.mrb[0].mxu0
      %v1766 = vpop.f32.mrb[0].mxu0
      %v1767 = vadd.f32 0.0, %v1766
      %v1768 = vpop.f32.mrb[0].mxu0
      %1769 = vmatprep.mubr.bf16.mxu0 0
      %1770 = vmatmul.mubr.bf16.gmra.mrb[0].mxu0 %v1652
      %v1771 = vpop.f32.mrb[0].mxu0
      %v1772 = vadd.f32 0.0, %v1771
      %v1773 = vpop.f32.mrb[0].mxu0
      %v1774 = vpop.f32.mrb[0].mxu0
      %v1775 = vadd.f32 0.0, %v1774
      %v1776 = vpop.f32.mrb[0].mxu0
      %1777 = vmatprep.mubr.bf16.mxu0 0
      %1778 = vmatmul.mubr.bf16.gmra.mrb[0].mxu0 %v1655
      %v1779 = vpop.f32.mrb[0].mxu0
      %v1780 = vadd.f32 0.0, %v1779
      %v1781 = vpop.f32.mrb[0].mxu0
      %v1782 = vpop.f32.mrb[0].mxu0
      %v1783 = vadd.f32 0.0, %v1782
      %v1784 = vpop.f32.mrb[0].mxu0
      %1785 = vmatprep.mubr.bf16.mxu0 0
      %1786 = vmatmul.mubr.bf16.gmra.mrb[0].mxu0 %v1658
      %v1787 = vpop.f32.mrb[0].mxu0
      %v1788 = vadd.f32 0.0, %v1787
      %v1789 = vpop.f32.mrb[0].mxu0
      %v1790 = vpop.f32.mrb[0].mxu0
      %v1791 = vadd.f32 0.0, %v1790
      %v1792 = vpop.f32.mrb[0].mxu0
      %1793 = vmatprep.mubr.bf16.mxu0 0
      %1794 = vmatmul.mubr.bf16.gmra.mrb[0].mxu0 %v1661
      %v1795 = vpop.f32.mrb[0].mxu0
      %v1796 = vadd.f32 0.0, %v1795
      %v1797 = vpop.f32.mrb[0].mxu0
      %v1798 = vpop.f32.mrb[0].mxu0
      %v1799 = vadd.f32 0.0, %v1798
      %v1800 = vpop.f32.mrb[0].mxu0
      %1801 = vmatprep.mubr.bf16.mxu0 0
      %1802 = vmatmul.mubr.bf16.gmra.mrb[0].mxu0 %v1664
      %v1803 = vpop.f32.mrb[0].mxu0
      %v1804 = vadd.f32 0.0, %v1803
      %v1805 = vpop.f32.mrb[0].mxu0
      %v1806 = vpop.f32.mrb[0].mxu0
      %v1807 = vadd.f32 0.0, %v1806
      %v1808 = vpop.f32.mrb[0].mxu0
      %1809 = vmatprep.mubr.bf16.mxu0 0
      %1810 = vmatmul.mubr.bf16.gmra.mrb[0].mxu0 %v1667
      %v1811 = vpop.f32.mrb[0].mxu0
      %v1812 = vadd.f32 0.0, %v1811
      %v1813 = vpop.f32.mrb[0].mxu0
      %v1814 = vpop.f32.mrb[0].mxu0
      %v1815 = vadd.f32 0.0, %v1814
      %v1816 = vpop.f32.mrb[0].mxu0
      %1817 = vmatprep.mubr.bf16.mxu0 0
      %1818 = vmatmul.mubr.bf16.gmra.mrb[0].mxu0 %v1670
      %v1819 = vpop.f32.mrb[0].mxu0
      %v1820 = vadd.f32 0.0, %v1819
      %v1821 = vpop.f32.mrb[0].mxu0
      %v1822 = vpop.f32.mrb[0].mxu0
      %v1823 = vadd.f32 0.0, %v1822
      %v1824 = vpop.f32.mrb[0].mxu0
      %1825 = vmatprep.mubr.bf16.mxu0 0
      %1826 = vmatmul.mubr.bf16.gmra.mrb[0].mxu0 %v1673
      %v1827 = vpop.f32.mrb[0].mxu0
      %v1828 = vadd.f32 0.0, %v1827
      %v1829 = vpop.f32.mrb[0].mxu0
      %v1830 = vpop.f32.mrb[0].mxu0
      %v1831 = vadd.f32 0.0, %v1830
      %v1832 = vpop.f32.mrb[0].mxu0
      %1833 = vmatprep.mubr.bf16.mxu0 0
      %1834 = vmatmul.mubr.bf16.gmra.mrb[0].mxu0 %v1676
      %v1835 = vpop.f32.mrb[0].mxu0
      %v1836 = vadd.f32 0.0, %v1835
      %v1837 = vpop.f32.mrb[0].mxu0
      %v1838 = vpop.f32.mrb[0].mxu0
      %v1839 = vadd.f32 0.0, %v1838
      %v1840 = vpop.f32.mrb[0].mxu0
      %1841 = vdwg.mxu0
      %v1842 = vadd.f32 %v1548, %v1716
      %v1843 = vadd.f32 %v1549, %v1719
      %v1844 = vadd.f32 %v1550, %v1724
      %v1845 = vadd.f32 %v1551, %v1727
      %v1846 = vadd.f32 %v1552, %v1732
      %v1847 = vadd.f32 %v1553, %v1735
      %v1848 = vadd.f32 %v1554, %v1740
      %v1849 = vadd.f32 %v1555, %v1743
      %v1850 = vadd.f32 %v1556, %v1748
      %v1851 = vadd.f32 %v1557, %v1751
      %v1852 = vadd.f32 %v1558, %v1756
      %v1853 = vadd.f32 %v1559, %v1759
      %v1854 = vadd.f32 %v1560, %v1764
      %v1855 = vadd.f32 %v1561, %v1767
      %v1856 = vadd.f32 %v1562, %v1772
      %v1857 = vadd.f32 %v1563, %v1775
      %v1858 = vadd.f32 %v1564, %v1780
      %v1859 = vadd.f32 %v1565, %v1783
      %v1860 = vadd.f32 %v1566, %v1788
      %v1861 = vadd.f32 %v1567, %v1791
      %v1862 = vadd.f32 %v1568, %v1796
      %v1863 = vadd.f32 %v1569, %v1799
      %v1864 = vadd.f32 %v1570, %v1804
      %v1865 = vadd.f32 %v1571, %v1807
      %v1866 = vadd.f32 %v1572, %v1812
      %v1867 = vadd.f32 %v1573, %v1815
      %v1868 = vadd.f32 %v1574, %v1820
      %v1869 = vadd.f32 %v1575, %v1823
      %v1870 = vadd.f32 %v1576, %v1828
      %v1871 = vadd.f32 %v1577, %v1831
      %v1872 = vadd.f32 %v1578, %v1836
      %v1873 = vadd.f32 %v1579, %v1839
      %s1874 = scalar_lea.vmem %s165, 48
      %v1875 = vld [vmem:[%s1874] sm:$0xff]
      %v1876 = vld [vmem:[%s1874 + $0x8] sm:$0xff]
      %v1877 = vld [vmem:[%s1874 + $0x18] sm:$0xff]
      %v1878 = vld [vmem:[%s1874 + $0x20] sm:$0xff]
      %v1879 = vld [vmem:[%s1874 + $0x30] sm:$0xff]
      %v1880 = vld [vmem:[%s1874 + $0x38] sm:$0xff]
      %v1881 = vld [vmem:[%s1874 + $0x48] sm:$0xff]
      %v1882 = vld [vmem:[%s1874 + $0x50] sm:$0xff]
      %v1883 = vld [vmem:[%s1874 + $0x60] sm:$0xff]
      %v1884 = vld [vmem:[%s1874 + $0x68] sm:$0xff]
      %v1885 = vld [vmem:[%s1874 + $0x78] sm:$0xff]
      %v1886 = vld [vmem:[%s1874 + $0x80] sm:$0xff]
      %v1887 = vld [vmem:[%s1874 + $0x90] sm:$0xff]
      %v1888 = vld [vmem:[%s1874 + $0x98] sm:$0xff]
      %v1889 = vld [vmem:[%s1874 + $0xa8] sm:$0xff]
      %v1890 = vld [vmem:[%s1874 + $0xb0] sm:$0xff]
      %v1891 = vld [vmem:[%s1874 + $0xc0] sm:$0xff]
      %v1892 = vld [vmem:[%s1874 + $0xc8] sm:$0xff]
      %v1893 = vld [vmem:[%s1874 + $0xd8] sm:$0xff]
      %v1894 = vld [vmem:[%s1874 + $0xe0] sm:$0xff]
      %v1895 = vld [vmem:[%s1874 + $0xf0] sm:$0xff]
      %v1896 = vld [vmem:[%s1874 + $0xf8] sm:$0xff]
      %v1897 = vld [vmem:[%s1874 + $0x108] sm:$0xff]
      %v1898 = vld [vmem:[%s1874 + $0x110] sm:$0xff]
      %v1899 = vld [vmem:[%s1874 + $0x120] sm:$0xff]
      %v1900 = vld [vmem:[%s1874 + $0x128] sm:$0xff]
      %v1901 = vld [vmem:[%s1874 + $0x138] sm:$0xff]
      %v1902 = vld [vmem:[%s1874 + $0x140] sm:$0xff]
      %v1903 = vld [vmem:[%s1874 + $0x150] sm:$0xff]
      %v1904 = vld [vmem:[%s1874 + $0x158] sm:$0xff]
      %v1905 = vld [vmem:[%s1874 + $0x168] sm:$0xff]
      %v1906 = vld [vmem:[%s1874 + $0x170] sm:$0xff]
      %v1907 = vpack.c.bf16 %v1876, %v1875
      %v1908 = vpack.c.bf16 %v1878, %v1877
      %v1909 = vpack.c.bf16 %v1880, %v1879
      %v1910 = vpack.c.bf16 %v1882, %v1881
      %v1911 = vpack.c.bf16 %v1884, %v1883
      %v1912 = vpack.c.bf16 %v1886, %v1885
      %v1913 = vpack.c.bf16 %v1888, %v1887
      %v1914 = vpack.c.bf16 %v1890, %v1889
      %v1915 = vpack.c.bf16 %v1892, %v1891
      %v1916 = vpack.c.bf16 %v1894, %v1893
      %v1917 = vpack.c.bf16 %v1896, %v1895
      %v1918 = vpack.c.bf16 %v1898, %v1897
      %v1919 = vpack.c.bf16 %v1900, %v1899
      %v1920 = vpack.c.bf16 %v1902, %v1901
      %v1921 = vpack.c.bf16 %v1904, %v1903
      %v1922 = vpack.c.bf16 %v1906, %v1905
      %s1923 = scalar_lea.vmem %s1, 12
      %v1924 = vld [vmem:[%s1923] sm:$0x3]
      %v1926 = vsel %vm271, %v1907, 0
      %v1929 = vsel %vm271, %v1908, 0
      %v1932 = vsel %vm271, %v1909, 0
      %v1935 = vsel %vm271, %v1910, 0
      %v1938 = vsel %vm271, %v1911, 0
      %v1941 = vsel %vm271, %v1912, 0
      %v1944 = vsel %vm271, %v1913, 0
      %v1947 = vsel %vm271, %v1914, 0
      %v1950 = vsel %vm271, %v1915, 0
      %v1953 = vsel %vm271, %v1916, 0
      %v1956 = vsel %vm271, %v1917, 0
      %v1959 = vsel %vm271, %v1918, 0
      %v1962 = vsel %vm271, %v1919, 0
      %v1965 = vsel %vm271, %v1920, 0
      %v1968 = vsel %vm271, %v1921, 0
      %v1971 = vsel %vm271, %v1922, 0
      %v1974 = vsel %vm320, %v1924, 0
      %1976 = vmatprep.subr.bf16.mxu0 0
      %1977 = vmatpush1.bf16.msra.mxu0 %v1974
      %1978 = vmatprep.subr.bf16.mxu0 0
      %1979 = vmatpush1.bf16.msra.mxu0 0
      %1980 = vmatprep.subr.bf16.mxu0 0
      %1981 = vmatpush1.bf16.msra.mxu0 0
      %1982 = vmatprep.subr.bf16.mxu0 0
      %1983 = vmatpush1.bf16.msra.mxu0 0
      %1984 = vmatprep.subr.bf16.mxu0 0
      %1985 = vmatpush1.bf16.msra.mxu0 0
      %1986 = vmatprep.subr.bf16.mxu0 0
      %1987 = vmatpush1.bf16.msra.mxu0 0
      %1988 = vmatprep.subr.bf16.mxu0 0
      %1989 = vmatpush1.bf16.msra.mxu0 0
      %1990 = vmatprep.subr.bf16.mxu0 0
      %1991 = vmatpush1.bf16.msra.mxu0 0
      %1992 = vmatprep.subr.bf16.mxu0 0
      %1993 = vmatpush1.bf16.msra.mxu0 0
      %1994 = vmatprep.subr.bf16.mxu0 0
      %1995 = vmatpush1.bf16.msra.mxu0 0
      %1996 = vmatprep.subr.bf16.mxu0 0
      %1997 = vmatpush1.bf16.msra.mxu0 0
      %1998 = vmatprep.subr.bf16.mxu0 0
      %1999 = vmatpush1.bf16.msra.mxu0 0
      %2000 = vmatprep.subr.bf16.mxu0 0
      %2001 = vmatpush1.bf16.msra.mxu0 0
      %2002 = vmatprep.subr.bf16.mxu0 0
      %2003 = vmatpush1.bf16.msra.mxu0 0
      %2004 = vmatprep.subr.bf16.mxu0 0
      %2005 = vmatpush1.bf16.msra.mxu0 0
      %2006 = vmatprep.subr.bf16.mxu0 0
      %2007 = vmatpush1.bf16.msra.mxu0 0
      %2008 = vmatprep.mubr.bf16.mxu0 0
      %2009 = vmatmul.mubr.bf16.gmra.mrb[0].mxu0 %v1926
      %v2010 = vpop.f32.mrb[0].mxu0
      %v2011 = vadd.f32 0.0, %v2010
      %v2012 = vpop.f32.mrb[0].mxu0
      %v2013 = vpop.f32.mrb[0].mxu0
      %v2014 = vadd.f32 0.0, %v2013
      %v2015 = vpop.f32.mrb[0].mxu0
      %2016 = vmatprep.mubr.bf16.mxu0 0
      %2017 = vmatmul.mubr.bf16.gmra.mrb[0].mxu0 %v1929
      %v2018 = vpop.f32.mrb[0].mxu0
      %v2019 = vadd.f32 0.0, %v2018
      %v2020 = vpop.f32.mrb[0].mxu0
      %v2021 = vpop.f32.mrb[0].mxu0
      %v2022 = vadd.f32 0.0, %v2021
      %v2023 = vpop.f32.mrb[0].mxu0
      %2024 = vmatprep.mubr.bf16.mxu0 0
      %2025 = vmatmul.mubr.bf16.gmra.mrb[0].mxu0 %v1932
      %v2026 = vpop.f32.mrb[0].mxu0
      %v2027 = vadd.f32 0.0, %v2026
      %v2028 = vpop.f32.mrb[0].mxu0
      %v2029 = vpop.f32.mrb[0].mxu0
      %v2030 = vadd.f32 0.0, %v2029
      %v2031 = vpop.f32.mrb[0].mxu0
      %2032 = vmatprep.mubr.bf16.mxu0 0
      %2033 = vmatmul.mubr.bf16.gmra.mrb[0].mxu0 %v1935
      %v2034 = vpop.f32.mrb[0].mxu0
      %v2035 = vadd.f32 0.0, %v2034
      %v2036 = vpop.f32.mrb[0].mxu0
      %v2037 = vpop.f32.mrb[0].mxu0
      %v2038 = vadd.f32 0.0, %v2037
      %v2039 = vpop.f32.mrb[0].mxu0
      %2040 = vmatprep.mubr.bf16.mxu0 0
      %2041 = vmatmul.mubr.bf16.gmra.mrb[0].mxu0 %v1938
      %v2042 = vpop.f32.mrb[0].mxu0
      %v2043 = vadd.f32 0.0, %v2042
      %v2044 = vpop.f32.mrb[0].mxu0
      %v2045 = vpop.f32.mrb[0].mxu0
      %v2046 = vadd.f32 0.0, %v2045
      %v2047 = vpop.f32.mrb[0].mxu0
      %2048 = vmatprep.mubr.bf16.mxu0 0
      %2049 = vmatmul.mubr.bf16.gmra.mrb[0].mxu0 %v1941
      %v2050 = vpop.f32.mrb[0].mxu0
      %v2051 = vadd.f32 0.0, %v2050
      %v2052 = vpop.f32.mrb[0].mxu0
      %v2053 = vpop.f32.mrb[0].mxu0
      %v2054 = vadd.f32 0.0, %v2053
      %v2055 = vpop.f32.mrb[0].mxu0
      %2056 = vmatprep.mubr.bf16.mxu0 0
      %2057 = vmatmul.mubr.bf16.gmra.mrb[0].mxu0 %v1944
      %v2058 = vpop.f32.mrb[0].mxu0
      %v2059 = vadd.f32 0.0, %v2058
      %v2060 = vpop.f32.mrb[0].mxu0
      %v2061 = vpop.f32.mrb[0].mxu0
      %v2062 = vadd.f32 0.0, %v2061
      %v2063 = vpop.f32.mrb[0].mxu0
      %2064 = vmatprep.mubr.bf16.mxu0 0
      %2065 = vmatmul.mubr.bf16.gmra.mrb[0].mxu0 %v1947
      %v2066 = vpop.f32.mrb[0].mxu0
      %v2067 = vadd.f32 0.0, %v2066
      %v2068 = vpop.f32.mrb[0].mxu0
      %v2069 = vpop.f32.mrb[0].mxu0
      %v2070 = vadd.f32 0.0, %v2069
      %v2071 = vpop.f32.mrb[0].mxu0
      %2072 = vmatprep.mubr.bf16.mxu0 0
      %2073 = vmatmul.mubr.bf16.gmra.mrb[0].mxu0 %v1950
      %v2074 = vpop.f32.mrb[0].mxu0
      %v2075 = vadd.f32 0.0, %v2074
      %v2076 = vpop.f32.mrb[0].mxu0
      %v2077 = vpop.f32.mrb[0].mxu0
      %v2078 = vadd.f32 0.0, %v2077
      %v2079 = vpop.f32.mrb[0].mxu0
      %2080 = vmatprep.mubr.bf16.mxu0 0
      %2081 = vmatmul.mubr.bf16.gmra.mrb[0].mxu0 %v1953
      %v2082 = vpop.f32.mrb[0].mxu0
      %v2083 = vadd.f32 0.0, %v2082
      %v2084 = vpop.f32.mrb[0].mxu0
      %v2085 = vpop.f32.mrb[0].mxu0
      %v2086 = vadd.f32 0.0, %v2085
      %v2087 = vpop.f32.mrb[0].mxu0
      %2088 = vmatprep.mubr.bf16.mxu0 0
      %2089 = vmatmul.mubr.bf16.gmra.mrb[0].mxu0 %v1956
      %v2090 = vpop.f32.mrb[0].mxu0
      %v2091 = vadd.f32 0.0, %v2090
      %v2092 = vpop.f32.mrb[0].mxu0
      %v2093 = vpop.f32.mrb[0].mxu0
      %v2094 = vadd.f32 0.0, %v2093
      %v2095 = vpop.f32.mrb[0].mxu0
      %2096 = vmatprep.mubr.bf16.mxu0 0
      %2097 = vmatmul.mubr.bf16.gmra.mrb[0].mxu0 %v1959
      %v2098 = vpop.f32.mrb[0].mxu0
      %v2099 = vadd.f32 0.0, %v2098
      %v2100 = vpop.f32.mrb[0].mxu0
      %v2101 = vpop.f32.mrb[0].mxu0
      %v2102 = vadd.f32 0.0, %v2101
      %v2103 = vpop.f32.mrb[0].mxu0
      %2104 = vmatprep.mubr.bf16.mxu0 0
      %2105 = vmatmul.mubr.bf16.gmra.mrb[0].mxu0 %v1962
      %v2106 = vpop.f32.mrb[0].mxu0
      %v2107 = vadd.f32 0.0, %v2106
      %v2108 = vpop.f32.mrb[0].mxu0
      %v2109 = vpop.f32.mrb[0].mxu0
      %v2110 = vadd.f32 0.0, %v2109
      %v2111 = vpop.f32.mrb[0].mxu0
      %2112 = vmatprep.mubr.bf16.mxu0 0
      %2113 = vmatmul.mubr.bf16.gmra.mrb[0].mxu0 %v1965
      %v2114 = vpop.f32.mrb[0].mxu0
      %v2115 = vadd.f32 0.0, %v2114
      %v2116 = vpop.f32.mrb[0].mxu0
      %v2117 = vpop.f32.mrb[0].mxu0
      %v2118 = vadd.f32 0.0, %v2117
      %v2119 = vpop.f32.mrb[0].mxu0
      %2120 = vmatprep.mubr.bf16.mxu0 0
      %2121 = vmatmul.mubr.bf16.gmra.mrb[0].mxu0 %v1968
      %v2122 = vpop.f32.mrb[0].mxu0
      %v2123 = vadd.f32 0.0, %v2122
      %v2124 = vpop.f32.mrb[0].mxu0
      %v2125 = vpop.f32.mrb[0].mxu0
      %v2126 = vadd.f32 0.0, %v2125
      %v2127 = vpop.f32.mrb[0].mxu0
      %2128 = vmatprep.mubr.bf16.mxu0 0
      %2129 = vmatmul.mubr.bf16.gmra.mrb[0].mxu0 %v1971
      %v2130 = vpop.f32.mrb[0].mxu0
      %v2131 = vadd.f32 0.0, %v2130
      %v2132 = vpop.f32.mrb[0].mxu0
      %v2133 = vpop.f32.mrb[0].mxu0
      %v2134 = vadd.f32 0.0, %v2133
      %v2135 = vpop.f32.mrb[0].mxu0
      %2136 = vdwg.mxu0
      %v2137 = vadd.f32 %v1842, %v2011
      %v2138 = vadd.f32 %v1843, %v2014
      %v2139 = vadd.f32 %v1844, %v2019
      %v2140 = vadd.f32 %v1845, %v2022
      %v2141 = vadd.f32 %v1846, %v2027
      %v2142 = vadd.f32 %v1847, %v2030
      %v2143 = vadd.f32 %v1848, %v2035
      %v2144 = vadd.f32 %v1849, %v2038
      %v2145 = vadd.f32 %v1850, %v2043
      %v2146 = vadd.f32 %v1851, %v2046
      %v2147 = vadd.f32 %v1852, %v2051
      %v2148 = vadd.f32 %v1853, %v2054
      %v2149 = vadd.f32 %v1854, %v2059
      %v2150 = vadd.f32 %v1855, %v2062
      %v2151 = vadd.f32 %v1856, %v2067
      %v2152 = vadd.f32 %v1857, %v2070
      %v2153 = vadd.f32 %v1858, %v2075
      %v2154 = vadd.f32 %v1859, %v2078
      %v2155 = vadd.f32 %v1860, %v2083
      %v2156 = vadd.f32 %v1861, %v2086
      %v2157 = vadd.f32 %v1862, %v2091
      %v2158 = vadd.f32 %v1863, %v2094
      %v2159 = vadd.f32 %v1864, %v2099
      %v2160 = vadd.f32 %v1865, %v2102
      %v2161 = vadd.f32 %v1866, %v2107
      %v2162 = vadd.f32 %v1867, %v2110
      %v2163 = vadd.f32 %v1868, %v2115
      %v2164 = vadd.f32 %v1869, %v2118
      %v2165 = vadd.f32 %v1870, %v2123
      %v2166 = vadd.f32 %v1871, %v2126
      %v2167 = vadd.f32 %v1872, %v2131
      %v2168 = vadd.f32 %v1873, %v2134
      %v2169 = vld [vmem:[%s1874 + $0x1] sm:$0xff]
      %v2170 = vld [vmem:[%s1874 + $0x9] sm:$0xff]
      %v2171 = vld [vmem:[%s1874 + $0x19] sm:$0xff]
      %v2172 = vld [vmem:[%s1874 + $0x21] sm:$0xff]
      %v2173 = vld [vmem:[%s1874 + $0x31] sm:$0xff]
      %v2174 = vld [vmem:[%s1874 + $0x39] sm:$0xff]
      %v2175 = vld [vmem:[%s1874 + $0x49] sm:$0xff]
      %v2176 = vld [vmem:[%s1874 + $0x51] sm:$0xff]
      %v2177 = vld [vmem:[%s1874 + $0x61] sm:$0xff]
      %v2178 = vld [vmem:[%s1874 + $0x69] sm:$0xff]
      %v2179 = vld [vmem:[%s1874 + $0x79] sm:$0xff]
      %v2180 = vld [vmem:[%s1874 + $0x81] sm:$0xff]
      %v2181 = vld [vmem:[%s1874 + $0x91] sm:$0xff]
      %v2182 = vld [vmem:[%s1874 + $0x99] sm:$0xff]
      %v2183 = vld [vmem:[%s1874 + $0xa9] sm:$0xff]
      %v2184 = vld [vmem:[%s1874 + $0xb1] sm:$0xff]
      %v2185 = vld [vmem:[%s1874 + $0xc1] sm:$0xff]
      %v2186 = vld [vmem:[%s1874 + $0xc9] sm:$0xff]
      %v2187 = vld [vmem:[%s1874 + $0xd9] sm:$0xff]
      %v2188 = vld [vmem:[%s1874 + $0xe1] sm:$0xff]
      %v2189 = vld [vmem:[%s1874 + $0xf1] sm:$0xff]
      %v2190 = vld [vmem:[%s1874 + $0xf9] sm:$0xff]
      %v2191 = vld [vmem:[%s1874 + $0x109] sm:$0xff]
      %v2192 = vld [vmem:[%s1874 + $0x111] sm:$0xff]
      %v2193 = vld [vmem:[%s1874 + $0x121] sm:$0xff]
      %v2194 = vld [vmem:[%s1874 + $0x129] sm:$0xff]
      %v2195 = vld [vmem:[%s1874 + $0x139] sm:$0xff]
      %v2196 = vld [vmem:[%s1874 + $0x141] sm:$0xff]
      %v2197 = vld [vmem:[%s1874 + $0x151] sm:$0xff]
      %v2198 = vld [vmem:[%s1874 + $0x159] sm:$0xff]
      %v2199 = vld [vmem:[%s1874 + $0x169] sm:$0xff]
      %v2200 = vld [vmem:[%s1874 + $0x171] sm:$0xff]
      %v2201 = vpack.c.bf16 %v2170, %v2169
      %v2202 = vpack.c.bf16 %v2172, %v2171
      %v2203 = vpack.c.bf16 %v2174, %v2173
      %v2204 = vpack.c.bf16 %v2176, %v2175
      %v2205 = vpack.c.bf16 %v2178, %v2177
      %v2206 = vpack.c.bf16 %v2180, %v2179
      %v2207 = vpack.c.bf16 %v2182, %v2181
      %v2208 = vpack.c.bf16 %v2184, %v2183
      %v2209 = vpack.c.bf16 %v2186, %v2185
      %v2210 = vpack.c.bf16 %v2188, %v2187
      %v2211 = vpack.c.bf16 %v2190, %v2189
      %v2212 = vpack.c.bf16 %v2192, %v2191
      %v2213 = vpack.c.bf16 %v2194, %v2193
      %v2214 = vpack.c.bf16 %v2196, %v2195
      %v2215 = vpack.c.bf16 %v2198, %v2197
      %v2216 = vpack.c.bf16 %v2200, %v2199
      %s2217 = scalar_lea.vmem %s1, 14
      %v2218 = vld [vmem:[%s2217] sm:$0x3]
      %v2220 = vsel %vm271, %v2201, 0
      %v2223 = vsel %vm271, %v2202, 0
      %v2226 = vsel %vm271, %v2203, 0
      %v2229 = vsel %vm271, %v2204, 0
      %v2232 = vsel %vm271, %v2205, 0
      %v2235 = vsel %vm271, %v2206, 0
      %v2238 = vsel %vm271, %v2207, 0
      %v2241 = vsel %vm271, %v2208, 0
      %v2244 = vsel %vm271, %v2209, 0
      %v2247 = vsel %vm271, %v2210, 0
      %v2250 = vsel %vm271, %v2211, 0
      %v2253 = vsel %vm271, %v2212, 0
      %v2256 = vsel %vm271, %v2213, 0
      %v2259 = vsel %vm271, %v2214, 0
      %v2262 = vsel %vm271, %v2215, 0
      %v2265 = vsel %vm271, %v2216, 0
      %v2268 = vsel %vm320, %v2218, 0
      %2270 = vmatprep.subr.bf16.mxu0 0
      %2271 = vmatpush1.bf16.msra.mxu0 %v2268
      %2272 = vmatprep.subr.bf16.mxu0 0
      %2273 = vmatpush1.bf16.msra.mxu0 0
      %2274 = vmatprep.subr.bf16.mxu0 0
      %2275 = vmatpush1.bf16.msra.mxu0 0
      %2276 = vmatprep.subr.bf16.mxu0 0
      %2277 = vmatpush1.bf16.msra.mxu0 0
      %2278 = vmatprep.subr.bf16.mxu0 0
      %2279 = vmatpush1.bf16.msra.mxu0 0
      %2280 = vmatprep.subr.bf16.mxu0 0
      %2281 = vmatpush1.bf16.msra.mxu0 0
      %2282 = vmatprep.subr.bf16.mxu0 0
      %2283 = vmatpush1.bf16.msra.mxu0 0
      %2284 = vmatprep.subr.bf16.mxu0 0
      %2285 = vmatpush1.bf16.msra.mxu0 0
      %2286 = vmatprep.subr.bf16.mxu0 0
      %2287 = vmatpush1.bf16.msra.mxu0 0
      %2288 = vmatprep.subr.bf16.mxu0 0
      %2289 = vmatpush1.bf16.msra.mxu0 0
      %2290 = vmatprep.subr.bf16.mxu0 0
      %2291 = vmatpush1.bf16.msra.mxu0 0
      %2292 = vmatprep.subr.bf16.mxu0 0
      %2293 = vmatpush1.bf16.msra.mxu0 0
      %2294 = vmatprep.subr.bf16.mxu0 0
      %2295 = vmatpush1.bf16.msra.mxu0 0
      %2296 = vmatprep.subr.bf16.mxu0 0
      %2297 = vmatpush1.bf16.msra.mxu0 0
      %2298 = vmatprep.subr.bf16.mxu0 0
      %2299 = vmatpush1.bf16.msra.mxu0 0
      %2300 = vmatprep.subr.bf16.mxu0 0
      %2301 = vmatpush1.bf16.msra.mxu0 0
      %2302 = vmatprep.mubr.bf16.mxu0 0
      %2303 = vmatmul.mubr.bf16.gmra.mrb[0].mxu0 %v2220
      %v2304 = vpop.f32.mrb[0].mxu0
      %v2305 = vadd.f32 0.0, %v2304
      %v2306 = vpop.f32.mrb[0].mxu0
      %v2307 = vpop.f32.mrb[0].mxu0
      %v2308 = vadd.f32 0.0, %v2307
      %v2309 = vpop.f32.mrb[0].mxu0
      %2310 = vmatprep.mubr.bf16.mxu0 0
      %2311 = vmatmul.mubr.bf16.gmra.mrb[0].mxu0 %v2223
      %v2312 = vpop.f32.mrb[0].mxu0
      %v2313 = vadd.f32 0.0, %v2312
      %v2314 = vpop.f32.mrb[0].mxu0
      %v2315 = vpop.f32.mrb[0].mxu0
      %v2316 = vadd.f32 0.0, %v2315
      %v2317 = vpop.f32.mrb[0].mxu0
      %2318 = vmatprep.mubr.bf16.mxu0 0
      %2319 = vmatmul.mubr.bf16.gmra.mrb[0].mxu0 %v2226
      %v2320 = vpop.f32.mrb[0].mxu0
      %v2321 = vadd.f32 0.0, %v2320
      %v2322 = vpop.f32.mrb[0].mxu0
      %v2323 = vpop.f32.mrb[0].mxu0
      %v2324 = vadd.f32 0.0, %v2323
      %v2325 = vpop.f32.mrb[0].mxu0
      %2326 = vmatprep.mubr.bf16.mxu0 0
      %2327 = vmatmul.mubr.bf16.gmra.mrb[0].mxu0 %v2229
      %v2328 = vpop.f32.mrb[0].mxu0
      %v2329 = vadd.f32 0.0, %v2328
      %v2330 = vpop.f32.mrb[0].mxu0
      %v2331 = vpop.f32.mrb[0].mxu0
      %v2332 = vadd.f32 0.0, %v2331
      %v2333 = vpop.f32.mrb[0].mxu0
      %2334 = vmatprep.mubr.bf16.mxu0 0
      %2335 = vmatmul.mubr.bf16.gmra.mrb[0].mxu0 %v2232
      %v2336 = vpop.f32.mrb[0].mxu0
      %v2337 = vadd.f32 0.0, %v2336
      %v2338 = vpop.f32.mrb[0].mxu0
      %v2339 = vpop.f32.mrb[0].mxu0
      %v2340 = vadd.f32 0.0, %v2339
      %v2341 = vpop.f32.mrb[0].mxu0
      %2342 = vmatprep.mubr.bf16.mxu0 0
      %2343 = vmatmul.mubr.bf16.gmra.mrb[0].mxu0 %v2235
      %v2344 = vpop.f32.mrb[0].mxu0
      %v2345 = vadd.f32 0.0, %v2344
      %v2346 = vpop.f32.mrb[0].mxu0
      %v2347 = vpop.f32.mrb[0].mxu0
      %v2348 = vadd.f32 0.0, %v2347
      %v2349 = vpop.f32.mrb[0].mxu0
      %2350 = vmatprep.mubr.bf16.mxu0 0
      %2351 = vmatmul.mubr.bf16.gmra.mrb[0].mxu0 %v2238
      %v2352 = vpop.f32.mrb[0].mxu0
      %v2353 = vadd.f32 0.0, %v2352
      %v2354 = vpop.f32.mrb[0].mxu0
      %v2355 = vpop.f32.mrb[0].mxu0
      %v2356 = vadd.f32 0.0, %v2355
      %v2357 = vpop.f32.mrb[0].mxu0
      %2358 = vmatprep.mubr.bf16.mxu0 0
      %2359 = vmatmul.mubr.bf16.gmra.mrb[0].mxu0 %v2241
      %v2360 = vpop.f32.mrb[0].mxu0
      %v2361 = vadd.f32 0.0, %v2360
      %v2362 = vpop.f32.mrb[0].mxu0
      %v2363 = vpop.f32.mrb[0].mxu0
      %v2364 = vadd.f32 0.0, %v2363
      %v2365 = vpop.f32.mrb[0].mxu0
      %2366 = vmatprep.mubr.bf16.mxu0 0
      %2367 = vmatmul.mubr.bf16.gmra.mrb[0].mxu0 %v2244
      %v2368 = vpop.f32.mrb[0].mxu0
      %v2369 = vadd.f32 0.0, %v2368
      %v2370 = vpop.f32.mrb[0].mxu0
      %v2371 = vpop.f32.mrb[0].mxu0
      %v2372 = vadd.f32 0.0, %v2371
      %v2373 = vpop.f32.mrb[0].mxu0
      %2374 = vmatprep.mubr.bf16.mxu0 0
      %2375 = vmatmul.mubr.bf16.gmra.mrb[0].mxu0 %v2247
      %v2376 = vpop.f32.mrb[0].mxu0
      %v2377 = vadd.f32 0.0, %v2376
      %v2378 = vpop.f32.mrb[0].mxu0
      %v2379 = vpop.f32.mrb[0].mxu0
      %v2380 = vadd.f32 0.0, %v2379
      %v2381 = vpop.f32.mrb[0].mxu0
      %2382 = vmatprep.mubr.bf16.mxu0 0
      %2383 = vmatmul.mubr.bf16.gmra.mrb[0].mxu0 %v2250
      %v2384 = vpop.f32.mrb[0].mxu0
      %v2385 = vadd.f32 0.0, %v2384
      %v2386 = vpop.f32.mrb[0].mxu0
      %v2387 = vpop.f32.mrb[0].mxu0
      %v2388 = vadd.f32 0.0, %v2387
      %v2389 = vpop.f32.mrb[0].mxu0
      %2390 = vmatprep.mubr.bf16.mxu0 0
      %2391 = vmatmul.mubr.bf16.gmra.mrb[0].mxu0 %v2253
      %v2392 = vpop.f32.mrb[0].mxu0
      %v2393 = vadd.f32 0.0, %v2392
      %v2394 = vpop.f32.mrb[0].mxu0
      %v2395 = vpop.f32.mrb[0].mxu0
      %v2396 = vadd.f32 0.0, %v2395
      %v2397 = vpop.f32.mrb[0].mxu0
      %2398 = vmatprep.mubr.bf16.mxu0 0
      %2399 = vmatmul.mubr.bf16.gmra.mrb[0].mxu0 %v2256
      %v2400 = vpop.f32.mrb[0].mxu0
      %v2401 = vadd.f32 0.0, %v2400
      %v2402 = vpop.f32.mrb[0].mxu0
      %v2403 = vpop.f32.mrb[0].mxu0
      %v2404 = vadd.f32 0.0, %v2403
      %v2405 = vpop.f32.mrb[0].mxu0
      %2406 = vmatprep.mubr.bf16.mxu0 0
      %2407 = vmatmul.mubr.bf16.gmra.mrb[0].mxu0 %v2259
      %v2408 = vpop.f32.mrb[0].mxu0
      %v2409 = vadd.f32 0.0, %v2408
      %v2410 = vpop.f32.mrb[0].mxu0
      %v2411 = vpop.f32.mrb[0].mxu0
      %v2412 = vadd.f32 0.0, %v2411
      %v2413 = vpop.f32.mrb[0].mxu0
      %2414 = vmatprep.mubr.bf16.mxu0 0
      %2415 = vmatmul.mubr.bf16.gmra.mrb[0].mxu0 %v2262
      %v2416 = vpop.f32.mrb[0].mxu0
      %v2417 = vadd.f32 0.0, %v2416
      %v2418 = vpop.f32.mrb[0].mxu0
      %v2419 = vpop.f32.mrb[0].mxu0
      %v2420 = vadd.f32 0.0, %v2419
      %v2421 = vpop.f32.mrb[0].mxu0
      %2422 = vmatprep.mubr.bf16.mxu0 0
      %2423 = vmatmul.mubr.bf16.gmra.mrb[0].mxu0 %v2265
      %v2424 = vpop.f32.mrb[0].mxu0
      %v2425 = vadd.f32 0.0, %v2424
      %v2426 = vpop.f32.mrb[0].mxu0
      %v2427 = vpop.f32.mrb[0].mxu0
      %v2428 = vadd.f32 0.0, %v2427
      %v2429 = vpop.f32.mrb[0].mxu0
      %2430 = vdwg.mxu0
      %v2431 = vadd.f32 %v2137, %v2305
      %v2432 = vadd.f32 %v2138, %v2308
      %v2433 = vadd.f32 %v2139, %v2313
      %v2434 = vadd.f32 %v2140, %v2316
      %v2435 = vadd.f32 %v2141, %v2321
      %v2436 = vadd.f32 %v2142, %v2324
      %v2437 = vadd.f32 %v2143, %v2329
      %v2438 = vadd.f32 %v2144, %v2332
      %v2439 = vadd.f32 %v2145, %v2337
      %v2440 = vadd.f32 %v2146, %v2340
      %v2441 = vadd.f32 %v2147, %v2345
      %v2442 = vadd.f32 %v2148, %v2348
      %v2443 = vadd.f32 %v2149, %v2353
      %v2444 = vadd.f32 %v2150, %v2356
      %v2445 = vadd.f32 %v2151, %v2361
      %v2446 = vadd.f32 %v2152, %v2364
      %v2447 = vadd.f32 %v2153, %v2369
      %v2448 = vadd.f32 %v2154, %v2372
      %v2449 = vadd.f32 %v2155, %v2377
      %v2450 = vadd.f32 %v2156, %v2380
      %v2451 = vadd.f32 %v2157, %v2385
      %v2452 = vadd.f32 %v2158, %v2388
      %v2453 = vadd.f32 %v2159, %v2393
      %v2454 = vadd.f32 %v2160, %v2396
      %v2455 = vadd.f32 %v2161, %v2401
      %v2456 = vadd.f32 %v2162, %v2404
      %v2457 = vadd.f32 %v2163, %v2409
      %v2458 = vadd.f32 %v2164, %v2412
      %v2459 = vadd.f32 %v2165, %v2417
      %v2460 = vadd.f32 %v2166, %v2420
      %v2461 = vadd.f32 %v2167, %v2425
      %v2462 = vadd.f32 %v2168, %v2428
      %v2463 = vld [vmem:[%s1874 + $0x2] sm:$0xff]
      %v2464 = vld [vmem:[%s1874 + $0xa] sm:$0xff]
      %v2465 = vld [vmem:[%s1874 + $0x1a] sm:$0xff]
      %v2466 = vld [vmem:[%s1874 + $0x22] sm:$0xff]
      %v2467 = vld [vmem:[%s1874 + $0x32] sm:$0xff]
      %v2468 = vld [vmem:[%s1874 + $0x3a] sm:$0xff]
      %v2469 = vld [vmem:[%s1874 + $0x4a] sm:$0xff]
      %v2470 = vld [vmem:[%s1874 + $0x52] sm:$0xff]
      %v2471 = vld [vmem:[%s1874 + $0x62] sm:$0xff]
      %v2472 = vld [vmem:[%s1874 + $0x6a] sm:$0xff]
      %v2473 = vld [vmem:[%s1874 + $0x7a] sm:$0xff]
      %v2474 = vld [vmem:[%s1874 + $0x82] sm:$0xff]
      %v2475 = vld [vmem:[%s1874 + $0x92] sm:$0xff]
      %v2476 = vld [vmem:[%s1874 + $0x9a] sm:$0xff]
      %v2477 = vld [vmem:[%s1874 + $0xaa] sm:$0xff]
      %v2478 = vld [vmem:[%s1874 + $0xb2] sm:$0xff]
      %v2479 = vld [vmem:[%s1874 + $0xc2] sm:$0xff]
      %v2480 = vld [vmem:[%s1874 + $0xca] sm:$0xff]
      %v2481 = vld [vmem:[%s1874 + $0xda] sm:$0xff]
      %v2482 = vld [vmem:[%s1874 + $0xe2] sm:$0xff]
      %v2483 = vld [vmem:[%s1874 + $0xf2] sm:$0xff]
      %v2484 = vld [vmem:[%s1874 + $0xfa] sm:$0xff]
      %v2485 = vld [vmem:[%s1874 + $0x10a] sm:$0xff]
      %v2486 = vld [vmem:[%s1874 + $0x112] sm:$0xff]
      %v2487 = vld [vmem:[%s1874 + $0x122] sm:$0xff]
      %v2488 = vld [vmem:[%s1874 + $0x12a] sm:$0xff]
      %v2489 = vld [vmem:[%s1874 + $0x13a] sm:$0xff]
      %v2490 = vld [vmem:[%s1874 + $0x142] sm:$0xff]
      %v2491 = vld [vmem:[%s1874 + $0x152] sm:$0xff]
      %v2492 = vld [vmem:[%s1874 + $0x15a] sm:$0xff]
      %v2493 = vld [vmem:[%s1874 + $0x16a] sm:$0xff]
      %v2494 = vld [vmem:[%s1874 + $0x172] sm:$0xff]
      %v2495 = vpack.c.bf16 %v2464, %v2463
      %v2496 = vpack.c.bf16 %v2466, %v2465
      %v2497 = vpack.c.bf16 %v2468, %v2467
      %v2498 = vpack.c.bf16 %v2470, %v2469
      %v2499 = vpack.c.bf16 %v2472, %v2471
      %v2500 = vpack.c.bf16 %v2474, %v2473
      %v2501 = vpack.c.bf16 %v2476, %v2475
      %v2502 = vpack.c.bf16 %v2478, %v2477
      %v2503 = vpack.c.bf16 %v2480, %v2479
      %v2504 = vpack.c.bf16 %v2482, %v2481
      %v2505 = vpack.c.bf16 %v2484, %v2483
      %v2506 = vpack.c.bf16 %v2486, %v2485
      %v2507 = vpack.c.bf16 %v2488, %v2487
      %v2508 = vpack.c.bf16 %v2490, %v2489
      %v2509 = vpack.c.bf16 %v2492, %v2491
      %v2510 = vpack.c.bf16 %v2494, %v2493
      %s2511 = scalar_lea.vmem %s1, 16
      %v2512 = vld [vmem:[%s2511] sm:$0x3]
      %v2514 = vsel %vm271, %v2495, 0
      %v2517 = vsel %vm271, %v2496, 0
      %v2520 = vsel %vm271, %v2497, 0
      %v2523 = vsel %vm271, %v2498, 0
      %v2526 = vsel %vm271, %v2499, 0
      %v2529 = vsel %vm271, %v2500, 0
      %v2532 = vsel %vm271, %v2501, 0
      %v2535 = vsel %vm271, %v2502, 0
      %v2538 = vsel %vm271, %v2503, 0
      %v2541 = vsel %vm271, %v2504, 0
      %v2544 = vsel %vm271, %v2505, 0
      %v2547 = vsel %vm271, %v2506, 0
      %v2550 = vsel %vm271, %v2507, 0
      %v2553 = vsel %vm271, %v2508, 0
      %v2556 = vsel %vm271, %v2509, 0
      %v2559 = vsel %vm271, %v2510, 0
      %v2562 = vsel %vm320, %v2512, 0
      %2564 = vmatprep.subr.bf16.mxu0 0
      %2565 = vmatpush1.bf16.msra.mxu0 %v2562
      %2566 = vmatprep.subr.bf16.mxu0 0
      %2567 = vmatpush1.bf16.msra.mxu0 0
      %2568 = vmatprep.subr.bf16.mxu0 0
      %2569 = vmatpush1.bf16.msra.mxu0 0
      %2570 = vmatprep.subr.bf16.mxu0 0
      %2571 = vmatpush1.bf16.msra.mxu0 0
      %2572 = vmatprep.subr.bf16.mxu0 0
      %2573 = vmatpush1.bf16.msra.mxu0 0
      %2574 = vmatprep.subr.bf16.mxu0 0
      %2575 = vmatpush1.bf16.msra.mxu0 0
      %2576 = vmatprep.subr.bf16.mxu0 0
      %2577 = vmatpush1.bf16.msra.mxu0 0
      %2578 = vmatprep.subr.bf16.mxu0 0
      %2579 = vmatpush1.bf16.msra.mxu0 0
      %2580 = vmatprep.subr.bf16.mxu0 0
      %2581 = vmatpush1.bf16.msra.mxu0 0
      %2582 = vmatprep.subr.bf16.mxu0 0
      %2583 = vmatpush1.bf16.msra.mxu0 0
      %2584 = vmatprep.subr.bf16.mxu0 0
      %2585 = vmatpush1.bf16.msra.mxu0 0
      %2586 = vmatprep.subr.bf16.mxu0 0
      %2587 = vmatpush1.bf16.msra.mxu0 0
      %2588 = vmatprep.subr.bf16.mxu0 0
      %2589 = vmatpush1.bf16.msra.mxu0 0
      %2590 = vmatprep.subr.bf16.mxu0 0
      %2591 = vmatpush1.bf16.msra.mxu0 0
      %2592 = vmatprep.subr.bf16.mxu0 0
      %2593 = vmatpush1.bf16.msra.mxu0 0
      %2594 = vmatprep.subr.bf16.mxu0 0
      %2595 = vmatpush1.bf16.msra.mxu0 0
      %2596 = vmatprep.mubr.bf16.mxu0 0
      %2597 = vmatmul.mubr.bf16.gmra.mrb[0].mxu0 %v2514
      %v2598 = vpop.f32.mrb[0].mxu0
      %v2599 = vadd.f32 0.0, %v2598
      %v2600 = vpop.f32.mrb[0].mxu0
      %v2601 = vpop.f32.mrb[0].mxu0
      %v2602 = vadd.f32 0.0, %v2601
      %v2603 = vpop.f32.mrb[0].mxu0
      %2604 = vmatprep.mubr.bf16.mxu0 0
      %2605 = vmatmul.mubr.bf16.gmra.mrb[0].mxu0 %v2517
      %v2606 = vpop.f32.mrb[0].mxu0
      %v2607 = vadd.f32 0.0, %v2606
      %v2608 = vpop.f32.mrb[0].mxu0
      %v2609 = vpop.f32.mrb[0].mxu0
      %v2610 = vadd.f32 0.0, %v2609
      %v2611 = vpop.f32.mrb[0].mxu0
      %2612 = vmatprep.mubr.bf16.mxu0 0
      %2613 = vmatmul.mubr.bf16.gmra.mrb[0].mxu0 %v2520
      %v2614 = vpop.f32.mrb[0].mxu0
      %v2615 = vadd.f32 0.0, %v2614
      %v2616 = vpop.f32.mrb[0].mxu0
      %v2617 = vpop.f32.mrb[0].mxu0
      %v2618 = vadd.f32 0.0, %v2617
      %v2619 = vpop.f32.mrb[0].mxu0
      %2620 = vmatprep.mubr.bf16.mxu0 0
      %2621 = vmatmul.mubr.bf16.gmra.mrb[0].mxu0 %v2523
      %v2622 = vpop.f32.mrb[0].mxu0
      %v2623 = vadd.f32 0.0, %v2622
      %v2624 = vpop.f32.mrb[0].mxu0
      %v2625 = vpop.f32.mrb[0].mxu0
      %v2626 = vadd.f32 0.0, %v2625
      %v2627 = vpop.f32.mrb[0].mxu0
      %2628 = vmatprep.mubr.bf16.mxu0 0
      %2629 = vmatmul.mubr.bf16.gmra.mrb[0].mxu0 %v2526
      %v2630 = vpop.f32.mrb[0].mxu0
      %v2631 = vadd.f32 0.0, %v2630
      %v2632 = vpop.f32.mrb[0].mxu0
      %v2633 = vpop.f32.mrb[0].mxu0
      %v2634 = vadd.f32 0.0, %v2633
      %v2635 = vpop.f32.mrb[0].mxu0
      %2636 = vmatprep.mubr.bf16.mxu0 0
      %2637 = vmatmul.mubr.bf16.gmra.mrb[0].mxu0 %v2529
      %v2638 = vpop.f32.mrb[0].mxu0
      %v2639 = vadd.f32 0.0, %v2638
      %v2640 = vpop.f32.mrb[0].mxu0
      %v2641 = vpop.f32.mrb[0].mxu0
      %v2642 = vadd.f32 0.0, %v2641
      %v2643 = vpop.f32.mrb[0].mxu0
      %2644 = vmatprep.mubr.bf16.mxu0 0
      %2645 = vmatmul.mubr.bf16.gmra.mrb[0].mxu0 %v2532
      %v2646 = vpop.f32.mrb[0].mxu0
      %v2647 = vadd.f32 0.0, %v2646
      %v2648 = vpop.f32.mrb[0].mxu0
      %v2649 = vpop.f32.mrb[0].mxu0
      %v2650 = vadd.f32 0.0, %v2649
      %v2651 = vpop.f32.mrb[0].mxu0
      %2652 = vmatprep.mubr.bf16.mxu0 0
      %2653 = vmatmul.mubr.bf16.gmra.mrb[0].mxu0 %v2535
      %v2654 = vpop.f32.mrb[0].mxu0
      %v2655 = vadd.f32 0.0, %v2654
      %v2656 = vpop.f32.mrb[0].mxu0
      %v2657 = vpop.f32.mrb[0].mxu0
      %v2658 = vadd.f32 0.0, %v2657
      %v2659 = vpop.f32.mrb[0].mxu0
      %2660 = vmatprep.mubr.bf16.mxu0 0
      %2661 = vmatmul.mubr.bf16.gmra.mrb[0].mxu0 %v2538
      %v2662 = vpop.f32.mrb[0].mxu0
      %v2663 = vadd.f32 0.0, %v2662
      %v2664 = vpop.f32.mrb[0].mxu0
      %v2665 = vpop.f32.mrb[0].mxu0
      %v2666 = vadd.f32 0.0, %v2665
      %v2667 = vpop.f32.mrb[0].mxu0
      %2668 = vmatprep.mubr.bf16.mxu0 0
      %2669 = vmatmul.mubr.bf16.gmra.mrb[0].mxu0 %v2541
      %v2670 = vpop.f32.mrb[0].mxu0
      %v2671 = vadd.f32 0.0, %v2670
      %v2672 = vpop.f32.mrb[0].mxu0
      %v2673 = vpop.f32.mrb[0].mxu0
      %v2674 = vadd.f32 0.0, %v2673
      %v2675 = vpop.f32.mrb[0].mxu0
      %2676 = vmatprep.mubr.bf16.mxu0 0
      %2677 = vmatmul.mubr.bf16.gmra.mrb[0].mxu0 %v2544
      %v2678 = vpop.f32.mrb[0].mxu0
      %v2679 = vadd.f32 0.0, %v2678
      %v2680 = vpop.f32.mrb[0].mxu0
      %v2681 = vpop.f32.mrb[0].mxu0
      %v2682 = vadd.f32 0.0, %v2681
      %v2683 = vpop.f32.mrb[0].mxu0
      %2684 = vmatprep.mubr.bf16.mxu0 0
      %2685 = vmatmul.mubr.bf16.gmra.mrb[0].mxu0 %v2547
      %v2686 = vpop.f32.mrb[0].mxu0
      %v2687 = vadd.f32 0.0, %v2686
      %v2688 = vpop.f32.mrb[0].mxu0
      %v2689 = vpop.f32.mrb[0].mxu0
      %v2690 = vadd.f32 0.0, %v2689
      %v2691 = vpop.f32.mrb[0].mxu0
      %2692 = vmatprep.mubr.bf16.mxu0 0
      %2693 = vmatmul.mubr.bf16.gmra.mrb[0].mxu0 %v2550
      %v2694 = vpop.f32.mrb[0].mxu0
      %v2695 = vadd.f32 0.0, %v2694
      %v2696 = vpop.f32.mrb[0].mxu0
      %v2697 = vpop.f32.mrb[0].mxu0
      %v2698 = vadd.f32 0.0, %v2697
      %v2699 = vpop.f32.mrb[0].mxu0
      %2700 = vmatprep.mubr.bf16.mxu0 0
      %2701 = vmatmul.mubr.bf16.gmra.mrb[0].mxu0 %v2553
      %v2702 = vpop.f32.mrb[0].mxu0
      %v2703 = vadd.f32 0.0, %v2702
      %v2704 = vpop.f32.mrb[0].mxu0
      %v2705 = vpop.f32.mrb[0].mxu0
      %v2706 = vadd.f32 0.0, %v2705
      %v2707 = vpop.f32.mrb[0].mxu0
      %2708 = vmatprep.mubr.bf16.mxu0 0
      %2709 = vmatmul.mubr.bf16.gmra.mrb[0].mxu0 %v2556
      %v2710 = vpop.f32.mrb[0].mxu0
      %v2711 = vadd.f32 0.0, %v2710
      %v2712 = vpop.f32.mrb[0].mxu0
      %v2713 = vpop.f32.mrb[0].mxu0
      %v2714 = vadd.f32 0.0, %v2713
      %v2715 = vpop.f32.mrb[0].mxu0
      %2716 = vmatprep.mubr.bf16.mxu0 0
      %2717 = vmatmul.mubr.bf16.gmra.mrb[0].mxu0 %v2559
      %v2718 = vpop.f32.mrb[0].mxu0
      %v2719 = vadd.f32 0.0, %v2718
      %v2720 = vpop.f32.mrb[0].mxu0
      %v2721 = vpop.f32.mrb[0].mxu0
      %v2722 = vadd.f32 0.0, %v2721
      %v2723 = vpop.f32.mrb[0].mxu0
      %2724 = vdwg.mxu0
      %v2725 = vadd.f32 %v2431, %v2599
      %v2726 = vadd.f32 %v2432, %v2602
      %v2727 = vadd.f32 %v2433, %v2607
      %v2728 = vadd.f32 %v2434, %v2610
      %v2729 = vadd.f32 %v2435, %v2615
      %v2730 = vadd.f32 %v2436, %v2618
      %v2731 = vadd.f32 %v2437, %v2623
      %v2732 = vadd.f32 %v2438, %v2626
      %v2733 = vadd.f32 %v2439, %v2631
      %v2734 = vadd.f32 %v2440, %v2634
      %v2735 = vadd.f32 %v2441, %v2639
      %v2736 = vadd.f32 %v2442, %v2642
      %v2737 = vadd.f32 %v2443, %v2647
      %v2738 = vadd.f32 %v2444, %v2650
      %v2739 = vadd.f32 %v2445, %v2655
      %v2740 = vadd.f32 %v2446, %v2658
      %v2741 = vadd.f32 %v2447, %v2663
      %v2742 = vadd.f32 %v2448, %v2666
      %v2743 = vadd.f32 %v2449, %v2671
      %v2744 = vadd.f32 %v2450, %v2674
      %v2745 = vadd.f32 %v2451, %v2679
      %v2746 = vadd.f32 %v2452, %v2682
      %v2747 = vadd.f32 %v2453, %v2687
      %v2748 = vadd.f32 %v2454, %v2690
      %v2749 = vadd.f32 %v2455, %v2695
      %v2750 = vadd.f32 %v2456, %v2698
      %v2751 = vadd.f32 %v2457, %v2703
      %v2752 = vadd.f32 %v2458, %v2706
      %v2753 = vadd.f32 %v2459, %v2711
      %v2754 = vadd.f32 %v2460, %v2714
      %v2755 = vadd.f32 %v2461, %v2719
      %v2756 = vadd.f32 %v2462, %v2722
      %v2757 = vld [vmem:[%s2] sm:$0x1]
      %v2759 = vlaneseq
      %v2760 = vshrl.u32 %v2759, 7
      %v2761 = vsub.s32 0, %v2760
      %v2762 = vrot.slane %v2757, %v2761
      %v2764 = vadd.f32 %v2725, %v2762
      %v2765 = vadd.f32 %v2726, %v2762
      %v2766 = vadd.f32 %v2727, %v2762
      %v2767 = vadd.f32 %v2728, %v2762
      %v2768 = vadd.f32 %v2729, %v2762
      %v2769 = vadd.f32 %v2730, %v2762
      %v2770 = vadd.f32 %v2731, %v2762
      %v2771 = vadd.f32 %v2732, %v2762
      %v2772 = vadd.f32 %v2733, %v2762
      %v2773 = vadd.f32 %v2734, %v2762
      %v2774 = vadd.f32 %v2735, %v2762
      %v2775 = vadd.f32 %v2736, %v2762
      %v2776 = vadd.f32 %v2737, %v2762
      %v2777 = vadd.f32 %v2738, %v2762
      %v2778 = vadd.f32 %v2739, %v2762
      %v2779 = vadd.f32 %v2740, %v2762
      %v2780 = vadd.f32 %v2741, %v2762
      %v2781 = vadd.f32 %v2742, %v2762
      %v2782 = vadd.f32 %v2743, %v2762
      %v2783 = vadd.f32 %v2744, %v2762
      %v2784 = vadd.f32 %v2745, %v2762
      %v2785 = vadd.f32 %v2746, %v2762
      %v2786 = vadd.f32 %v2747, %v2762
      %v2787 = vadd.f32 %v2748, %v2762
      %v2788 = vadd.f32 %v2749, %v2762
      %v2789 = vadd.f32 %v2750, %v2762
      %v2790 = vadd.f32 %v2751, %v2762
      %v2791 = vadd.f32 %v2752, %v2762
      %v2792 = vadd.f32 %v2753, %v2762
      %v2793 = vadd.f32 %v2754, %v2762
      %v2794 = vadd.f32 %v2755, %v2762
      %v2795 = vadd.f32 %v2756, %v2762
      %v2796 = vmax.f32 %v2764, 0.0
      %v2797 = vmax.f32 %v2765, 0.0
      %v2798 = vmax.f32 %v2766, 0.0
      %v2799 = vmax.f32 %v2767, 0.0
      %v2800 = vmax.f32 %v2768, 0.0
      %v2801 = vmax.f32 %v2769, 0.0
      %v2802 = vmax.f32 %v2770, 0.0
      %v2803 = vmax.f32 %v2771, 0.0
      %v2804 = vmax.f32 %v2772, 0.0
      %v2805 = vmax.f32 %v2773, 0.0
      %v2806 = vmax.f32 %v2774, 0.0
      %v2807 = vmax.f32 %v2775, 0.0
      %v2808 = vmax.f32 %v2776, 0.0
      %v2809 = vmax.f32 %v2777, 0.0
      %v2810 = vmax.f32 %v2778, 0.0
      %v2811 = vmax.f32 %v2779, 0.0
      %v2812 = vmax.f32 %v2780, 0.0
      %v2813 = vmax.f32 %v2781, 0.0
      %v2814 = vmax.f32 %v2782, 0.0
      %v2815 = vmax.f32 %v2783, 0.0
      %v2816 = vmax.f32 %v2784, 0.0
      %v2817 = vmax.f32 %v2785, 0.0
      %v2818 = vmax.f32 %v2786, 0.0
      %v2819 = vmax.f32 %v2787, 0.0
      %v2820 = vmax.f32 %v2788, 0.0
      %v2821 = vmax.f32 %v2789, 0.0
      %v2822 = vmax.f32 %v2790, 0.0
      %v2823 = vmax.f32 %v2791, 0.0
      %v2824 = vmax.f32 %v2792, 0.0
      %v2825 = vmax.f32 %v2793, 0.0
      %v2826 = vmax.f32 %v2794, 0.0
      %v2827 = vmax.f32 %v2795, 0.0
      %2828 = vst [vmem:[%s170] sm:$0xff] %v2796
      %2829 = vst [vmem:[%s170 + $0x8] sm:$0xff] %v2797
      %2830 = vst [vmem:[%s170 + $0x10] sm:$0xff] %v2798
      %2831 = vst [vmem:[%s170 + $0x18] sm:$0xff] %v2799
      %2832 = vst [vmem:[%s170 + $0x20] sm:$0xff] %v2800
      %2833 = vst [vmem:[%s170 + $0x28] sm:$0xff] %v2801
      %2834 = vst [vmem:[%s170 + $0x30] sm:$0xff] %v2802
      %2835 = vst [vmem:[%s170 + $0x38] sm:$0xff] %v2803
      %2836 = vst [vmem:[%s170 + $0x40] sm:$0xff] %v2804
      %2837 = vst [vmem:[%s170 + $0x48] sm:$0xff] %v2805
      %2838 = vst [vmem:[%s170 + $0x50] sm:$0xff] %v2806
      %2839 = vst [vmem:[%s170 + $0x58] sm:$0xff] %v2807
      %2840 = vst [vmem:[%s170 + $0x60] sm:$0xff] %v2808
      %2841 = vst [vmem:[%s170 + $0x68] sm:$0xff] %v2809
      %2842 = vst [vmem:[%s170 + $0x70] sm:$0xff] %v2810
      %2843 = vst [vmem:[%s170 + $0x78] sm:$0xff] %v2811
      %2844 = vst [vmem:[%s170 + $0x80] sm:$0xff] %v2812
      %2845 = vst [vmem:[%s170 + $0x88] sm:$0xff] %v2813
      %2846 = vst [vmem:[%s170 + $0x90] sm:$0xff] %v2814
      %2847 = vst [vmem:[%s170 + $0x98] sm:$0xff] %v2815
      %2848 = vst [vmem:[%s170 + $0xa0] sm:$0xff] %v2816
      %2849 = vst [vmem:[%s170 + $0xa8] sm:$0xff] %v2817
      %2850 = vst [vmem:[%s170 + $0xb0] sm:$0xff] %v2818
      %2851 = vst [vmem:[%s170 + $0xb8] sm:$0xff] %v2819
      %2852 = vst [vmem:[%s170 + $0xc0] sm:$0xff] %v2820
      %2853 = vst [vmem:[%s170 + $0xc8] sm:$0xff] %v2821
      %2854 = vst [vmem:[%s170 + $0xd0] sm:$0xff] %v2822
      %2855 = vst [vmem:[%s170 + $0xd8] sm:$0xff] %v2823
      %2856 = vst [vmem:[%s170 + $0xe0] sm:$0xff] %v2824
      %2857 = vst [vmem:[%s170 + $0xe8] sm:$0xff] %v2825
      %2858 = vst [vmem:[%s170 + $0xf0] sm:$0xff] %v2826
      %2859 = vst [vmem:[%s170 + $0xf8] sm:$0xff] %v2827
      %p2860 = scmp.lt.s32.totalorder %s14, 1
      %s2861 = scalar_select %p2860, %s14, 1
      %s2862 = smul.addr %s2861, 32
      %s2863 = smul.addr %s2862, 8
      %s2864 = scalar_lea.vmem %s3, %s2863
      // Predicated region
      $region33: #{_lambda_.3} parent=31 // pred_check
        %p2865 = pneg %p100
      $region34: #{_lambda_.3} parent=31 // pred_check_branch
        %2867 = sbr.rel (%p2865) target = $region36
      $region35: #{_lambda_.3} parent=31 // pred_region
        _
      $region36: #{_lambda_.3} parent=31 // pred_fallthru
        _
    $region32: #{_lambda_.3} parent=5 // pred_fallthru
      _
    %p2868 = scmp.le.s32.totalorder 2, %s9
    // Predicated region
    $region37: #{_lambda_.3} parent=5 // pred_check
      %p2869 = pneg %p2868
    $region38: #{_lambda_.3} parent=5 // pred_check_branch
      %2871 = sbr.rel (%p2869) target = $region40
    $region39: #{_lambda_.3} parent=5 // pred_region
      %s2872 = ssub.s32 %s9, 2
      // Predicated region
      $region41: #{_lambda_.3} parent=39 // pred_check
        %p2873 = pneg %p106
      $region42: #{_lambda_.3} parent=39 // pred_check_branch
        %2875 = sbr.rel (%p2873) target = $region44
      $region43: #{_lambda_.3} parent=39 // pred_region
        %p2876 = scmp.lt.s32.totalorder %s15, 1
        %s2877 = scalar_select %p2876, %s15, 1
        %s2878 = smul.addr %s2877, 32
        %s2879 = smul.addr %s2878, 8
        %s2880 = scalar_lea.vmem %s3, %s2879
      $region44: #{_lambda_.3} parent=39 // pred_fallthru
        _
    $region40: #{_lambda_.3} parent=5 // pred_fallthru
      _
  $region6: #{_lambda_.3} parent=0 // loop_footer
    %s13 = sadd.s32 1, %s9
  $region7: #{_lambda_.3} parent=0 // loop_footer_branch
    %8 = sbr.rel target = $region3
  $region8: #{_lambda_.3} parent=0 // loop_exit
    _

// kernel: _lambda_.4
$region0: #{_lambda_.4}
  #allocation0 [shape = 'u32[]', space=smem, size = 0x4, offset = 0x4, fixed_abs, tag = 'smem constant byte address 0x4 - core index']
  #allocation1 [shape = 'u32[144,128]{1,0:T(1,128)}', space=vmem, size = 0x12000, scoped, tag = 'internal scratch']
  %s0 = inlined_call_operand.vmem [shape: f32[2,18,18,128], index: 0, kind: input, shape index: {}]
  %s1 = inlined_call_operand.vmem [shape: bf16[9,128,128], index: 1, kind: input, shape index: {}]
  %s2 = inlined_call_operand.vmem [shape: f32[1,128], index: 2, kind: input, shape index: {}]
  %s3 = inlined_call_operand.vmem [shape: f32[2,16,16,128], index: 3, kind: output, shape index: {}]
  %s4 = sld [smem:[#allocation0]]
  $region45: #{_lambda_.4} parent=0
    _
  %s6 = ssub.s32 1, %s4
  %s7 = scalar_select 0, %s6, %s4
  loop: start=0, step=1, limit=4
  $region2: #{_lambda_.4} parent=0 // loop_pre_header
    _
  $region3: #{_lambda_.4} parent=0 // loop_header
    %s9 = sphi 0, %s13
    %p10 = scmp.ge.s32.totalorder %s9, 4
    %s19 = sphi 0, %s21
    %s22 = sphi 0, %s19
    %s23 = sphi 0, %s22
    %s39 = sphi 0, %s23
    %s43 = sphi 0, %s43
    %s45 = sphi 0, %s43
    %s46 = sphi 0, %s45
    %s60 = sphi 0, %s46
    %s64 = sphi 0, %s64
    %s66 = sphi 0, %s64
    %s67 = sphi 0, %s66
    %s81 = sphi 0, %s67
    %s87 = sphi 0, %s89
    %s90 = sphi 0, %s87
    %s91 = sphi 0, %s90
    %s107 = sphi 0, %s91
  $region4: #{_lambda_.4} parent=0 // loop_header_branch
    %12 = sbr.rel (%p10) target = $region8
  $region5: #{_lambda_.4} parent=0 // loop_body
    %s14 = ssub.s32 %s9, 1
    %s15 = ssub.s32 %s9, 2
    %s16 = sadd.s32 %s9, 1
    %s17 = ssub.s32 %s9, %s16
    %p18 = scmp.eq.s32.totalorder %s17, 0
    %s20 = sadd.s32 %s19, 1
    %s21 = scalar_select %p18, %s19, %s20
    %p24 = pneg %p18
    %p25 = scmp.eq.s32.totalorder %s9, 1
    %p26 = por %p24, %p25
    %p27 = scmp.ne.s32.totalorder %s19, %s22
    %p28 = scmp.eq.s32.totalorder %s9, 0
    %p29 = por %p27, %p28
    %p30 = scmp.ne.s32.totalorder %s19, %s22
    %p31 = scmp.eq.s32.totalorder %s14, 1
    %p32 = por %p30, %p31
    %p33 = scmp.ne.s32.totalorder %s22, %s23
    %p34 = scmp.eq.s32.totalorder %s14, 0
    %p35 = por %p33, %p34
    %p36 = scmp.ne.s32.totalorder %s22, %s23
    %p37 = scmp.eq.s32.totalorder %s15, 1
    %p38 = por %p36, %p37
    %p40 = scmp.ne.s32.totalorder %s23, %s39
    %p41 = scmp.eq.s32.totalorder %s15, 0
    %p42 = por %p40, %p41
    %s44 = sadd.s32 %s43, 1
    %p47 = scmp.eq.s32.totalorder %s9, 1
    %p48 = scmp.ne.s32.totalorder %s43, %s45
    %p49 = scmp.eq.s32.totalorder %s9, 0
    %p50 = por %p48, %p49
    %p51 = scmp.ne.s32.totalorder %s43, %s45
    %p52 = scmp.eq.s32.totalorder %s14, 1
    %p53 = por %p51, %p52
    %p54 = scmp.ne.s32.totalorder %s45, %s46
    %p55 = scmp.eq.s32.totalorder %s14, 0
    %p56 = por %p54, %p55
    %p57 = scmp.ne.s32.totalorder %s45, %s46
    %p58 = scmp.eq.s32.totalorder %s15, 1
    %p59 = por %p57, %p58
    %p61 = scmp.ne.s32.totalorder %s46, %s60
    %p62 = scmp.eq.s32.totalorder %s15, 0
    %p63 = por %p61, %p62
    %s65 = sadd.s32 %s64, 1
    %p68 = scmp.eq.s32.totalorder %s9, 1
    %p69 = scmp.ne.s32.totalorder %s64, %s66
    %p70 = scmp.eq.s32.totalorder %s9, 0
    %p71 = por %p69, %p70
    %p72 = scmp.ne.s32.totalorder %s64, %s66
    %p73 = scmp.eq.s32.totalorder %s14, 1
    %p74 = por %p72, %p73
    %p75 = scmp.ne.s32.totalorder %s66, %s67
    %p76 = scmp.eq.s32.totalorder %s14, 0
    %p77 = por %p75, %p76
    %p78 = scmp.ne.s32.totalorder %s66, %s67
    %p79 = scmp.eq.s32.totalorder %s15, 1
    %p80 = por %p78, %p79
    %p82 = scmp.ne.s32.totalorder %s67, %s81
    %p83 = scmp.eq.s32.totalorder %s15, 0
    %p84 = por %p82, %p83
    %s85 = ssub.s32 %s9, %s16
    %p86 = scmp.eq.s32.totalorder %s85, 0
    %s88 = sadd.s32 %s87, 1
    %s89 = scalar_select %p86, %s87, %s88
    %p92 = pneg %p86
    %p93 = scmp.eq.s32.totalorder %s9, 1
    %p94 = por %p92, %p93
    %p95 = scmp.ne.s32.totalorder %s87, %s90
    %p96 = scmp.eq.s32.totalorder %s9, 0
    %p97 = por %p95, %p96
    %p98 = scmp.ne.s32.totalorder %s87, %s90
    %p99 = scmp.eq.s32.totalorder %s14, 1
    %p100 = por %p98, %p99
    %p101 = scmp.ne.s32.totalorder %s90, %s91
    %p102 = scmp.eq.s32.totalorder %s14, 0
    %p103 = por %p101, %p102
    %p104 = scmp.ne.s32.totalorder %s90, %s91
    %p105 = scmp.eq.s32.totalorder %s15, 1
    %p106 = por %p104, %p105
    %p108 = scmp.ne.s32.totalorder %s91, %s107
    %p109 = scmp.eq.s32.totalorder %s15, 0
    %p110 = por %p108, %p109
    %p111 = scmp.le.s32.totalorder 1, %s9
    %p112 = scmp.lt.s32.totalorder %s9, 3
    %p113 = pnand %p111, %p112
    %p114 = pneg %p113
    // Predicated region
    $region9: #{_lambda_.4} parent=5 // pred_check
      _
    $region10: #{_lambda_.4} parent=5 // pred_check_branch
      %116 = sbr.rel (%p113) target = $region12
    $region11: #{_lambda_.4} parent=5 // pred_region
      %s117 = ssub.s32 %s9, 1
      // Predicated region
      $region13: #{_lambda_.4} parent=11 // pred_check
        %p118 = pneg %p56
      $region14: #{_lambda_.4} parent=11 // pred_check_branch
        %120 = sbr.rel (%p118) target = $region16
      $region15: #{_lambda_.4} parent=11 // pred_region
        _
      $region16: #{_lambda_.4} parent=11 // pred_fallthru
        _
      // Predicated region
      $region17: #{_lambda_.4} parent=11 // pred_check
        %p121 = pneg %p77
      $region18: #{_lambda_.4} parent=11 // pred_check_branch
        %123 = sbr.rel (%p121) target = $region20
      $region19: #{_lambda_.4} parent=11 // pred_region
        _
      $region20: #{_lambda_.4} parent=11 // pred_fallthru
        _
    $region12: #{_lambda_.4} parent=5 // pred_fallthru
      _
    %p124 = scmp.lt.s32.totalorder %s9, 2
    // Predicated region
    $region21: #{_lambda_.4} parent=5 // pred_check
      %p125 = pneg %p124
    $region22: #{_lambda_.4} parent=5 // pred_check_branch
      %127 = sbr.rel (%p125) target = $region24
    $region23: #{_lambda_.4} parent=5 // pred_region
      // Predicated region
      $region25: #{_lambda_.4} parent=23 // pred_check
        %p128 = pneg %p29
      $region26: #{_lambda_.4} parent=23 // pred_check_branch
        %130 = sbr.rel (%p128) target = $region28
      $region27: #{_lambda_.4} parent=23 // pred_region
        %p131 = scmp.lt.s32.totalorder %s9, 1
        %s132 = scalar_select %p131, %s9, 1
        %s133 = smul.addr %s132, 54
        %s134 = smul.addr %s133, 8
        %s135 = scalar_lea.vmem %s0, %s134
      $region28: #{_lambda_.4} parent=23 // pred_fallthru
        _
    $region24: #{_lambda_.4} parent=5 // pred_fallthru
      _
    %p136 = scmp.le.s32.totalorder 1, %s9
    %p137 = scmp.lt.s32.totalorder %s9, 3
    %p138 = pnand %p136, %p137
    %p139 = pneg %p138
    // Predicated region
    $region29: #{_lambda_.4} parent=5 // pred_check
      _
    $region30: #{_lambda_.4} parent=5 // pred_check_branch
      %141 = sbr.rel (%p138) target = $region32
    $region31: #{_lambda_.4} parent=5 // pred_region
      %s142 = ssub.s32 %s9, 1
      %p143 = scmp.lt.s32.totalorder %s14, 1
      %s144 = scalar_select %p143, %s14, 1
      %s145 = smul.addr %s144, 54
      %s146 = smul.addr %s145, 8
      %s147 = scalar_lea.vmem %s0, %s146
      %p148 = pneg %p35
      %p149 = pneg %p32
      %p150 = pneg %p56
      %p151 = pneg %p53
      %p152 = pneg %p77
      %p153 = pneg %p74
      %p154 = pneg %p103
      %p155 = pneg %p100
      %p156 = scmp.lt.s32.totalorder %s14, 1
      %s157 = scalar_select %p156, %s14, 1
      %s158 = smul.addr %s157, 32
      %s159 = smul.addr %s158, 8
      %s160 = scalar_lea.vmem %s3, %s159
      %p161 = scmp.lt.s32.totalorder %s14, 1
      %s162 = scalar_select %p161, %s14, 1
      %s163 = smul.addr %s162, 54
      %s164 = smul.addr %s163, 8
      %s165 = scalar_lea.vmem %s0, %s164
      %p166 = scmp.lt.s32.totalorder %s14, 1
      %s167 = scalar_select %p166, %s14, 1
      %s168 = smul.addr %s167, 32
      %s169 = smul.addr %s168, 8
      %s170 = scalar_lea.vmem %s3, %s169
      %v172 = vld [vmem:[%s165] sm:$0xff]
      %v173 = vld [vmem:[%s165 + $0x8] sm:$0xff]
      %v174 = vld [vmem:[%s165 + $0x18] sm:$0xff]
      %v175 = vld [vmem:[%s165 + $0x20] sm:$0xff]
      %v176 = vld [vmem:[%s165 + $0x30] sm:$0xff]
      %v177 = vld [vmem:[%s165 + $0x38] sm:$0xff]
      %v178 = vld [vmem:[%s165 + $0x48] sm:$0xff]
      %v179 = vld [vmem:[%s165 + $0x50] sm:$0xff]
      %v180 = vld [vmem:[%s165 + $0x60] sm:$0xff]
      %v181 = vld [vmem:[%s165 + $0x68] sm:$0xff]
      %v182 = vld [vmem:[%s165 + $0x78] sm:$0xff]
      %v183 = vld [vmem:[%s165 + $0x80] sm:$0xff]
      %v184 = vld [vmem:[%s165 + $0x90] sm:$0xff]
      %v185 = vld [vmem:[%s165 + $0x98] sm:$0xff]
      %v186 = vld [vmem:[%s165 + $0xa8] sm:$0xff]
      %v187 = vld [vmem:[%s165 + $0xb0] sm:$0xff]
      %v188 = vld [vmem:[%s165 + $0xc0] sm:$0xff]
      %v189 = vld [vmem:[%s165 + $0xc8] sm:$0xff]
      %v190 = vld [vmem:[%s165 + $0xd8] sm:$0xff]
      %v191 = vld [vmem:[%s165 + $0xe0] sm:$0xff]
      %v192 = vld [vmem:[%s165 + $0xf0] sm:$0xff]
      %v193 = vld [vmem:[%s165 + $0xf8] sm:$0xff]
      %v194 = vld [vmem:[%s165 + $0x108] sm:$0xff]
      %v195 = vld [vmem:[%s165 + $0x110] sm:$0xff]
      %v196 = vld [vmem:[%s165 + $0x120] sm:$0xff]
      %v197 = vld [vmem:[%s165 + $0x128] sm:$0xff]
      %v198 = vld [vmem:[%s165 + $0x138] sm:$0xff]
      %v199 = vld [vmem:[%s165 + $0x140] sm:$0xff]
      %v200 = vld [vmem:[%s165 + $0x150] sm:$0xff]
      %v201 = vld [vmem:[%s165 + $0x158] sm:$0xff]
      %v202 = vld [vmem:[%s165 + $0x168] sm:$0xff]
      %v203 = vld [vmem:[%s165 + $0x170] sm:$0xff]
      %v204 = vpack.c.bf16 %v173, %v172
      %v205 = vpack.c.bf16 %v175, %v174
      %v206 = vpack.c.bf16 %v177, %v176
      %v207 = vpack.c.bf16 %v179, %v178
      %v208 = vpack.c.bf16 %v181, %v180
      %v209 = vpack.c.bf16 %v183, %v182
      %v210 = vpack.c.bf16 %v185, %v184
      %v211 = vpack.c.bf16 %v187, %v186
      %v212 = vpack.c.bf16 %v189, %v188
      %v213 = vpack.c.bf16 %v191, %v190
      %v214 = vpack.c.bf16 %v193, %v192
      %v215 = vpack.c.bf16 %v195, %v194
      %v216 = vpack.c.bf16 %v197, %v196
      %v217 = vpack.c.bf16 %v199, %v198
      %v218 = vpack.c.bf16 %v201, %v200
      %v219 = vpack.c.bf16 %v203, %v202
      %v220 = vld [vmem:[%s1] sm:$0xf]
      %v221 = vld [vmem:[%s1 + $0x4] sm:$0xf]
      %v222 = vld [vmem:[%s1 + $0x8] sm:$0xf]
      %v223 = vld [vmem:[%s1 + $0xc] sm:$0xf]
      %v224 = vld [vmem:[%s1 + $0x10] sm:$0xf]
      %v225 = vld [vmem:[%s1 + $0x14] sm:$0xf]
      %v226 = vld [vmem:[%s1 + $0x18] sm:$0xf]
      %v227 = vld [vmem:[%s1 + $0x1c] sm:$0xf]
      %v228 = vld [vmem:[%s1 + $0x20] sm:$0xf]
      %v229 = vld [vmem:[%s1 + $0x24] sm:$0xf]
      %v230 = vld [vmem:[%s1 + $0x28] sm:$0xf]
      %v231 = vld [vmem:[%s1 + $0x2c] sm:$0xf]
      %v232 = vld [vmem:[%s1 + $0x30] sm:$0xf]
      %v233 = vld [vmem:[%s1 + $0x34] sm:$0xf]
      %v234 = vld [vmem:[%s1 + $0x38] sm:$0xf]
      %v235 = vld [vmem:[%s1 + $0x3c] sm:$0xf]
      %v236 = vld [vmem:[%s165 + $0x1] sm:$0xff]
      %v237 = vld [vmem:[%s165 + $0x9] sm:$0xff]
      %v238 = vld [vmem:[%s165 + $0x19] sm:$0xff]
      %v239 = vld [vmem:[%s165 + $0x21] sm:$0xff]
      %v240 = vld [vmem:[%s165 + $0x31] sm:$0xff]
      %v241 = vld [vmem:[%s165 + $0x39] sm:$0xff]
      %v242 = vld [vmem:[%s165 + $0x49] sm:$0xff]
      %v243 = vld [vmem:[%s165 + $0x51] sm:$0xff]
      %v244 = vld [vmem:[%s165 + $0x61] sm:$0xff]
      %v245 = vld [vmem:[%s165 + $0x69] sm:$0xff]
      %v246 = vld [vmem:[%s165 + $0x79] sm:$0xff]
      %v247 = vld [vmem:[%s165 + $0x81] sm:$0xff]
      %v248 = vld [vmem:[%s165 + $0x91] sm:$0xff]
      %v249 = vld [vmem:[%s165 + $0x99] sm:$0xff]
      %v250 = vld [vmem:[%s165 + $0xa9] sm:$0xff]
      %v251 = vld [vmem:[%s165 + $0xb1] sm:$0xff]
      %v252 = vld [vmem:[%s165 + $0xc1] sm:$0xff]
      %v253 = vld [vmem:[%s165 + $0xc9] sm:$0xff]
      %v254 = vld [vmem:[%s165 + $0xd9] sm:$0xff]
      %v255 = vld [vmem:[%s165 + $0xe1] sm:$0xff]
      %v256 = vld [vmem:[%s165 + $0xf1] sm:$0xff]
      %v257 = vld [vmem:[%s165 + $0xf9] sm:$0xff]
      %v258 = vld [vmem:[%s165 + $0x109] sm:$0xff]
      %v259 = vld [vmem:[%s165 + $0x111] sm:$0xff]
      %v260 = vld [vmem:[%s165 + $0x121] sm:$0xff]
      %v261 = vld [vmem:[%s165 + $0x129] sm:$0xff]
      %v262 = vld [vmem:[%s165 + $0x139] sm:$0xff]
      %v263 = vld [vmem:[%s165 + $0x141] sm:$0xff]
      %v264 = vld [vmem:[%s165 + $0x151] sm:$0xff]
      %v265 = vld [vmem:[%s165 + $0x159] sm:$0xff]
      %v266 = vld [vmem:[%s165 + $0x169] sm:$0xff]
      %v267 = vld [vmem:[%s165 + $0x171] sm:$0xff]
      %v268 = vpack.c.bf16 %v237, %v236
      %v269 = vpack.c.bf16 %v239, %v238
      %v270 = vpack.c.bf16 %v241, %v240
      %v271 = vpack.c.bf16 %v243, %v242
      %v272 = vpack.c.bf16 %v245, %v244
      %v273 = vpack.c.bf16 %v247, %v246
      %v274 = vpack.c.bf16 %v249, %v248
      %v275 = vpack.c.bf16 %v251, %v250
      %v276 = vpack.c.bf16 %v253, %v252
      %v277 = vpack.c.bf16 %v255, %v254
      %v278 = vpack.c.bf16 %v257, %v256
      %v279 = vpack.c.bf16 %v259, %v258
      %v280 = vpack.c.bf16 %v261, %v260
      %v281 = vpack.c.bf16 %v263, %v262
      %v282 = vpack.c.bf16 %v265, %v264
      %v283 = vpack.c.bf16 %v267, %v266
      %s284 = scalar_lea.vmem %s1, 64
      %v285 = vld [vmem:[%s284] sm:$0xf]
      %v286 = vld [vmem:[%s284 + $0x4] sm:$0xf]
      %v287 = vld [vmem:[%s284 + $0x8] sm:$0xf]
      %v288 = vld [vmem:[%s284 + $0xc] sm:$0xf]
      %v289 = vld [vmem:[%s284 + $0x10] sm:$0xf]
      %v290 = vld [vmem:[%s284 + $0x14] sm:$0xf]
      %v291 = vld [vmem:[%s284 + $0x18] sm:$0xf]
      %v292 = vld [vmem:[%s284 + $0x1c] sm:$0xf]
      %v293 = vld [vmem:[%s284 + $0x20] sm:$0xf]
      %v294 = vld [vmem:[%s284 + $0x24] sm:$0xf]
      %v295 = vld [vmem:[%s284 + $0x28] sm:$0xf]
      %v296 = vld [vmem:[%s284 + $0x2c] sm:$0xf]
      %v297 = vld [vmem:[%s284 + $0x30] sm:$0xf]
      %v298 = vld [vmem:[%s284 + $0x34] sm:$0xf]
      %v299 = vld [vmem:[%s284 + $0x38] sm:$0xf]
      %v300 = vld [vmem:[%s284 + $0x3c] sm:$0xf]
      %v317 = vunpack.c.l.b16 %v285
      %v318 = vunpack.c.l.b16 %v286
      %v319 = vunpack.c.l.b16 %v287
      %v320 = vunpack.c.l.b16 %v288
      %v321 = vunpack.c.l.b16 %v289
      %v322 = vunpack.c.l.b16 %v290
      %v323 = vunpack.c.l.b16 %v291
      %v324 = vunpack.c.l.b16 %v292
      %v325 = vunpack.c.l.b16 %v293
      %v326 = vunpack.c.l.b16 %v294
      %v327 = vunpack.c.l.b16 %v295
      %v328 = vunpack.c.l.b16 %v296
      %v329 = vunpack.c.l.b16 %v297
      %v330 = vunpack.c.l.b16 %v298
      %v331 = vunpack.c.l.b16 %v299
      %v332 = vunpack.c.l.b16 %v300
      %v333 = vpack.c.b16 %v318, %v317
      %v334 = vpack.c.b16 %v320, %v319
      %v335 = vpack.c.b16 %v322, %v321
      %v336 = vpack.c.b16 %v324, %v323
      %v337 = vpack.c.b16 %v326, %v325
      %v338 = vpack.c.b16 %v328, %v327
      %v339 = vpack.c.b16 %v330, %v329
      %v340 = vpack.c.b16 %v332, %v331
      %349 = vmatprep.subr.bf16.mxu0 0
      %350 = vmatpush1.bf16.msra.mxu0 %v333
      %351 = vmatprep.subr.bf16.mxu0 0
      %352 = vmatpush1.bf16.msra.mxu0 %v334
      %353 = vmatprep.subr.bf16.mxu0 0
      %354 = vmatpush1.bf16.msra.mxu0 %v335
      %355 = vmatprep.subr.bf16.mxu0 0
      %356 = vmatpush1.bf16.msra.mxu0 %v336
      %357 = vmatprep.subr.bf16.mxu0 0
      %358 = vmatpush1.bf16.msra.mxu0 %v337
      %359 = vmatprep.subr.bf16.mxu0 0
      %360 = vmatpush1.bf16.msra.mxu0 %v338
      %361 = vmatprep.subr.bf16.mxu0 0
      %362 = vmatpush1.bf16.msra.mxu0 %v339
      %363 = vmatprep.subr.bf16.mxu0 0
      %364 = vmatpush1.bf16.msra.mxu0 %v340
      %365 = vmatprep.subr.bf16.mxu0 0
      %366 = vmatpush1.bf16.msra.mxu0 0
      %367 = vmatprep.subr.bf16.mxu0 0
      %368 = vmatpush1.bf16.msra.mxu0 0
      %369 = vmatprep.subr.bf16.mxu0 0
      %370 = vmatpush1.bf16.msra.mxu0 0
      %371 = vmatprep.subr.bf16.mxu0 0
      %372 = vmatpush1.bf16.msra.mxu0 0
      %373 = vmatprep.subr.bf16.mxu0 0
      %374 = vmatpush1.bf16.msra.mxu0 0
      %375 = vmatprep.subr.bf16.mxu0 0
      %376 = vmatpush1.bf16.msra.mxu0 0
      %377 = vmatprep.subr.bf16.mxu0 0
      %378 = vmatpush1.bf16.msra.mxu0 0
      %379 = vmatprep.subr.bf16.mxu0 0
      %380 = vmatpush1.bf16.msra.mxu0 0
      %381 = vmatprep.mubr.bf16.mxu0 0
      %382 = vmatmul.mubr.bf16.gmra.mrb[0].mxu0 %v268
      %v383 = vpop.f32.mrb[0].mxu0
      %v384 = vadd.f32 0.0, %v383
      %v385 = vpop.f32.mrb[0].mxu0
      %v386 = vpop.f32.mrb[0].mxu0
      %v387 = vadd.f32 0.0, %v386
      %v388 = vpop.f32.mrb[0].mxu0
      %389 = vmatprep.mubr.bf16.mxu0 0
      %390 = vmatmul.mubr.bf16.gmra.mrb[0].mxu0 %v269
      %v391 = vpop.f32.mrb[0].mxu0
      %v392 = vadd.f32 0.0, %v391
      %v393 = vpop.f32.mrb[0].mxu0
      %v394 = vpop.f32.mrb[0].mxu0
      %v395 = vadd.f32 0.0, %v394
      %v396 = vpop.f32.mrb[0].mxu0
      %397 = vmatprep.mubr.bf16.mxu0 0
      %398 = vmatmul.mubr.bf16.gmra.mrb[0].mxu0 %v270
      %v399 = vpop.f32.mrb[0].mxu0
      %v400 = vadd.f32 0.0, %v399
      %v401 = vpop.f32.mrb[0].mxu0
      %v402 = vpop.f32.mrb[0].mxu0
      %v403 = vadd.f32 0.0, %v402
      %v404 = vpop.f32.mrb[0].mxu0
      %405 = vmatprep.mubr.bf16.mxu0 0
      %406 = vmatmul.mubr.bf16.gmra.mrb[0].mxu0 %v271
      %v407 = vpop.f32.mrb[0].mxu0
      %v408 = vadd.f32 0.0, %v407
      %v409 = vpop.f32.mrb[0].mxu0
      %v410 = vpop.f32.mrb[0].mxu0
      %v411 = vadd.f32 0.0, %v410
      %v412 = vpop.f32.mrb[0].mxu0
      %413 = vmatprep.mubr.bf16.mxu0 0
      %414 = vmatmul.mubr.bf16.gmra.mrb[0].mxu0 %v272
      %v415 = vpop.f32.mrb[0].mxu0
      %v416 = vadd.f32 0.0, %v415
      %v417 = vpop.f32.mrb[0].mxu0
      %v418 = vpop.f32.mrb[0].mxu0
      %v419 = vadd.f32 0.0, %v418
      %v420 = vpop.f32.mrb[0].mxu0
      %421 = vmatprep.mubr.bf16.mxu0 0
      %422 = vmatmul.mubr.bf16.gmra.mrb[0].mxu0 %v273
      %v423 = vpop.f32.mrb[0].mxu0
      %v424 = vadd.f32 0.0, %v423
      %v425 = vpop.f32.mrb[0].mxu0
      %v426 = vpop.f32.mrb[0].mxu0
      %v427 = vadd.f32 0.0, %v426
      %v428 = vpop.f32.mrb[0].mxu0
      %429 = vmatprep.mubr.bf16.mxu0 0
      %430 = vmatmul.mubr.bf16.gmra.mrb[0].mxu0 %v274
      %v431 = vpop.f32.mrb[0].mxu0
      %v432 = vadd.f32 0.0, %v431
      %v433 = vpop.f32.mrb[0].mxu0
      %v434 = vpop.f32.mrb[0].mxu0
      %v435 = vadd.f32 0.0, %v434
      %v436 = vpop.f32.mrb[0].mxu0
      %437 = vmatprep.mubr.bf16.mxu0 0
      %438 = vmatmul.mubr.bf16.gmra.mrb[0].mxu0 %v275
      %v439 = vpop.f32.mrb[0].mxu0
      %v440 = vadd.f32 0.0, %v439
      %v441 = vpop.f32.mrb[0].mxu0
      %v442 = vpop.f32.mrb[0].mxu0
      %v443 = vadd.f32 0.0, %v442
      %v444 = vpop.f32.mrb[0].mxu0
      %445 = vmatprep.mubr.bf16.mxu0 0
      %446 = vmatmul.mubr.bf16.gmra.mrb[0].mxu0 %v276
      %v447 = vpop.f32.mrb[0].mxu0
      %v448 = vadd.f32 0.0, %v447
      %v449 = vpop.f32.mrb[0].mxu0
      %v450 = vpop.f32.mrb[0].mxu0
      %v451 = vadd.f32 0.0, %v450
      %v452 = vpop.f32.mrb[0].mxu0
      %453 = vmatprep.mubr.bf16.mxu0 0
      %454 = vmatmul.mubr.bf16.gmra.mrb[0].mxu0 %v277
      %v455 = vpop.f32.mrb[0].mxu0
      %v456 = vadd.f32 0.0, %v455
      %v457 = vpop.f32.mrb[0].mxu0
      %v458 = vpop.f32.mrb[0].mxu0
      %v459 = vadd.f32 0.0, %v458
      %v460 = vpop.f32.mrb[0].mxu0
      %461 = vmatprep.mubr.bf16.mxu0 0
      %462 = vmatmul.mubr.bf16.gmra.mrb[0].mxu0 %v278
      %v463 = vpop.f32.mrb[0].mxu0
      %v464 = vadd.f32 0.0, %v463
      %v465 = vpop.f32.mrb[0].mxu0
      %v466 = vpop.f32.mrb[0].mxu0
      %v467 = vadd.f32 0.0, %v466
      %v468 = vpop.f32.mrb[0].mxu0
      %469 = vmatprep.mubr.bf16.mxu0 0
      %470 = vmatmul.mubr.bf16.gmra.mrb[0].mxu0 %v279
      %v471 = vpop.f32.mrb[0].mxu0
      %v472 = vadd.f32 0.0, %v471
      %v473 = vpop.f32.mrb[0].mxu0
      %v474 = vpop.f32.mrb[0].mxu0
      %v475 = vadd.f32 0.0, %v474
      %v476 = vpop.f32.mrb[0].mxu0
      %477 = vmatprep.mubr.bf16.mxu0 0
      %478 = vmatmul.mubr.bf16.gmra.mrb[0].mxu0 %v280
      %v479 = vpop.f32.mrb[0].mxu0
      %v480 = vadd.f32 0.0, %v479
      %v481 = vpop.f32.mrb[0].mxu0
      %v482 = vpop.f32.mrb[0].mxu0
      %v483 = vadd.f32 0.0, %v482
      %v484 = vpop.f32.mrb[0].mxu0
      %485 = vmatprep.mubr.bf16.mxu0 0
      %486 = vmatmul.mubr.bf16.gmra.mrb[0].mxu0 %v281
      %v487 = vpop.f32.mrb[0].mxu0
      %v488 = vadd.f32 0.0, %v487
      %v489 = vpop.f32.mrb[0].mxu0
      %v490 = vpop.f32.mrb[0].mxu0
      %v491 = vadd.f32 0.0, %v490
      %v492 = vpop.f32.mrb[0].mxu0
      %493 = vmatprep.mubr.bf16.mxu0 0
      %494 = vmatmul.mubr.bf16.gmra.mrb[0].mxu0 %v282
      %v495 = vpop.f32.mrb[0].mxu0
      %v496 = vadd.f32 0.0, %v495
      %v497 = vpop.f32.mrb[0].mxu0
      %v498 = vpop.f32.mrb[0].mxu0
      %v499 = vadd.f32 0.0, %v498
      %v500 = vpop.f32.mrb[0].mxu0
      %501 = vmatprep.mubr.bf16.mxu0 0
      %502 = vmatmul.mubr.bf16.gmra.mrb[0].mxu0 %v283
      %v503 = vpop.f32.mrb[0].mxu0
      %v504 = vadd.f32 0.0, %v503
      %v505 = vpop.f32.mrb[0].mxu0
      %v506 = vpop.f32.mrb[0].mxu0
      %v507 = vadd.f32 0.0, %v506
      %v508 = vpop.f32.mrb[0].mxu0
      %509 = vdwg.mxu0
      %v526 = vunpack.c.l.b16 %v220
      %v527 = vunpack.c.l.b16 %v221
      %v528 = vunpack.c.l.b16 %v222
      %v529 = vunpack.c.l.b16 %v223
      %v530 = vunpack.c.l.b16 %v224
      %v531 = vunpack.c.l.b16 %v225
      %v532 = vunpack.c.l.b16 %v226
      %v533 = vunpack.c.l.b16 %v227
      %v534 = vunpack.c.l.b16 %v228
      %v535 = vunpack.c.l.b16 %v229
      %v536 = vunpack.c.l.b16 %v230
      %v537 = vunpack.c.l.b16 %v231
      %v538 = vunpack.c.l.b16 %v232
      %v539 = vunpack.c.l.b16 %v233
      %v540 = vunpack.c.l.b16 %v234
      %v541 = vunpack.c.l.b16 %v235
      %v542 = vpack.c.b16 %v527, %v526
      %v543 = vpack.c.b16 %v529, %v528
      %v544 = vpack.c.b16 %v531, %v530
      %v545 = vpack.c.b16 %v533, %v532
      %v546 = vpack.c.b16 %v535, %v534
      %v547 = vpack.c.b16 %v537, %v536
      %v548 = vpack.c.b16 %v539, %v538
      %v549 = vpack.c.b16 %v541, %v540
      %558 = vmatprep.subr.bf16.mxu0 0
      %559 = vmatpush1.bf16.msra.mxu0 %v542
      %560 = vmatprep.subr.bf16.mxu0 0
      %561 = vmatpush1.bf16.msra.mxu0 %v543
      %562 = vmatprep.subr.bf16.mxu0 0
      %563 = vmatpush1.bf16.msra.mxu0 %v544
      %564 = vmatprep.subr.bf16.mxu0 0
      %565 = vmatpush1.bf16.msra.mxu0 %v545
      %566 = vmatprep.subr.bf16.mxu0 0
      %567 = vmatpush1.bf16.msra.mxu0 %v546
      %568 = vmatprep.subr.bf16.mxu0 0
      %569 = vmatpush1.bf16.msra.mxu0 %v547
      %570 = vmatprep.subr.bf16.mxu0 0
      %571 = vmatpush1.bf16.msra.mxu0 %v548
      %572 = vmatprep.subr.bf16.mxu0 0
      %573 = vmatpush1.bf16.msra.mxu0 %v549
      %574 = vmatprep.subr.bf16.mxu0 0
      %575 = vmatpush1.bf16.msra.mxu0 0
      %576 = vmatprep.subr.bf16.mxu0 0
      %577 = vmatpush1.bf16.msra.mxu0 0
      %578 = vmatprep.subr.bf16.mxu0 0
      %579 = vmatpush1.bf16.msra.mxu0 0
      %580 = vmatprep.subr.bf16.mxu0 0
      %581 = vmatpush1.bf16.msra.mxu0 0
      %582 = vmatprep.subr.bf16.mxu0 0
      %583 = vmatpush1.bf16.msra.mxu0 0
      %584 = vmatprep.subr.bf16.mxu0 0
      %585 = vmatpush1.bf16.msra.mxu0 0
      %586 = vmatprep.subr.bf16.mxu0 0
      %587 = vmatpush1.bf16.msra.mxu0 0
      %588 = vmatprep.subr.bf16.mxu0 0
      %589 = vmatpush1.bf16.msra.mxu0 0
      %590 = vmatprep.mubr.bf16.mxu0 0
      %591 = vmatmul.mubr.bf16.gmra.mrb[0].mxu0 %v204
      %v592 = vpop.f32.mrb[0].mxu0
      %v593 = vadd.f32 %v384, %v592
      %v594 = vpop.f32.mrb[0].mxu0
      %v595 = vpop.f32.mrb[0].mxu0
      %v596 = vadd.f32 %v387, %v595
      %v597 = vpop.f32.mrb[0].mxu0
      %598 = vmatprep.mubr.bf16.mxu0 0
      %599 = vmatmul.mubr.bf16.gmra.mrb[0].mxu0 %v205
      %v600 = vpop.f32.mrb[0].mxu0
      %v601 = vadd.f32 %v392, %v600
      %v602 = vpop.f32.mrb[0].mxu0
      %v603 = vpop.f32.mrb[0].mxu0
      %v604 = vadd.f32 %v395, %v603
      %v605 = vpop.f32.mrb[0].mxu0
      %606 = vmatprep.mubr.bf16.mxu0 0
      %607 = vmatmul.mubr.bf16.gmra.mrb[0].mxu0 %v206
      %v608 = vpop.f32.mrb[0].mxu0
      %v609 = vadd.f32 %v400, %v608
      %v610 = vpop.f32.mrb[0].mxu0
      %v611 = vpop.f32.mrb[0].mxu0
      %v612 = vadd.f32 %v403, %v611
      %v613 = vpop.f32.mrb[0].mxu0
      %614 = vmatprep.mubr.bf16.mxu0 0
      %615 = vmatmul.mubr.bf16.gmra.mrb[0].mxu0 %v207
      %v616 = vpop.f32.mrb[0].mxu0
      %v617 = vadd.f32 %v408, %v616
      %v618 = vpop.f32.mrb[0].mxu0
      %v619 = vpop.f32.mrb[0].mxu0
      %v620 = vadd.f32 %v411, %v619
      %v621 = vpop.f32.mrb[0].mxu0
      %622 = vmatprep.mubr.bf16.mxu0 0
      %623 = vmatmul.mubr.bf16.gmra.mrb[0].mxu0 %v208
      %v624 = vpop.f32.mrb[0].mxu0
      %v625 = vadd.f32 %v416, %v624
      %v626 = vpop.f32.mrb[0].mxu0
      %v627 = vpop.f32.mrb[0].mxu0
      %v628 = vadd.f32 %v419, %v627
      %v629 = vpop.f32.mrb[0].mxu0
      %630 = vmatprep.mubr.bf16.mxu0 0
      %631 = vmatmul.mubr.bf16.gmra.mrb[0].mxu0 %v209
      %v632 = vpop.f32.mrb[0].mxu0
      %v633 = vadd.f32 %v424, %v632
      %v634 = vpop.f32.mrb[0].mxu0
      %v635 = vpop.f32.mrb[0].mxu0
      %v636 = vadd.f32 %v427, %v635
      %v637 = vpop.f32.mrb[0].mxu0
      %638 = vmatprep.mubr.bf16.mxu0 0
      %639 = vmatmul.mubr.bf16.gmra.mrb[0].mxu0 %v210
      %v640 = vpop.f32.mrb[0].mxu0
      %v641 = vadd.f32 %v432, %v640
      %v642 = vpop.f32.mrb[0].mxu0
      %v643 = vpop.f32.mrb[0].mxu0
      %v644 = vadd.f32 %v435, %v643
      %v645 = vpop.f32.mrb[0].mxu0
      %646 = vmatprep.mubr.bf16.mxu0 0
      %647 = vmatmul.mubr.bf16.gmra.mrb[0].mxu0 %v211
      %v648 = vpop.f32.mrb[0].mxu0
      %v649 = vadd.f32 %v440, %v648
      %v650 = vpop.f32.mrb[0].mxu0
      %v651 = vpop.f32.mrb[0].mxu0
      %v652 = vadd.f32 %v443, %v651
      %v653 = vpop.f32.mrb[0].mxu0
      %654 = vmatprep.mubr.bf16.mxu0 0
      %655 = vmatmul.mubr.bf16.gmra.mrb[0].mxu0 %v212
      %v656 = vpop.f32.mrb[0].mxu0
      %v657 = vadd.f32 %v448, %v656
      %v658 = vpop.f32.mrb[0].mxu0
      %v659 = vpop.f32.mrb[0].mxu0
      %v660 = vadd.f32 %v451, %v659
      %v661 = vpop.f32.mrb[0].mxu0
      %662 = vmatprep.mubr.bf16.mxu0 0
      %663 = vmatmul.mubr.bf16.gmra.mrb[0].mxu0 %v213
      %v664 = vpop.f32.mrb[0].mxu0
      %v665 = vadd.f32 %v456, %v664
      %v666 = vpop.f32.mrb[0].mxu0
      %v667 = vpop.f32.mrb[0].mxu0
      %v668 = vadd.f32 %v459, %v667
      %v669 = vpop.f32.mrb[0].mxu0
      %670 = vmatprep.mubr.bf16.mxu0 0
      %671 = vmatmul.mubr.bf16.gmra.mrb[0].mxu0 %v214
      %v672 = vpop.f32.mrb[0].mxu0
      %v673 = vadd.f32 %v464, %v672
      %v674 = vpop.f32.mrb[0].mxu0
      %v675 = vpop.f32.mrb[0].mxu0
      %v676 = vadd.f32 %v467, %v675
      %v677 = vpop.f32.mrb[0].mxu0
      %678 = vmatprep.mubr.bf16.mxu0 0
      %679 = vmatmul.mubr.bf16.gmra.mrb[0].mxu0 %v215
      %v680 = vpop.f32.mrb[0].mxu0
      %v681 = vadd.f32 %v472, %v680
      %v682 = vpop.f32.mrb[0].mxu0
      %v683 = vpop.f32.mrb[0].mxu0
      %v684 = vadd.f32 %v475, %v683
      %v685 = vpop.f32.mrb[0].mxu0
      %686 = vmatprep.mubr.bf16.mxu0 0
      %687 = vmatmul.mubr.bf16.gmra.mrb[0].mxu0 %v216
      %v688 = vpop.f32.mrb[0].mxu0
      %v689 = vadd.f32 %v480, %v688
      %v690 = vpop.f32.mrb[0].mxu0
      %v691 = vpop.f32.mrb[0].mxu0
      %v692 = vadd.f32 %v483, %v691
      %v693 = vpop.f32.mrb[0].mxu0
      %694 = vmatprep.mubr.bf16.mxu0 0
      %695 = vmatmul.mubr.bf16.gmra.mrb[0].mxu0 %v217
      %v696 = vpop.f32.mrb[0].mxu0
      %v697 = vadd.f32 %v488, %v696
      %v698 = vpop.f32.mrb[0].mxu0
      %v699 = vpop.f32.mrb[0].mxu0
      %v700 = vadd.f32 %v491, %v699
      %v701 = vpop.f32.mrb[0].mxu0
      %702 = vmatprep.mubr.bf16.mxu0 0
      %703 = vmatmul.mubr.bf16.gmra.mrb[0].mxu0 %v218
      %v704 = vpop.f32.mrb[0].mxu0
      %v705 = vadd.f32 %v496, %v704
      %v706 = vpop.f32.mrb[0].mxu0
      %v707 = vpop.f32.mrb[0].mxu0
      %v708 = vadd.f32 %v499, %v707
      %v709 = vpop.f32.mrb[0].mxu0
      %710 = vmatprep.mubr.bf16.mxu0 0
      %711 = vmatmul.mubr.bf16.gmra.mrb[0].mxu0 %v219
      %v712 = vpop.f32.mrb[0].mxu0
      %v713 = vadd.f32 %v504, %v712
      %v714 = vpop.f32.mrb[0].mxu0
      %v715 = vpop.f32.mrb[0].mxu0
      %v716 = vadd.f32 %v507, %v715
      %v717 = vpop.f32.mrb[0].mxu0
      %718 = vdwg.mxu0
      %v719 = vld [vmem:[%s165 + $0x2] sm:$0xff]
      %v720 = vld [vmem:[%s165 + $0xa] sm:$0xff]
      %v721 = vld [vmem:[%s165 + $0x1a] sm:$0xff]
      %v722 = vld [vmem:[%s165 + $0x22] sm:$0xff]
      %v723 = vld [vmem:[%s165 + $0x32] sm:$0xff]
      %v724 = vld [vmem:[%s165 + $0x3a] sm:$0xff]
      %v725 = vld [vmem:[%s165 + $0x4a] sm:$0xff]
      %v726 = vld [vmem:[%s165 + $0x52] sm:$0xff]
      %v727 = vld [vmem:[%s165 + $0x62] sm:$0xff]
      %v728 = vld [vmem:[%s165 + $0x6a] sm:$0xff]
      %v729 = vld [vmem:[%s165 + $0x7a] sm:$0xff]
      %v730 = vld [vmem:[%s165 + $0x82] sm:$0xff]
      %v731 = vld [vmem:[%s165 + $0x92] sm:$0xff]
      %v732 = vld [vmem:[%s165 + $0x9a] sm:$0xff]
      %v733 = vld [vmem:[%s165 + $0xaa] sm:$0xff]
      %v734 = vld [vmem:[%s165 + $0xb2] sm:$0xff]
      %v735 = vld [vmem:[%s165 + $0xc2] sm:$0xff]
      %v736 = vld [vmem:[%s165 + $0xca] sm:$0xff]
      %v737 = vld [vmem:[%s165 + $0xda] sm:$0xff]
      %v738 = vld [vmem:[%s165 + $0xe2] sm:$0xff]
      %v739 = vld [vmem:[%s165 + $0xf2] sm:$0xff]
      %v740 = vld [vmem:[%s165 + $0xfa] sm:$0xff]
      %v741 = vld [vmem:[%s165 + $0x10a] sm:$0xff]
      %v742 = vld [vmem:[%s165 + $0x112] sm:$0xff]
      %v743 = vld [vmem:[%s165 + $0x122] sm:$0xff]
      %v744 = vld [vmem:[%s165 + $0x12a] sm:$0xff]
      %v745 = vld [vmem:[%s165 + $0x13a] sm:$0xff]
      %v746 = vld [vmem:[%s165 + $0x142] sm:$0xff]
      %v747 = vld [vmem:[%s165 + $0x152] sm:$0xff]
      %v748 = vld [vmem:[%s165 + $0x15a] sm:$0xff]
      %v749 = vld [vmem:[%s165 + $0x16a] sm:$0xff]
      %v750 = vld [vmem:[%s165 + $0x172] sm:$0xff]
      %v751 = vpack.c.bf16 %v720, %v719
      %v752 = vpack.c.bf16 %v722, %v721
      %v753 = vpack.c.bf16 %v724, %v723
      %v754 = vpack.c.bf16 %v726, %v725
      %v755 = vpack.c.bf16 %v728, %v727
      %v756 = vpack.c.bf16 %v730, %v729
      %v757 = vpack.c.bf16 %v732, %v731
      %v758 = vpack.c.bf16 %v734, %v733
      %v759 = vpack.c.bf16 %v736, %v735
      %v760 = vpack.c.bf16 %v738, %v737
      %v761 = vpack.c.bf16 %v740, %v739
      %v762 = vpack.c.bf16 %v742, %v741
      %v763 = vpack.c.bf16 %v744, %v743
      %v764 = vpack.c.bf16 %v746, %v745
      %v765 = vpack.c.bf16 %v748, %v747
      %v766 = vpack.c.bf16 %v750, %v749
      %s767 = scalar_lea.vmem %s1, 128
      %v768 = vld [vmem:[%s767] sm:$0xf]
      %v769 = vld [vmem:[%s767 + $0x4] sm:$0xf]
      %v770 = vld [vmem:[%s767 + $0x8] sm:$0xf]
      %v771 = vld [vmem:[%s767 + $0xc] sm:$0xf]
      %v772 = vld [vmem:[%s767 + $0x10] sm:$0xf]
      %v773 = vld [vmem:[%s767 + $0x14] sm:$0xf]
      %v774 = vld [vmem:[%s767 + $0x18] sm:$0xf]
      %v775 = vld [vmem:[%s767 + $0x1c] sm:$0xf]
      %v776 = vld [vmem:[%s767 + $0x20] sm:$0xf]
      %v777 = vld [vmem:[%s767 + $0x24] sm:$0xf]
      %v778 = vld [vmem:[%s767 + $0x28] sm:$0xf]
      %v779 = vld [vmem:[%s767 + $0x2c] sm:$0xf]
      %v780 = vld [vmem:[%s767 + $0x30] sm:$0xf]
      %v781 = vld [vmem:[%s767 + $0x34] sm:$0xf]
      %v782 = vld [vmem:[%s767 + $0x38] sm:$0xf]
      %v783 = vld [vmem:[%s767 + $0x3c] sm:$0xf]
      %v800 = vunpack.c.l.b16 %v768
      %v801 = vunpack.c.l.b16 %v769
      %v802 = vunpack.c.l.b16 %v770
      %v803 = vunpack.c.l.b16 %v771
      %v804 = vunpack.c.l.b16 %v772
      %v805 = vunpack.c.l.b16 %v773
      %v806 = vunpack.c.l.b16 %v774
      %v807 = vunpack.c.l.b16 %v775
      %v808 = vunpack.c.l.b16 %v776
      %v809 = vunpack.c.l.b16 %v777
      %v810 = vunpack.c.l.b16 %v778
      %v811 = vunpack.c.l.b16 %v779
      %v812 = vunpack.c.l.b16 %v780
      %v813 = vunpack.c.l.b16 %v781
      %v814 = vunpack.c.l.b16 %v782
      %v815 = vunpack.c.l.b16 %v783
      %v816 = vpack.c.b16 %v801, %v800
      %v817 = vpack.c.b16 %v803, %v802
      %v818 = vpack.c.b16 %v805, %v804
      %v819 = vpack.c.b16 %v807, %v806
      %v820 = vpack.c.b16 %v809, %v808
      %v821 = vpack.c.b16 %v811, %v810
      %v822 = vpack.c.b16 %v813, %v812
      %v823 = vpack.c.b16 %v815, %v814
      %832 = vmatprep.subr.bf16.mxu0 0
      %833 = vmatpush1.bf16.msra.mxu0 %v816
      %834 = vmatprep.subr.bf16.mxu0 0
      %835 = vmatpush1.bf16.msra.mxu0 %v817
      %836 = vmatprep.subr.bf16.mxu0 0
      %837 = vmatpush1.bf16.msra.mxu0 %v818
      %838 = vmatprep.subr.bf16.mxu0 0
      %839 = vmatpush1.bf16.msra.mxu0 %v819
      %840 = vmatprep.subr.bf16.mxu0 0
      %841 = vmatpush1.bf16.msra.mxu0 %v820
      %842 = vmatprep.subr.bf16.mxu0 0
      %843 = vmatpush1.bf16.msra.mxu0 %v821
      %844 = vmatprep.subr.bf16.mxu0 0
      %845 = vmatpush1.bf16.msra.mxu0 %v822
      %846 = vmatprep.subr.bf16.mxu0 0
      %847 = vmatpush1.bf16.msra.mxu0 %v823
      %848 = vmatprep.subr.bf16.mxu0 0
      %849 = vmatpush1.bf16.msra.mxu0 0
      %850 = vmatprep.subr.bf16.mxu0 0
      %851 = vmatpush1.bf16.msra.mxu0 0
      %852 = vmatprep.subr.bf16.mxu0 0
      %853 = vmatpush1.bf16.msra.mxu0 0
      %854 = vmatprep.subr.bf16.mxu0 0
      %855 = vmatpush1.bf16.msra.mxu0 0
      %856 = vmatprep.subr.bf16.mxu0 0
      %857 = vmatpush1.bf16.msra.mxu0 0
      %858 = vmatprep.subr.bf16.mxu0 0
      %859 = vmatpush1.bf16.msra.mxu0 0
      %860 = vmatprep.subr.bf16.mxu0 0
      %861 = vmatpush1.bf16.msra.mxu0 0
      %862 = vmatprep.subr.bf16.mxu0 0
      %863 = vmatpush1.bf16.msra.mxu0 0
      %864 = vmatprep.mubr.bf16.mxu0 0
      %865 = vmatmul.mubr.bf16.gmra.mrb[0].mxu0 %v751
      %v866 = vpop.f32.mrb[0].mxu0
      %v867 = vadd.f32 0.0, %v866
      %v868 = vpop.f32.mrb[0].mxu0
      %v869 = vpop.f32.mrb[0].mxu0
      %v870 = vadd.f32 0.0, %v869
      %v871 = vpop.f32.mrb[0].mxu0
      %872 = vmatprep.mubr.bf16.mxu0 0
      %873 = vmatmul.mubr.bf16.gmra.mrb[0].mxu0 %v752
      %v874 = vpop.f32.mrb[0].mxu0
      %v875 = vadd.f32 0.0, %v874
      %v876 = vpop.f32.mrb[0].mxu0
      %v877 = vpop.f32.mrb[0].mxu0
      %v878 = vadd.f32 0.0, %v877
      %v879 = vpop.f32.mrb[0].mxu0
      %880 = vmatprep.mubr.bf16.mxu0 0
      %881 = vmatmul.mubr.bf16.gmra.mrb[0].mxu0 %v753
      %v882 = vpop.f32.mrb[0].mxu0
      %v883 = vadd.f32 0.0, %v882
      %v884 = vpop.f32.mrb[0].mxu0
      %v885 = vpop.f32.mrb[0].mxu0
      %v886 = vadd.f32 0.0, %v885
      %v887 = vpop.f32.mrb[0].mxu0
      %888 = vmatprep.mubr.bf16.mxu0 0
      %889 = vmatmul.mubr.bf16.gmra.mrb[0].mxu0 %v754
      %v890 = vpop.f32.mrb[0].mxu0
      %v891 = vadd.f32 0.0, %v890
      %v892 = vpop.f32.mrb[0].mxu0
      %v893 = vpop.f32.mrb[0].mxu0
      %v894 = vadd.f32 0.0, %v893
      %v895 = vpop.f32.mrb[0].mxu0
      %896 = vmatprep.mubr.bf16.mxu0 0
      %897 = vmatmul.mubr.bf16.gmra.mrb[0].mxu0 %v755
      %v898 = vpop.f32.mrb[0].mxu0
      %v899 = vadd.f32 0.0, %v898
      %v900 = vpop.f32.mrb[0].mxu0
      %v901 = vpop.f32.mrb[0].mxu0
      %v902 = vadd.f32 0.0, %v901
      %v903 = vpop.f32.mrb[0].mxu0
      %904 = vmatprep.mubr.bf16.mxu0 0
      %905 = vmatmul.mubr.bf16.gmra.mrb[0].mxu0 %v756
      %v906 = vpop.f32.mrb[0].mxu0
      %v907 = vadd.f32 0.0, %v906
      %v908 = vpop.f32.mrb[0].mxu0
      %v909 = vpop.f32.mrb[0].mxu0
      %v910 = vadd.f32 0.0, %v909
      %v911 = vpop.f32.mrb[0].mxu0
      %912 = vmatprep.mubr.bf16.mxu0 0
      %913 = vmatmul.mubr.bf16.gmra.mrb[0].mxu0 %v757
      %v914 = vpop.f32.mrb[0].mxu0
      %v915 = vadd.f32 0.0, %v914
      %v916 = vpop.f32.mrb[0].mxu0
      %v917 = vpop.f32.mrb[0].mxu0
      %v918 = vadd.f32 0.0, %v917
      %v919 = vpop.f32.mrb[0].mxu0
      %920 = vmatprep.mubr.bf16.mxu0 0
      %921 = vmatmul.mubr.bf16.gmra.mrb[0].mxu0 %v758
      %v922 = vpop.f32.mrb[0].mxu0
      %v923 = vadd.f32 0.0, %v922
      %v924 = vpop.f32.mrb[0].mxu0
      %v925 = vpop.f32.mrb[0].mxu0
      %v926 = vadd.f32 0.0, %v925
      %v927 = vpop.f32.mrb[0].mxu0
      %928 = vmatprep.mubr.bf16.mxu0 0
      %929 = vmatmul.mubr.bf16.gmra.mrb[0].mxu0 %v759
      %v930 = vpop.f32.mrb[0].mxu0
      %v931 = vadd.f32 0.0, %v930
      %v932 = vpop.f32.mrb[0].mxu0
      %v933 = vpop.f32.mrb[0].mxu0
      %v934 = vadd.f32 0.0, %v933
      %v935 = vpop.f32.mrb[0].mxu0
      %936 = vmatprep.mubr.bf16.mxu0 0
      %937 = vmatmul.mubr.bf16.gmra.mrb[0].mxu0 %v760
      %v938 = vpop.f32.mrb[0].mxu0
      %v939 = vadd.f32 0.0, %v938
      %v940 = vpop.f32.mrb[0].mxu0
      %v941 = vpop.f32.mrb[0].mxu0
      %v942 = vadd.f32 0.0, %v941
      %v943 = vpop.f32.mrb[0].mxu0
      %944 = vmatprep.mubr.bf16.mxu0 0
      %945 = vmatmul.mubr.bf16.gmra.mrb[0].mxu0 %v761
      %v946 = vpop.f32.mrb[0].mxu0
      %v947 = vadd.f32 0.0, %v946
      %v948 = vpop.f32.mrb[0].mxu0
      %v949 = vpop.f32.mrb[0].mxu0
      %v950 = vadd.f32 0.0, %v949
      %v951 = vpop.f32.mrb[0].mxu0
      %952 = vmatprep.mubr.bf16.mxu0 0
      %953 = vmatmul.mubr.bf16.gmra.mrb[0].mxu0 %v762
      %v954 = vpop.f32.mrb[0].mxu0
      %v955 = vadd.f32 0.0, %v954
      %v956 = vpop.f32.mrb[0].mxu0
      %v957 = vpop.f32.mrb[0].mxu0
      %v958 = vadd.f32 0.0, %v957
      %v959 = vpop.f32.mrb[0].mxu0
      %960 = vmatprep.mubr.bf16.mxu0 0
      %961 = vmatmul.mubr.bf16.gmra.mrb[0].mxu0 %v763
      %v962 = vpop.f32.mrb[0].mxu0
      %v963 = vadd.f32 0.0, %v962
      %v964 = vpop.f32.mrb[0].mxu0
      %v965 = vpop.f32.mrb[0].mxu0
      %v966 = vadd.f32 0.0, %v965
      %v967 = vpop.f32.mrb[0].mxu0
      %968 = vmatprep.mubr.bf16.mxu0 0
      %969 = vmatmul.mubr.bf16.gmra.mrb[0].mxu0 %v764
      %v970 = vpop.f32.mrb[0].mxu0
      %v971 = vadd.f32 0.0, %v970
      %v972 = vpop.f32.mrb[0].mxu0
      %v973 = vpop.f32.mrb[0].mxu0
      %v974 = vadd.f32 0.0, %v973
      %v975 = vpop.f32.mrb[0].mxu0
      %976 = vmatprep.mubr.bf16.mxu0 0
      %977 = vmatmul.mubr.bf16.gmra.mrb[0].mxu0 %v765
      %v978 = vpop.f32.mrb[0].mxu0
      %v979 = vadd.f32 0.0, %v978
      %v980 = vpop.f32.mrb[0].mxu0
      %v981 = vpop.f32.mrb[0].mxu0
      %v982 = vadd.f32 0.0, %v981
      %v983 = vpop.f32.mrb[0].mxu0
      %984 = vmatprep.mubr.bf16.mxu0 0
      %985 = vmatmul.mubr.bf16.gmra.mrb[0].mxu0 %v766
      %v986 = vpop.f32.mrb[0].mxu0
      %v987 = vadd.f32 0.0, %v986
      %v988 = vpop.f32.mrb[0].mxu0
      %v989 = vpop.f32.mrb[0].mxu0
      %v990 = vadd.f32 0.0, %v989
      %v991 = vpop.f32.mrb[0].mxu0
      %992 = vdwg.mxu0
      %v993 = vadd.f32 %v593, %v867
      %v994 = vadd.f32 %v596, %v870
      %v995 = vadd.f32 %v601, %v875
      %v996 = vadd.f32 %v604, %v878
      %v997 = vadd.f32 %v609, %v883
      %v998 = vadd.f32 %v612, %v886
      %v999 = vadd.f32 %v617, %v891
      %v1000 = vadd.f32 %v620, %v894
      %v1001 = vadd.f32 %v625, %v899
      %v1002 = vadd.f32 %v628, %v902
      %v1003 = vadd.f32 %v633, %v907
      %v1004 = vadd.f32 %v636, %v910
      %v1005 = vadd.f32 %v641, %v915
      %v1006 = vadd.f32 %v644, %v918
      %v1007 = vadd.f32 %v649, %v923
      %v1008 = vadd.f32 %v652, %v926
      %v1009 = vadd.f32 %v657, %v931
      %v1010 = vadd.f32 %v660, %v934
      %v1011 = vadd.f32 %v665, %v939
      %v1012 = vadd.f32 %v668, %v942
      %v1013 = vadd.f32 %v673, %v947
      %v1014 = vadd.f32 %v676, %v950
      %v1015 = vadd.f32 %v681, %v955
      %v1016 = vadd.f32 %v684, %v958
      %v1017 = vadd.f32 %v689, %v963
      %v1018 = vadd.f32 %v692, %v966
      %v1019 = vadd.f32 %v697, %v971
      %v1020 = vadd.f32 %v700, %v974
      %v1021 = vadd.f32 %v705, %v979
      %v1022 = vadd.f32 %v708, %v982
      %v1023 = vadd.f32 %v713, %v987
      %v1024 = vadd.f32 %v716, %v990
      %s1025 = scalar_lea.vmem %s165, 24
      %v1026 = vld [vmem:[%s1025] sm:$0xff]
      %v1027 = vld [vmem:[%s1025 + $0x8] sm:$0xff]
      %v1028 = vld [vmem:[%s1025 + $0x18] sm:$0xff]
      %v1029 = vld [vmem:[%s1025 + $0x20] sm:$0xff]
      %v1030 = vld [vmem:[%s1025 + $0x30] sm:$0xff]
      %v1031 = vld [vmem:[%s1025 + $0x38] sm:$0xff]
      %v1032 = vld [vmem:[%s1025 + $0x48] sm:$0xff]
      %v1033 = vld [vmem:[%s1025 + $0x50] sm:$0xff]
      %v1034 = vld [vmem:[%s1025 + $0x60] sm:$0xff]
      %v1035 = vld [vmem:[%s1025 + $0x68] sm:$0xff]
      %v1036 = vld [vmem:[%s1025 + $0x78] sm:$0xff]
      %v1037 = vld [vmem:[%s1025 + $0x80] sm:$0xff]
      %v1038 = vld [vmem:[%s1025 + $0x90] sm:$0xff]
      %v1039 = vld [vmem:[%s1025 + $0x98] sm:$0xff]
      %v1040 = vld [vmem:[%s1025 + $0xa8] sm:$0xff]
      %v1041 = vld [vmem:[%s1025 + $0xb0] sm:$0xff]
      %v1042 = vld [vmem:[%s1025 + $0xc0] sm:$0xff]
      %v1043 = vld [vmem:[%s1025 + $0xc8] sm:$0xff]
      %v1044 = vld [vmem:[%s1025 + $0xd8] sm:$0xff]
      %v1045 = vld [vmem:[%s1025 + $0xe0] sm:$0xff]
      %v1046 = vld [vmem:[%s1025 + $0xf0] sm:$0xff]
      %v1047 = vld [vmem:[%s1025 + $0xf8] sm:$0xff]
      %v1048 = vld [vmem:[%s1025 + $0x108] sm:$0xff]
      %v1049 = vld [vmem:[%s1025 + $0x110] sm:$0xff]
      %v1050 = vld [vmem:[%s1025 + $0x120] sm:$0xff]
      %v1051 = vld [vmem:[%s1025 + $0x128] sm:$0xff]
      %v1052 = vld [vmem:[%s1025 + $0x138] sm:$0xff]
      %v1053 = vld [vmem:[%s1025 + $0x140] sm:$0xff]
      %v1054 = vld [vmem:[%s1025 + $0x150] sm:$0xff]
      %v1055 = vld [vmem:[%s1025 + $0x158] sm:$0xff]
      %v1056 = vld [vmem:[%s1025 + $0x168] sm:$0xff]
      %v1057 = vld [vmem:[%s1025 + $0x170] sm:$0xff]
      %v1058 = vpack.c.bf16 %v1027, %v1026
      %v1059 = vpack.c.bf16 %v1029, %v1028
      %v1060 = vpack.c.bf16 %v1031, %v1030
      %v1061 = vpack.c.bf16 %v1033, %v1032
      %v1062 = vpack.c.bf16 %v1035, %v1034
      %v1063 = vpack.c.bf16 %v1037, %v1036
      %v1064 = vpack.c.bf16 %v1039, %v1038
      %v1065 = vpack.c.bf16 %v1041, %v1040
      %v1066 = vpack.c.bf16 %v1043, %v1042
      %v1067 = vpack.c.bf16 %v1045, %v1044
      %v1068 = vpack.c.bf16 %v1047, %v1046
      %v1069 = vpack.c.bf16 %v1049, %v1048
      %v1070 = vpack.c.bf16 %v1051, %v1050
      %v1071 = vpack.c.bf16 %v1053, %v1052
      %v1072 = vpack.c.bf16 %v1055, %v1054
      %v1073 = vpack.c.bf16 %v1057, %v1056
      %s1074 = scalar_lea.vmem %s1, 192
      %v1075 = vld [vmem:[%s1074] sm:$0xf]
      %v1076 = vld [vmem:[%s1074 + $0x4] sm:$0xf]
      %v1077 = vld [vmem:[%s1074 + $0x8] sm:$0xf]
      %v1078 = vld [vmem:[%s1074 + $0xc] sm:$0xf]
      %v1079 = vld [vmem:[%s1074 + $0x10] sm:$0xf]
      %v1080 = vld [vmem:[%s1074 + $0x14] sm:$0xf]
      %v1081 = vld [vmem:[%s1074 + $0x18] sm:$0xf]
      %v1082 = vld [vmem:[%s1074 + $0x1c] sm:$0xf]
      %v1083 = vld [vmem:[%s1074 + $0x20] sm:$0xf]
      %v1084 = vld [vmem:[%s1074 + $0x24] sm:$0xf]
      %v1085 = vld [vmem:[%s1074 + $0x28] sm:$0xf]
      %v1086 = vld [vmem:[%s1074 + $0x2c] sm:$0xf]
      %v1087 = vld [vmem:[%s1074 + $0x30] sm:$0xf]
      %v1088 = vld [vmem:[%s1074 + $0x34] sm:$0xf]
      %v1089 = vld [vmem:[%s1074 + $0x38] sm:$0xf]
      %v1090 = vld [vmem:[%s1074 + $0x3c] sm:$0xf]
      %v1107 = vunpack.c.l.b16 %v1075
      %v1108 = vunpack.c.l.b16 %v1076
      %v1109 = vunpack.c.l.b16 %v1077
      %v1110 = vunpack.c.l.b16 %v1078
      %v1111 = vunpack.c.l.b16 %v1079
      %v1112 = vunpack.c.l.b16 %v1080
      %v1113 = vunpack.c.l.b16 %v1081
      %v1114 = vunpack.c.l.b16 %v1082
      %v1115 = vunpack.c.l.b16 %v1083
      %v1116 = vunpack.c.l.b16 %v1084
      %v1117 = vunpack.c.l.b16 %v1085
      %v1118 = vunpack.c.l.b16 %v1086
      %v1119 = vunpack.c.l.b16 %v1087
      %v1120 = vunpack.c.l.b16 %v1088
      %v1121 = vunpack.c.l.b16 %v1089
      %v1122 = vunpack.c.l.b16 %v1090
      %v1123 = vpack.c.b16 %v1108, %v1107
      %v1124 = vpack.c.b16 %v1110, %v1109
      %v1125 = vpack.c.b16 %v1112, %v1111
      %v1126 = vpack.c.b16 %v1114, %v1113
      %v1127 = vpack.c.b16 %v1116, %v1115
      %v1128 = vpack.c.b16 %v1118, %v1117
      %v1129 = vpack.c.b16 %v1120, %v1119
      %v1130 = vpack.c.b16 %v1122, %v1121
      %1139 = vmatprep.subr.bf16.mxu0 0
      %1140 = vmatpush1.bf16.msra.mxu0 %v1123
      %1141 = vmatprep.subr.bf16.mxu0 0
      %1142 = vmatpush1.bf16.msra.mxu0 %v1124
      %1143 = vmatprep.subr.bf16.mxu0 0
      %1144 = vmatpush1.bf16.msra.mxu0 %v1125
      %1145 = vmatprep.subr.bf16.mxu0 0
      %1146 = vmatpush1.bf16.msra.mxu0 %v1126
      %1147 = vmatprep.subr.bf16.mxu0 0
      %1148 = vmatpush1.bf16.msra.mxu0 %v1127
      %1149 = vmatprep.subr.bf16.mxu0 0
      %1150 = vmatpush1.bf16.msra.mxu0 %v1128
      %1151 = vmatprep.subr.bf16.mxu0 0
      %1152 = vmatpush1.bf16.msra.mxu0 %v1129
      %1153 = vmatprep.subr.bf16.mxu0 0
      %1154 = vmatpush1.bf16.msra.mxu0 %v1130
      %1155 = vmatprep.subr.bf16.mxu0 0
      %1156 = vmatpush1.bf16.msra.mxu0 0
      %1157 = vmatprep.subr.bf16.mxu0 0
      %1158 = vmatpush1.bf16.msra.mxu0 0
      %1159 = vmatprep.subr.bf16.mxu0 0
      %1160 = vmatpush1.bf16.msra.mxu0 0
      %1161 = vmatprep.subr.bf16.mxu0 0
      %1162 = vmatpush1.bf16.msra.mxu0 0
      %1163 = vmatprep.subr.bf16.mxu0 0
      %1164 = vmatpush1.bf16.msra.mxu0 0
      %1165 = vmatprep.subr.bf16.mxu0 0
      %1166 = vmatpush1.bf16.msra.mxu0 0
      %1167 = vmatprep.subr.bf16.mxu0 0
      %1168 = vmatpush1.bf16.msra.mxu0 0
      %1169 = vmatprep.subr.bf16.mxu0 0
      %1170 = vmatpush1.bf16.msra.mxu0 0
      %1171 = vmatprep.mubr.bf16.mxu0 0
      %1172 = vmatmul.mubr.bf16.gmra.mrb[0].mxu0 %v1058
      %v1173 = vpop.f32.mrb[0].mxu0
      %v1174 = vadd.f32 0.0, %v1173
      %v1175 = vpop.f32.mrb[0].mxu0
      %v1176 = vpop.f32.mrb[0].mxu0
      %v1177 = vadd.f32 0.0, %v1176
      %v1178 = vpop.f32.mrb[0].mxu0
      %1179 = vmatprep.mubr.bf16.mxu0 0
      %1180 = vmatmul.mubr.bf16.gmra.mrb[0].mxu0 %v1059
      %v1181 = vpop.f32.mrb[0].mxu0
      %v1182 = vadd.f32 0.0, %v1181
      %v1183 = vpop.f32.mrb[0].mxu0
      %v1184 = vpop.f32.mrb[0].mxu0
      %v1185 = vadd.f32 0.0, %v1184
      %v1186 = vpop.f32.mrb[0].mxu0
      %1187 = vmatprep.mubr.bf16.mxu0 0
      %1188 = vmatmul.mubr.bf16.gmra.mrb[0].mxu0 %v1060
      %v1189 = vpop.f32.mrb[0].mxu0
      %v1190 = vadd.f32 0.0, %v1189
      %v1191 = vpop.f32.mrb[0].mxu0
      %v1192 = vpop.f32.mrb[0].mxu0
      %v1193 = vadd.f32 0.0, %v1192
      %v1194 = vpop.f32.mrb[0].mxu0
      %1195 = vmatprep.mubr.bf16.mxu0 0
      %1196 = vmatmul.mubr.bf16.gmra.mrb[0].mxu0 %v1061
      %v1197 = vpop.f32.mrb[0].mxu0
      %v1198 = vadd.f32 0.0, %v1197
      %v1199 = vpop.f32.mrb[0].mxu0
      %v1200 = vpop.f32.mrb[0].mxu0
      %v1201 = vadd.f32 0.0, %v1200
      %v1202 = vpop.f32.mrb[0].mxu0
      %1203 = vmatprep.mubr.bf16.mxu0 0
      %1204 = vmatmul.mubr.bf16.gmra.mrb[0].mxu0 %v1062
      %v1205 = vpop.f32.mrb[0].mxu0
      %v1206 = vadd.f32 0.0, %v1205
      %v1207 = vpop.f32.mrb[0].mxu0
      %v1208 = vpop.f32.mrb[0].mxu0
      %v1209 = vadd.f32 0.0, %v1208
      %v1210 = vpop.f32.mrb[0].mxu0
      %1211 = vmatprep.mubr.bf16.mxu0 0
      %1212 = vmatmul.mubr.bf16.gmra.mrb[0].mxu0 %v1063
      %v1213 = vpop.f32.mrb[0].mxu0
      %v1214 = vadd.f32 0.0, %v1213
      %v1215 = vpop.f32.mrb[0].mxu0
      %v1216 = vpop.f32.mrb[0].mxu0
      %v1217 = vadd.f32 0.0, %v1216
      %v1218 = vpop.f32.mrb[0].mxu0
      %1219 = vmatprep.mubr.bf16.mxu0 0
      %1220 = vmatmul.mubr.bf16.gmra.mrb[0].mxu0 %v1064
      %v1221 = vpop.f32.mrb[0].mxu0
      %v1222 = vadd.f32 0.0, %v1221
      %v1223 = vpop.f32.mrb[0].mxu0
      %v1224 = vpop.f32.mrb[0].mxu0
      %v1225 = vadd.f32 0.0, %v1224
      %v1226 = vpop.f32.mrb[0].mxu0
      %1227 = vmatprep.mubr.bf16.mxu0 0
      %1228 = vmatmul.mubr.bf16.gmra.mrb[0].mxu0 %v1065
      %v1229 = vpop.f32.mrb[0].mxu0
      %v1230 = vadd.f32 0.0, %v1229
      %v1231 = vpop.f32.mrb[0].mxu0
      %v1232 = vpop.f32.mrb[0].mxu0
      %v1233 = vadd.f32 0.0, %v1232
      %v1234 = vpop.f32.mrb[0].mxu0
      %1235 = vmatprep.mubr.bf16.mxu0 0
      %1236 = vmatmul.mubr.bf16.gmra.mrb[0].mxu0 %v1066
      %v1237 = vpop.f32.mrb[0].mxu0
      %v1238 = vadd.f32 0.0, %v1237
      %v1239 = vpop.f32.mrb[0].mxu0
      %v1240 = vpop.f32.mrb[0].mxu0
      %v1241 = vadd.f32 0.0, %v1240
      %v1242 = vpop.f32.mrb[0].mxu0
      %1243 = vmatprep.mubr.bf16.mxu0 0
      %1244 = vmatmul.mubr.bf16.gmra.mrb[0].mxu0 %v1067
      %v1245 = vpop.f32.mrb[0].mxu0
      %v1246 = vadd.f32 0.0, %v1245
      %v1247 = vpop.f32.mrb[0].mxu0
      %v1248 = vpop.f32.mrb[0].mxu0
      %v1249 = vadd.f32 0.0, %v1248
      %v1250 = vpop.f32.mrb[0].mxu0
      %1251 = vmatprep.mubr.bf16.mxu0 0
      %1252 = vmatmul.mubr.bf16.gmra.mrb[0].mxu0 %v1068
      %v1253 = vpop.f32.mrb[0].mxu0
      %v1254 = vadd.f32 0.0, %v1253
      %v1255 = vpop.f32.mrb[0].mxu0
      %v1256 = vpop.f32.mrb[0].mxu0
      %v1257 = vadd.f32 0.0, %v1256
      %v1258 = vpop.f32.mrb[0].mxu0
      %1259 = vmatprep.mubr.bf16.mxu0 0
      %1260 = vmatmul.mubr.bf16.gmra.mrb[0].mxu0 %v1069
      %v1261 = vpop.f32.mrb[0].mxu0
      %v1262 = vadd.f32 0.0, %v1261
      %v1263 = vpop.f32.mrb[0].mxu0
      %v1264 = vpop.f32.mrb[0].mxu0
      %v1265 = vadd.f32 0.0, %v1264
      %v1266 = vpop.f32.mrb[0].mxu0
      %1267 = vmatprep.mubr.bf16.mxu0 0
      %1268 = vmatmul.mubr.bf16.gmra.mrb[0].mxu0 %v1070
      %v1269 = vpop.f32.mrb[0].mxu0
      %v1270 = vadd.f32 0.0, %v1269
      %v1271 = vpop.f32.mrb[0].mxu0
      %v1272 = vpop.f32.mrb[0].mxu0
      %v1273 = vadd.f32 0.0, %v1272
      %v1274 = vpop.f32.mrb[0].mxu0
      %1275 = vmatprep.mubr.bf16.mxu0 0
      %1276 = vmatmul.mubr.bf16.gmra.mrb[0].mxu0 %v1071
      %v1277 = vpop.f32.mrb[0].mxu0
      %v1278 = vadd.f32 0.0, %v1277
      %v1279 = vpop.f32.mrb[0].mxu0
      %v1280 = vpop.f32.mrb[0].mxu0
      %v1281 = vadd.f32 0.0, %v1280
      %v1282 = vpop.f32.mrb[0].mxu0
      %1283 = vmatprep.mubr.bf16.mxu0 0
      %1284 = vmatmul.mubr.bf16.gmra.mrb[0].mxu0 %v1072
      %v1285 = vpop.f32.mrb[0].mxu0
      %v1286 = vadd.f32 0.0, %v1285
      %v1287 = vpop.f32.mrb[0].mxu0
      %v1288 = vpop.f32.mrb[0].mxu0
      %v1289 = vadd.f32 0.0, %v1288
      %v1290 = vpop.f32.mrb[0].mxu0
      %1291 = vmatprep.mubr.bf16.mxu0 0
      %1292 = vmatmul.mubr.bf16.gmra.mrb[0].mxu0 %v1073
      %v1293 = vpop.f32.mrb[0].mxu0
      %v1294 = vadd.f32 0.0, %v1293
      %v1295 = vpop.f32.mrb[0].mxu0
      %v1296 = vpop.f32.mrb[0].mxu0
      %v1297 = vadd.f32 0.0, %v1296
      %v1298 = vpop.f32.mrb[0].mxu0
      %1299 = vdwg.mxu0
      %v1300 = vadd.f32 %v993, %v1174
      %v1301 = vadd.f32 %v994, %v1177
      %v1302 = vadd.f32 %v995, %v1182
      %v1303 = vadd.f32 %v996, %v1185
      %v1304 = vadd.f32 %v997, %v1190
      %v1305 = vadd.f32 %v998, %v1193
      %v1306 = vadd.f32 %v999, %v1198
      %v1307 = vadd.f32 %v1000, %v1201
      %v1308 = vadd.f32 %v1001, %v1206
      %v1309 = vadd.f32 %v1002, %v1209
      %v1310 = vadd.f32 %v1003, %v1214
      %v1311 = vadd.f32 %v1004, %v1217
      %v1312 = vadd.f32 %v1005, %v1222
      %v1313 = vadd.f32 %v1006, %v1225
      %v1314 = vadd.f32 %v1007, %v1230
      %v1315 = vadd.f32 %v1008, %v1233
      %v1316 = vadd.f32 %v1009, %v1238
      %v1317 = vadd.f32 %v1010, %v1241
      %v1318 = vadd.f32 %v1011, %v1246
      %v1319 = vadd.f32 %v1012, %v1249
      %v1320 = vadd.f32 %v1013, %v1254
      %v1321 = vadd.f32 %v1014, %v1257
      %v1322 = vadd.f32 %v1015, %v1262
      %v1323 = vadd.f32 %v1016, %v1265
      %v1324 = vadd.f32 %v1017, %v1270
      %v1325 = vadd.f32 %v1018, %v1273
      %v1326 = vadd.f32 %v1019, %v1278
      %v1327 = vadd.f32 %v1020, %v1281
      %v1328 = vadd.f32 %v1021, %v1286
      %v1329 = vadd.f32 %v1022, %v1289
      %v1330 = vadd.f32 %v1023, %v1294
      %v1331 = vadd.f32 %v1024, %v1297
      %v1332 = vld [vmem:[%s1025 + $0x1] sm:$0xff]
      %v1333 = vld [vmem:[%s1025 + $0x9] sm:$0xff]
      %v1334 = vld [vmem:[%s1025 + $0x19] sm:$0xff]
      %v1335 = vld [vmem:[%s1025 + $0x21] sm:$0xff]
      %v1336 = vld [vmem:[%s1025 + $0x31] sm:$0xff]
      %v1337 = vld [vmem:[%s1025 + $0x39] sm:$0xff]
      %v1338 = vld [vmem:[%s1025 + $0x49] sm:$0xff]
      %v1339 = vld [vmem:[%s1025 + $0x51] sm:$0xff]
      %v1340 = vld [vmem:[%s1025 + $0x61] sm:$0xff]
      %v1341 = vld [vmem:[%s1025 + $0x69] sm:$0xff]
      %v1342 = vld [vmem:[%s1025 + $0x79] sm:$0xff]
      %v1343 = vld [vmem:[%s1025 + $0x81] sm:$0xff]
      %v1344 = vld [vmem:[%s1025 + $0x91] sm:$0xff]
      %v1345 = vld [vmem:[%s1025 + $0x99] sm:$0xff]
      %v1346 = vld [vmem:[%s1025 + $0xa9] sm:$0xff]
      %v1347 = vld [vmem:[%s1025 + $0xb1] sm:$0xff]
      %v1348 = vld [vmem:[%s1025 + $0xc1] sm:$0xff]
      %v1349 = vld [vmem:[%s1025 + $0xc9] sm:$0xff]
      %v1350 = vld [vmem:[%s1025 + $0xd9] sm:$0xff]
      %v1351 = vld [vmem:[%s1025 + $0xe1] sm:$0xff]
      %v1352 = vld [vmem:[%s1025 + $0xf1] sm:$0xff]
      %v1353 = vld [vmem:[%s1025 + $0xf9] sm:$0xff]
      %v1354 = vld [vmem:[%s1025 + $0x109] sm:$0xff]
      %v1355 = vld [vmem:[%s1025 + $0x111] sm:$0xff]
      %v1356 = vld [vmem:[%s1025 + $0x121] sm:$0xff]
      %v1357 = vld [vmem:[%s1025 + $0x129] sm:$0xff]
      %v1358 = vld [vmem:[%s1025 + $0x139] sm:$0xff]
      %v1359 = vld [vmem:[%s1025 + $0x141] sm:$0xff]
      %v1360 = vld [vmem:[%s1025 + $0x151] sm:$0xff]
      %v1361 = vld [vmem:[%s1025 + $0x159] sm:$0xff]
      %v1362 = vld [vmem:[%s1025 + $0x169] sm:$0xff]
      %v1363 = vld [vmem:[%s1025 + $0x171] sm:$0xff]
      %v1364 = vpack.c.bf16 %v1333, %v1332
      %v1365 = vpack.c.bf16 %v1335, %v1334
      %v1366 = vpack.c.bf16 %v1337, %v1336
      %v1367 = vpack.c.bf16 %v1339, %v1338
      %v1368 = vpack.c.bf16 %v1341, %v1340
      %v1369 = vpack.c.bf16 %v1343, %v1342
      %v1370 = vpack.c.bf16 %v1345, %v1344
      %v1371 = vpack.c.bf16 %v1347, %v1346
      %v1372 = vpack.c.bf16 %v1349, %v1348
      %v1373 = vpack.c.bf16 %v1351, %v1350
      %v1374 = vpack.c.bf16 %v1353, %v1352
      %v1375 = vpack.c.bf16 %v1355, %v1354
      %v1376 = vpack.c.bf16 %v1357, %v1356
      %v1377 = vpack.c.bf16 %v1359, %v1358
      %v1378 = vpack.c.bf16 %v1361, %v1360
      %v1379 = vpack.c.bf16 %v1363, %v1362
      %s1380 = scalar_lea.vmem %s1, 256
      %v1381 = vld [vmem:[%s1380] sm:$0xf]
      %v1382 = vld [vmem:[%s1380 + $0x4] sm:$0xf]
      %v1383 = vld [vmem:[%s1380 + $0x8] sm:$0xf]
      %v1384 = vld [vmem:[%s1380 + $0xc] sm:$0xf]
      %v1385 = vld [vmem:[%s1380 + $0x10] sm:$0xf]
      %v1386 = vld [vmem:[%s1380 + $0x14] sm:$0xf]
      %v1387 = vld [vmem:[%s1380 + $0x18] sm:$0xf]
      %v1388 = vld [vmem:[%s1380 + $0x1c] sm:$0xf]
      %v1389 = vld [vmem:[%s1380 + $0x20] sm:$0xf]
      %v1390 = vld [vmem:[%s1380 + $0x24] sm:$0xf]
      %v1391 = vld [vmem:[%s1380 + $0x28] sm:$0xf]
      %v1392 = vld [vmem:[%s1380 + $0x2c] sm:$0xf]
      %v1393 = vld [vmem:[%s1380 + $0x30] sm:$0xf]
      %v1394 = vld [vmem:[%s1380 + $0x34] sm:$0xf]
      %v1395 = vld [vmem:[%s1380 + $0x38] sm:$0xf]
      %v1396 = vld [vmem:[%s1380 + $0x3c] sm:$0xf]
      %v1413 = vunpack.c.l.b16 %v1381
      %v1414 = vunpack.c.l.b16 %v1382
      %v1415 = vunpack.c.l.b16 %v1383
      %v1416 = vunpack.c.l.b16 %v1384
      %v1417 = vunpack.c.l.b16 %v1385
      %v1418 = vunpack.c.l.b16 %v1386
      %v1419 = vunpack.c.l.b16 %v1387
      %v1420 = vunpack.c.l.b16 %v1388
      %v1421 = vunpack.c.l.b16 %v1389
      %v1422 = vunpack.c.l.b16 %v1390
      %v1423 = vunpack.c.l.b16 %v1391
      %v1424 = vunpack.c.l.b16 %v1392
      %v1425 = vunpack.c.l.b16 %v1393
      %v1426 = vunpack.c.l.b16 %v1394
      %v1427 = vunpack.c.l.b16 %v1395
      %v1428 = vunpack.c.l.b16 %v1396
      %v1429 = vpack.c.b16 %v1414, %v1413
      %v1430 = vpack.c.b16 %v1416, %v1415
      %v1431 = vpack.c.b16 %v1418, %v1417
      %v1432 = vpack.c.b16 %v1420, %v1419
      %v1433 = vpack.c.b16 %v1422, %v1421
      %v1434 = vpack.c.b16 %v1424, %v1423
      %v1435 = vpack.c.b16 %v1426, %v1425
      %v1436 = vpack.c.b16 %v1428, %v1427
      %1445 = vmatprep.subr.bf16.mxu0 0
      %1446 = vmatpush1.bf16.msra.mxu0 %v1429
      %1447 = vmatprep.subr.bf16.mxu0 0
      %1448 = vmatpush1.bf16.msra.mxu0 %v1430
      %1449 = vmatprep.subr.bf16.mxu0 0
      %1450 = vmatpush1.bf16.msra.mxu0 %v1431
      %1451 = vmatprep.subr.bf16.mxu0 0
      %1452 = vmatpush1.bf16.msra.mxu0 %v1432
      %1453 = vmatprep.subr.bf16.mxu0 0
      %1454 = vmatpush1.bf16.msra.mxu0 %v1433
      %1455 = vmatprep.subr.bf16.mxu0 0
      %1456 = vmatpush1.bf16.msra.mxu0 %v1434
      %1457 = vmatprep.subr.bf16.mxu0 0
      %1458 = vmatpush1.bf16.msra.mxu0 %v1435
      %1459 = vmatprep.subr.bf16.mxu0 0
      %1460 = vmatpush1.bf16.msra.mxu0 %v1436
      %1461 = vmatprep.subr.bf16.mxu0 0
      %1462 = vmatpush1.bf16.msra.mxu0 0
      %1463 = vmatprep.subr.bf16.mxu0 0
      %1464 = vmatpush1.bf16.msra.mxu0 0
      %1465 = vmatprep.subr.bf16.mxu0 0
      %1466 = vmatpush1.bf16.msra.mxu0 0
      %1467 = vmatprep.subr.bf16.mxu0 0
      %1468 = vmatpush1.bf16.msra.mxu0 0
      %1469 = vmatprep.subr.bf16.mxu0 0
      %1470 = vmatpush1.bf16.msra.mxu0 0
      %1471 = vmatprep.subr.bf16.mxu0 0
      %1472 = vmatpush1.bf16.msra.mxu0 0
      %1473 = vmatprep.subr.bf16.mxu0 0
      %1474 = vmatpush1.bf16.msra.mxu0 0
      %1475 = vmatprep.subr.bf16.mxu0 0
      %1476 = vmatpush1.bf16.msra.mxu0 0
      %1477 = vmatprep.mubr.bf16.mxu0 0
      %1478 = vmatmul.mubr.bf16.gmra.mrb[0].mxu0 %v1364
      %v1479 = vpop.f32.mrb[0].mxu0
      %v1480 = vadd.f32 0.0, %v1479
      %v1481 = vpop.f32.mrb[0].mxu0
      %v1482 = vpop.f32.mrb[0].mxu0
      %v1483 = vadd.f32 0.0, %v1482
      %v1484 = vpop.f32.mrb[0].mxu0
      %1485 = vmatprep.mubr.bf16.mxu0 0
      %1486 = vmatmul.mubr.bf16.gmra.mrb[0].mxu0 %v1365
      %v1487 = vpop.f32.mrb[0].mxu0
      %v1488 = vadd.f32 0.0, %v1487
      %v1489 = vpop.f32.mrb[0].mxu0
      %v1490 = vpop.f32.mrb[0].mxu0
      %v1491 = vadd.f32 0.0, %v1490
      %v1492 = vpop.f32.mrb[0].mxu0
      %1493 = vmatprep.mubr.bf16.mxu0 0
      %1494 = vmatmul.mubr.bf16.gmra.mrb[0].mxu0 %v1366
      %v1495 = vpop.f32.mrb[0].mxu0
      %v1496 = vadd.f32 0.0, %v1495
      %v1497 = vpop.f32.mrb[0].mxu0
      %v1498 = vpop.f32.mrb[0].mxu0
      %v1499 = vadd.f32 0.0, %v1498
      %v1500 = vpop.f32.mrb[0].mxu0
      %1501 = vmatprep.mubr.bf16.mxu0 0
      %1502 = vmatmul.mubr.bf16.gmra.mrb[0].mxu0 %v1367
      %v1503 = vpop.f32.mrb[0].mxu0
      %v1504 = vadd.f32 0.0, %v1503
      %v1505 = vpop.f32.mrb[0].mxu0
      %v1506 = vpop.f32.mrb[0].mxu0
      %v1507 = vadd.f32 0.0, %v1506
      %v1508 = vpop.f32.mrb[0].mxu0
      %1509 = vmatprep.mubr.bf16.mxu0 0
      %1510 = vmatmul.mubr.bf16.gmra.mrb[0].mxu0 %v1368
      %v1511 = vpop.f32.mrb[0].mxu0
      %v1512 = vadd.f32 0.0, %v1511
      %v1513 = vpop.f32.mrb[0].mxu0
      %v1514 = vpop.f32.mrb[0].mxu0
      %v1515 = vadd.f32 0.0, %v1514
      %v1516 = vpop.f32.mrb[0].mxu0
      %1517 = vmatprep.mubr.bf16.mxu0 0
      %1518 = vmatmul.mubr.bf16.gmra.mrb[0].mxu0 %v1369
      %v1519 = vpop.f32.mrb[0].mxu0
      %v1520 = vadd.f32 0.0, %v1519
      %v1521 = vpop.f32.mrb[0].mxu0
      %v1522 = vpop.f32.mrb[0].mxu0
      %v1523 = vadd.f32 0.0, %v1522
      %v1524 = vpop.f32.mrb[0].mxu0
      %1525 = vmatprep.mubr.bf16.mxu0 0
      %1526 = vmatmul.mubr.bf16.gmra.mrb[0].mxu0 %v1370
      %v1527 = vpop.f32.mrb[0].mxu0
      %v1528 = vadd.f32 0.0, %v1527
      %v1529 = vpop.f32.mrb[0].mxu0
      %v1530 = vpop.f32.mrb[0].mxu0
      %v1531 = vadd.f32 0.0, %v1530
      %v1532 = vpop.f32.mrb[0].mxu0
      %1533 = vmatprep.mubr.bf16.mxu0 0
      %1534 = vmatmul.mubr.bf16.gmra.mrb[0].mxu0 %v1371
      %v1535 = vpop.f32.mrb[0].mxu0
      %v1536 = vadd.f32 0.0, %v1535
      %v1537 = vpop.f32.mrb[0].mxu0
      %v1538 = vpop.f32.mrb[0].mxu0
      %v1539 = vadd.f32 0.0, %v1538
      %v1540 = vpop.f32.mrb[0].mxu0
      %1541 = vmatprep.mubr.bf16.mxu0 0
      %1542 = vmatmul.mubr.bf16.gmra.mrb[0].mxu0 %v1372
      %v1543 = vpop.f32.mrb[0].mxu0
      %v1544 = vadd.f32 0.0, %v1543
      %v1545 = vpop.f32.mrb[0].mxu0
      %v1546 = vpop.f32.mrb[0].mxu0
      %v1547 = vadd.f32 0.0, %v1546
      %v1548 = vpop.f32.mrb[0].mxu0
      %1549 = vmatprep.mubr.bf16.mxu0 0
      %1550 = vmatmul.mubr.bf16.gmra.mrb[0].mxu0 %v1373
      %v1551 = vpop.f32.mrb[0].mxu0
      %v1552 = vadd.f32 0.0, %v1551
      %v1553 = vpop.f32.mrb[0].mxu0
      %v1554 = vpop.f32.mrb[0].mxu0
      %v1555 = vadd.f32 0.0, %v1554
      %v1556 = vpop.f32.mrb[0].mxu0
      %1557 = vmatprep.mubr.bf16.mxu0 0
      %1558 = vmatmul.mubr.bf16.gmra.mrb[0].mxu0 %v1374
      %v1559 = vpop.f32.mrb[0].mxu0
      %v1560 = vadd.f32 0.0, %v1559
      %v1561 = vpop.f32.mrb[0].mxu0
      %v1562 = vpop.f32.mrb[0].mxu0
      %v1563 = vadd.f32 0.0, %v1562
      %v1564 = vpop.f32.mrb[0].mxu0
      %1565 = vmatprep.mubr.bf16.mxu0 0
      %1566 = vmatmul.mubr.bf16.gmra.mrb[0].mxu0 %v1375
      %v1567 = vpop.f32.mrb[0].mxu0
      %v1568 = vadd.f32 0.0, %v1567
      %v1569 = vpop.f32.mrb[0].mxu0
      %v1570 = vpop.f32.mrb[0].mxu0
      %v1571 = vadd.f32 0.0, %v1570
      %v1572 = vpop.f32.mrb[0].mxu0
      %1573 = vmatprep.mubr.bf16.mxu0 0
      %1574 = vmatmul.mubr.bf16.gmra.mrb[0].mxu0 %v1376
      %v1575 = vpop.f32.mrb[0].mxu0
      %v1576 = vadd.f32 0.0, %v1575
      %v1577 = vpop.f32.mrb[0].mxu0
      %v1578 = vpop.f32.mrb[0].mxu0
      %v1579 = vadd.f32 0.0, %v1578
      %v1580 = vpop.f32.mrb[0].mxu0
      %1581 = vmatprep.mubr.bf16.mxu0 0
      %1582 = vmatmul.mubr.bf16.gmra.mrb[0].mxu0 %v1377
      %v1583 = vpop.f32.mrb[0].mxu0
      %v1584 = vadd.f32 0.0, %v1583
      %v1585 = vpop.f32.mrb[0].mxu0
      %v1586 = vpop.f32.mrb[0].mxu0
      %v1587 = vadd.f32 0.0, %v1586
      %v1588 = vpop.f32.mrb[0].mxu0
      %1589 = vmatprep.mubr.bf16.mxu0 0
      %1590 = vmatmul.mubr.bf16.gmra.mrb[0].mxu0 %v1378
      %v1591 = vpop.f32.mrb[0].mxu0
      %v1592 = vadd.f32 0.0, %v1591
      %v1593 = vpop.f32.mrb[0].mxu0
      %v1594 = vpop.f32.mrb[0].mxu0
      %v1595 = vadd.f32 0.0, %v1594
      %v1596 = vpop.f32.mrb[0].mxu0
      %1597 = vmatprep.mubr.bf16.mxu0 0
      %1598 = vmatmul.mubr.bf16.gmra.mrb[0].mxu0 %v1379
      %v1599 = vpop.f32.mrb[0].mxu0
      %v1600 = vadd.f32 0.0, %v1599
      %v1601 = vpop.f32.mrb[0].mxu0
      %v1602 = vpop.f32.mrb[0].mxu0
      %v1603 = vadd.f32 0.0, %v1602
      %v1604 = vpop.f32.mrb[0].mxu0
      %1605 = vdwg.mxu0
      %v1606 = vadd.f32 %v1300, %v1480
      %v1607 = vadd.f32 %v1301, %v1483
      %v1608 = vadd.f32 %v1302, %v1488
      %v1609 = vadd.f32 %v1303, %v1491
      %v1610 = vadd.f32 %v1304, %v1496
      %v1611 = vadd.f32 %v1305, %v1499
      %v1612 = vadd.f32 %v1306, %v1504
      %v1613 = vadd.f32 %v1307, %v1507
      %v1614 = vadd.f32 %v1308, %v1512
      %v1615 = vadd.f32 %v1309, %v1515
      %v1616 = vadd.f32 %v1310, %v1520
      %v1617 = vadd.f32 %v1311, %v1523
      %v1618 = vadd.f32 %v1312, %v1528
      %v1619 = vadd.f32 %v1313, %v1531
      %v1620 = vadd.f32 %v1314, %v1536
      %v1621 = vadd.f32 %v1315, %v1539
      %v1622 = vadd.f32 %v1316, %v1544
      %v1623 = vadd.f32 %v1317, %v1547
      %v1624 = vadd.f32 %v1318, %v1552
      %v1625 = vadd.f32 %v1319, %v1555
      %v1626 = vadd.f32 %v1320, %v1560
      %v1627 = vadd.f32 %v1321, %v1563
      %v1628 = vadd.f32 %v1322, %v1568
      %v1629 = vadd.f32 %v1323, %v1571
      %v1630 = vadd.f32 %v1324, %v1576
      %v1631 = vadd.f32 %v1325, %v1579
      %v1632 = vadd.f32 %v1326, %v1584
      %v1633 = vadd.f32 %v1327, %v1587
      %v1634 = vadd.f32 %v1328, %v1592
      %v1635 = vadd.f32 %v1329, %v1595
      %v1636 = vadd.f32 %v1330, %v1600
      %v1637 = vadd.f32 %v1331, %v1603
      %v1638 = vld [vmem:[%s1025 + $0x2] sm:$0xff]
      %v1639 = vld [vmem:[%s1025 + $0xa] sm:$0xff]
      %v1640 = vld [vmem:[%s1025 + $0x1a] sm:$0xff]
      %v1641 = vld [vmem:[%s1025 + $0x22] sm:$0xff]
      %v1642 = vld [vmem:[%s1025 + $0x32] sm:$0xff]
      %v1643 = vld [vmem:[%s1025 + $0x3a] sm:$0xff]
      %v1644 = vld [vmem:[%s1025 + $0x4a] sm:$0xff]
      %v1645 = vld [vmem:[%s1025 + $0x52] sm:$0xff]
      %v1646 = vld [vmem:[%s1025 + $0x62] sm:$0xff]
      %v1647 = vld [vmem:[%s1025 + $0x6a] sm:$0xff]
      %v1648 = vld [vmem:[%s1025 + $0x7a] sm:$0xff]
      %v1649 = vld [vmem:[%s1025 + $0x82] sm:$0xff]
      %v1650 = vld [vmem:[%s1025 + $0x92] sm:$0xff]
      %v1651 = vld [vmem:[%s1025 + $0x9a] sm:$0xff]
      %v1652 = vld [vmem:[%s1025 + $0xaa] sm:$0xff]
      %v1653 = vld [vmem:[%s1025 + $0xb2] sm:$0xff]
      %v1654 = vld [vmem:[%s1025 + $0xc2] sm:$0xff]
      %v1655 = vld [vmem:[%s1025 + $0xca] sm:$0xff]
      %v1656 = vld [vmem:[%s1025 + $0xda] sm:$0xff]
      %v1657 = vld [vmem:[%s1025 + $0xe2] sm:$0xff]
      %v1658 = vld [vmem:[%s1025 + $0xf2] sm:$0xff]
      %v1659 = vld [vmem:[%s1025 + $0xfa] sm:$0xff]
      %v1660 = vld [vmem:[%s1025 + $0x10a] sm:$0xff]
      %v1661 = vld [vmem:[%s1025 + $0x112] sm:$0xff]
      %v1662 = vld [vmem:[%s1025 + $0x122] sm:$0xff]
      %v1663 = vld [vmem:[%s1025 + $0x12a] sm:$0xff]
      %v1664 = vld [vmem:[%s1025 + $0x13a] sm:$0xff]
      %v1665 = vld [vmem:[%s1025 + $0x142] sm:$0xff]
      %v1666 = vld [vmem:[%s1025 + $0x152] sm:$0xff]
      %v1667 = vld [vmem:[%s1025 + $0x15a] sm:$0xff]
      %v1668 = vld [vmem:[%s1025 + $0x16a] sm:$0xff]
      %v1669 = vld [vmem:[%s1025 + $0x172] sm:$0xff]
      %v1670 = vpack.c.bf16 %v1639, %v1638
      %v1671 = vpack.c.bf16 %v1641, %v1640
      %v1672 = vpack.c.bf16 %v1643, %v1642
      %v1673 = vpack.c.bf16 %v1645, %v1644
      %v1674 = vpack.c.bf16 %v1647, %v1646
      %v1675 = vpack.c.bf16 %v1649, %v1648
      %v1676 = vpack.c.bf16 %v1651, %v1650
      %v1677 = vpack.c.bf16 %v1653, %v1652
      %v1678 = vpack.c.bf16 %v1655, %v1654
      %v1679 = vpack.c.bf16 %v1657, %v1656
      %v1680 = vpack.c.bf16 %v1659, %v1658
      %v1681 = vpack.c.bf16 %v1661, %v1660
      %v1682 = vpack.c.bf16 %v1663, %v1662
      %v1683 = vpack.c.bf16 %v1665, %v1664
      %v1684 = vpack.c.bf16 %v1667, %v1666
      %v1685 = vpack.c.bf16 %v1669, %v1668
      %s1686 = scalar_lea.vmem %s1, 320
      %v1687 = vld [vmem:[%s1686] sm:$0xf]
      %v1688 = vld [vmem:[%s1686 + $0x4] sm:$0xf]
      %v1689 = vld [vmem:[%s1686 + $0x8] sm:$0xf]
      %v1690 = vld [vmem:[%s1686 + $0xc] sm:$0xf]
      %v1691 = vld [vmem:[%s1686 + $0x10] sm:$0xf]
      %v1692 = vld [vmem:[%s1686 + $0x14] sm:$0xf]
      %v1693 = vld [vmem:[%s1686 + $0x18] sm:$0xf]
      %v1694 = vld [vmem:[%s1686 + $0x1c] sm:$0xf]
      %v1695 = vld [vmem:[%s1686 + $0x20] sm:$0xf]
      %v1696 = vld [vmem:[%s1686 + $0x24] sm:$0xf]
      %v1697 = vld [vmem:[%s1686 + $0x28] sm:$0xf]
      %v1698 = vld [vmem:[%s1686 + $0x2c] sm:$0xf]
      %v1699 = vld [vmem:[%s1686 + $0x30] sm:$0xf]
      %v1700 = vld [vmem:[%s1686 + $0x34] sm:$0xf]
      %v1701 = vld [vmem:[%s1686 + $0x38] sm:$0xf]
      %v1702 = vld [vmem:[%s1686 + $0x3c] sm:$0xf]
      %v1719 = vunpack.c.l.b16 %v1687
      %v1720 = vunpack.c.l.b16 %v1688
      %v1721 = vunpack.c.l.b16 %v1689
      %v1722 = vunpack.c.l.b16 %v1690
      %v1723 = vunpack.c.l.b16 %v1691
      %v1724 = vunpack.c.l.b16 %v1692
      %v1725 = vunpack.c.l.b16 %v1693
      %v1726 = vunpack.c.l.b16 %v1694
      %v1727 = vunpack.c.l.b16 %v1695
      %v1728 = vunpack.c.l.b16 %v1696
      %v1729 = vunpack.c.l.b16 %v1697
      %v1730 = vunpack.c.l.b16 %v1698
      %v1731 = vunpack.c.l.b16 %v1699
      %v1732 = vunpack.c.l.b16 %v1700
      %v1733 = vunpack.c.l.b16 %v1701
      %v1734 = vunpack.c.l.b16 %v1702
      %v1735 = vpack.c.b16 %v1720, %v1719
      %v1736 = vpack.c.b16 %v1722, %v1721
      %v1737 = vpack.c.b16 %v1724, %v1723
      %v1738 = vpack.c.b16 %v1726, %v1725
      %v1739 = vpack.c.b16 %v1728, %v1727
      %v1740 = vpack.c.b16 %v1730, %v1729
      %v1741 = vpack.c.b16 %v1732, %v1731
      %v1742 = vpack.c.b16 %v1734, %v1733
      %1751 = vmatprep.subr.bf16.mxu0 0
      %1752 = vmatpush1.bf16.msra.mxu0 %v1735
      %1753 = vmatprep.subr.bf16.mxu0 0
      %1754 = vmatpush1.bf16.msra.mxu0 %v1736
      %1755 = vmatprep.subr.bf16.mxu0 0
      %1756 = vmatpush1.bf16.msra.mxu0 %v1737
      %1757 = vmatprep.subr.bf16.mxu0 0
      %1758 = vmatpush1.bf16.msra.mxu0 %v1738
      %1759 = vmatprep.subr.bf16.mxu0 0
      %1760 = vmatpush1.bf16.msra.mxu0 %v1739
      %1761 = vmatprep.subr.bf16.mxu0 0
      %1762 = vmatpush1.bf16.msra.mxu0 %v1740
      %1763 = vmatprep.subr.bf16.mxu0 0
      %1764 = vmatpush1.bf16.msra.mxu0 %v1741
      %1765 = vmatprep.subr.bf16.mxu0 0
      %1766 = vmatpush1.bf16.msra.mxu0 %v1742
      %1767 = vmatprep.subr.bf16.mxu0 0
      %1768 = vmatpush1.bf16.msra.mxu0 0
      %1769 = vmatprep.subr.bf16.mxu0 0
      %1770 = vmatpush1.bf16.msra.mxu0 0
      %1771 = vmatprep.subr.bf16.mxu0 0
      %1772 = vmatpush1.bf16.msra.mxu0 0
      %1773 = vmatprep.subr.bf16.mxu0 0
      %1774 = vmatpush1.bf16.msra.mxu0 0
      %1775 = vmatprep.subr.bf16.mxu0 0
      %1776 = vmatpush1.bf16.msra.mxu0 0
      %1777 = vmatprep.subr.bf16.mxu0 0
      %1778 = vmatpush1.bf16.msra.mxu0 0
      %1779 = vmatprep.subr.bf16.mxu0 0
      %1780 = vmatpush1.bf16.msra.mxu0 0
      %1781 = vmatprep.subr.bf16.mxu0 0
      %1782 = vmatpush1.bf16.msra.mxu0 0
      %1783 = vmatprep.mubr.bf16.mxu0 0
      %1784 = vmatmul.mubr.bf16.gmra.mrb[0].mxu0 %v1670
      %v1785 = vpop.f32.mrb[0].mxu0
      %v1786 = vadd.f32 0.0, %v1785
      %v1787 = vpop.f32.mrb[0].mxu0
      %v1788 = vpop.f32.mrb[0].mxu0
      %v1789 = vadd.f32 0.0, %v1788
      %v1790 = vpop.f32.mrb[0].mxu0
      %1791 = vmatprep.mubr.bf16.mxu0 0
      %1792 = vmatmul.mubr.bf16.gmra.mrb[0].mxu0 %v1671
      %v1793 = vpop.f32.mrb[0].mxu0
      %v1794 = vadd.f32 0.0, %v1793
      %v1795 = vpop.f32.mrb[0].mxu0
      %v1796 = vpop.f32.mrb[0].mxu0
      %v1797 = vadd.f32 0.0, %v1796
      %v1798 = vpop.f32.mrb[0].mxu0
      %1799 = vmatprep.mubr.bf16.mxu0 0
      %1800 = vmatmul.mubr.bf16.gmra.mrb[0].mxu0 %v1672
      %v1801 = vpop.f32.mrb[0].mxu0
      %v1802 = vadd.f32 0.0, %v1801
      %v1803 = vpop.f32.mrb[0].mxu0
      %v1804 = vpop.f32.mrb[0].mxu0
      %v1805 = vadd.f32 0.0, %v1804
      %v1806 = vpop.f32.mrb[0].mxu0
      %1807 = vmatprep.mubr.bf16.mxu0 0
      %1808 = vmatmul.mubr.bf16.gmra.mrb[0].mxu0 %v1673
      %v1809 = vpop.f32.mrb[0].mxu0
      %v1810 = vadd.f32 0.0, %v1809
      %v1811 = vpop.f32.mrb[0].mxu0
      %v1812 = vpop.f32.mrb[0].mxu0
      %v1813 = vadd.f32 0.0, %v1812
      %v1814 = vpop.f32.mrb[0].mxu0
      %1815 = vmatprep.mubr.bf16.mxu0 0
      %1816 = vmatmul.mubr.bf16.gmra.mrb[0].mxu0 %v1674
      %v1817 = vpop.f32.mrb[0].mxu0
      %v1818 = vadd.f32 0.0, %v1817
      %v1819 = vpop.f32.mrb[0].mxu0
      %v1820 = vpop.f32.mrb[0].mxu0
      %v1821 = vadd.f32 0.0, %v1820
      %v1822 = vpop.f32.mrb[0].mxu0
      %1823 = vmatprep.mubr.bf16.mxu0 0
      %1824 = vmatmul.mubr.bf16.gmra.mrb[0].mxu0 %v1675
      %v1825 = vpop.f32.mrb[0].mxu0
      %v1826 = vadd.f32 0.0, %v1825
      %v1827 = vpop.f32.mrb[0].mxu0
      %v1828 = vpop.f32.mrb[0].mxu0
      %v1829 = vadd.f32 0.0, %v1828
      %v1830 = vpop.f32.mrb[0].mxu0
      %1831 = vmatprep.mubr.bf16.mxu0 0
      %1832 = vmatmul.mubr.bf16.gmra.mrb[0].mxu0 %v1676
      %v1833 = vpop.f32.mrb[0].mxu0
      %v1834 = vadd.f32 0.0, %v1833
      %v1835 = vpop.f32.mrb[0].mxu0
      %v1836 = vpop.f32.mrb[0].mxu0
      %v1837 = vadd.f32 0.0, %v1836
      %v1838 = vpop.f32.mrb[0].mxu0
      %1839 = vmatprep.mubr.bf16.mxu0 0
      %1840 = vmatmul.mubr.bf16.gmra.mrb[0].mxu0 %v1677
      %v1841 = vpop.f32.mrb[0].mxu0
      %v1842 = vadd.f32 0.0, %v1841
      %v1843 = vpop.f32.mrb[0].mxu0
      %v1844 = vpop.f32.mrb[0].mxu0
      %v1845 = vadd.f32 0.0, %v1844
      %v1846 = vpop.f32.mrb[0].mxu0
      %1847 = vmatprep.mubr.bf16.mxu0 0
      %1848 = vmatmul.mubr.bf16.gmra.mrb[0].mxu0 %v1678
      %v1849 = vpop.f32.mrb[0].mxu0
      %v1850 = vadd.f32 0.0, %v1849
      %v1851 = vpop.f32.mrb[0].mxu0
      %v1852 = vpop.f32.mrb[0].mxu0
      %v1853 = vadd.f32 0.0, %v1852
      %v1854 = vpop.f32.mrb[0].mxu0
      %1855 = vmatprep.mubr.bf16.mxu0 0
      %1856 = vmatmul.mubr.bf16.gmra.mrb[0].mxu0 %v1679
      %v1857 = vpop.f32.mrb[0].mxu0
      %v1858 = vadd.f32 0.0, %v1857
      %v1859 = vpop.f32.mrb[0].mxu0
      %v1860 = vpop.f32.mrb[0].mxu0
      %v1861 = vadd.f32 0.0, %v1860
      %v1862 = vpop.f32.mrb[0].mxu0
      %1863 = vmatprep.mubr.bf16.mxu0 0
      %1864 = vmatmul.mubr.bf16.gmra.mrb[0].mxu0 %v1680
      %v1865 = vpop.f32.mrb[0].mxu0
      %v1866 = vadd.f32 0.0, %v1865
      %v1867 = vpop.f32.mrb[0].mxu0
      %v1868 = vpop.f32.mrb[0].mxu0
      %v1869 = vadd.f32 0.0, %v1868
      %v1870 = vpop.f32.mrb[0].mxu0
      %1871 = vmatprep.mubr.bf16.mxu0 0
      %1872 = vmatmul.mubr.bf16.gmra.mrb[0].mxu0 %v1681
      %v1873 = vpop.f32.mrb[0].mxu0
      %v1874 = vadd.f32 0.0, %v1873
      %v1875 = vpop.f32.mrb[0].mxu0
      %v1876 = vpop.f32.mrb[0].mxu0
      %v1877 = vadd.f32 0.0, %v1876
      %v1878 = vpop.f32.mrb[0].mxu0
      %1879 = vmatprep.mubr.bf16.mxu0 0
      %1880 = vmatmul.mubr.bf16.gmra.mrb[0].mxu0 %v1682
      %v1881 = vpop.f32.mrb[0].mxu0
      %v1882 = vadd.f32 0.0, %v1881
      %v1883 = vpop.f32.mrb[0].mxu0
      %v1884 = vpop.f32.mrb[0].mxu0
      %v1885 = vadd.f32 0.0, %v1884
      %v1886 = vpop.f32.mrb[0].mxu0
      %1887 = vmatprep.mubr.bf16.mxu0 0
      %1888 = vmatmul.mubr.bf16.gmra.mrb[0].mxu0 %v1683
      %v1889 = vpop.f32.mrb[0].mxu0
      %v1890 = vadd.f32 0.0, %v1889
      %v1891 = vpop.f32.mrb[0].mxu0
      %v1892 = vpop.f32.mrb[0].mxu0
      %v1893 = vadd.f32 0.0, %v1892
      %v1894 = vpop.f32.mrb[0].mxu0
      %1895 = vmatprep.mubr.bf16.mxu0 0
      %1896 = vmatmul.mubr.bf16.gmra.mrb[0].mxu0 %v1684
      %v1897 = vpop.f32.mrb[0].mxu0
      %v1898 = vadd.f32 0.0, %v1897
      %v1899 = vpop.f32.mrb[0].mxu0
      %v1900 = vpop.f32.mrb[0].mxu0
      %v1901 = vadd.f32 0.0, %v1900
      %v1902 = vpop.f32.mrb[0].mxu0
      %1903 = vmatprep.mubr.bf16.mxu0 0
      %1904 = vmatmul.mubr.bf16.gmra.mrb[0].mxu0 %v1685
      %v1905 = vpop.f32.mrb[0].mxu0
      %v1906 = vadd.f32 0.0, %v1905
      %v1907 = vpop.f32.mrb[0].mxu0
      %v1908 = vpop.f32.mrb[0].mxu0
      %v1909 = vadd.f32 0.0, %v1908
      %v1910 = vpop.f32.mrb[0].mxu0
      %1911 = vdwg.mxu0
      %v1912 = vadd.f32 %v1606, %v1786
      %v1913 = vadd.f32 %v1607, %v1789
      %v1914 = vadd.f32 %v1608, %v1794
      %v1915 = vadd.f32 %v1609, %v1797
      %v1916 = vadd.f32 %v1610, %v1802
      %v1917 = vadd.f32 %v1611, %v1805
      %v1918 = vadd.f32 %v1612, %v1810
      %v1919 = vadd.f32 %v1613, %v1813
      %v1920 = vadd.f32 %v1614, %v1818
      %v1921 = vadd.f32 %v1615, %v1821
      %v1922 = vadd.f32 %v1616, %v1826
      %v1923 = vadd.f32 %v1617, %v1829
      %v1924 = vadd.f32 %v1618, %v1834
      %v1925 = vadd.f32 %v1619, %v1837
      %v1926 = vadd.f32 %v1620, %v1842
      %v1927 = vadd.f32 %v1621, %v1845
      %v1928 = vadd.f32 %v1622, %v1850
      %v1929 = vadd.f32 %v1623, %v1853
      %v1930 = vadd.f32 %v1624, %v1858
      %v1931 = vadd.f32 %v1625, %v1861
      %v1932 = vadd.f32 %v1626, %v1866
      %v1933 = vadd.f32 %v1627, %v1869
      %v1934 = vadd.f32 %v1628, %v1874
      %v1935 = vadd.f32 %v1629, %v1877
      %v1936 = vadd.f32 %v1630, %v1882
      %v1937 = vadd.f32 %v1631, %v1885
      %v1938 = vadd.f32 %v1632, %v1890
      %v1939 = vadd.f32 %v1633, %v1893
      %v1940 = vadd.f32 %v1634, %v1898
      %v1941 = vadd.f32 %v1635, %v1901
      %v1942 = vadd.f32 %v1636, %v1906
      %v1943 = vadd.f32 %v1637, %v1909
      %s1944 = scalar_lea.vmem %s165, 48
      %v1945 = vld [vmem:[%s1944] sm:$0xff]
      %v1946 = vld [vmem:[%s1944 + $0x8] sm:$0xff]
      %v1947 = vld [vmem:[%s1944 + $0x18] sm:$0xff]
      %v1948 = vld [vmem:[%s1944 + $0x20] sm:$0xff]
      %v1949 = vld [vmem:[%s1944 + $0x30] sm:$0xff]
      %v1950 = vld [vmem:[%s1944 + $0x38] sm:$0xff]
      %v1951 = vld [vmem:[%s1944 + $0x48] sm:$0xff]
      %v1952 = vld [vmem:[%s1944 + $0x50] sm:$0xff]
      %v1953 = vld [vmem:[%s1944 + $0x60] sm:$0xff]
      %v1954 = vld [vmem:[%s1944 + $0x68] sm:$0xff]
      %v1955 = vld [vmem:[%s1944 + $0x78] sm:$0xff]
      %v1956 = vld [vmem:[%s1944 + $0x80] sm:$0xff]
      %v1957 = vld [vmem:[%s1944 + $0x90] sm:$0xff]
      %v1958 = vld [vmem:[%s1944 + $0x98] sm:$0xff]
      %v1959 = vld [vmem:[%s1944 + $0xa8] sm:$0xff]
      %v1960 = vld [vmem:[%s1944 + $0xb0] sm:$0xff]
      %v1961 = vld [vmem:[%s1944 + $0xc0] sm:$0xff]
      %v1962 = vld [vmem:[%s1944 + $0xc8] sm:$0xff]
      %v1963 = vld [vmem:[%s1944 + $0xd8] sm:$0xff]
      %v1964 = vld [vmem:[%s1944 + $0xe0] sm:$0xff]
      %v1965 = vld [vmem:[%s1944 + $0xf0] sm:$0xff]
      %v1966 = vld [vmem:[%s1944 + $0xf8] sm:$0xff]
      %v1967 = vld [vmem:[%s1944 + $0x108] sm:$0xff]
      %v1968 = vld [vmem:[%s1944 + $0x110] sm:$0xff]
      %v1969 = vld [vmem:[%s1944 + $0x120] sm:$0xff]
      %v1970 = vld [vmem:[%s1944 + $0x128] sm:$0xff]
      %v1971 = vld [vmem:[%s1944 + $0x138] sm:$0xff]
      %v1972 = vld [vmem:[%s1944 + $0x140] sm:$0xff]
      %v1973 = vld [vmem:[%s1944 + $0x150] sm:$0xff]
      %v1974 = vld [vmem:[%s1944 + $0x158] sm:$0xff]
      %v1975 = vld [vmem:[%s1944 + $0x168] sm:$0xff]
      %v1976 = vld [vmem:[%s1944 + $0x170] sm:$0xff]
      %v1977 = vpack.c.bf16 %v1946, %v1945
      %v1978 = vpack.c.bf16 %v1948, %v1947
      %v1979 = vpack.c.bf16 %v1950, %v1949
      %v1980 = vpack.c.bf16 %v1952, %v1951
      %v1981 = vpack.c.bf16 %v1954, %v1953
      %v1982 = vpack.c.bf16 %v1956, %v1955
      %v1983 = vpack.c.bf16 %v1958, %v1957
      %v1984 = vpack.c.bf16 %v1960, %v1959
      %v1985 = vpack.c.bf16 %v1962, %v1961
      %v1986 = vpack.c.bf16 %v1964, %v1963
      %v1987 = vpack.c.bf16 %v1966, %v1965
      %v1988 = vpack.c.bf16 %v1968, %v1967
      %v1989 = vpack.c.bf16 %v1970, %v1969
      %v1990 = vpack.c.bf16 %v1972, %v1971
      %v1991 = vpack.c.bf16 %v1974, %v1973
      %v1992 = vpack.c.bf16 %v1976, %v1975
      %s1993 = scalar_lea.vmem %s1, 384
      %v1994 = vld [vmem:[%s1993] sm:$0xf]
      %v1995 = vld [vmem:[%s1993 + $0x4] sm:$0xf]
      %v1996 = vld [vmem:[%s1993 + $0x8] sm:$0xf]
      %v1997 = vld [vmem:[%s1993 + $0xc] sm:$0xf]
      %v1998 = vld [vmem:[%s1993 + $0x10] sm:$0xf]
      %v1999 = vld [vmem:[%s1993 + $0x14] sm:$0xf]
      %v2000 = vld [vmem:[%s1993 + $0x18] sm:$0xf]
      %v2001 = vld [vmem:[%s1993 + $0x1c] sm:$0xf]
      %v2002 = vld [vmem:[%s1993 + $0x20] sm:$0xf]
      %v2003 = vld [vmem:[%s1993 + $0x24] sm:$0xf]
      %v2004 = vld [vmem:[%s1993 + $0x28] sm:$0xf]
      %v2005 = vld [vmem:[%s1993 + $0x2c] sm:$0xf]
      %v2006 = vld [vmem:[%s1993 + $0x30] sm:$0xf]
      %v2007 = vld [vmem:[%s1993 + $0x34] sm:$0xf]
      %v2008 = vld [vmem:[%s1993 + $0x38] sm:$0xf]
      %v2009 = vld [vmem:[%s1993 + $0x3c] sm:$0xf]
      %v2026 = vunpack.c.l.b16 %v1994
      %v2027 = vunpack.c.l.b16 %v1995
      %v2028 = vunpack.c.l.b16 %v1996
      %v2029 = vunpack.c.l.b16 %v1997
      %v2030 = vunpack.c.l.b16 %v1998
      %v2031 = vunpack.c.l.b16 %v1999
      %v2032 = vunpack.c.l.b16 %v2000
      %v2033 = vunpack.c.l.b16 %v2001
      %v2034 = vunpack.c.l.b16 %v2002
      %v2035 = vunpack.c.l.b16 %v2003
      %v2036 = vunpack.c.l.b16 %v2004
      %v2037 = vunpack.c.l.b16 %v2005
      %v2038 = vunpack.c.l.b16 %v2006
      %v2039 = vunpack.c.l.b16 %v2007
      %v2040 = vunpack.c.l.b16 %v2008
      %v2041 = vunpack.c.l.b16 %v2009
      %v2042 = vpack.c.b16 %v2027, %v2026
      %v2043 = vpack.c.b16 %v2029, %v2028
      %v2044 = vpack.c.b16 %v2031, %v2030
      %v2045 = vpack.c.b16 %v2033, %v2032
      %v2046 = vpack.c.b16 %v2035, %v2034
      %v2047 = vpack.c.b16 %v2037, %v2036
      %v2048 = vpack.c.b16 %v2039, %v2038
      %v2049 = vpack.c.b16 %v2041, %v2040
      %2058 = vmatprep.subr.bf16.mxu0 0
      %2059 = vmatpush1.bf16.msra.mxu0 %v2042
      %2060 = vmatprep.subr.bf16.mxu0 0
      %2061 = vmatpush1.bf16.msra.mxu0 %v2043
      %2062 = vmatprep.subr.bf16.mxu0 0
      %2063 = vmatpush1.bf16.msra.mxu0 %v2044
      %2064 = vmatprep.subr.bf16.mxu0 0
      %2065 = vmatpush1.bf16.msra.mxu0 %v2045
      %2066 = vmatprep.subr.bf16.mxu0 0
      %2067 = vmatpush1.bf16.msra.mxu0 %v2046
      %2068 = vmatprep.subr.bf16.mxu0 0
      %2069 = vmatpush1.bf16.msra.mxu0 %v2047
      %2070 = vmatprep.subr.bf16.mxu0 0
      %2071 = vmatpush1.bf16.msra.mxu0 %v2048
      %2072 = vmatprep.subr.bf16.mxu0 0
      %2073 = vmatpush1.bf16.msra.mxu0 %v2049
      %2074 = vmatprep.subr.bf16.mxu0 0
      %2075 = vmatpush1.bf16.msra.mxu0 0
      %2076 = vmatprep.subr.bf16.mxu0 0
      %2077 = vmatpush1.bf16.msra.mxu0 0
      %2078 = vmatprep.subr.bf16.mxu0 0
      %2079 = vmatpush1.bf16.msra.mxu0 0
      %2080 = vmatprep.subr.bf16.mxu0 0
      %2081 = vmatpush1.bf16.msra.mxu0 0
      %2082 = vmatprep.subr.bf16.mxu0 0
      %2083 = vmatpush1.bf16.msra.mxu0 0
      %2084 = vmatprep.subr.bf16.mxu0 0
      %2085 = vmatpush1.bf16.msra.mxu0 0
      %2086 = vmatprep.subr.bf16.mxu0 0
      %2087 = vmatpush1.bf16.msra.mxu0 0
      %2088 = vmatprep.subr.bf16.mxu0 0
      %2089 = vmatpush1.bf16.msra.mxu0 0
      %2090 = vmatprep.mubr.bf16.mxu0 0
      %2091 = vmatmul.mubr.bf16.gmra.mrb[0].mxu0 %v1977
      %v2092 = vpop.f32.mrb[0].mxu0
      %v2093 = vadd.f32 0.0, %v2092
      %v2094 = vpop.f32.mrb[0].mxu0
      %v2095 = vpop.f32.mrb[0].mxu0
      %v2096 = vadd.f32 0.0, %v2095
      %v2097 = vpop.f32.mrb[0].mxu0
      %2098 = vmatprep.mubr.bf16.mxu0 0
      %2099 = vmatmul.mubr.bf16.gmra.mrb[0].mxu0 %v1978
      %v2100 = vpop.f32.mrb[0].mxu0
      %v2101 = vadd.f32 0.0, %v2100
      %v2102 = vpop.f32.mrb[0].mxu0
      %v2103 = vpop.f32.mrb[0].mxu0
      %v2104 = vadd.f32 0.0, %v2103
      %v2105 = vpop.f32.mrb[0].mxu0
      %2106 = vmatprep.mubr.bf16.mxu0 0
      %2107 = vmatmul.mubr.bf16.gmra.mrb[0].mxu0 %v1979
      %v2108 = vpop.f32.mrb[0].mxu0
      %v2109 = vadd.f32 0.0, %v2108
      %v2110 = vpop.f32.mrb[0].mxu0
      %v2111 = vpop.f32.mrb[0].mxu0
      %v2112 = vadd.f32 0.0, %v2111
      %v2113 = vpop.f32.mrb[0].mxu0
      %2114 = vmatprep.mubr.bf16.mxu0 0
      %2115 = vmatmul.mubr.bf16.gmra.mrb[0].mxu0 %v1980
      %v2116 = vpop.f32.mrb[0].mxu0
      %v2117 = vadd.f32 0.0, %v2116
      %v2118 = vpop.f32.mrb[0].mxu0
      %v2119 = vpop.f32.mrb[0].mxu0
      %v2120 = vadd.f32 0.0, %v2119
      %v2121 = vpop.f32.mrb[0].mxu0
      %2122 = vmatprep.mubr.bf16.mxu0 0
      %2123 = vmatmul.mubr.bf16.gmra.mrb[0].mxu0 %v1981
      %v2124 = vpop.f32.mrb[0].mxu0
      %v2125 = vadd.f32 0.0, %v2124
      %v2126 = vpop.f32.mrb[0].mxu0
      %v2127 = vpop.f32.mrb[0].mxu0
      %v2128 = vadd.f32 0.0, %v2127
      %v2129 = vpop.f32.mrb[0].mxu0
      %2130 = vmatprep.mubr.bf16.mxu0 0
      %2131 = vmatmul.mubr.bf16.gmra.mrb[0].mxu0 %v1982
      %v2132 = vpop.f32.mrb[0].mxu0
      %v2133 = vadd.f32 0.0, %v2132
      %v2134 = vpop.f32.mrb[0].mxu0
      %v2135 = vpop.f32.mrb[0].mxu0
      %v2136 = vadd.f32 0.0, %v2135
      %v2137 = vpop.f32.mrb[0].mxu0
      %2138 = vmatprep.mubr.bf16.mxu0 0
      %2139 = vmatmul.mubr.bf16.gmra.mrb[0].mxu0 %v1983
      %v2140 = vpop.f32.mrb[0].mxu0
      %v2141 = vadd.f32 0.0, %v2140
      %v2142 = vpop.f32.mrb[0].mxu0
      %v2143 = vpop.f32.mrb[0].mxu0
      %v2144 = vadd.f32 0.0, %v2143
      %v2145 = vpop.f32.mrb[0].mxu0
      %2146 = vmatprep.mubr.bf16.mxu0 0
      %2147 = vmatmul.mubr.bf16.gmra.mrb[0].mxu0 %v1984
      %v2148 = vpop.f32.mrb[0].mxu0
      %v2149 = vadd.f32 0.0, %v2148
      %v2150 = vpop.f32.mrb[0].mxu0
      %v2151 = vpop.f32.mrb[0].mxu0
      %v2152 = vadd.f32 0.0, %v2151
      %v2153 = vpop.f32.mrb[0].mxu0
      %2154 = vmatprep.mubr.bf16.mxu0 0
      %2155 = vmatmul.mubr.bf16.gmra.mrb[0].mxu0 %v1985
      %v2156 = vpop.f32.mrb[0].mxu0
      %v2157 = vadd.f32 0.0, %v2156
      %v2158 = vpop.f32.mrb[0].mxu0
      %v2159 = vpop.f32.mrb[0].mxu0
      %v2160 = vadd.f32 0.0, %v2159
      %v2161 = vpop.f32.mrb[0].mxu0
      %2162 = vmatprep.mubr.bf16.mxu0 0
      %2163 = vmatmul.mubr.bf16.gmra.mrb[0].mxu0 %v1986
      %v2164 = vpop.f32.mrb[0].mxu0
      %v2165 = vadd.f32 0.0, %v2164
      %v2166 = vpop.f32.mrb[0].mxu0
      %v2167 = vpop.f32.mrb[0].mxu0
      %v2168 = vadd.f32 0.0, %v2167
      %v2169 = vpop.f32.mrb[0].mxu0
      %2170 = vmatprep.mubr.bf16.mxu0 0
      %2171 = vmatmul.mubr.bf16.gmra.mrb[0].mxu0 %v1987
      %v2172 = vpop.f32.mrb[0].mxu0
      %v2173 = vadd.f32 0.0, %v2172
      %v2174 = vpop.f32.mrb[0].mxu0
      %v2175 = vpop.f32.mrb[0].mxu0
      %v2176 = vadd.f32 0.0, %v2175
      %v2177 = vpop.f32.mrb[0].mxu0
      %2178 = vmatprep.mubr.bf16.mxu0 0
      %2179 = vmatmul.mubr.bf16.gmra.mrb[0].mxu0 %v1988
      %v2180 = vpop.f32.mrb[0].mxu0
      %v2181 = vadd.f32 0.0, %v2180
      %v2182 = vpop.f32.mrb[0].mxu0
      %v2183 = vpop.f32.mrb[0].mxu0
      %v2184 = vadd.f32 0.0, %v2183
      %v2185 = vpop.f32.mrb[0].mxu0
      %2186 = vmatprep.mubr.bf16.mxu0 0
      %2187 = vmatmul.mubr.bf16.gmra.mrb[0].mxu0 %v1989
      %v2188 = vpop.f32.mrb[0].mxu0
      %v2189 = vadd.f32 0.0, %v2188
      %v2190 = vpop.f32.mrb[0].mxu0
      %v2191 = vpop.f32.mrb[0].mxu0
      %v2192 = vadd.f32 0.0, %v2191
      %v2193 = vpop.f32.mrb[0].mxu0
      %2194 = vmatprep.mubr.bf16.mxu0 0
      %2195 = vmatmul.mubr.bf16.gmra.mrb[0].mxu0 %v1990
      %v2196 = vpop.f32.mrb[0].mxu0
      %v2197 = vadd.f32 0.0, %v2196
      %v2198 = vpop.f32.mrb[0].mxu0
      %v2199 = vpop.f32.mrb[0].mxu0
      %v2200 = vadd.f32 0.0, %v2199
      %v2201 = vpop.f32.mrb[0].mxu0
      %2202 = vmatprep.mubr.bf16.mxu0 0
      %2203 = vmatmul.mubr.bf16.gmra.mrb[0].mxu0 %v1991
      %v2204 = vpop.f32.mrb[0].mxu0
      %v2205 = vadd.f32 0.0, %v2204
      %v2206 = vpop.f32.mrb[0].mxu0
      %v2207 = vpop.f32.mrb[0].mxu0
      %v2208 = vadd.f32 0.0, %v2207
      %v2209 = vpop.f32.mrb[0].mxu0
      %2210 = vmatprep.mubr.bf16.mxu0 0
      %2211 = vmatmul.mubr.bf16.gmra.mrb[0].mxu0 %v1992
      %v2212 = vpop.f32.mrb[0].mxu0
      %v2213 = vadd.f32 0.0, %v2212
      %v2214 = vpop.f32.mrb[0].mxu0
      %v2215 = vpop.f32.mrb[0].mxu0
      %v2216 = vadd.f32 0.0, %v2215
      %v2217 = vpop.f32.mrb[0].mxu0
      %2218 = vdwg.mxu0
      %v2219 = vadd.f32 %v1912, %v2093
      %v2220 = vadd.f32 %v1913, %v2096
      %v2221 = vadd.f32 %v1914, %v2101
      %v2222 = vadd.f32 %v1915, %v2104
      %v2223 = vadd.f32 %v1916, %v2109
      %v2224 = vadd.f32 %v1917, %v2112
      %v2225 = vadd.f32 %v1918, %v2117
      %v2226 = vadd.f32 %v1919, %v2120
      %v2227 = vadd.f32 %v1920, %v2125
      %v2228 = vadd.f32 %v1921, %v2128
      %v2229 = vadd.f32 %v1922, %v2133
      %v2230 = vadd.f32 %v1923, %v2136
      %v2231 = vadd.f32 %v1924, %v2141
      %v2232 = vadd.f32 %v1925, %v2144
      %v2233 = vadd.f32 %v1926, %v2149
      %v2234 = vadd.f32 %v1927, %v2152
      %v2235 = vadd.f32 %v1928, %v2157
      %v2236 = vadd.f32 %v1929, %v2160
      %v2237 = vadd.f32 %v1930, %v2165
      %v2238 = vadd.f32 %v1931, %v2168
      %v2239 = vadd.f32 %v1932, %v2173
      %v2240 = vadd.f32 %v1933, %v2176
      %v2241 = vadd.f32 %v1934, %v2181
      %v2242 = vadd.f32 %v1935, %v2184
      %v2243 = vadd.f32 %v1936, %v2189
      %v2244 = vadd.f32 %v1937, %v2192
      %v2245 = vadd.f32 %v1938, %v2197
      %v2246 = vadd.f32 %v1939, %v2200
      %v2247 = vadd.f32 %v1940, %v2205
      %v2248 = vadd.f32 %v1941, %v2208
      %v2249 = vadd.f32 %v1942, %v2213
      %v2250 = vadd.f32 %v1943, %v2216
      %v2251 = vld [vmem:[%s1944 + $0x1] sm:$0xff]
      %v2252 = vld [vmem:[%s1944 + $0x9] sm:$0xff]
      %v2253 = vld [vmem:[%s1944 + $0x19] sm:$0xff]
      %v2254 = vld [vmem:[%s1944 + $0x21] sm:$0xff]
      %v2255 = vld [vmem:[%s1944 + $0x31] sm:$0xff]
      %v2256 = vld [vmem:[%s1944 + $0x39] sm:$0xff]
      %v2257 = vld [vmem:[%s1944 + $0x49] sm:$0xff]
      %v2258 = vld [vmem:[%s1944 + $0x51] sm:$0xff]
      %v2259 = vld [vmem:[%s1944 + $0x61] sm:$0xff]
      %v2260 = vld [vmem:[%s1944 + $0x69] sm:$0xff]
      %v2261 = vld [vmem:[%s1944 + $0x79] sm:$0xff]
      %v2262 = vld [vmem:[%s1944 + $0x81] sm:$0xff]
      %v2263 = vld [vmem:[%s1944 + $0x91] sm:$0xff]
      %v2264 = vld [vmem:[%s1944 + $0x99] sm:$0xff]
      %v2265 = vld [vmem:[%s1944 + $0xa9] sm:$0xff]
      %v2266 = vld [vmem:[%s1944 + $0xb1] sm:$0xff]
      %v2267 = vld [vmem:[%s1944 + $0xc1] sm:$0xff]
      %v2268 = vld [vmem:[%s1944 + $0xc9] sm:$0xff]
      %v2269 = vld [vmem:[%s1944 + $0xd9] sm:$0xff]
      %v2270 = vld [vmem:[%s1944 + $0xe1] sm:$0xff]
      %v2271 = vld [vmem:[%s1944 + $0xf1] sm:$0xff]
      %v2272 = vld [vmem:[%s1944 + $0xf9] sm:$0xff]
      %v2273 = vld [vmem:[%s1944 + $0x109] sm:$0xff]
      %v2274 = vld [vmem:[%s1944 + $0x111] sm:$0xff]
      %v2275 = vld [vmem:[%s1944 + $0x121] sm:$0xff]
      %v2276 = vld [vmem:[%s1944 + $0x129] sm:$0xff]
      %v2277 = vld [vmem:[%s1944 + $0x139] sm:$0xff]
      %v2278 = vld [vmem:[%s1944 + $0x141] sm:$0xff]
      %v2279 = vld [vmem:[%s1944 + $0x151] sm:$0xff]
      %v2280 = vld [vmem:[%s1944 + $0x159] sm:$0xff]
      %v2281 = vld [vmem:[%s1944 + $0x169] sm:$0xff]
      %v2282 = vld [vmem:[%s1944 + $0x171] sm:$0xff]
      %v2283 = vpack.c.bf16 %v2252, %v2251
      %v2284 = vpack.c.bf16 %v2254, %v2253
      %v2285 = vpack.c.bf16 %v2256, %v2255
      %v2286 = vpack.c.bf16 %v2258, %v2257
      %v2287 = vpack.c.bf16 %v2260, %v2259
      %v2288 = vpack.c.bf16 %v2262, %v2261
      %v2289 = vpack.c.bf16 %v2264, %v2263
      %v2290 = vpack.c.bf16 %v2266, %v2265
      %v2291 = vpack.c.bf16 %v2268, %v2267
      %v2292 = vpack.c.bf16 %v2270, %v2269
      %v2293 = vpack.c.bf16 %v2272, %v2271
      %v2294 = vpack.c.bf16 %v2274, %v2273
      %v2295 = vpack.c.bf16 %v2276, %v2275
      %v2296 = vpack.c.bf16 %v2278, %v2277
      %v2297 = vpack.c.bf16 %v2280, %v2279
      %v2298 = vpack.c.bf16 %v2282, %v2281
      %s2299 = scalar_lea.vmem %s1, 448
      %v2300 = vld [vmem:[%s2299] sm:$0xf]
      %v2301 = vld [vmem:[%s2299 + $0x4] sm:$0xf]
      %v2302 = vld [vmem:[%s2299 + $0x8] sm:$0xf]
      %v2303 = vld [vmem:[%s2299 + $0xc] sm:$0xf]
      %v2304 = vld [vmem:[%s2299 + $0x10] sm:$0xf]
      %v2305 = vld [vmem:[%s2299 + $0x14] sm:$0xf]
      %v2306 = vld [vmem:[%s2299 + $0x18] sm:$0xf]
      %v2307 = vld [vmem:[%s2299 + $0x1c] sm:$0xf]
      %v2308 = vld [vmem:[%s2299 + $0x20] sm:$0xf]
      %v2309 = vld [vmem:[%s2299 + $0x24] sm:$0xf]
      %v2310 = vld [vmem:[%s2299 + $0x28] sm:$0xf]
      %v2311 = vld [vmem:[%s2299 + $0x2c] sm:$0xf]
      %v2312 = vld [vmem:[%s2299 + $0x30] sm:$0xf]
      %v2313 = vld [vmem:[%s2299 + $0x34] sm:$0xf]
      %v2314 = vld [vmem:[%s2299 + $0x38] sm:$0xf]
      %v2315 = vld [vmem:[%s2299 + $0x3c] sm:$0xf]
      %v2332 = vunpack.c.l.b16 %v2300
      %v2333 = vunpack.c.l.b16 %v2301
      %v2334 = vunpack.c.l.b16 %v2302
      %v2335 = vunpack.c.l.b16 %v2303
      %v2336 = vunpack.c.l.b16 %v2304
      %v2337 = vunpack.c.l.b16 %v2305
      %v2338 = vunpack.c.l.b16 %v2306
      %v2339 = vunpack.c.l.b16 %v2307
      %v2340 = vunpack.c.l.b16 %v2308
      %v2341 = vunpack.c.l.b16 %v2309
      %v2342 = vunpack.c.l.b16 %v2310
      %v2343 = vunpack.c.l.b16 %v2311
      %v2344 = vunpack.c.l.b16 %v2312
      %v2345 = vunpack.c.l.b16 %v2313
      %v2346 = vunpack.c.l.b16 %v2314
      %v2347 = vunpack.c.l.b16 %v2315
      %v2348 = vpack.c.b16 %v2333, %v2332
      %v2349 = vpack.c.b16 %v2335, %v2334
      %v2350 = vpack.c.b16 %v2337, %v2336
      %v2351 = vpack.c.b16 %v2339, %v2338
      %v2352 = vpack.c.b16 %v2341, %v2340
      %v2353 = vpack.c.b16 %v2343, %v2342
      %v2354 = vpack.c.b16 %v2345, %v2344
      %v2355 = vpack.c.b16 %v2347, %v2346
      %2364 = vmatprep.subr.bf16.mxu0 0
      %2365 = vmatpush1.bf16.msra.mxu0 %v2348
      %2366 = vmatprep.subr.bf16.mxu0 0
      %2367 = vmatpush1.bf16.msra.mxu0 %v2349
      %2368 = vmatprep.subr.bf16.mxu0 0
      %2369 = vmatpush1.bf16.msra.mxu0 %v2350
      %2370 = vmatprep.subr.bf16.mxu0 0
      %2371 = vmatpush1.bf16.msra.mxu0 %v2351
      %2372 = vmatprep.subr.bf16.mxu0 0
      %2373 = vmatpush1.bf16.msra.mxu0 %v2352
      %2374 = vmatprep.subr.bf16.mxu0 0
      %2375 = vmatpush1.bf16.msra.mxu0 %v2353
      %2376 = vmatprep.subr.bf16.mxu0 0
      %2377 = vmatpush1.bf16.msra.mxu0 %v2354
      %2378 = vmatprep.subr.bf16.mxu0 0
      %2379 = vmatpush1.bf16.msra.mxu0 %v2355
      %2380 = vmatprep.subr.bf16.mxu0 0
      %2381 = vmatpush1.bf16.msra.mxu0 0
      %2382 = vmatprep.subr.bf16.mxu0 0
      %2383 = vmatpush1.bf16.msra.mxu0 0
      %2384 = vmatprep.subr.bf16.mxu0 0
      %2385 = vmatpush1.bf16.msra.mxu0 0
      %2386 = vmatprep.subr.bf16.mxu0 0
      %2387 = vmatpush1.bf16.msra.mxu0 0
      %2388 = vmatprep.subr.bf16.mxu0 0
      %2389 = vmatpush1.bf16.msra.mxu0 0
      %2390 = vmatprep.subr.bf16.mxu0 0
      %2391 = vmatpush1.bf16.msra.mxu0 0
      %2392 = vmatprep.subr.bf16.mxu0 0
      %2393 = vmatpush1.bf16.msra.mxu0 0
      %2394 = vmatprep.subr.bf16.mxu0 0
      %2395 = vmatpush1.bf16.msra.mxu0 0
      %2396 = vmatprep.mubr.bf16.mxu0 0
      %2397 = vmatmul.mubr.bf16.gmra.mrb[0].mxu0 %v2283
      %v2398 = vpop.f32.mrb[0].mxu0
      %v2399 = vadd.f32 0.0, %v2398
      %v2400 = vpop.f32.mrb[0].mxu0
      %v2401 = vpop.f32.mrb[0].mxu0
      %v2402 = vadd.f32 0.0, %v2401
      %v2403 = vpop.f32.mrb[0].mxu0
      %2404 = vmatprep.mubr.bf16.mxu0 0
      %2405 = vmatmul.mubr.bf16.gmra.mrb[0].mxu0 %v2284
      %v2406 = vpop.f32.mrb[0].mxu0
      %v2407 = vadd.f32 0.0, %v2406
      %v2408 = vpop.f32.mrb[0].mxu0
      %v2409 = vpop.f32.mrb[0].mxu0
      %v2410 = vadd.f32 0.0, %v2409
      %v2411 = vpop.f32.mrb[0].mxu0
      %2412 = vmatprep.mubr.bf16.mxu0 0
      %2413 = vmatmul.mubr.bf16.gmra.mrb[0].mxu0 %v2285
      %v2414 = vpop.f32.mrb[0].mxu0
      %v2415 = vadd.f32 0.0, %v2414
      %v2416 = vpop.f32.mrb[0].mxu0
      %v2417 = vpop.f32.mrb[0].mxu0
      %v2418 = vadd.f32 0.0, %v2417
      %v2419 = vpop.f32.mrb[0].mxu0
      %2420 = vmatprep.mubr.bf16.mxu0 0
      %2421 = vmatmul.mubr.bf16.gmra.mrb[0].mxu0 %v2286
      %v2422 = vpop.f32.mrb[0].mxu0
      %v2423 = vadd.f32 0.0, %v2422
      %v2424 = vpop.f32.mrb[0].mxu0
      %v2425 = vpop.f32.mrb[0].mxu0
      %v2426 = vadd.f32 0.0, %v2425
      %v2427 = vpop.f32.mrb[0].mxu0
      %2428 = vmatprep.mubr.bf16.mxu0 0
      %2429 = vmatmul.mubr.bf16.gmra.mrb[0].mxu0 %v2287
      %v2430 = vpop.f32.mrb[0].mxu0
      %v2431 = vadd.f32 0.0, %v2430
      %v2432 = vpop.f32.mrb[0].mxu0
      %v2433 = vpop.f32.mrb[0].mxu0
      %v2434 = vadd.f32 0.0, %v2433
      %v2435 = vpop.f32.mrb[0].mxu0
      %2436 = vmatprep.mubr.bf16.mxu0 0
      %2437 = vmatmul.mubr.bf16.gmra.mrb[0].mxu0 %v2288
      %v2438 = vpop.f32.mrb[0].mxu0
      %v2439 = vadd.f32 0.0, %v2438
      %v2440 = vpop.f32.mrb[0].mxu0
      %v2441 = vpop.f32.mrb[0].mxu0
      %v2442 = vadd.f32 0.0, %v2441
      %v2443 = vpop.f32.mrb[0].mxu0
      %2444 = vmatprep.mubr.bf16.mxu0 0
      %2445 = vmatmul.mubr.bf16.gmra.mrb[0].mxu0 %v2289
      %v2446 = vpop.f32.mrb[0].mxu0
      %v2447 = vadd.f32 0.0, %v2446
      %v2448 = vpop.f32.mrb[0].mxu0
      %v2449 = vpop.f32.mrb[0].mxu0
      %v2450 = vadd.f32 0.0, %v2449
      %v2451 = vpop.f32.mrb[0].mxu0
      %2452 = vmatprep.mubr.bf16.mxu0 0
      %2453 = vmatmul.mubr.bf16.gmra.mrb[0].mxu0 %v2290
      %v2454 = vpop.f32.mrb[0].mxu0
      %v2455 = vadd.f32 0.0, %v2454
      %v2456 = vpop.f32.mrb[0].mxu0
      %v2457 = vpop.f32.mrb[0].mxu0
      %v2458 = vadd.f32 0.0, %v2457
      %v2459 = vpop.f32.mrb[0].mxu0
      %2460 = vmatprep.mubr.bf16.mxu0 0
      %2461 = vmatmul.mubr.bf16.gmra.mrb[0].mxu0 %v2291
      %v2462 = vpop.f32.mrb[0].mxu0
      %v2463 = vadd.f32 0.0, %v2462
      %v2464 = vpop.f32.mrb[0].mxu0
      %v2465 = vpop.f32.mrb[0].mxu0
      %v2466 = vadd.f32 0.0, %v2465
      %v2467 = vpop.f32.mrb[0].mxu0
      %2468 = vmatprep.mubr.bf16.mxu0 0
      %2469 = vmatmul.mubr.bf16.gmra.mrb[0].mxu0 %v2292
      %v2470 = vpop.f32.mrb[0].mxu0
      %v2471 = vadd.f32 0.0, %v2470
      %v2472 = vpop.f32.mrb[0].mxu0
      %v2473 = vpop.f32.mrb[0].mxu0
      %v2474 = vadd.f32 0.0, %v2473
      %v2475 = vpop.f32.mrb[0].mxu0
      %2476 = vmatprep.mubr.bf16.mxu0 0
      %2477 = vmatmul.mubr.bf16.gmra.mrb[0].mxu0 %v2293
      %v2478 = vpop.f32.mrb[0].mxu0
      %v2479 = vadd.f32 0.0, %v2478
      %v2480 = vpop.f32.mrb[0].mxu0
      %v2481 = vpop.f32.mrb[0].mxu0
      %v2482 = vadd.f32 0.0, %v2481
      %v2483 = vpop.f32.mrb[0].mxu0
      %2484 = vmatprep.mubr.bf16.mxu0 0
      %2485 = vmatmul.mubr.bf16.gmra.mrb[0].mxu0 %v2294
      %v2486 = vpop.f32.mrb[0].mxu0
      %v2487 = vadd.f32 0.0, %v2486
      %v2488 = vpop.f32.mrb[0].mxu0
      %v2489 = vpop.f32.mrb[0].mxu0
      %v2490 = vadd.f32 0.0, %v2489
      %v2491 = vpop.f32.mrb[0].mxu0
      %2492 = vmatprep.mubr.bf16.mxu0 0
      %2493 = vmatmul.mubr.bf16.gmra.mrb[0].mxu0 %v2295
      %v2494 = vpop.f32.mrb[0].mxu0
      %v2495 = vadd.f32 0.0, %v2494
      %v2496 = vpop.f32.mrb[0].mxu0
      %v2497 = vpop.f32.mrb[0].mxu0
      %v2498 = vadd.f32 0.0, %v2497
      %v2499 = vpop.f32.mrb[0].mxu0
      %2500 = vmatprep.mubr.bf16.mxu0 0
      %2501 = vmatmul.mubr.bf16.gmra.mrb[0].mxu0 %v2296
      %v2502 = vpop.f32.mrb[0].mxu0
      %v2503 = vadd.f32 0.0, %v2502
      %v2504 = vpop.f32.mrb[0].mxu0
      %v2505 = vpop.f32.mrb[0].mxu0
      %v2506 = vadd.f32 0.0, %v2505
      %v2507 = vpop.f32.mrb[0].mxu0
      %2508 = vmatprep.mubr.bf16.mxu0 0
      %2509 = vmatmul.mubr.bf16.gmra.mrb[0].mxu0 %v2297
      %v2510 = vpop.f32.mrb[0].mxu0
      %v2511 = vadd.f32 0.0, %v2510
      %v2512 = vpop.f32.mrb[0].mxu0
      %v2513 = vpop.f32.mrb[0].mxu0
      %v2514 = vadd.f32 0.0, %v2513
      %v2515 = vpop.f32.mrb[0].mxu0
      %2516 = vmatprep.mubr.bf16.mxu0 0
      %2517 = vmatmul.mubr.bf16.gmra.mrb[0].mxu0 %v2298
      %v2518 = vpop.f32.mrb[0].mxu0
      %v2519 = vadd.f32 0.0, %v2518
      %v2520 = vpop.f32.mrb[0].mxu0
      %v2521 = vpop.f32.mrb[0].mxu0
      %v2522 = vadd.f32 0.0, %v2521
      %v2523 = vpop.f32.mrb[0].mxu0
      %2524 = vdwg.mxu0
      %v2525 = vadd.f32 %v2219, %v2399
      %v2526 = vadd.f32 %v2220, %v2402
      %v2527 = vadd.f32 %v2221, %v2407
      %v2528 = vadd.f32 %v2222, %v2410
      %v2529 = vadd.f32 %v2223, %v2415
      %v2530 = vadd.f32 %v2224, %v2418
      %v2531 = vadd.f32 %v2225, %v2423
      %v2532 = vadd.f32 %v2226, %v2426
      %v2533 = vadd.f32 %v2227, %v2431
      %v2534 = vadd.f32 %v2228, %v2434
      %v2535 = vadd.f32 %v2229, %v2439
      %v2536 = vadd.f32 %v2230, %v2442
      %v2537 = vadd.f32 %v2231, %v2447
      %v2538 = vadd.f32 %v2232, %v2450
      %v2539 = vadd.f32 %v2233, %v2455
      %v2540 = vadd.f32 %v2234, %v2458
      %v2541 = vadd.f32 %v2235, %v2463
      %v2542 = vadd.f32 %v2236, %v2466
      %v2543 = vadd.f32 %v2237, %v2471
      %v2544 = vadd.f32 %v2238, %v2474
      %v2545 = vadd.f32 %v2239, %v2479
      %v2546 = vadd.f32 %v2240, %v2482
      %v2547 = vadd.f32 %v2241, %v2487
      %v2548 = vadd.f32 %v2242, %v2490
      %v2549 = vadd.f32 %v2243, %v2495
      %v2550 = vadd.f32 %v2244, %v2498
      %v2551 = vadd.f32 %v2245, %v2503
      %v2552 = vadd.f32 %v2246, %v2506
      %v2553 = vadd.f32 %v2247, %v2511
      %v2554 = vadd.f32 %v2248, %v2514
      %v2555 = vadd.f32 %v2249, %v2519
      %v2556 = vadd.f32 %v2250, %v2522
      %v2557 = vld [vmem:[%s1944 + $0x2] sm:$0xff]
      %v2558 = vld [vmem:[%s1944 + $0xa] sm:$0xff]
      %v2559 = vld [vmem:[%s1944 + $0x1a] sm:$0xff]
      %v2560 = vld [vmem:[%s1944 + $0x22] sm:$0xff]
      %v2561 = vld [vmem:[%s1944 + $0x32] sm:$0xff]
      %v2562 = vld [vmem:[%s1944 + $0x3a] sm:$0xff]
      %v2563 = vld [vmem:[%s1944 + $0x4a] sm:$0xff]
      %v2564 = vld [vmem:[%s1944 + $0x52] sm:$0xff]
      %v2565 = vld [vmem:[%s1944 + $0x62] sm:$0xff]
      %v2566 = vld [vmem:[%s1944 + $0x6a] sm:$0xff]
      %v2567 = vld [vmem:[%s1944 + $0x7a] sm:$0xff]
      %v2568 = vld [vmem:[%s1944 + $0x82] sm:$0xff]
      %v2569 = vld [vmem:[%s1944 + $0x92] sm:$0xff]
      %v2570 = vld [vmem:[%s1944 + $0x9a] sm:$0xff]
      %v2571 = vld [vmem:[%s1944 + $0xaa] sm:$0xff]
      %v2572 = vld [vmem:[%s1944 + $0xb2] sm:$0xff]
      %v2573 = vld [vmem:[%s1944 + $0xc2] sm:$0xff]
      %v2574 = vld [vmem:[%s1944 + $0xca] sm:$0xff]
      %v2575 = vld [vmem:[%s1944 + $0xda] sm:$0xff]
      %v2576 = vld [vmem:[%s1944 + $0xe2] sm:$0xff]
      %v2577 = vld [vmem:[%s1944 + $0xf2] sm:$0xff]
      %v2578 = vld [vmem:[%s1944 + $0xfa] sm:$0xff]
      %v2579 = vld [vmem:[%s1944 + $0x10a] sm:$0xff]
      %v2580 = vld [vmem:[%s1944 + $0x112] sm:$0xff]
      %v2581 = vld [vmem:[%s1944 + $0x122] sm:$0xff]
      %v2582 = vld [vmem:[%s1944 + $0x12a] sm:$0xff]
      %v2583 = vld [vmem:[%s1944 + $0x13a] sm:$0xff]
      %v2584 = vld [vmem:[%s1944 + $0x142] sm:$0xff]
      %v2585 = vld [vmem:[%s1944 + $0x152] sm:$0xff]
      %v2586 = vld [vmem:[%s1944 + $0x15a] sm:$0xff]
      %v2587 = vld [vmem:[%s1944 + $0x16a] sm:$0xff]
      %v2588 = vld [vmem:[%s1944 + $0x172] sm:$0xff]
      %v2589 = vpack.c.bf16 %v2558, %v2557
      %v2590 = vpack.c.bf16 %v2560, %v2559
      %v2591 = vpack.c.bf16 %v2562, %v2561
      %v2592 = vpack.c.bf16 %v2564, %v2563
      %v2593 = vpack.c.bf16 %v2566, %v2565
      %v2594 = vpack.c.bf16 %v2568, %v2567
      %v2595 = vpack.c.bf16 %v2570, %v2569
      %v2596 = vpack.c.bf16 %v2572, %v2571
      %v2597 = vpack.c.bf16 %v2574, %v2573
      %v2598 = vpack.c.bf16 %v2576, %v2575
      %v2599 = vpack.c.bf16 %v2578, %v2577
      %v2600 = vpack.c.bf16 %v2580, %v2579
      %v2601 = vpack.c.bf16 %v2582, %v2581
      %v2602 = vpack.c.bf16 %v2584, %v2583
      %v2603 = vpack.c.bf16 %v2586, %v2585
      %v2604 = vpack.c.bf16 %v2588, %v2587
      %s2605 = scalar_lea.vmem %s1, 512
      %v2606 = vld [vmem:[%s2605] sm:$0xf]
      %v2607 = vld [vmem:[%s2605 + $0x4] sm:$0xf]
      %v2608 = vld [vmem:[%s2605 + $0x8] sm:$0xf]
      %v2609 = vld [vmem:[%s2605 + $0xc] sm:$0xf]
      %v2610 = vld [vmem:[%s2605 + $0x10] sm:$0xf]
      %v2611 = vld [vmem:[%s2605 + $0x14] sm:$0xf]
      %v2612 = vld [vmem:[%s2605 + $0x18] sm:$0xf]
      %v2613 = vld [vmem:[%s2605 + $0x1c] sm:$0xf]
      %v2614 = vld [vmem:[%s2605 + $0x20] sm:$0xf]
      %v2615 = vld [vmem:[%s2605 + $0x24] sm:$0xf]
      %v2616 = vld [vmem:[%s2605 + $0x28] sm:$0xf]
      %v2617 = vld [vmem:[%s2605 + $0x2c] sm:$0xf]
      %v2618 = vld [vmem:[%s2605 + $0x30] sm:$0xf]
      %v2619 = vld [vmem:[%s2605 + $0x34] sm:$0xf]
      %v2620 = vld [vmem:[%s2605 + $0x38] sm:$0xf]
      %v2621 = vld [vmem:[%s2605 + $0x3c] sm:$0xf]
      %v2638 = vunpack.c.l.b16 %v2606
      %v2639 = vunpack.c.l.b16 %v2607
      %v2640 = vunpack.c.l.b16 %v2608
      %v2641 = vunpack.c.l.b16 %v2609
      %v2642 = vunpack.c.l.b16 %v2610
      %v2643 = vunpack.c.l.b16 %v2611
      %v2644 = vunpack.c.l.b16 %v2612
      %v2645 = vunpack.c.l.b16 %v2613
      %v2646 = vunpack.c.l.b16 %v2614
      %v2647 = vunpack.c.l.b16 %v2615
      %v2648 = vunpack.c.l.b16 %v2616
      %v2649 = vunpack.c.l.b16 %v2617
      %v2650 = vunpack.c.l.b16 %v2618
      %v2651 = vunpack.c.l.b16 %v2619
      %v2652 = vunpack.c.l.b16 %v2620
      %v2653 = vunpack.c.l.b16 %v2621
      %v2654 = vpack.c.b16 %v2639, %v2638
      %v2655 = vpack.c.b16 %v2641, %v2640
      %v2656 = vpack.c.b16 %v2643, %v2642
      %v2657 = vpack.c.b16 %v2645, %v2644
      %v2658 = vpack.c.b16 %v2647, %v2646
      %v2659 = vpack.c.b16 %v2649, %v2648
      %v2660 = vpack.c.b16 %v2651, %v2650
      %v2661 = vpack.c.b16 %v2653, %v2652
      %2670 = vmatprep.subr.bf16.mxu0 0
      %2671 = vmatpush1.bf16.msra.mxu0 %v2654
      %2672 = vmatprep.subr.bf16.mxu0 0
      %2673 = vmatpush1.bf16.msra.mxu0 %v2655
      %2674 = vmatprep.subr.bf16.mxu0 0
      %2675 = vmatpush1.bf16.msra.mxu0 %v2656
      %2676 = vmatprep.subr.bf16.mxu0 0
      %2677 = vmatpush1.bf16.msra.mxu0 %v2657
      %2678 = vmatprep.subr.bf16.mxu0 0
      %2679 = vmatpush1.bf16.msra.mxu0 %v2658
      %2680 = vmatprep.subr.bf16.mxu0 0
      %2681 = vmatpush1.bf16.msra.mxu0 %v2659
      %2682 = vmatprep.subr.bf16.mxu0 0
      %2683 = vmatpush1.bf16.msra.mxu0 %v2660
      %2684 = vmatprep.subr.bf16.mxu0 0
      %2685 = vmatpush1.bf16.msra.mxu0 %v2661
      %2686 = vmatprep.subr.bf16.mxu0 0
      %2687 = vmatpush1.bf16.msra.mxu0 0
      %2688 = vmatprep.subr.bf16.mxu0 0
      %2689 = vmatpush1.bf16.msra.mxu0 0
      %2690 = vmatprep.subr.bf16.mxu0 0
      %2691 = vmatpush1.bf16.msra.mxu0 0
      %2692 = vmatprep.subr.bf16.mxu0 0
      %2693 = vmatpush1.bf16.msra.mxu0 0
      %2694 = vmatprep.subr.bf16.mxu0 0
      %2695 = vmatpush1.bf16.msra.mxu0 0
      %2696 = vmatprep.subr.bf16.mxu0 0
      %2697 = vmatpush1.bf16.msra.mxu0 0
      %2698 = vmatprep.subr.bf16.mxu0 0
      %2699 = vmatpush1.bf16.msra.mxu0 0
      %2700 = vmatprep.subr.bf16.mxu0 0
      %2701 = vmatpush1.bf16.msra.mxu0 0
      %2702 = vmatprep.mubr.bf16.mxu0 0
      %2703 = vmatmul.mubr.bf16.gmra.mrb[0].mxu0 %v2589
      %v2704 = vpop.f32.mrb[0].mxu0
      %v2705 = vadd.f32 0.0, %v2704
      %v2706 = vpop.f32.mrb[0].mxu0
      %v2707 = vpop.f32.mrb[0].mxu0
      %v2708 = vadd.f32 0.0, %v2707
      %v2709 = vpop.f32.mrb[0].mxu0
      %2710 = vmatprep.mubr.bf16.mxu0 0
      %2711 = vmatmul.mubr.bf16.gmra.mrb[0].mxu0 %v2590
      %v2712 = vpop.f32.mrb[0].mxu0
      %v2713 = vadd.f32 0.0, %v2712
      %v2714 = vpop.f32.mrb[0].mxu0
      %v2715 = vpop.f32.mrb[0].mxu0
      %v2716 = vadd.f32 0.0, %v2715
      %v2717 = vpop.f32.mrb[0].mxu0
      %2718 = vmatprep.mubr.bf16.mxu0 0
      %2719 = vmatmul.mubr.bf16.gmra.mrb[0].mxu0 %v2591
      %v2720 = vpop.f32.mrb[0].mxu0
      %v2721 = vadd.f32 0.0, %v2720
      %v2722 = vpop.f32.mrb[0].mxu0
      %v2723 = vpop.f32.mrb[0].mxu0
      %v2724 = vadd.f32 0.0, %v2723
      %v2725 = vpop.f32.mrb[0].mxu0
      %2726 = vmatprep.mubr.bf16.mxu0 0
      %2727 = vmatmul.mubr.bf16.gmra.mrb[0].mxu0 %v2592
      %v2728 = vpop.f32.mrb[0].mxu0
      %v2729 = vadd.f32 0.0, %v2728
      %v2730 = vpop.f32.mrb[0].mxu0
      %v2731 = vpop.f32.mrb[0].mxu0
      %v2732 = vadd.f32 0.0, %v2731
      %v2733 = vpop.f32.mrb[0].mxu0
      %2734 = vmatprep.mubr.bf16.mxu0 0
      %2735 = vmatmul.mubr.bf16.gmra.mrb[0].mxu0 %v2593
      %v2736 = vpop.f32.mrb[0].mxu0
      %v2737 = vadd.f32 0.0, %v2736
      %v2738 = vpop.f32.mrb[0].mxu0
      %v2739 = vpop.f32.mrb[0].mxu0
      %v2740 = vadd.f32 0.0, %v2739
      %v2741 = vpop.f32.mrb[0].mxu0
      %2742 = vmatprep.mubr.bf16.mxu0 0
      %2743 = vmatmul.mubr.bf16.gmra.mrb[0].mxu0 %v2594
      %v2744 = vpop.f32.mrb[0].mxu0
      %v2745 = vadd.f32 0.0, %v2744
      %v2746 = vpop.f32.mrb[0].mxu0
      %v2747 = vpop.f32.mrb[0].mxu0
      %v2748 = vadd.f32 0.0, %v2747
      %v2749 = vpop.f32.mrb[0].mxu0
      %2750 = vmatprep.mubr.bf16.mxu0 0
      %2751 = vmatmul.mubr.bf16.gmra.mrb[0].mxu0 %v2595
      %v2752 = vpop.f32.mrb[0].mxu0
      %v2753 = vadd.f32 0.0, %v2752
      %v2754 = vpop.f32.mrb[0].mxu0
      %v2755 = vpop.f32.mrb[0].mxu0
      %v2756 = vadd.f32 0.0, %v2755
      %v2757 = vpop.f32.mrb[0].mxu0
      %2758 = vmatprep.mubr.bf16.mxu0 0
      %2759 = vmatmul.mubr.bf16.gmra.mrb[0].mxu0 %v2596
      %v2760 = vpop.f32.mrb[0].mxu0
      %v2761 = vadd.f32 0.0, %v2760
      %v2762 = vpop.f32.mrb[0].mxu0
      %v2763 = vpop.f32.mrb[0].mxu0
      %v2764 = vadd.f32 0.0, %v2763
      %v2765 = vpop.f32.mrb[0].mxu0
      %2766 = vmatprep.mubr.bf16.mxu0 0
      %2767 = vmatmul.mubr.bf16.gmra.mrb[0].mxu0 %v2597
      %v2768 = vpop.f32.mrb[0].mxu0
      %v2769 = vadd.f32 0.0, %v2768
      %v2770 = vpop.f32.mrb[0].mxu0
      %v2771 = vpop.f32.mrb[0].mxu0
      %v2772 = vadd.f32 0.0, %v2771
      %v2773 = vpop.f32.mrb[0].mxu0
      %2774 = vmatprep.mubr.bf16.mxu0 0
      %2775 = vmatmul.mubr.bf16.gmra.mrb[0].mxu0 %v2598
      %v2776 = vpop.f32.mrb[0].mxu0
      %v2777 = vadd.f32 0.0, %v2776
      %v2778 = vpop.f32.mrb[0].mxu0
      %v2779 = vpop.f32.mrb[0].mxu0
      %v2780 = vadd.f32 0.0, %v2779
      %v2781 = vpop.f32.mrb[0].mxu0
      %2782 = vmatprep.mubr.bf16.mxu0 0
      %2783 = vmatmul.mubr.bf16.gmra.mrb[0].mxu0 %v2599
      %v2784 = vpop.f32.mrb[0].mxu0
      %v2785 = vadd.f32 0.0, %v2784
      %v2786 = vpop.f32.mrb[0].mxu0
      %v2787 = vpop.f32.mrb[0].mxu0
      %v2788 = vadd.f32 0.0, %v2787
      %v2789 = vpop.f32.mrb[0].mxu0
      %2790 = vmatprep.mubr.bf16.mxu0 0
      %2791 = vmatmul.mubr.bf16.gmra.mrb[0].mxu0 %v2600
      %v2792 = vpop.f32.mrb[0].mxu0
      %v2793 = vadd.f32 0.0, %v2792
      %v2794 = vpop.f32.mrb[0].mxu0
      %v2795 = vpop.f32.mrb[0].mxu0
      %v2796 = vadd.f32 0.0, %v2795
      %v2797 = vpop.f32.mrb[0].mxu0
      %2798 = vmatprep.mubr.bf16.mxu0 0
      %2799 = vmatmul.mubr.bf16.gmra.mrb[0].mxu0 %v2601
      %v2800 = vpop.f32.mrb[0].mxu0
      %v2801 = vadd.f32 0.0, %v2800
      %v2802 = vpop.f32.mrb[0].mxu0
      %v2803 = vpop.f32.mrb[0].mxu0
      %v2804 = vadd.f32 0.0, %v2803
      %v2805 = vpop.f32.mrb[0].mxu0
      %2806 = vmatprep.mubr.bf16.mxu0 0
      %2807 = vmatmul.mubr.bf16.gmra.mrb[0].mxu0 %v2602
      %v2808 = vpop.f32.mrb[0].mxu0
      %v2809 = vadd.f32 0.0, %v2808
      %v2810 = vpop.f32.mrb[0].mxu0
      %v2811 = vpop.f32.mrb[0].mxu0
      %v2812 = vadd.f32 0.0, %v2811
      %v2813 = vpop.f32.mrb[0].mxu0
      %2814 = vmatprep.mubr.bf16.mxu0 0
      %2815 = vmatmul.mubr.bf16.gmra.mrb[0].mxu0 %v2603
      %v2816 = vpop.f32.mrb[0].mxu0
      %v2817 = vadd.f32 0.0, %v2816
      %v2818 = vpop.f32.mrb[0].mxu0
      %v2819 = vpop.f32.mrb[0].mxu0
      %v2820 = vadd.f32 0.0, %v2819
      %v2821 = vpop.f32.mrb[0].mxu0
      %2822 = vmatprep.mubr.bf16.mxu0 0
      %2823 = vmatmul.mubr.bf16.gmra.mrb[0].mxu0 %v2604
      %v2824 = vpop.f32.mrb[0].mxu0
      %v2825 = vadd.f32 0.0, %v2824
      %v2826 = vpop.f32.mrb[0].mxu0
      %v2827 = vpop.f32.mrb[0].mxu0
      %v2828 = vadd.f32 0.0, %v2827
      %v2829 = vpop.f32.mrb[0].mxu0
      %2830 = vdwg.mxu0
      %v2831 = vadd.f32 %v2525, %v2705
      %v2832 = vadd.f32 %v2526, %v2708
      %v2833 = vadd.f32 %v2527, %v2713
      %v2834 = vadd.f32 %v2528, %v2716
      %v2835 = vadd.f32 %v2529, %v2721
      %v2836 = vadd.f32 %v2530, %v2724
      %v2837 = vadd.f32 %v2531, %v2729
      %v2838 = vadd.f32 %v2532, %v2732
      %v2839 = vadd.f32 %v2533, %v2737
      %v2840 = vadd.f32 %v2534, %v2740
      %v2841 = vadd.f32 %v2535, %v2745
      %v2842 = vadd.f32 %v2536, %v2748
      %v2843 = vadd.f32 %v2537, %v2753
      %v2844 = vadd.f32 %v2538, %v2756
      %v2845 = vadd.f32 %v2539, %v2761
      %v2846 = vadd.f32 %v2540, %v2764
      %v2847 = vadd.f32 %v2541, %v2769
      %v2848 = vadd.f32 %v2542, %v2772
      %v2849 = vadd.f32 %v2543, %v2777
      %v2850 = vadd.f32 %v2544, %v2780
      %v2851 = vadd.f32 %v2545, %v2785
      %v2852 = vadd.f32 %v2546, %v2788
      %v2853 = vadd.f32 %v2547, %v2793
      %v2854 = vadd.f32 %v2548, %v2796
      %v2855 = vadd.f32 %v2549, %v2801
      %v2856 = vadd.f32 %v2550, %v2804
      %v2857 = vadd.f32 %v2551, %v2809
      %v2858 = vadd.f32 %v2552, %v2812
      %v2859 = vadd.f32 %v2553, %v2817
      %v2860 = vadd.f32 %v2554, %v2820
      %v2861 = vadd.f32 %v2555, %v2825
      %v2862 = vadd.f32 %v2556, %v2828
      %v2863 = vld [vmem:[%s2] sm:$0x1]
      %v2865 = vlaneseq
      %v2866 = vshrl.u32 %v2865, 7
      %v2867 = vsub.s32 0, %v2866
      %v2868 = vrot.slane %v2863, %v2867
      %v2870 = vadd.f32 %v2831, %v2868
      %v2871 = vadd.f32 %v2832, %v2868
      %v2872 = vadd.f32 %v2833, %v2868
      %v2873 = vadd.f32 %v2834, %v2868
      %v2874 = vadd.f32 %v2835, %v2868
      %v2875 = vadd.f32 %v2836, %v2868
      %v2876 = vadd.f32 %v2837, %v2868
      %v2877 = vadd.f32 %v2838, %v2868
      %v2878 = vadd.f32 %v2839, %v2868
      %v2879 = vadd.f32 %v2840, %v2868
      %v2880 = vadd.f32 %v2841, %v2868
      %v2881 = vadd.f32 %v2842, %v2868
      %v2882 = vadd.f32 %v2843, %v2868
      %v2883 = vadd.f32 %v2844, %v2868
      %v2884 = vadd.f32 %v2845, %v2868
      %v2885 = vadd.f32 %v2846, %v2868
      %v2886 = vadd.f32 %v2847, %v2868
      %v2887 = vadd.f32 %v2848, %v2868
      %v2888 = vadd.f32 %v2849, %v2868
      %v2889 = vadd.f32 %v2850, %v2868
      %v2890 = vadd.f32 %v2851, %v2868
      %v2891 = vadd.f32 %v2852, %v2868
      %v2892 = vadd.f32 %v2853, %v2868
      %v2893 = vadd.f32 %v2854, %v2868
      %v2894 = vadd.f32 %v2855, %v2868
      %v2895 = vadd.f32 %v2856, %v2868
      %v2896 = vadd.f32 %v2857, %v2868
      %v2897 = vadd.f32 %v2858, %v2868
      %v2898 = vadd.f32 %v2859, %v2868
      %v2899 = vadd.f32 %v2860, %v2868
      %v2900 = vadd.f32 %v2861, %v2868
      %v2901 = vadd.f32 %v2862, %v2868
      %v2902 = vmax.f32 %v2870, 0.0
      %v2903 = vmax.f32 %v2871, 0.0
      %v2904 = vmax.f32 %v2872, 0.0
      %v2905 = vmax.f32 %v2873, 0.0
      %v2906 = vmax.f32 %v2874, 0.0
      %v2907 = vmax.f32 %v2875, 0.0
      %v2908 = vmax.f32 %v2876, 0.0
      %v2909 = vmax.f32 %v2877, 0.0
      %v2910 = vmax.f32 %v2878, 0.0
      %v2911 = vmax.f32 %v2879, 0.0
      %v2912 = vmax.f32 %v2880, 0.0
      %v2913 = vmax.f32 %v2881, 0.0
      %v2914 = vmax.f32 %v2882, 0.0
      %v2915 = vmax.f32 %v2883, 0.0
      %v2916 = vmax.f32 %v2884, 0.0
      %v2917 = vmax.f32 %v2885, 0.0
      %v2918 = vmax.f32 %v2886, 0.0
      %v2919 = vmax.f32 %v2887, 0.0
      %v2920 = vmax.f32 %v2888, 0.0
      %v2921 = vmax.f32 %v2889, 0.0
      %v2922 = vmax.f32 %v2890, 0.0
      %v2923 = vmax.f32 %v2891, 0.0
      %v2924 = vmax.f32 %v2892, 0.0
      %v2925 = vmax.f32 %v2893, 0.0
      %v2926 = vmax.f32 %v2894, 0.0
      %v2927 = vmax.f32 %v2895, 0.0
      %v2928 = vmax.f32 %v2896, 0.0
      %v2929 = vmax.f32 %v2897, 0.0
      %v2930 = vmax.f32 %v2898, 0.0
      %v2931 = vmax.f32 %v2899, 0.0
      %v2932 = vmax.f32 %v2900, 0.0
      %v2933 = vmax.f32 %v2901, 0.0
      %2934 = vst [vmem:[%s170] sm:$0xff] %v2902
      %2935 = vst [vmem:[%s170 + $0x8] sm:$0xff] %v2903
      %2936 = vst [vmem:[%s170 + $0x10] sm:$0xff] %v2904
      %2937 = vst [vmem:[%s170 + $0x18] sm:$0xff] %v2905
      %2938 = vst [vmem:[%s170 + $0x20] sm:$0xff] %v2906
      %2939 = vst [vmem:[%s170 + $0x28] sm:$0xff] %v2907
      %2940 = vst [vmem:[%s170 + $0x30] sm:$0xff] %v2908
      %2941 = vst [vmem:[%s170 + $0x38] sm:$0xff] %v2909
      %2942 = vst [vmem:[%s170 + $0x40] sm:$0xff] %v2910
      %2943 = vst [vmem:[%s170 + $0x48] sm:$0xff] %v2911
      %2944 = vst [vmem:[%s170 + $0x50] sm:$0xff] %v2912
      %2945 = vst [vmem:[%s170 + $0x58] sm:$0xff] %v2913
      %2946 = vst [vmem:[%s170 + $0x60] sm:$0xff] %v2914
      %2947 = vst [vmem:[%s170 + $0x68] sm:$0xff] %v2915
      %2948 = vst [vmem:[%s170 + $0x70] sm:$0xff] %v2916
      %2949 = vst [vmem:[%s170 + $0x78] sm:$0xff] %v2917
      %2950 = vst [vmem:[%s170 + $0x80] sm:$0xff] %v2918
      %2951 = vst [vmem:[%s170 + $0x88] sm:$0xff] %v2919
      %2952 = vst [vmem:[%s170 + $0x90] sm:$0xff] %v2920
      %2953 = vst [vmem:[%s170 + $0x98] sm:$0xff] %v2921
      %2954 = vst [vmem:[%s170 + $0xa0] sm:$0xff] %v2922
      %2955 = vst [vmem:[%s170 + $0xa8] sm:$0xff] %v2923
      %2956 = vst [vmem:[%s170 + $0xb0] sm:$0xff] %v2924
      %2957 = vst [vmem:[%s170 + $0xb8] sm:$0xff] %v2925
      %2958 = vst [vmem:[%s170 + $0xc0] sm:$0xff] %v2926
      %2959 = vst [vmem:[%s170 + $0xc8] sm:$0xff] %v2927
      %2960 = vst [vmem:[%s170 + $0xd0] sm:$0xff] %v2928
      %2961 = vst [vmem:[%s170 + $0xd8] sm:$0xff] %v2929
      %2962 = vst [vmem:[%s170 + $0xe0] sm:$0xff] %v2930
      %2963 = vst [vmem:[%s170 + $0xe8] sm:$0xff] %v2931
      %2964 = vst [vmem:[%s170 + $0xf0] sm:$0xff] %v2932
      %2965 = vst [vmem:[%s170 + $0xf8] sm:$0xff] %v2933
      %p2966 = scmp.lt.s32.totalorder %s14, 1
      %s2967 = scalar_select %p2966, %s14, 1
      %s2968 = smul.addr %s2967, 32
      %s2969 = smul.addr %s2968, 8
      %s2970 = scalar_lea.vmem %s3, %s2969
      // Predicated region
      $region33: #{_lambda_.4} parent=31 // pred_check
        %p2971 = pneg %p100
      $region34: #{_lambda_.4} parent=31 // pred_check_branch
        %2973 = sbr.rel (%p2971) target = $region36
      $region35: #{_lambda_.4} parent=31 // pred_region
        _
      $region36: #{_lambda_.4} parent=31 // pred_fallthru
        _
    $region32: #{_lambda_.4} parent=5 // pred_fallthru
      _
    %p2974 = scmp.le.s32.totalorder 2, %s9
    // Predicated region
    $region37: #{_lambda_.4} parent=5 // pred_check
      %p2975 = pneg %p2974
    $region38: #{_lambda_.4} parent=5 // pred_check_branch
      %2977 = sbr.rel (%p2975) target = $region40
    $region39: #{_lambda_.4} parent=5 // pred_region
      %s2978 = ssub.s32 %s9, 2
      // Predicated region
      $region41: #{_lambda_.4} parent=39 // pred_check
        %p2979 = pneg %p106
      $region42: #{_lambda_.4} parent=39 // pred_check_branch
        %2981 = sbr.rel (%p2979) target = $region44
      $region43: #{_lambda_.4} parent=39 // pred_region
        %p2982 = scmp.lt.s32.totalorder %s15, 1
        %s2983 = scalar_select %p2982, %s15, 1
        %s2984 = smul.addr %s2983, 32
        %s2985 = smul.addr %s2984, 8
        %s2986 = scalar_lea.vmem %s3, %s2985
      $region44: #{_lambda_.4} parent=39 // pred_fallthru
        _
    $region40: #{_lambda_.4} parent=5 // pred_fallthru
      _
  $region6: #{_lambda_.4} parent=0 // loop_footer
    %s13 = sadd.s32 1, %s9
  $region7: #{_lambda_.4} parent=0 // loop_footer_branch
    %8 = sbr.rel target = $region3
  $region8: #{_lambda_.4} parent=0 // loop_exit
    _

// kernel: _lambda_.5
$region0: #{_lambda_.5}
  #allocation0 [shape = 'u32[]', space=smem, size = 0x4, offset = 0x4, fixed_abs, tag = 'smem constant byte address 0x4 - core index']
  #allocation1 [shape = 'u32[144,128]{1,0:T(1,128)}', space=vmem, size = 0x12000, scoped, tag = 'internal scratch']
  %s0 = inlined_call_operand.vmem [shape: f32[2,18,18,128], index: 0, kind: input, shape index: {}]
  %s1 = inlined_call_operand.vmem [shape: f32[2,16,16,128], index: 1, kind: input, shape index: {}]
  %s2 = inlined_call_operand.vmem [shape: bf16[9,128,128], index: 2, kind: input, shape index: {}]
  %s3 = inlined_call_operand.vmem [shape: f32[1,128], index: 3, kind: input, shape index: {}]
  %s4 = inlined_call_operand.vmem [shape: bf16[128,128], index: 4, kind: input, shape index: {}]
  %s5 = inlined_call_operand.vmem [shape: f32[1,128], index: 5, kind: input, shape index: {}]
  %s6 = inlined_call_operand.hbm [shape: f32[2,1,128], index: 6, kind: output, shape index: {}]
  %s7 = sld [smem:[#allocation0]]
  $region57: #{_lambda_.5} parent=0
    _
  %s9 = ssub.s32 1, %s7
  %s10 = scalar_select 0, %s9, %s7
  $region1: #{_lambda_.5} parent=0
    #allocation2 [shape = 'u8[1024]{0}', space=vmem, size = 0x400, scoped, tag = 'output window, operand 0']
    #allocation3 [shape = 's32[2]{0}', space=sflag, size = 0x8, scoped, tag = 'scoped memory for _lambda_.5']
    %11 = vsyncpa [#allocation3], 0
    %s12 = scalar_lea.sflag [#allocation3], 1
    %13 = vsyncpa %s12, 0
    loop: start=0, step=1, limit=4
    $region2: #{_lambda_.5} parent=1 // loop_pre_header
      _
    $region3: #{_lambda_.5} parent=1 // loop_header
      %s15 = sphi 0, %s19
      %p16 = scmp.ge.s32.totalorder %s15, 4
      %s25 = sphi 0, %s27
      %s28 = sphi 0, %s25
      %s29 = sphi 0, %s28
      %s45 = sphi 0, %s29
      %s51 = sphi 0, %s53
      %s54 = sphi 0, %s51
      %s55 = sphi 0, %s54
      %s71 = sphi 0, %s55
      %s75 = sphi 0, %s75
      %s77 = sphi 0, %s75
      %s78 = sphi 0, %s77
      %s92 = sphi 0, %s78
      %s96 = sphi 0, %s96
      %s98 = sphi 0, %s96
      %s99 = sphi 0, %s98
      %s113 = sphi 0, %s99
      %s117 = sphi 0, %s117
      %s119 = sphi 0, %s117
      %s120 = sphi 0, %s119
      %s134 = sphi 0, %s120
      %s138 = sphi 0, %s138
      %s140 = sphi 0, %s138
      %s141 = sphi 0, %s140
      %s155 = sphi 0, %s141
      %s161 = sphi 0, %s163
      %s164 = sphi 0, %s161
      %s165 = sphi 0, %s164
      %s181 = sphi 0, %s165
    $region4: #{_lambda_.5} parent=1 // loop_header_branch
      %18 = sbr.rel (%p16) target = $region8
    $region5: #{_lambda_.5} parent=1 // loop_body
      %s20 = ssub.s32 %s15, 1
      %s21 = ssub.s32 %s15, 2
      %s22 = sadd.s32 %s15, 1
      %s23 = ssub.s32 %s15, %s22
      %p24 = scmp.eq.s32.totalorder %s23, 0
      %s26 = sadd.s32 %s25, 1
      %s27 = scalar_select %p24, %s25, %s26
      %p30 = pneg %p24
      %p31 = scmp.eq.s32.totalorder %s15, 1
      %p32 = por %p30, %p31
      %p33 = scmp.ne.s32.totalorder %s25, %s28
      %p34 = scmp.eq.s32.totalorder %s15, 0
      %p35 = por %p33, %p34
      %p36 = scmp.ne.s32.totalorder %s25, %s28
      %p37 = scmp.eq.s32.totalorder %s20, 1
      %p38 = por %p36, %p37
      %p39 = scmp.ne.s32.totalorder %s28, %s29
      %p40 = scmp.eq.s32.totalorder %s20, 0
      %p41 = por %p39, %p40
      %p42 = scmp.ne.s32.totalorder %s28, %s29
      %p43 = scmp.eq.s32.totalorder %s21, 1
      %p44 = por %p42, %p43
      %p46 = scmp.ne.s32.totalorder %s29, %s45
      %p47 = scmp.eq.s32.totalorder %s21, 0
      %p48 = por %p46, %p47
      %s49 = ssub.s32 %s15, %s22
      %p50 = scmp.eq.s32.totalorder %s49, 0
      %s52 = sadd.s32 %s51, 1
      %s53 = scalar_select %p50, %s51, %s52
      %p56 = pneg %p50
      %p57 = scmp.eq.s32.totalorder %s15, 1
      %p58 = por %p56, %p57
      %p59 = scmp.ne.s32.totalorder %s51, %s54
      %p60 = scmp.eq.s32.totalorder %s15, 0
      %p61 = por %p59, %p60
      %p62 = scmp.ne.s32.totalorder %s51, %s54
      %p63 = scmp.eq.s32.totalorder %s20, 1
      %p64 = por %p62, %p63
      %p65 = scmp.ne.s32.totalorder %s54, %s55
      %p66 = scmp.eq.s32.totalorder %s20, 0
      %p67 = por %p65, %p66
      %p68 = scmp.ne.s32.totalorder %s54, %s55
      %p69 = scmp.eq.s32.totalorder %s21, 1
      %p70 = por %p68, %p69
      %p72 = scmp.ne.s32.totalorder %s55, %s71
      %p73 = scmp.eq.s32.totalorder %s21, 0
      %p74 = por %p72, %p73
      %s76 = sadd.s32 %s75, 1
      %p79 = scmp.eq.s32.totalorder %s15, 1
      %p80 = scmp.ne.s32.totalorder %s75, %s77
      %p81 = scmp.eq.s32.totalorder %s15, 0
      %p82 = por %p80, %p81
      %p83 = scmp.ne.s32.totalorder %s75, %s77
      %p84 = scmp.eq.s32.totalorder %s20, 1
      %p85 = por %p83, %p84
      %p86 = scmp.ne.s32.totalorder %s77, %s78
      %p87 = scmp.eq.s32.totalorder %s20, 0
      %p88 = por %p86, %p87
      %p89 = scmp.ne.s32.totalorder %s77, %s78
      %p90 = scmp.eq.s32.totalorder %s21, 1
      %p91 = por %p89, %p90
      %p93 = scmp.ne.s32.totalorder %s78, %s92
      %p94 = scmp.eq.s32.totalorder %s21, 0
      %p95 = por %p93, %p94
      %s97 = sadd.s32 %s96, 1
      %p100 = scmp.eq.s32.totalorder %s15, 1
      %p101 = scmp.ne.s32.totalorder %s96, %s98
      %p102 = scmp.eq.s32.totalorder %s15, 0
      %p103 = por %p101, %p102
      %p104 = scmp.ne.s32.totalorder %s96, %s98
      %p105 = scmp.eq.s32.totalorder %s20, 1
      %p106 = por %p104, %p105
      %p107 = scmp.ne.s32.totalorder %s98, %s99
      %p108 = scmp.eq.s32.totalorder %s20, 0
      %p109 = por %p107, %p108
      %p110 = scmp.ne.s32.totalorder %s98, %s99
      %p111 = scmp.eq.s32.totalorder %s21, 1
      %p112 = por %p110, %p111
      %p114 = scmp.ne.s32.totalorder %s99, %s113
      %p115 = scmp.eq.s32.totalorder %s21, 0
      %p116 = por %p114, %p115
      %s118 = sadd.s32 %s117, 1
      %p121 = scmp.eq.s32.totalorder %s15, 1
      %p122 = scmp.ne.s32.totalorder %s117, %s119
      %p123 = scmp.eq.s32.totalorder %s15, 0
      %p124 = por %p122, %p123
      %p125 = scmp.ne.s32.totalorder %s117, %s119
      %p126 = scmp.eq.s32.totalorder %s20, 1
      %p127 = por %p125, %p126
      %p128 = scmp.ne.s32.totalorder %s119, %s120
      %p129 = scmp.eq.s32.totalorder %s20, 0
      %p130 = por %p128, %p129
      %p131 = scmp.ne.s32.totalorder %s119, %s120
      %p132 = scmp.eq.s32.totalorder %s21, 1
      %p133 = por %p131, %p132
      %p135 = scmp.ne.s32.totalorder %s120, %s134
      %p136 = scmp.eq.s32.totalorder %s21, 0
      %p137 = por %p135, %p136
      %s139 = sadd.s32 %s138, 1
      %p142 = scmp.eq.s32.totalorder %s15, 1
      %p143 = scmp.ne.s32.totalorder %s138, %s140
      %p144 = scmp.eq.s32.totalorder %s15, 0
      %p145 = por %p143, %p144
      %p146 = scmp.ne.s32.totalorder %s138, %s140
      %p147 = scmp.eq.s32.totalorder %s20, 1
      %p148 = por %p146, %p147
      %p149 = scmp.ne.s32.totalorder %s140, %s141
      %p150 = scmp.eq.s32.totalorder %s20, 0
      %p151 = por %p149, %p150
      %p152 = scmp.ne.s32.totalorder %s140, %s141
      %p153 = scmp.eq.s32.totalorder %s21, 1
      %p154 = por %p152, %p153
      %p156 = scmp.ne.s32.totalorder %s141, %s155
      %p157 = scmp.eq.s32.totalorder %s21, 0
      %p158 = por %p156, %p157
      %s159 = ssub.s32 %s15, %s22
      %p160 = scmp.eq.s32.totalorder %s159, 0
      %s162 = sadd.s32 %s161, 1
      %s163 = scalar_select %p160, %s161, %s162
      %p166 = pneg %p160
      %p167 = scmp.eq.s32.totalorder %s15, 1
      %p168 = por %p166, %p167
      %p169 = scmp.ne.s32.totalorder %s161, %s164
      %p170 = scmp.eq.s32.totalorder %s15, 0
      %p171 = por %p169, %p170
      %p172 = scmp.ne.s32.totalorder %s161, %s164
      %p173 = scmp.eq.s32.totalorder %s20, 1
      %p174 = por %p172, %p173
      %p175 = scmp.ne.s32.totalorder %s164, %s165
      %p176 = scmp.eq.s32.totalorder %s20, 0
      %p177 = por %p175, %p176
      %p178 = scmp.ne.s32.totalorder %s164, %s165
      %p179 = scmp.eq.s32.totalorder %s21, 1
      %p180 = por %p178, %p179
      %p182 = scmp.ne.s32.totalorder %s165, %s181
      %p183 = scmp.eq.s32.totalorder %s21, 0
      %p184 = por %p182, %p183
      %p185 = scmp.le.s32.totalorder 1, %s15
      %p186 = scmp.lt.s32.totalorder %s15, 3
      %p187 = pnand %p185, %p186
      %p188 = pneg %p187
      // Predicated region
      $region9: #{_lambda_.5} parent=5 // pred_check
        _
      $region10: #{_lambda_.5} parent=5 // pred_check_branch
        %190 = sbr.rel (%p187) target = $region12
      $region11: #{_lambda_.5} parent=5 // pred_region
        %s191 = ssub.s32 %s15, 1
        // Predicated region
        $region13: #{_lambda_.5} parent=11 // pred_check
          %p192 = pneg %p88
        $region14: #{_lambda_.5} parent=11 // pred_check_branch
          %194 = sbr.rel (%p192) target = $region16
        $region15: #{_lambda_.5} parent=11 // pred_region
          _
        $region16: #{_lambda_.5} parent=11 // pred_fallthru
          _
        // Predicated region
        $region17: #{_lambda_.5} parent=11 // pred_check
          %p195 = pneg %p109
        $region18: #{_lambda_.5} parent=11 // pred_check_branch
          %197 = sbr.rel (%p195) target = $region20
        $region19: #{_lambda_.5} parent=11 // pred_region
          _
        $region20: #{_lambda_.5} parent=11 // pred_fallthru
          _
        // Predicated region
        $region21: #{_lambda_.5} parent=11 // pred_check
          %p198 = pneg %p130
        $region22: #{_lambda_.5} parent=11 // pred_check_branch
          %200 = sbr.rel (%p198) target = $region24
        $region23: #{_lambda_.5} parent=11 // pred_region
          _
        $region24: #{_lambda_.5} parent=11 // pred_fallthru
          _
        // Predicated region
        $region25: #{_lambda_.5} parent=11 // pred_check
          %p201 = pneg %p151
        $region26: #{_lambda_.5} parent=11 // pred_check_branch
          %203 = sbr.rel (%p201) target = $region28
        $region27: #{_lambda_.5} parent=11 // pred_region
          _
        $region28: #{_lambda_.5} parent=11 // pred_fallthru
          _
      $region12: #{_lambda_.5} parent=5 // pred_fallthru
        _
      %p204 = scmp.lt.s32.totalorder %s15, 2
      // Predicated region
      $region29: #{_lambda_.5} parent=5 // pred_check
        %p205 = pneg %p204
      $region30: #{_lambda_.5} parent=5 // pred_check_branch
        %207 = sbr.rel (%p205) target = $region32
      $region31: #{_lambda_.5} parent=5 // pred_region
        // Predicated region
        $region33: #{_lambda_.5} parent=31 // pred_check
          %p208 = pneg %p35
        $region34: #{_lambda_.5} parent=31 // pred_check_branch
          %210 = sbr.rel (%p208) target = $region36
        $region35: #{_lambda_.5} parent=31 // pred_region
          %p211 = scmp.lt.s32.totalorder %s15, 1
          %s212 = scalar_select %p211, %s15, 1
          %s213 = smul.addr %s212, 54
          %s214 = smul.addr %s213, 8
          %s215 = scalar_lea.vmem %s0, %s214
        $region36: #{_lambda_.5} parent=31 // pred_fallthru
          _
        // Predicated region
        $region37: #{_lambda_.5} parent=31 // pred_check
          %p216 = pneg %p61
        $region38: #{_lambda_.5} parent=31 // pred_check_branch
          %218 = sbr.rel (%p216) target = $region40
        $region39: #{_lambda_.5} parent=31 // pred_region
          %p219 = scmp.lt.s32.totalorder %s15, 1
          %s220 = scalar_select %p219, %s15, 1
          %s221 = smul.addr %s220, 32
          %s222 = smul.addr %s221, 8
          %s223 = scalar_lea.vmem %s1, %s222
        $region40: #{_lambda_.5} parent=31 // pred_fallthru
          _
      $region32: #{_lambda_.5} parent=5 // pred_fallthru
        _
      %p224 = scmp.le.s32.totalorder 1, %s15
      %p225 = scmp.lt.s32.totalorder %s15, 3
      %p226 = pnand %p224, %p225
      %p227 = pneg %p226
      // Predicated region
      $region41: #{_lambda_.5} parent=5 // pred_check
        _
      $region42: #{_lambda_.5} parent=5 // pred_check_branch
        %229 = sbr.rel (%p226) target = $region44
      $region43: #{_lambda_.5} parent=5 // pred_region
        %s230 = ssub.s32 %s15, 1
        %p231 = scmp.lt.s32.totalorder %s20, 1
        %s232 = scalar_select %p231, %s20, 1
        %s233 = smul.addr %s232, 54
        %s234 = smul.addr %s233, 8
        %s235 = scalar_lea.vmem %s0, %s234
        %p236 = pneg %p41
        %p237 = pneg %p38
        %p238 = scmp.lt.s32.totalorder %s20, 1
        %s239 = scalar_select %p238, %s20, 1
        %s240 = smul.addr %s239, 32
        %s241 = smul.addr %s240, 8
        %s242 = scalar_lea.vmem %s1, %s241
        %p243 = pneg %p67
        %p244 = pneg %p64
        %p245 = pneg %p88
        %p246 = pneg %p85
        %p247 = pneg %p109
        %p248 = pneg %p106
        %p249 = pneg %p130
        %p250 = pneg %p127
        %p251 = pneg %p151
        %p252 = pneg %p148
        %p253 = pneg %p177
        %p254 = pneg %p174
        %s255 = sand.u32 %s164, 1
        %s256 = scalar_lea.sflag [#allocation3], %s255
        %s257 = sand.u32 %s164, 1
        %s258 = scalar_lea.vmem [#allocation2], %s257
        %p259 = scmp.lt.s32.totalorder %s20, 1
        %s260 = scalar_select %p259, %s20, 1
        %s261 = smul.addr %s260, 54
        %s262 = smul.addr %s261, 8
        %s263 = scalar_lea.vmem %s0, %s262
        %p264 = scmp.lt.s32.totalorder %s20, 1
        %s265 = scalar_select %p264, %s20, 1
        %s266 = smul.addr %s265, 32
        %s267 = smul.addr %s266, 8
        %s268 = scalar_lea.vmem %s1, %s267
        %v270 = vld [vmem:[%s263] sm:$0xff]
        %v271 = vld [vmem:[%s263 + $0x8] sm:$0xff]
        %v272 = vld [vmem:[%s263 + $0x18] sm:$0xff]
        %v273 = vld [vmem:[%s263 + $0x20] sm:$0xff]
        %v274 = vld [vmem:[%s263 + $0x30] sm:$0xff]
        %v275 = vld [vmem:[%s263 + $0x38] sm:$0xff]
        %v276 = vld [vmem:[%s263 + $0x48] sm:$0xff]
        %v277 = vld [vmem:[%s263 + $0x50] sm:$0xff]
        %v278 = vld [vmem:[%s263 + $0x60] sm:$0xff]
        %v279 = vld [vmem:[%s263 + $0x68] sm:$0xff]
        %v280 = vld [vmem:[%s263 + $0x78] sm:$0xff]
        %v281 = vld [vmem:[%s263 + $0x80] sm:$0xff]
        %v282 = vld [vmem:[%s263 + $0x90] sm:$0xff]
        %v283 = vld [vmem:[%s263 + $0x98] sm:$0xff]
        %v284 = vld [vmem:[%s263 + $0xa8] sm:$0xff]
        %v285 = vld [vmem:[%s263 + $0xb0] sm:$0xff]
        %v286 = vld [vmem:[%s263 + $0xc0] sm:$0xff]
        %v287 = vld [vmem:[%s263 + $0xc8] sm:$0xff]
        %v288 = vld [vmem:[%s263 + $0xd8] sm:$0xff]
        %v289 = vld [vmem:[%s263 + $0xe0] sm:$0xff]
        %v290 = vld [vmem:[%s263 + $0xf0] sm:$0xff]
        %v291 = vld [vmem:[%s263 + $0xf8] sm:$0xff]
        %v292 = vld [vmem:[%s263 + $0x108] sm:$0xff]
        %v293 = vld [vmem:[%s263 + $0x110] sm:$0xff]
        %v294 = vld [vmem:[%s263 + $0x120] sm:$0xff]
        %v295 = vld [vmem:[%s263 + $0x128] sm:$0xff]
        %v296 = vld [vmem:[%s263 + $0x138] sm:$0xff]
        %v297 = vld [vmem:[%s263 + $0x140] sm:$0xff]
        %v298 = vld [vmem:[%s263 + $0x150] sm:$0xff]
        %v299 = vld [vmem:[%s263 + $0x158] sm:$0xff]
        %v300 = vld [vmem:[%s263 + $0x168] sm:$0xff]
        %v301 = vld [vmem:[%s263 + $0x170] sm:$0xff]
        %v302 = vpack.c.bf16 %v271, %v270
        %v303 = vpack.c.bf16 %v273, %v272
        %v304 = vpack.c.bf16 %v275, %v274
        %v305 = vpack.c.bf16 %v277, %v276
        %v306 = vpack.c.bf16 %v279, %v278
        %v307 = vpack.c.bf16 %v281, %v280
        %v308 = vpack.c.bf16 %v283, %v282
        %v309 = vpack.c.bf16 %v285, %v284
        %v310 = vpack.c.bf16 %v287, %v286
        %v311 = vpack.c.bf16 %v289, %v288
        %v312 = vpack.c.bf16 %v291, %v290
        %v313 = vpack.c.bf16 %v293, %v292
        %v314 = vpack.c.bf16 %v295, %v294
        %v315 = vpack.c.bf16 %v297, %v296
        %v316 = vpack.c.bf16 %v299, %v298
        %v317 = vpack.c.bf16 %v301, %v300
        %v318 = vld [vmem:[%s2] sm:$0xf]
        %v319 = vld [vmem:[%s2 + $0x4] sm:$0xf]
        %v320 = vld [vmem:[%s2 + $0x8] sm:$0xf]
        %v321 = vld [vmem:[%s2 + $0xc] sm:$0xf]
        %v322 = vld [vmem:[%s2 + $0x10] sm:$0xf]
        %v323 = vld [vmem:[%s2 + $0x14] sm:$0xf]
        %v324 = vld [vmem:[%s2 + $0x18] sm:$0xf]
        %v325 = vld [vmem:[%s2 + $0x1c] sm:$0xf]
        %v326 = vld [vmem:[%s2 + $0x20] sm:$0xf]
        %v327 = vld [vmem:[%s2 + $0x24] sm:$0xf]
        %v328 = vld [vmem:[%s2 + $0x28] sm:$0xf]
        %v329 = vld [vmem:[%s2 + $0x2c] sm:$0xf]
        %v330 = vld [vmem:[%s2 + $0x30] sm:$0xf]
        %v331 = vld [vmem:[%s2 + $0x34] sm:$0xf]
        %v332 = vld [vmem:[%s2 + $0x38] sm:$0xf]
        %v333 = vld [vmem:[%s2 + $0x3c] sm:$0xf]
        %v334 = vld [vmem:[%s263 + $0x1] sm:$0xff]
        %v335 = vld [vmem:[%s263 + $0x9] sm:$0xff]
        %v336 = vld [vmem:[%s263 + $0x19] sm:$0xff]
        %v337 = vld [vmem:[%s263 + $0x21] sm:$0xff]
        %v338 = vld [vmem:[%s263 + $0x31] sm:$0xff]
        %v339 = vld [vmem:[%s263 + $0x39] sm:$0xff]
        %v340 = vld [vmem:[%s263 + $0x49] sm:$0xff]
        %v341 = vld [vmem:[%s263 + $0x51] sm:$0xff]
        %v342 = vld [vmem:[%s263 + $0x61] sm:$0xff]
        %v343 = vld [vmem:[%s263 + $0x69] sm:$0xff]
        %v344 = vld [vmem:[%s263 + $0x79] sm:$0xff]
        %v345 = vld [vmem:[%s263 + $0x81] sm:$0xff]
        %v346 = vld [vmem:[%s263 + $0x91] sm:$0xff]
        %v347 = vld [vmem:[%s263 + $0x99] sm:$0xff]
        %v348 = vld [vmem:[%s263 + $0xa9] sm:$0xff]
        %v349 = vld [vmem:[%s263 + $0xb1] sm:$0xff]
        %v350 = vld [vmem:[%s263 + $0xc1] sm:$0xff]
        %v351 = vld [vmem:[%s263 + $0xc9] sm:$0xff]
        %v352 = vld [vmem:[%s263 + $0xd9] sm:$0xff]
        %v353 = vld [vmem:[%s263 + $0xe1] sm:$0xff]
        %v354 = vld [vmem:[%s263 + $0xf1] sm:$0xff]
        %v355 = vld [vmem:[%s263 + $0xf9] sm:$0xff]
        %v356 = vld [vmem:[%s263 + $0x109] sm:$0xff]
        %v357 = vld [vmem:[%s263 + $0x111] sm:$0xff]
        %v358 = vld [vmem:[%s263 + $0x121] sm:$0xff]
        %v359 = vld [vmem:[%s263 + $0x129] sm:$0xff]
        %v360 = vld [vmem:[%s263 + $0x139] sm:$0xff]
        %v361 = vld [vmem:[%s263 + $0x141] sm:$0xff]
        %v362 = vld [vmem:[%s263 + $0x151] sm:$0xff]
        %v363 = vld [vmem:[%s263 + $0x159] sm:$0xff]
        %v364 = vld [vmem:[%s263 + $0x169] sm:$0xff]
        %v365 = vld [vmem:[%s263 + $0x171] sm:$0xff]
        %v366 = vpack.c.bf16 %v335, %v334
        %v367 = vpack.c.bf16 %v337, %v336
        %v368 = vpack.c.bf16 %v339, %v338
        %v369 = vpack.c.bf16 %v341, %v340
        %v370 = vpack.c.bf16 %v343, %v342
        %v371 = vpack.c.bf16 %v345, %v344
        %v372 = vpack.c.bf16 %v347, %v346
        %v373 = vpack.c.bf16 %v349, %v348
        %v374 = vpack.c.bf16 %v351, %v350
        %v375 = vpack.c.bf16 %v353, %v352
        %v376 = vpack.c.bf16 %v355, %v354
        %v377 = vpack.c.bf16 %v357, %v356
        %v378 = vpack.c.bf16 %v359, %v358
        %v379 = vpack.c.bf16 %v361, %v360
        %v380 = vpack.c.bf16 %v363, %v362
        %v381 = vpack.c.bf16 %v365, %v364
        %s382 = scalar_lea.vmem %s2, 64
        %v383 = vld [vmem:[%s382] sm:$0xf]
        %v384 = vld [vmem:[%s382 + $0x4] sm:$0xf]
        %v385 = vld [vmem:[%s382 + $0x8] sm:$0xf]
        %v386 = vld [vmem:[%s382 + $0xc] sm:$0xf]
        %v387 = vld [vmem:[%s382 + $0x10] sm:$0xf]
        %v388 = vld [vmem:[%s382 + $0x14] sm:$0xf]
        %v389 = vld [vmem:[%s382 + $0x18] sm:$0xf]
        %v390 = vld [vmem:[%s382 + $0x1c] sm:$0xf]
        %v391 = vld [vmem:[%s382 + $0x20] sm:$0xf]
        %v392 = vld [vmem:[%s382 + $0x24] sm:$0xf]
        %v393 = vld [vmem:[%s382 + $0x28] sm:$0xf]
        %v394 = vld [vmem:[%s382 + $0x2c] sm:$0xf]
        %v395 = vld [vmem:[%s382 + $0x30] sm:$0xf]
        %v396 = vld [vmem:[%s382 + $0x34] sm:$0xf]
        %v397 = vld [vmem:[%s382 + $0x38] sm:$0xf]
        %v398 = vld [vmem:[%s382 + $0x3c] sm:$0xf]
        %v415 = vunpack.c.l.b16 %v383
        %v416 = vunpack.c.l.b16 %v384
        %v417 = vunpack.c.l.b16 %v385
        %v418 = vunpack.c.l.b16 %v386
        %v419 = vunpack.c.l.b16 %v387
        %v420 = vunpack.c.l.b16 %v388
        %v421 = vunpack.c.l.b16 %v389
        %v422 = vunpack.c.l.b16 %v390
        %v423 = vunpack.c.l.b16 %v391
        %v424 = vunpack.c.l.b16 %v392
        %v425 = vunpack.c.l.b16 %v393
        %v426 = vunpack.c.l.b16 %v394
        %v427 = vunpack.c.l.b16 %v395
        %v428 = vunpack.c.l.b16 %v396
        %v429 = vunpack.c.l.b16 %v397
        %v430 = vunpack.c.l.b16 %v398
        %v431 = vpack.c.b16 %v416, %v415
        %v432 = vpack.c.b16 %v418, %v417
        %v433 = vpack.c.b16 %v420, %v419
        %v434 = vpack.c.b16 %v422, %v421
        %v435 = vpack.c.b16 %v424, %v423
        %v436 = vpack.c.b16 %v426, %v425
        %v437 = vpack.c.b16 %v428, %v427
        %v438 = vpack.c.b16 %v430, %v429
        %447 = vmatprep.subr.bf16.mxu0 0
        %448 = vmatpush1.bf16.msra.mxu0 %v431
        %449 = vmatprep.subr.bf16.mxu0 0
        %450 = vmatpush1.bf16.msra.mxu0 %v432
        %451 = vmatprep.subr.bf16.mxu0 0
        %452 = vmatpush1.bf16.msra.mxu0 %v433
        %453 = vmatprep.subr.bf16.mxu0 0
        %454 = vmatpush1.bf16.msra.mxu0 %v434
        %455 = vmatprep.subr.bf16.mxu0 0
        %456 = vmatpush1.bf16.msra.mxu0 %v435
        %457 = vmatprep.subr.bf16.mxu0 0
        %458 = vmatpush1.bf16.msra.mxu0 %v436
        %459 = vmatprep.subr.bf16.mxu0 0
        %460 = vmatpush1.bf16.msra.mxu0 %v437
        %461 = vmatprep.subr.bf16.mxu0 0
        %462 = vmatpush1.bf16.msra.mxu0 %v438
        %463 = vmatprep.subr.bf16.mxu0 0
        %464 = vmatpush1.bf16.msra.mxu0 0
        %465 = vmatprep.subr.bf16.mxu0 0
        %466 = vmatpush1.bf16.msra.mxu0 0
        %467 = vmatprep.subr.bf16.mxu0 0
        %468 = vmatpush1.bf16.msra.mxu0 0
        %469 = vmatprep.subr.bf16.mxu0 0
        %470 = vmatpush1.bf16.msra.mxu0 0
        %471 = vmatprep.subr.bf16.mxu0 0
        %472 = vmatpush1.bf16.msra.mxu0 0
        %473 = vmatprep.subr.bf16.mxu0 0
        %474 = vmatpush1.bf16.msra.mxu0 0
        %475 = vmatprep.subr.bf16.mxu0 0
        %476 = vmatpush1.bf16.msra.mxu0 0
        %477 = vmatprep.subr.bf16.mxu0 0
        %478 = vmatpush1.bf16.msra.mxu0 0
        %479 = vmatprep.mubr.bf16.mxu0 0
        %480 = vmatmul.mubr.bf16.gmra.mrb[0].mxu0 %v366
        %v481 = vpop.f32.mrb[0].mxu0
        %v482 = vadd.f32 0.0, %v481
        %v483 = vpop.f32.mrb[0].mxu0
        %v484 = vpop.f32.mrb[0].mxu0
        %v485 = vadd.f32 0.0, %v484
        %v486 = vpop.f32.mrb[0].mxu0
        %487 = vmatprep.mubr.bf16.mxu0 0
        %488 = vmatmul.mubr.bf16.gmra.mrb[0].mxu0 %v367
        %v489 = vpop.f32.mrb[0].mxu0
        %v490 = vadd.f32 0.0, %v489
        %v491 = vpop.f32.mrb[0].mxu0
        %v492 = vpop.f32.mrb[0].mxu0
        %v493 = vadd.f32 0.0, %v492
        %v494 = vpop.f32.mrb[0].mxu0
        %495 = vmatprep.mubr.bf16.mxu0 0
        %496 = vmatmul.mubr.bf16.gmra.mrb[0].mxu0 %v368
        %v497 = vpop.f32.mrb[0].mxu0
        %v498 = vadd.f32 0.0, %v497
        %v499 = vpop.f32.mrb[0].mxu0
        %v500 = vpop.f32.mrb[0].mxu0
        %v501 = vadd.f32 0.0, %v500
        %v502 = vpop.f32.mrb[0].mxu0
        %503 = vmatprep.mubr.bf16.mxu0 0
        %504 = vmatmul.mubr.bf16.gmra.mrb[0].mxu0 %v369
        %v505 = vpop.f32.mrb[0].mxu0
        %v506 = vadd.f32 0.0, %v505
        %v507 = vpop.f32.mrb[0].mxu0
        %v508 = vpop.f32.mrb[0].mxu0
        %v509 = vadd.f32 0.0, %v508
        %v510 = vpop.f32.mrb[0].mxu0
        %511 = vmatprep.mubr.bf16.mxu0 0
        %512 = vmatmul.mubr.bf16.gmra.mrb[0].mxu0 %v370
        %v513 = vpop.f32.mrb[0].mxu0
        %v514 = vadd.f32 0.0, %v513
        %v515 = vpop.f32.mrb[0].mxu0
        %v516 = vpop.f32.mrb[0].mxu0
        %v517 = vadd.f32 0.0, %v516
        %v518 = vpop.f32.mrb[0].mxu0
        %519 = vmatprep.mubr.bf16.mxu0 0
        %520 = vmatmul.mubr.bf16.gmra.mrb[0].mxu0 %v371
        %v521 = vpop.f32.mrb[0].mxu0
        %v522 = vadd.f32 0.0, %v521
        %v523 = vpop.f32.mrb[0].mxu0
        %v524 = vpop.f32.mrb[0].mxu0
        %v525 = vadd.f32 0.0, %v524
        %v526 = vpop.f32.mrb[0].mxu0
        %527 = vmatprep.mubr.bf16.mxu0 0
        %528 = vmatmul.mubr.bf16.gmra.mrb[0].mxu0 %v372
        %v529 = vpop.f32.mrb[0].mxu0
        %v530 = vadd.f32 0.0, %v529
        %v531 = vpop.f32.mrb[0].mxu0
        %v532 = vpop.f32.mrb[0].mxu0
        %v533 = vadd.f32 0.0, %v532
        %v534 = vpop.f32.mrb[0].mxu0
        %535 = vmatprep.mubr.bf16.mxu0 0
        %536 = vmatmul.mubr.bf16.gmra.mrb[0].mxu0 %v373
        %v537 = vpop.f32.mrb[0].mxu0
        %v538 = vadd.f32 0.0, %v537
        %v539 = vpop.f32.mrb[0].mxu0
        %v540 = vpop.f32.mrb[0].mxu0
        %v541 = vadd.f32 0.0, %v540
        %v542 = vpop.f32.mrb[0].mxu0
        %543 = vmatprep.mubr.bf16.mxu0 0
        %544 = vmatmul.mubr.bf16.gmra.mrb[0].mxu0 %v374
        %v545 = vpop.f32.mrb[0].mxu0
        %v546 = vadd.f32 0.0, %v545
        %v547 = vpop.f32.mrb[0].mxu0
        %v548 = vpop.f32.mrb[0].mxu0
        %v549 = vadd.f32 0.0, %v548
        %v550 = vpop.f32.mrb[0].mxu0
        %551 = vmatprep.mubr.bf16.mxu0 0
        %552 = vmatmul.mubr.bf16.gmra.mrb[0].mxu0 %v375
        %v553 = vpop.f32.mrb[0].mxu0
        %v554 = vadd.f32 0.0, %v553
        %v555 = vpop.f32.mrb[0].mxu0
        %v556 = vpop.f32.mrb[0].mxu0
        %v557 = vadd.f32 0.0, %v556
        %v558 = vpop.f32.mrb[0].mxu0
        %559 = vmatprep.mubr.bf16.mxu0 0
        %560 = vmatmul.mubr.bf16.gmra.mrb[0].mxu0 %v376
        %v561 = vpop.f32.mrb[0].mxu0
        %v562 = vadd.f32 0.0, %v561
        %v563 = vpop.f32.mrb[0].mxu0
        %v564 = vpop.f32.mrb[0].mxu0
        %v565 = vadd.f32 0.0, %v564
        %v566 = vpop.f32.mrb[0].mxu0
        %567 = vmatprep.mubr.bf16.mxu0 0
        %568 = vmatmul.mubr.bf16.gmra.mrb[0].mxu0 %v377
        %v569 = vpop.f32.mrb[0].mxu0
        %v570 = vadd.f32 0.0, %v569
        %v571 = vpop.f32.mrb[0].mxu0
        %v572 = vpop.f32.mrb[0].mxu0
        %v573 = vadd.f32 0.0, %v572
        %v574 = vpop.f32.mrb[0].mxu0
        %575 = vmatprep.mubr.bf16.mxu0 0
        %576 = vmatmul.mubr.bf16.gmra.mrb[0].mxu0 %v378
        %v577 = vpop.f32.mrb[0].mxu0
        %v578 = vadd.f32 0.0, %v577
        %v579 = vpop.f32.mrb[0].mxu0
        %v580 = vpop.f32.mrb[0].mxu0
        %v581 = vadd.f32 0.0, %v580
        %v582 = vpop.f32.mrb[0].mxu0
        %583 = vmatprep.mubr.bf16.mxu0 0
        %584 = vmatmul.mubr.bf16.gmra.mrb[0].mxu0 %v379
        %v585 = vpop.f32.mrb[0].mxu0
        %v586 = vadd.f32 0.0, %v585
        %v587 = vpop.f32.mrb[0].mxu0
        %v588 = vpop.f32.mrb[0].mxu0
        %v589 = vadd.f32 0.0, %v588
        %v590 = vpop.f32.mrb[0].mxu0
        %591 = vmatprep.mubr.bf16.mxu0 0
        %592 = vmatmul.mubr.bf16.gmra.mrb[0].mxu0 %v380
        %v593 = vpop.f32.mrb[0].mxu0
        %v594 = vadd.f32 0.0, %v593
        %v595 = vpop.f32.mrb[0].mxu0
        %v596 = vpop.f32.mrb[0].mxu0
        %v597 = vadd.f32 0.0, %v596
        %v598 = vpop.f32.mrb[0].mxu0
        %599 = vmatprep.mubr.bf16.mxu0 0
        %600 = vmatmul.mubr.bf16.gmra.mrb[0].mxu0 %v381
        %v601 = vpop.f32.mrb[0].mxu0
        %v602 = vadd.f32 0.0, %v601
        %v603 = vpop.f32.mrb[0].mxu0
        %v604 = vpop.f32.mrb[0].mxu0
        %v605 = vadd.f32 0.0, %v604
        %v606 = vpop.f32.mrb[0].mxu0
        %607 = vdwg.mxu0
        %v624 = vunpack.c.l.b16 %v318
        %v625 = vunpack.c.l.b16 %v319
        %v626 = vunpack.c.l.b16 %v320
        %v627 = vunpack.c.l.b16 %v321
        %v628 = vunpack.c.l.b16 %v322
        %v629 = vunpack.c.l.b16 %v323
        %v630 = vunpack.c.l.b16 %v324
        %v631 = vunpack.c.l.b16 %v325
        %v632 = vunpack.c.l.b16 %v326
        %v633 = vunpack.c.l.b16 %v327
        %v634 = vunpack.c.l.b16 %v328
        %v635 = vunpack.c.l.b16 %v329
        %v636 = vunpack.c.l.b16 %v330
        %v637 = vunpack.c.l.b16 %v331
        %v638 = vunpack.c.l.b16 %v332
        %v639 = vunpack.c.l.b16 %v333
        %v640 = vpack.c.b16 %v625, %v624
        %v641 = vpack.c.b16 %v627, %v626
        %v642 = vpack.c.b16 %v629, %v628
        %v643 = vpack.c.b16 %v631, %v630
        %v644 = vpack.c.b16 %v633, %v632
        %v645 = vpack.c.b16 %v635, %v634
        %v646 = vpack.c.b16 %v637, %v636
        %v647 = vpack.c.b16 %v639, %v638
        %656 = vmatprep.subr.bf16.mxu0 0
        %657 = vmatpush1.bf16.msra.mxu0 %v640
        %658 = vmatprep.subr.bf16.mxu0 0
        %659 = vmatpush1.bf16.msra.mxu0 %v641
        %660 = vmatprep.subr.bf16.mxu0 0
        %661 = vmatpush1.bf16.msra.mxu0 %v642
        %662 = vmatprep.subr.bf16.mxu0 0
        %663 = vmatpush1.bf16.msra.mxu0 %v643
        %664 = vmatprep.subr.bf16.mxu0 0
        %665 = vmatpush1.bf16.msra.mxu0 %v644
        %666 = vmatprep.subr.bf16.mxu0 0
        %667 = vmatpush1.bf16.msra.mxu0 %v645
        %668 = vmatprep.subr.bf16.mxu0 0
        %669 = vmatpush1.bf16.msra.mxu0 %v646
        %670 = vmatprep.subr.bf16.mxu0 0
        %671 = vmatpush1.bf16.msra.mxu0 %v647
        %672 = vmatprep.subr.bf16.mxu0 0
        %673 = vmatpush1.bf16.msra.mxu0 0
        %674 = vmatprep.subr.bf16.mxu0 0
        %675 = vmatpush1.bf16.msra.mxu0 0
        %676 = vmatprep.subr.bf16.mxu0 0
        %677 = vmatpush1.bf16.msra.mxu0 0
        %678 = vmatprep.subr.bf16.mxu0 0
        %679 = vmatpush1.bf16.msra.mxu0 0
        %680 = vmatprep.subr.bf16.mxu0 0
        %681 = vmatpush1.bf16.msra.mxu0 0
        %682 = vmatprep.subr.bf16.mxu0 0
        %683 = vmatpush1.bf16.msra.mxu0 0
        %684 = vmatprep.subr.bf16.mxu0 0
        %685 = vmatpush1.bf16.msra.mxu0 0
        %686 = vmatprep.subr.bf16.mxu0 0
        %687 = vmatpush1.bf16.msra.mxu0 0
        %688 = vmatprep.mubr.bf16.mxu0 0
        %689 = vmatmul.mubr.bf16.gmra.mrb[0].mxu0 %v302
        %v690 = vpop.f32.mrb[0].mxu0
        %v691 = vadd.f32 %v482, %v690
        %v692 = vpop.f32.mrb[0].mxu0
        %v693 = vpop.f32.mrb[0].mxu0
        %v694 = vadd.f32 %v485, %v693
        %v695 = vpop.f32.mrb[0].mxu0
        %696 = vmatprep.mubr.bf16.mxu0 0
        %697 = vmatmul.mubr.bf16.gmra.mrb[0].mxu0 %v303
        %v698 = vpop.f32.mrb[0].mxu0
        %v699 = vadd.f32 %v490, %v698
        %v700 = vpop.f32.mrb[0].mxu0
        %v701 = vpop.f32.mrb[0].mxu0
        %v702 = vadd.f32 %v493, %v701
        %v703 = vpop.f32.mrb[0].mxu0
        %704 = vmatprep.mubr.bf16.mxu0 0
        %705 = vmatmul.mubr.bf16.gmra.mrb[0].mxu0 %v304
        %v706 = vpop.f32.mrb[0].mxu0
        %v707 = vadd.f32 %v498, %v706
        %v708 = vpop.f32.mrb[0].mxu0
        %v709 = vpop.f32.mrb[0].mxu0
        %v710 = vadd.f32 %v501, %v709
        %v711 = vpop.f32.mrb[0].mxu0
        %712 = vmatprep.mubr.bf16.mxu0 0
        %713 = vmatmul.mubr.bf16.gmra.mrb[0].mxu0 %v305
        %v714 = vpop.f32.mrb[0].mxu0
        %v715 = vadd.f32 %v506, %v714
        %v716 = vpop.f32.mrb[0].mxu0
        %v717 = vpop.f32.mrb[0].mxu0
        %v718 = vadd.f32 %v509, %v717
        %v719 = vpop.f32.mrb[0].mxu0
        %720 = vmatprep.mubr.bf16.mxu0 0
        %721 = vmatmul.mubr.bf16.gmra.mrb[0].mxu0 %v306
        %v722 = vpop.f32.mrb[0].mxu0
        %v723 = vadd.f32 %v514, %v722
        %v724 = vpop.f32.mrb[0].mxu0
        %v725 = vpop.f32.mrb[0].mxu0
        %v726 = vadd.f32 %v517, %v725
        %v727 = vpop.f32.mrb[0].mxu0
        %728 = vmatprep.mubr.bf16.mxu0 0
        %729 = vmatmul.mubr.bf16.gmra.mrb[0].mxu0 %v307
        %v730 = vpop.f32.mrb[0].mxu0
        %v731 = vadd.f32 %v522, %v730
        %v732 = vpop.f32.mrb[0].mxu0
        %v733 = vpop.f32.mrb[0].mxu0
        %v734 = vadd.f32 %v525, %v733
        %v735 = vpop.f32.mrb[0].mxu0
        %736 = vmatprep.mubr.bf16.mxu0 0
        %737 = vmatmul.mubr.bf16.gmra.mrb[0].mxu0 %v308
        %v738 = vpop.f32.mrb[0].mxu0
        %v739 = vadd.f32 %v530, %v738
        %v740 = vpop.f32.mrb[0].mxu0
        %v741 = vpop.f32.mrb[0].mxu0
        %v742 = vadd.f32 %v533, %v741
        %v743 = vpop.f32.mrb[0].mxu0
        %744 = vmatprep.mubr.bf16.mxu0 0
        %745 = vmatmul.mubr.bf16.gmra.mrb[0].mxu0 %v309
        %v746 = vpop.f32.mrb[0].mxu0
        %v747 = vadd.f32 %v538, %v746
        %v748 = vpop.f32.mrb[0].mxu0
        %v749 = vpop.f32.mrb[0].mxu0
        %v750 = vadd.f32 %v541, %v749
        %v751 = vpop.f32.mrb[0].mxu0
        %752 = vmatprep.mubr.bf16.mxu0 0
        %753 = vmatmul.mubr.bf16.gmra.mrb[0].mxu0 %v310
        %v754 = vpop.f32.mrb[0].mxu0
        %v755 = vadd.f32 %v546, %v754
        %v756 = vpop.f32.mrb[0].mxu0
        %v757 = vpop.f32.mrb[0].mxu0
        %v758 = vadd.f32 %v549, %v757
        %v759 = vpop.f32.mrb[0].mxu0
        %760 = vmatprep.mubr.bf16.mxu0 0
        %761 = vmatmul.mubr.bf16.gmra.mrb[0].mxu0 %v311
        %v762 = vpop.f32.mrb[0].mxu0
        %v763 = vadd.f32 %v554, %v762
        %v764 = vpop.f32.mrb[0].mxu0
        %v765 = vpop.f32.mrb[0].mxu0
        %v766 = vadd.f32 %v557, %v765
        %v767 = vpop.f32.mrb[0].mxu0
        %768 = vmatprep.mubr.bf16.mxu0 0
        %769 = vmatmul.mubr.bf16.gmra.mrb[0].mxu0 %v312
        %v770 = vpop.f32.mrb[0].mxu0
        %v771 = vadd.f32 %v562, %v770
        %v772 = vpop.f32.mrb[0].mxu0
        %v773 = vpop.f32.mrb[0].mxu0
        %v774 = vadd.f32 %v565, %v773
        %v775 = vpop.f32.mrb[0].mxu0
        %776 = vmatprep.mubr.bf16.mxu0 0
        %777 = vmatmul.mubr.bf16.gmra.mrb[0].mxu0 %v313
        %v778 = vpop.f32.mrb[0].mxu0
        %v779 = vadd.f32 %v570, %v778
        %v780 = vpop.f32.mrb[0].mxu0
        %v781 = vpop.f32.mrb[0].mxu0
        %v782 = vadd.f32 %v573, %v781
        %v783 = vpop.f32.mrb[0].mxu0
        %784 = vmatprep.mubr.bf16.mxu0 0
        %785 = vmatmul.mubr.bf16.gmra.mrb[0].mxu0 %v314
        %v786 = vpop.f32.mrb[0].mxu0
        %v787 = vadd.f32 %v578, %v786
        %v788 = vpop.f32.mrb[0].mxu0
        %v789 = vpop.f32.mrb[0].mxu0
        %v790 = vadd.f32 %v581, %v789
        %v791 = vpop.f32.mrb[0].mxu0
        %792 = vmatprep.mubr.bf16.mxu0 0
        %793 = vmatmul.mubr.bf16.gmra.mrb[0].mxu0 %v315
        %v794 = vpop.f32.mrb[0].mxu0
        %v795 = vadd.f32 %v586, %v794
        %v796 = vpop.f32.mrb[0].mxu0
        %v797 = vpop.f32.mrb[0].mxu0
        %v798 = vadd.f32 %v589, %v797
        %v799 = vpop.f32.mrb[0].mxu0
        %800 = vmatprep.mubr.bf16.mxu0 0
        %801 = vmatmul.mubr.bf16.gmra.mrb[0].mxu0 %v316
        %v802 = vpop.f32.mrb[0].mxu0
        %v803 = vadd.f32 %v594, %v802
        %v804 = vpop.f32.mrb[0].mxu0
        %v805 = vpop.f32.mrb[0].mxu0
        %v806 = vadd.f32 %v597, %v805
        %v807 = vpop.f32.mrb[0].mxu0
        %808 = vmatprep.mubr.bf16.mxu0 0
        %809 = vmatmul.mubr.bf16.gmra.mrb[0].mxu0 %v317
        %v810 = vpop.f32.mrb[0].mxu0
        %v811 = vadd.f32 %v602, %v810
        %v812 = vpop.f32.mrb[0].mxu0
        %v813 = vpop.f32.mrb[0].mxu0
        %v814 = vadd.f32 %v605, %v813
        %v815 = vpop.f32.mrb[0].mxu0
        %816 = vdwg.mxu0
        %v817 = vld [vmem:[%s263 + $0x2] sm:$0xff]
        %v818 = vld [vmem:[%s263 + $0xa] sm:$0xff]
        %v819 = vld [vmem:[%s263 + $0x1a] sm:$0xff]
        %v820 = vld [vmem:[%s263 + $0x22] sm:$0xff]
        %v821 = vld [vmem:[%s263 + $0x32] sm:$0xff]
        %v822 = vld [vmem:[%s263 + $0x3a] sm:$0xff]
        %v823 = vld [vmem:[%s263 + $0x4a] sm:$0xff]
        %v824 = vld [vmem:[%s263 + $0x52] sm:$0xff]
        %v825 = vld [vmem:[%s263 + $0x62] sm:$0xff]
        %v826 = vld [vmem:[%s263 + $0x6a] sm:$0xff]
        %v827 = vld [vmem:[%s263 + $0x7a] sm:$0xff]
        %v828 = vld [vmem:[%s263 + $0x82] sm:$0xff]
        %v829 = vld [vmem:[%s263 + $0x92] sm:$0xff]
        %v830 = vld [vmem:[%s263 + $0x9a] sm:$0xff]
        %v831 = vld [vmem:[%s263 + $0xaa] sm:$0xff]
        %v832 = vld [vmem:[%s263 + $0xb2] sm:$0xff]
        %v833 = vld [vmem:[%s263 + $0xc2] sm:$0xff]
        %v834 = vld [vmem:[%s263 + $0xca] sm:$0xff]
        %v835 = vld [vmem:[%s263 + $0xda] sm:$0xff]
        %v836 = vld [vmem:[%s263 + $0xe2] sm:$0xff]
        %v837 = vld [vmem:[%s263 + $0xf2] sm:$0xff]
        %v838 = vld [vmem:[%s263 + $0xfa] sm:$0xff]
        %v839 = vld [vmem:[%s263 + $0x10a] sm:$0xff]
        %v840 = vld [vmem:[%s263 + $0x112] sm:$0xff]
        %v841 = vld [vmem:[%s263 + $0x122] sm:$0xff]
        %v842 = vld [vmem:[%s263 + $0x12a] sm:$0xff]
        %v843 = vld [vmem:[%s263 + $0x13a] sm:$0xff]
        %v844 = vld [vmem:[%s263 + $0x142] sm:$0xff]
        %v845 = vld [vmem:[%s263 + $0x152] sm:$0xff]
        %v846 = vld [vmem:[%s263 + $0x15a] sm:$0xff]
        %v847 = vld [vmem:[%s263 + $0x16a] sm:$0xff]
        %v848 = vld [vmem:[%s263 + $0x172] sm:$0xff]
        %v849 = vpack.c.bf16 %v818, %v817
        %v850 = vpack.c.bf16 %v820, %v819
        %v851 = vpack.c.bf16 %v822, %v821
        %v852 = vpack.c.bf16 %v824, %v823
        %v853 = vpack.c.bf16 %v826, %v825
        %v854 = vpack.c.bf16 %v828, %v827
        %v855 = vpack.c.bf16 %v830, %v829
        %v856 = vpack.c.bf16 %v832, %v831
        %v857 = vpack.c.bf16 %v834, %v833
        %v858 = vpack.c.bf16 %v836, %v835
        %v859 = vpack.c.bf16 %v838, %v837
        %v860 = vpack.c.bf16 %v840, %v839
        %v861 = vpack.c.bf16 %v842, %v841
        %v862 = vpack.c.bf16 %v844, %v843
        %v863 = vpack.c.bf16 %v846, %v845
        %v864 = vpack.c.bf16 %v848, %v847
        %s865 = scalar_lea.vmem %s2, 128
        %v866 = vld [vmem:[%s865] sm:$0xf]
        %v867 = vld [vmem:[%s865 + $0x4] sm:$0xf]
        %v868 = vld [vmem:[%s865 + $0x8] sm:$0xf]
        %v869 = vld [vmem:[%s865 + $0xc] sm:$0xf]
        %v870 = vld [vmem:[%s865 + $0x10] sm:$0xf]
        %v871 = vld [vmem:[%s865 + $0x14] sm:$0xf]
        %v872 = vld [vmem:[%s865 + $0x18] sm:$0xf]
        %v873 = vld [vmem:[%s865 + $0x1c] sm:$0xf]
        %v874 = vld [vmem:[%s865 + $0x20] sm:$0xf]
        %v875 = vld [vmem:[%s865 + $0x24] sm:$0xf]
        %v876 = vld [vmem:[%s865 + $0x28] sm:$0xf]
        %v877 = vld [vmem:[%s865 + $0x2c] sm:$0xf]
        %v878 = vld [vmem:[%s865 + $0x30] sm:$0xf]
        %v879 = vld [vmem:[%s865 + $0x34] sm:$0xf]
        %v880 = vld [vmem:[%s865 + $0x38] sm:$0xf]
        %v881 = vld [vmem:[%s865 + $0x3c] sm:$0xf]
        %v898 = vunpack.c.l.b16 %v866
        %v899 = vunpack.c.l.b16 %v867
        %v900 = vunpack.c.l.b16 %v868
        %v901 = vunpack.c.l.b16 %v869
        %v902 = vunpack.c.l.b16 %v870
        %v903 = vunpack.c.l.b16 %v871
        %v904 = vunpack.c.l.b16 %v872
        %v905 = vunpack.c.l.b16 %v873
        %v906 = vunpack.c.l.b16 %v874
        %v907 = vunpack.c.l.b16 %v875
        %v908 = vunpack.c.l.b16 %v876
        %v909 = vunpack.c.l.b16 %v877
        %v910 = vunpack.c.l.b16 %v878
        %v911 = vunpack.c.l.b16 %v879
        %v912 = vunpack.c.l.b16 %v880
        %v913 = vunpack.c.l.b16 %v881
        %v914 = vpack.c.b16 %v899, %v898
        %v915 = vpack.c.b16 %v901, %v900
        %v916 = vpack.c.b16 %v903, %v902
        %v917 = vpack.c.b16 %v905, %v904
        %v918 = vpack.c.b16 %v907, %v906
        %v919 = vpack.c.b16 %v909, %v908
        %v920 = vpack.c.b16 %v911, %v910
        %v921 = vpack.c.b16 %v913, %v912
        %930 = vmatprep.subr.bf16.mxu0 0
        %931 = vmatpush1.bf16.msra.mxu0 %v914
        %932 = vmatprep.subr.bf16.mxu0 0
        %933 = vmatpush1.bf16.msra.mxu0 %v915
        %934 = vmatprep.subr.bf16.mxu0 0
        %935 = vmatpush1.bf16.msra.mxu0 %v916
        %936 = vmatprep.subr.bf16.mxu0 0
        %937 = vmatpush1.bf16.msra.mxu0 %v917
        %938 = vmatprep.subr.bf16.mxu0 0
        %939 = vmatpush1.bf16.msra.mxu0 %v918
        %940 = vmatprep.subr.bf16.mxu0 0
        %941 = vmatpush1.bf16.msra.mxu0 %v919
        %942 = vmatprep.subr.bf16.mxu0 0
        %943 = vmatpush1.bf16.msra.mxu0 %v920
        %944 = vmatprep.subr.bf16.mxu0 0
        %945 = vmatpush1.bf16.msra.mxu0 %v921
        %946 = vmatprep.subr.bf16.mxu0 0
        %947 = vmatpush1.bf16.msra.mxu0 0
        %948 = vmatprep.subr.bf16.mxu0 0
        %949 = vmatpush1.bf16.msra.mxu0 0
        %950 = vmatprep.subr.bf16.mxu0 0
        %951 = vmatpush1.bf16.msra.mxu0 0
        %952 = vmatprep.subr.bf16.mxu0 0
        %953 = vmatpush1.bf16.msra.mxu0 0
        %954 = vmatprep.subr.bf16.mxu0 0
        %955 = vmatpush1.bf16.msra.mxu0 0
        %956 = vmatprep.subr.bf16.mxu0 0
        %957 = vmatpush1.bf16.msra.mxu0 0
        %958 = vmatprep.subr.bf16.mxu0 0
        %959 = vmatpush1.bf16.msra.mxu0 0
        %960 = vmatprep.subr.bf16.mxu0 0
        %961 = vmatpush1.bf16.msra.mxu0 0
        %962 = vmatprep.mubr.bf16.mxu0 0
        %963 = vmatmul.mubr.bf16.gmra.mrb[0].mxu0 %v849
        %v964 = vpop.f32.mrb[0].mxu0
        %v965 = vadd.f32 0.0, %v964
        %v966 = vpop.f32.mrb[0].mxu0
        %v967 = vpop.f32.mrb[0].mxu0
        %v968 = vadd.f32 0.0, %v967
        %v969 = vpop.f32.mrb[0].mxu0
        %970 = vmatprep.mubr.bf16.mxu0 0
        %971 = vmatmul.mubr.bf16.gmra.mrb[0].mxu0 %v850
        %v972 = vpop.f32.mrb[0].mxu0
        %v973 = vadd.f32 0.0, %v972
        %v974 = vpop.f32.mrb[0].mxu0
        %v975 = vpop.f32.mrb[0].mxu0
        %v976 = vadd.f32 0.0, %v975
        %v977 = vpop.f32.mrb[0].mxu0
        %978 = vmatprep.mubr.bf16.mxu0 0
        %979 = vmatmul.mubr.bf16.gmra.mrb[0].mxu0 %v851
        %v980 = vpop.f32.mrb[0].mxu0
        %v981 = vadd.f32 0.0, %v980
        %v982 = vpop.f32.mrb[0].mxu0
        %v983 = vpop.f32.mrb[0].mxu0
        %v984 = vadd.f32 0.0, %v983
        %v985 = vpop.f32.mrb[0].mxu0
        %986 = vmatprep.mubr.bf16.mxu0 0
        %987 = vmatmul.mubr.bf16.gmra.mrb[0].mxu0 %v852
        %v988 = vpop.f32.mrb[0].mxu0
        %v989 = vadd.f32 0.0, %v988
        %v990 = vpop.f32.mrb[0].mxu0
        %v991 = vpop.f32.mrb[0].mxu0
        %v992 = vadd.f32 0.0, %v991
        %v993 = vpop.f32.mrb[0].mxu0
        %994 = vmatprep.mubr.bf16.mxu0 0
        %995 = vmatmul.mubr.bf16.gmra.mrb[0].mxu0 %v853
        %v996 = vpop.f32.mrb[0].mxu0
        %v997 = vadd.f32 0.0, %v996
        %v998 = vpop.f32.mrb[0].mxu0
        %v999 = vpop.f32.mrb[0].mxu0
        %v1000 = vadd.f32 0.0, %v999
        %v1001 = vpop.f32.mrb[0].mxu0
        %1002 = vmatprep.mubr.bf16.mxu0 0
        %1003 = vmatmul.mubr.bf16.gmra.mrb[0].mxu0 %v854
        %v1004 = vpop.f32.mrb[0].mxu0
        %v1005 = vadd.f32 0.0, %v1004
        %v1006 = vpop.f32.mrb[0].mxu0
        %v1007 = vpop.f32.mrb[0].mxu0
        %v1008 = vadd.f32 0.0, %v1007
        %v1009 = vpop.f32.mrb[0].mxu0
        %1010 = vmatprep.mubr.bf16.mxu0 0
        %1011 = vmatmul.mubr.bf16.gmra.mrb[0].mxu0 %v855
        %v1012 = vpop.f32.mrb[0].mxu0
        %v1013 = vadd.f32 0.0, %v1012
        %v1014 = vpop.f32.mrb[0].mxu0
        %v1015 = vpop.f32.mrb[0].mxu0
        %v1016 = vadd.f32 0.0, %v1015
        %v1017 = vpop.f32.mrb[0].mxu0
        %1018 = vmatprep.mubr.bf16.mxu0 0
        %1019 = vmatmul.mubr.bf16.gmra.mrb[0].mxu0 %v856
        %v1020 = vpop.f32.mrb[0].mxu0
        %v1021 = vadd.f32 0.0, %v1020
        %v1022 = vpop.f32.mrb[0].mxu0
        %v1023 = vpop.f32.mrb[0].mxu0
        %v1024 = vadd.f32 0.0, %v1023
        %v1025 = vpop.f32.mrb[0].mxu0
        %1026 = vmatprep.mubr.bf16.mxu0 0
        %1027 = vmatmul.mubr.bf16.gmra.mrb[0].mxu0 %v857
        %v1028 = vpop.f32.mrb[0].mxu0
        %v1029 = vadd.f32 0.0, %v1028
        %v1030 = vpop.f32.mrb[0].mxu0
        %v1031 = vpop.f32.mrb[0].mxu0
        %v1032 = vadd.f32 0.0, %v1031
        %v1033 = vpop.f32.mrb[0].mxu0
        %1034 = vmatprep.mubr.bf16.mxu0 0
        %1035 = vmatmul.mubr.bf16.gmra.mrb[0].mxu0 %v858
        %v1036 = vpop.f32.mrb[0].mxu0
        %v1037 = vadd.f32 0.0, %v1036
        %v1038 = vpop.f32.mrb[0].mxu0
        %v1039 = vpop.f32.mrb[0].mxu0
        %v1040 = vadd.f32 0.0, %v1039
        %v1041 = vpop.f32.mrb[0].mxu0
        %1042 = vmatprep.mubr.bf16.mxu0 0
        %1043 = vmatmul.mubr.bf16.gmra.mrb[0].mxu0 %v859
        %v1044 = vpop.f32.mrb[0].mxu0
        %v1045 = vadd.f32 0.0, %v1044
        %v1046 = vpop.f32.mrb[0].mxu0
        %v1047 = vpop.f32.mrb[0].mxu0
        %v1048 = vadd.f32 0.0, %v1047
        %v1049 = vpop.f32.mrb[0].mxu0
        %1050 = vmatprep.mubr.bf16.mxu0 0
        %1051 = vmatmul.mubr.bf16.gmra.mrb[0].mxu0 %v860
        %v1052 = vpop.f32.mrb[0].mxu0
        %v1053 = vadd.f32 0.0, %v1052
        %v1054 = vpop.f32.mrb[0].mxu0
        %v1055 = vpop.f32.mrb[0].mxu0
        %v1056 = vadd.f32 0.0, %v1055
        %v1057 = vpop.f32.mrb[0].mxu0
        %1058 = vmatprep.mubr.bf16.mxu0 0
        %1059 = vmatmul.mubr.bf16.gmra.mrb[0].mxu0 %v861
        %v1060 = vpop.f32.mrb[0].mxu0
        %v1061 = vadd.f32 0.0, %v1060
        %v1062 = vpop.f32.mrb[0].mxu0
        %v1063 = vpop.f32.mrb[0].mxu0
        %v1064 = vadd.f32 0.0, %v1063
        %v1065 = vpop.f32.mrb[0].mxu0
        %1066 = vmatprep.mubr.bf16.mxu0 0
        %1067 = vmatmul.mubr.bf16.gmra.mrb[0].mxu0 %v862
        %v1068 = vpop.f32.mrb[0].mxu0
        %v1069 = vadd.f32 0.0, %v1068
        %v1070 = vpop.f32.mrb[0].mxu0
        %v1071 = vpop.f32.mrb[0].mxu0
        %v1072 = vadd.f32 0.0, %v1071
        %v1073 = vpop.f32.mrb[0].mxu0
        %1074 = vmatprep.mubr.bf16.mxu0 0
        %1075 = vmatmul.mubr.bf16.gmra.mrb[0].mxu0 %v863
        %v1076 = vpop.f32.mrb[0].mxu0
        %v1077 = vadd.f32 0.0, %v1076
        %v1078 = vpop.f32.mrb[0].mxu0
        %v1079 = vpop.f32.mrb[0].mxu0
        %v1080 = vadd.f32 0.0, %v1079
        %v1081 = vpop.f32.mrb[0].mxu0
        %1082 = vmatprep.mubr.bf16.mxu0 0
        %1083 = vmatmul.mubr.bf16.gmra.mrb[0].mxu0 %v864
        %v1084 = vpop.f32.mrb[0].mxu0
        %v1085 = vadd.f32 0.0, %v1084
        %v1086 = vpop.f32.mrb[0].mxu0
        %v1087 = vpop.f32.mrb[0].mxu0
        %v1088 = vadd.f32 0.0, %v1087
        %v1089 = vpop.f32.mrb[0].mxu0
        %1090 = vdwg.mxu0
        %v1091 = vadd.f32 %v691, %v965
        %v1092 = vadd.f32 %v694, %v968
        %v1093 = vadd.f32 %v699, %v973
        %v1094 = vadd.f32 %v702, %v976
        %v1095 = vadd.f32 %v707, %v981
        %v1096 = vadd.f32 %v710, %v984
        %v1097 = vadd.f32 %v715, %v989
        %v1098 = vadd.f32 %v718, %v992
        %v1099 = vadd.f32 %v723, %v997
        %v1100 = vadd.f32 %v726, %v1000
        %v1101 = vadd.f32 %v731, %v1005
        %v1102 = vadd.f32 %v734, %v1008
        %v1103 = vadd.f32 %v739, %v1013
        %v1104 = vadd.f32 %v742, %v1016
        %v1105 = vadd.f32 %v747, %v1021
        %v1106 = vadd.f32 %v750, %v1024
        %v1107 = vadd.f32 %v755, %v1029
        %v1108 = vadd.f32 %v758, %v1032
        %v1109 = vadd.f32 %v763, %v1037
        %v1110 = vadd.f32 %v766, %v1040
        %v1111 = vadd.f32 %v771, %v1045
        %v1112 = vadd.f32 %v774, %v1048
        %v1113 = vadd.f32 %v779, %v1053
        %v1114 = vadd.f32 %v782, %v1056
        %v1115 = vadd.f32 %v787, %v1061
        %v1116 = vadd.f32 %v790, %v1064
        %v1117 = vadd.f32 %v795, %v1069
        %v1118 = vadd.f32 %v798, %v1072
        %v1119 = vadd.f32 %v803, %v1077
        %v1120 = vadd.f32 %v806, %v1080
        %v1121 = vadd.f32 %v811, %v1085
        %v1122 = vadd.f32 %v814, %v1088
        %s1123 = scalar_lea.vmem %s263, 24
        %v1124 = vld [vmem:[%s1123] sm:$0xff]
        %v1125 = vld [vmem:[%s1123 + $0x8] sm:$0xff]
        %v1126 = vld [vmem:[%s1123 + $0x18] sm:$0xff]
        %v1127 = vld [vmem:[%s1123 + $0x20] sm:$0xff]
        %v1128 = vld [vmem:[%s1123 + $0x30] sm:$0xff]
        %v1129 = vld [vmem:[%s1123 + $0x38] sm:$0xff]
        %v1130 = vld [vmem:[%s1123 + $0x48] sm:$0xff]
        %v1131 = vld [vmem:[%s1123 + $0x50] sm:$0xff]
        %v1132 = vld [vmem:[%s1123 + $0x60] sm:$0xff]
        %v1133 = vld [vmem:[%s1123 + $0x68] sm:$0xff]
        %v1134 = vld [vmem:[%s1123 + $0x78] sm:$0xff]
        %v1135 = vld [vmem:[%s1123 + $0x80] sm:$0xff]
        %v1136 = vld [vmem:[%s1123 + $0x90] sm:$0xff]
        %v1137 = vld [vmem:[%s1123 + $0x98] sm:$0xff]
        %v1138 = vld [vmem:[%s1123 + $0xa8] sm:$0xff]
        %v1139 = vld [vmem:[%s1123 + $0xb0] sm:$0xff]
        %v1140 = vld [vmem:[%s1123 + $0xc0] sm:$0xff]
        %v1141 = vld [vmem:[%s1123 + $0xc8] sm:$0xff]
        %v1142 = vld [vmem:[%s1123 + $0xd8] sm:$0xff]
        %v1143 = vld [vmem:[%s1123 + $0xe0] sm:$0xff]
        %v1144 = vld [vmem:[%s1123 + $0xf0] sm:$0xff]
        %v1145 = vld [vmem:[%s1123 + $0xf8] sm:$0xff]
        %v1146 = vld [vmem:[%s1123 + $0x108] sm:$0xff]
        %v1147 = vld [vmem:[%s1123 + $0x110] sm:$0xff]
        %v1148 = vld [vmem:[%s1123 + $0x120] sm:$0xff]
        %v1149 = vld [vmem:[%s1123 + $0x128] sm:$0xff]
        %v1150 = vld [vmem:[%s1123 + $0x138] sm:$0xff]
        %v1151 = vld [vmem:[%s1123 + $0x140] sm:$0xff]
        %v1152 = vld [vmem:[%s1123 + $0x150] sm:$0xff]
        %v1153 = vld [vmem:[%s1123 + $0x158] sm:$0xff]
        %v1154 = vld [vmem:[%s1123 + $0x168] sm:$0xff]
        %v1155 = vld [vmem:[%s1123 + $0x170] sm:$0xff]
        %v1156 = vpack.c.bf16 %v1125, %v1124
        %v1157 = vpack.c.bf16 %v1127, %v1126
        %v1158 = vpack.c.bf16 %v1129, %v1128
        %v1159 = vpack.c.bf16 %v1131, %v1130
        %v1160 = vpack.c.bf16 %v1133, %v1132
        %v1161 = vpack.c.bf16 %v1135, %v1134
        %v1162 = vpack.c.bf16 %v1137, %v1136
        %v1163 = vpack.c.bf16 %v1139, %v1138
        %v1164 = vpack.c.bf16 %v1141, %v1140
        %v1165 = vpack.c.bf16 %v1143, %v1142
        %v1166 = vpack.c.bf16 %v1145, %v1144
        %v1167 = vpack.c.bf16 %v1147, %v1146
        %v1168 = vpack.c.bf16 %v1149, %v1148
        %v1169 = vpack.c.bf16 %v1151, %v1150
        %v1170 = vpack.c.bf16 %v1153, %v1152
        %v1171 = vpack.c.bf16 %v1155, %v1154
        %s1172 = scalar_lea.vmem %s2, 192
        %v1173 = vld [vmem:[%s1172] sm:$0xf]
        %v1174 = vld [vmem:[%s1172 + $0x4] sm:$0xf]
        %v1175 = vld [vmem:[%s1172 + $0x8] sm:$0xf]
        %v1176 = vld [vmem:[%s1172 + $0xc] sm:$0xf]
        %v1177 = vld [vmem:[%s1172 + $0x10] sm:$0xf]
        %v1178 = vld [vmem:[%s1172 + $0x14] sm:$0xf]
        %v1179 = vld [vmem:[%s1172 + $0x18] sm:$0xf]
        %v1180 = vld [vmem:[%s1172 + $0x1c] sm:$0xf]
        %v1181 = vld [vmem:[%s1172 + $0x20] sm:$0xf]
        %v1182 = vld [vmem:[%s1172 + $0x24] sm:$0xf]
        %v1183 = vld [vmem:[%s1172 + $0x28] sm:$0xf]
        %v1184 = vld [vmem:[%s1172 + $0x2c] sm:$0xf]
        %v1185 = vld [vmem:[%s1172 + $0x30] sm:$0xf]
        %v1186 = vld [vmem:[%s1172 + $0x34] sm:$0xf]
        %v1187 = vld [vmem:[%s1172 + $0x38] sm:$0xf]
        %v1188 = vld [vmem:[%s1172 + $0x3c] sm:$0xf]
        %v1205 = vunpack.c.l.b16 %v1173
        %v1206 = vunpack.c.l.b16 %v1174
        %v1207 = vunpack.c.l.b16 %v1175
        %v1208 = vunpack.c.l.b16 %v1176
        %v1209 = vunpack.c.l.b16 %v1177
        %v1210 = vunpack.c.l.b16 %v1178
        %v1211 = vunpack.c.l.b16 %v1179
        %v1212 = vunpack.c.l.b16 %v1180
        %v1213 = vunpack.c.l.b16 %v1181
        %v1214 = vunpack.c.l.b16 %v1182
        %v1215 = vunpack.c.l.b16 %v1183
        %v1216 = vunpack.c.l.b16 %v1184
        %v1217 = vunpack.c.l.b16 %v1185
        %v1218 = vunpack.c.l.b16 %v1186
        %v1219 = vunpack.c.l.b16 %v1187
        %v1220 = vunpack.c.l.b16 %v1188
        %v1221 = vpack.c.b16 %v1206, %v1205
        %v1222 = vpack.c.b16 %v1208, %v1207
        %v1223 = vpack.c.b16 %v1210, %v1209
        %v1224 = vpack.c.b16 %v1212, %v1211
        %v1225 = vpack.c.b16 %v1214, %v1213
        %v1226 = vpack.c.b16 %v1216, %v1215
        %v1227 = vpack.c.b16 %v1218, %v1217
        %v1228 = vpack.c.b16 %v1220, %v1219
        %1237 = vmatprep.subr.bf16.mxu0 0
        %1238 = vmatpush1.bf16.msra.mxu0 %v1221
        %1239 = vmatprep.subr.bf16.mxu0 0
        %1240 = vmatpush1.bf16.msra.mxu0 %v1222
        %1241 = vmatprep.subr.bf16.mxu0 0
        %1242 = vmatpush1.bf16.msra.mxu0 %v1223
        %1243 = vmatprep.subr.bf16.mxu0 0
        %1244 = vmatpush1.bf16.msra.mxu0 %v1224
        %1245 = vmatprep.subr.bf16.mxu0 0
        %1246 = vmatpush1.bf16.msra.mxu0 %v1225
        %1247 = vmatprep.subr.bf16.mxu0 0
        %1248 = vmatpush1.bf16.msra.mxu0 %v1226
        %1249 = vmatprep.subr.bf16.mxu0 0
        %1250 = vmatpush1.bf16.msra.mxu0 %v1227
        %1251 = vmatprep.subr.bf16.mxu0 0
        %1252 = vmatpush1.bf16.msra.mxu0 %v1228
        %1253 = vmatprep.subr.bf16.mxu0 0
        %1254 = vmatpush1.bf16.msra.mxu0 0
        %1255 = vmatprep.subr.bf16.mxu0 0
        %1256 = vmatpush1.bf16.msra.mxu0 0
        %1257 = vmatprep.subr.bf16.mxu0 0
        %1258 = vmatpush1.bf16.msra.mxu0 0
        %1259 = vmatprep.subr.bf16.mxu0 0
        %1260 = vmatpush1.bf16.msra.mxu0 0
        %1261 = vmatprep.subr.bf16.mxu0 0
        %1262 = vmatpush1.bf16.msra.mxu0 0
        %1263 = vmatprep.subr.bf16.mxu0 0
        %1264 = vmatpush1.bf16.msra.mxu0 0
        %1265 = vmatprep.subr.bf16.mxu0 0
        %1266 = vmatpush1.bf16.msra.mxu0 0
        %1267 = vmatprep.subr.bf16.mxu0 0
        %1268 = vmatpush1.bf16.msra.mxu0 0
        %1269 = vmatprep.mubr.bf16.mxu0 0
        %1270 = vmatmul.mubr.bf16.gmra.mrb[0].mxu0 %v1156
        %v1271 = vpop.f32.mrb[0].mxu0
        %v1272 = vadd.f32 0.0, %v1271
        %v1273 = vpop.f32.mrb[0].mxu0
        %v1274 = vpop.f32.mrb[0].mxu0
        %v1275 = vadd.f32 0.0, %v1274
        %v1276 = vpop.f32.mrb[0].mxu0
        %1277 = vmatprep.mubr.bf16.mxu0 0
        %1278 = vmatmul.mubr.bf16.gmra.mrb[0].mxu0 %v1157
        %v1279 = vpop.f32.mrb[0].mxu0
        %v1280 = vadd.f32 0.0, %v1279
        %v1281 = vpop.f32.mrb[0].mxu0
        %v1282 = vpop.f32.mrb[0].mxu0
        %v1283 = vadd.f32 0.0, %v1282
        %v1284 = vpop.f32.mrb[0].mxu0
        %1285 = vmatprep.mubr.bf16.mxu0 0
        %1286 = vmatmul.mubr.bf16.gmra.mrb[0].mxu0 %v1158
        %v1287 = vpop.f32.mrb[0].mxu0
        %v1288 = vadd.f32 0.0, %v1287
        %v1289 = vpop.f32.mrb[0].mxu0
        %v1290 = vpop.f32.mrb[0].mxu0
        %v1291 = vadd.f32 0.0, %v1290
        %v1292 = vpop.f32.mrb[0].mxu0
        %1293 = vmatprep.mubr.bf16.mxu0 0
        %1294 = vmatmul.mubr.bf16.gmra.mrb[0].mxu0 %v1159
        %v1295 = vpop.f32.mrb[0].mxu0
        %v1296 = vadd.f32 0.0, %v1295
        %v1297 = vpop.f32.mrb[0].mxu0
        %v1298 = vpop.f32.mrb[0].mxu0
        %v1299 = vadd.f32 0.0, %v1298
        %v1300 = vpop.f32.mrb[0].mxu0
        %1301 = vmatprep.mubr.bf16.mxu0 0
        %1302 = vmatmul.mubr.bf16.gmra.mrb[0].mxu0 %v1160
        %v1303 = vpop.f32.mrb[0].mxu0
        %v1304 = vadd.f32 0.0, %v1303
        %v1305 = vpop.f32.mrb[0].mxu0
        %v1306 = vpop.f32.mrb[0].mxu0
        %v1307 = vadd.f32 0.0, %v1306
        %v1308 = vpop.f32.mrb[0].mxu0
        %1309 = vmatprep.mubr.bf16.mxu0 0
        %1310 = vmatmul.mubr.bf16.gmra.mrb[0].mxu0 %v1161
        %v1311 = vpop.f32.mrb[0].mxu0
        %v1312 = vadd.f32 0.0, %v1311
        %v1313 = vpop.f32.mrb[0].mxu0
        %v1314 = vpop.f32.mrb[0].mxu0
        %v1315 = vadd.f32 0.0, %v1314
        %v1316 = vpop.f32.mrb[0].mxu0
        %1317 = vmatprep.mubr.bf16.mxu0 0
        %1318 = vmatmul.mubr.bf16.gmra.mrb[0].mxu0 %v1162
        %v1319 = vpop.f32.mrb[0].mxu0
        %v1320 = vadd.f32 0.0, %v1319
        %v1321 = vpop.f32.mrb[0].mxu0
        %v1322 = vpop.f32.mrb[0].mxu0
        %v1323 = vadd.f32 0.0, %v1322
        %v1324 = vpop.f32.mrb[0].mxu0
        %1325 = vmatprep.mubr.bf16.mxu0 0
        %1326 = vmatmul.mubr.bf16.gmra.mrb[0].mxu0 %v1163
        %v1327 = vpop.f32.mrb[0].mxu0
        %v1328 = vadd.f32 0.0, %v1327
        %v1329 = vpop.f32.mrb[0].mxu0
        %v1330 = vpop.f32.mrb[0].mxu0
        %v1331 = vadd.f32 0.0, %v1330
        %v1332 = vpop.f32.mrb[0].mxu0
        %1333 = vmatprep.mubr.bf16.mxu0 0
        %1334 = vmatmul.mubr.bf16.gmra.mrb[0].mxu0 %v1164
        %v1335 = vpop.f32.mrb[0].mxu0
        %v1336 = vadd.f32 0.0, %v1335
        %v1337 = vpop.f32.mrb[0].mxu0
        %v1338 = vpop.f32.mrb[0].mxu0
        %v1339 = vadd.f32 0.0, %v1338
        %v1340 = vpop.f32.mrb[0].mxu0
        %1341 = vmatprep.mubr.bf16.mxu0 0
        %1342 = vmatmul.mubr.bf16.gmra.mrb[0].mxu0 %v1165
        %v1343 = vpop.f32.mrb[0].mxu0
        %v1344 = vadd.f32 0.0, %v1343
        %v1345 = vpop.f32.mrb[0].mxu0
        %v1346 = vpop.f32.mrb[0].mxu0
        %v1347 = vadd.f32 0.0, %v1346
        %v1348 = vpop.f32.mrb[0].mxu0
        %1349 = vmatprep.mubr.bf16.mxu0 0
        %1350 = vmatmul.mubr.bf16.gmra.mrb[0].mxu0 %v1166
        %v1351 = vpop.f32.mrb[0].mxu0
        %v1352 = vadd.f32 0.0, %v1351
        %v1353 = vpop.f32.mrb[0].mxu0
        %v1354 = vpop.f32.mrb[0].mxu0
        %v1355 = vadd.f32 0.0, %v1354
        %v1356 = vpop.f32.mrb[0].mxu0
        %1357 = vmatprep.mubr.bf16.mxu0 0
        %1358 = vmatmul.mubr.bf16.gmra.mrb[0].mxu0 %v1167
        %v1359 = vpop.f32.mrb[0].mxu0
        %v1360 = vadd.f32 0.0, %v1359
        %v1361 = vpop.f32.mrb[0].mxu0
        %v1362 = vpop.f32.mrb[0].mxu0
        %v1363 = vadd.f32 0.0, %v1362
        %v1364 = vpop.f32.mrb[0].mxu0
        %1365 = vmatprep.mubr.bf16.mxu0 0
        %1366 = vmatmul.mubr.bf16.gmra.mrb[0].mxu0 %v1168
        %v1367 = vpop.f32.mrb[0].mxu0
        %v1368 = vadd.f32 0.0, %v1367
        %v1369 = vpop.f32.mrb[0].mxu0
        %v1370 = vpop.f32.mrb[0].mxu0
        %v1371 = vadd.f32 0.0, %v1370
        %v1372 = vpop.f32.mrb[0].mxu0
        %1373 = vmatprep.mubr.bf16.mxu0 0
        %1374 = vmatmul.mubr.bf16.gmra.mrb[0].mxu0 %v1169
        %v1375 = vpop.f32.mrb[0].mxu0
        %v1376 = vadd.f32 0.0, %v1375
        %v1377 = vpop.f32.mrb[0].mxu0
        %v1378 = vpop.f32.mrb[0].mxu0
        %v1379 = vadd.f32 0.0, %v1378
        %v1380 = vpop.f32.mrb[0].mxu0
        %1381 = vmatprep.mubr.bf16.mxu0 0
        %1382 = vmatmul.mubr.bf16.gmra.mrb[0].mxu0 %v1170
        %v1383 = vpop.f32.mrb[0].mxu0
        %v1384 = vadd.f32 0.0, %v1383
        %v1385 = vpop.f32.mrb[0].mxu0
        %v1386 = vpop.f32.mrb[0].mxu0
        %v1387 = vadd.f32 0.0, %v1386
        %v1388 = vpop.f32.mrb[0].mxu0
        %1389 = vmatprep.mubr.bf16.mxu0 0
        %1390 = vmatmul.mubr.bf16.gmra.mrb[0].mxu0 %v1171
        %v1391 = vpop.f32.mrb[0].mxu0
        %v1392 = vadd.f32 0.0, %v1391
        %v1393 = vpop.f32.mrb[0].mxu0
        %v1394 = vpop.f32.mrb[0].mxu0
        %v1395 = vadd.f32 0.0, %v1394
        %v1396 = vpop.f32.mrb[0].mxu0
        %1397 = vdwg.mxu0
        %v1398 = vadd.f32 %v1091, %v1272
        %v1399 = vadd.f32 %v1092, %v1275
        %v1400 = vadd.f32 %v1093, %v1280
        %v1401 = vadd.f32 %v1094, %v1283
        %v1402 = vadd.f32 %v1095, %v1288
        %v1403 = vadd.f32 %v1096, %v1291
        %v1404 = vadd.f32 %v1097, %v1296
        %v1405 = vadd.f32 %v1098, %v1299
        %v1406 = vadd.f32 %v1099, %v1304
        %v1407 = vadd.f32 %v1100, %v1307
        %v1408 = vadd.f32 %v1101, %v1312
        %v1409 = vadd.f32 %v1102, %v1315
        %v1410 = vadd.f32 %v1103, %v1320
        %v1411 = vadd.f32 %v1104, %v1323
        %v1412 = vadd.f32 %v1105, %v1328
        %v1413 = vadd.f32 %v1106, %v1331
        %v1414 = vadd.f32 %v1107, %v1336
        %v1415 = vadd.f32 %v1108, %v1339
        %v1416 = vadd.f32 %v1109, %v1344
        %v1417 = vadd.f32 %v1110, %v1347
        %v1418 = vadd.f32 %v1111, %v1352
        %v1419 = vadd.f32 %v1112, %v1355
        %v1420 = vadd.f32 %v1113, %v1360
        %v1421 = vadd.f32 %v1114, %v1363
        %v1422 = vadd.f32 %v1115, %v1368
        %v1423 = vadd.f32 %v1116, %v1371
        %v1424 = vadd.f32 %v1117, %v1376
        %v1425 = vadd.f32 %v1118, %v1379
        %v1426 = vadd.f32 %v1119, %v1384
        %v1427 = vadd.f32 %v1120, %v1387
        %v1428 = vadd.f32 %v1121, %v1392
        %v1429 = vadd.f32 %v1122, %v1395
        %v1430 = vld [vmem:[%s1123 + $0x1] sm:$0xff]
        %v1431 = vld [vmem:[%s1123 + $0x9] sm:$0xff]
        %v1432 = vld [vmem:[%s1123 + $0x19] sm:$0xff]
        %v1433 = vld [vmem:[%s1123 + $0x21] sm:$0xff]
        %v1434 = vld [vmem:[%s1123 + $0x31] sm:$0xff]
        %v1435 = vld [vmem:[%s1123 + $0x39] sm:$0xff]
        %v1436 = vld [vmem:[%s1123 + $0x49] sm:$0xff]
        %v1437 = vld [vmem:[%s1123 + $0x51] sm:$0xff]
        %v1438 = vld [vmem:[%s1123 + $0x61] sm:$0xff]
        %v1439 = vld [vmem:[%s1123 + $0x69] sm:$0xff]
        %v1440 = vld [vmem:[%s1123 + $0x79] sm:$0xff]
        %v1441 = vld [vmem:[%s1123 + $0x81] sm:$0xff]
        %v1442 = vld [vmem:[%s1123 + $0x91] sm:$0xff]
        %v1443 = vld [vmem:[%s1123 + $0x99] sm:$0xff]
        %v1444 = vld [vmem:[%s1123 + $0xa9] sm:$0xff]
        %v1445 = vld [vmem:[%s1123 + $0xb1] sm:$0xff]
        %v1446 = vld [vmem:[%s1123 + $0xc1] sm:$0xff]
        %v1447 = vld [vmem:[%s1123 + $0xc9] sm:$0xff]
        %v1448 = vld [vmem:[%s1123 + $0xd9] sm:$0xff]
        %v1449 = vld [vmem:[%s1123 + $0xe1] sm:$0xff]
        %v1450 = vld [vmem:[%s1123 + $0xf1] sm:$0xff]
        %v1451 = vld [vmem:[%s1123 + $0xf9] sm:$0xff]
        %v1452 = vld [vmem:[%s1123 + $0x109] sm:$0xff]
        %v1453 = vld [vmem:[%s1123 + $0x111] sm:$0xff]
        %v1454 = vld [vmem:[%s1123 + $0x121] sm:$0xff]
        %v1455 = vld [vmem:[%s1123 + $0x129] sm:$0xff]
        %v1456 = vld [vmem:[%s1123 + $0x139] sm:$0xff]
        %v1457 = vld [vmem:[%s1123 + $0x141] sm:$0xff]
        %v1458 = vld [vmem:[%s1123 + $0x151] sm:$0xff]
        %v1459 = vld [vmem:[%s1123 + $0x159] sm:$0xff]
        %v1460 = vld [vmem:[%s1123 + $0x169] sm:$0xff]
        %v1461 = vld [vmem:[%s1123 + $0x171] sm:$0xff]
        %v1462 = vpack.c.bf16 %v1431, %v1430
        %v1463 = vpack.c.bf16 %v1433, %v1432
        %v1464 = vpack.c.bf16 %v1435, %v1434
        %v1465 = vpack.c.bf16 %v1437, %v1436
        %v1466 = vpack.c.bf16 %v1439, %v1438
        %v1467 = vpack.c.bf16 %v1441, %v1440
        %v1468 = vpack.c.bf16 %v1443, %v1442
        %v1469 = vpack.c.bf16 %v1445, %v1444
        %v1470 = vpack.c.bf16 %v1447, %v1446
        %v1471 = vpack.c.bf16 %v1449, %v1448
        %v1472 = vpack.c.bf16 %v1451, %v1450
        %v1473 = vpack.c.bf16 %v1453, %v1452
        %v1474 = vpack.c.bf16 %v1455, %v1454
        %v1475 = vpack.c.bf16 %v1457, %v1456
        %v1476 = vpack.c.bf16 %v1459, %v1458
        %v1477 = vpack.c.bf16 %v1461, %v1460
        %s1478 = scalar_lea.vmem %s2, 256
        %v1479 = vld [vmem:[%s1478] sm:$0xf]
        %v1480 = vld [vmem:[%s1478 + $0x4] sm:$0xf]
        %v1481 = vld [vmem:[%s1478 + $0x8] sm:$0xf]
        %v1482 = vld [vmem:[%s1478 + $0xc] sm:$0xf]
        %v1483 = vld [vmem:[%s1478 + $0x10] sm:$0xf]
        %v1484 = vld [vmem:[%s1478 + $0x14] sm:$0xf]
        %v1485 = vld [vmem:[%s1478 + $0x18] sm:$0xf]
        %v1486 = vld [vmem:[%s1478 + $0x1c] sm:$0xf]
        %v1487 = vld [vmem:[%s1478 + $0x20] sm:$0xf]
        %v1488 = vld [vmem:[%s1478 + $0x24] sm:$0xf]
        %v1489 = vld [vmem:[%s1478 + $0x28] sm:$0xf]
        %v1490 = vld [vmem:[%s1478 + $0x2c] sm:$0xf]
        %v1491 = vld [vmem:[%s1478 + $0x30] sm:$0xf]
        %v1492 = vld [vmem:[%s1478 + $0x34] sm:$0xf]
        %v1493 = vld [vmem:[%s1478 + $0x38] sm:$0xf]
        %v1494 = vld [vmem:[%s1478 + $0x3c] sm:$0xf]
        %v1511 = vunpack.c.l.b16 %v1479
        %v1512 = vunpack.c.l.b16 %v1480
        %v1513 = vunpack.c.l.b16 %v1481
        %v1514 = vunpack.c.l.b16 %v1482
        %v1515 = vunpack.c.l.b16 %v1483
        %v1516 = vunpack.c.l.b16 %v1484
        %v1517 = vunpack.c.l.b16 %v1485
        %v1518 = vunpack.c.l.b16 %v1486
        %v1519 = vunpack.c.l.b16 %v1487
        %v1520 = vunpack.c.l.b16 %v1488
        %v1521 = vunpack.c.l.b16 %v1489
        %v1522 = vunpack.c.l.b16 %v1490
        %v1523 = vunpack.c.l.b16 %v1491
        %v1524 = vunpack.c.l.b16 %v1492
        %v1525 = vunpack.c.l.b16 %v1493
        %v1526 = vunpack.c.l.b16 %v1494
        %v1527 = vpack.c.b16 %v1512, %v1511
        %v1528 = vpack.c.b16 %v1514, %v1513
        %v1529 = vpack.c.b16 %v1516, %v1515
        %v1530 = vpack.c.b16 %v1518, %v1517
        %v1531 = vpack.c.b16 %v1520, %v1519
        %v1532 = vpack.c.b16 %v1522, %v1521
        %v1533 = vpack.c.b16 %v1524, %v1523
        %v1534 = vpack.c.b16 %v1526, %v1525
        %1543 = vmatprep.subr.bf16.mxu0 0
        %1544 = vmatpush1.bf16.msra.mxu0 %v1527
        %1545 = vmatprep.subr.bf16.mxu0 0
        %1546 = vmatpush1.bf16.msra.mxu0 %v1528
        %1547 = vmatprep.subr.bf16.mxu0 0
        %1548 = vmatpush1.bf16.msra.mxu0 %v1529
        %1549 = vmatprep.subr.bf16.mxu0 0
        %1550 = vmatpush1.bf16.msra.mxu0 %v1530
        %1551 = vmatprep.subr.bf16.mxu0 0
        %1552 = vmatpush1.bf16.msra.mxu0 %v1531
        %1553 = vmatprep.subr.bf16.mxu0 0
        %1554 = vmatpush1.bf16.msra.mxu0 %v1532
        %1555 = vmatprep.subr.bf16.mxu0 0
        %1556 = vmatpush1.bf16.msra.mxu0 %v1533
        %1557 = vmatprep.subr.bf16.mxu0 0
        %1558 = vmatpush1.bf16.msra.mxu0 %v1534
        %1559 = vmatprep.subr.bf16.mxu0 0
        %1560 = vmatpush1.bf16.msra.mxu0 0
        %1561 = vmatprep.subr.bf16.mxu0 0
        %1562 = vmatpush1.bf16.msra.mxu0 0
        %1563 = vmatprep.subr.bf16.mxu0 0
        %1564 = vmatpush1.bf16.msra.mxu0 0
        %1565 = vmatprep.subr.bf16.mxu0 0
        %1566 = vmatpush1.bf16.msra.mxu0 0
        %1567 = vmatprep.subr.bf16.mxu0 0
        %1568 = vmatpush1.bf16.msra.mxu0 0
        %1569 = vmatprep.subr.bf16.mxu0 0
        %1570 = vmatpush1.bf16.msra.mxu0 0
        %1571 = vmatprep.subr.bf16.mxu0 0
        %1572 = vmatpush1.bf16.msra.mxu0 0
        %1573 = vmatprep.subr.bf16.mxu0 0
        %1574 = vmatpush1.bf16.msra.mxu0 0
        %1575 = vmatprep.mubr.bf16.mxu0 0
        %1576 = vmatmul.mubr.bf16.gmra.mrb[0].mxu0 %v1462
        %v1577 = vpop.f32.mrb[0].mxu0
        %v1578 = vadd.f32 0.0, %v1577
        %v1579 = vpop.f32.mrb[0].mxu0
        %v1580 = vpop.f32.mrb[0].mxu0
        %v1581 = vadd.f32 0.0, %v1580
        %v1582 = vpop.f32.mrb[0].mxu0
        %1583 = vmatprep.mubr.bf16.mxu0 0
        %1584 = vmatmul.mubr.bf16.gmra.mrb[0].mxu0 %v1463
        %v1585 = vpop.f32.mrb[0].mxu0
        %v1586 = vadd.f32 0.0, %v1585
        %v1587 = vpop.f32.mrb[0].mxu0
        %v1588 = vpop.f32.mrb[0].mxu0
        %v1589 = vadd.f32 0.0, %v1588
        %v1590 = vpop.f32.mrb[0].mxu0
        %1591 = vmatprep.mubr.bf16.mxu0 0
        %1592 = vmatmul.mubr.bf16.gmra.mrb[0].mxu0 %v1464
        %v1593 = vpop.f32.mrb[0].mxu0
        %v1594 = vadd.f32 0.0, %v1593
        %v1595 = vpop.f32.mrb[0].mxu0
        %v1596 = vpop.f32.mrb[0].mxu0
        %v1597 = vadd.f32 0.0, %v1596
        %v1598 = vpop.f32.mrb[0].mxu0
        %1599 = vmatprep.mubr.bf16.mxu0 0
        %1600 = vmatmul.mubr.bf16.gmra.mrb[0].mxu0 %v1465
        %v1601 = vpop.f32.mrb[0].mxu0
        %v1602 = vadd.f32 0.0, %v1601
        %v1603 = vpop.f32.mrb[0].mxu0
        %v1604 = vpop.f32.mrb[0].mxu0
        %v1605 = vadd.f32 0.0, %v1604
        %v1606 = vpop.f32.mrb[0].mxu0
        %1607 = vmatprep.mubr.bf16.mxu0 0
        %1608 = vmatmul.mubr.bf16.gmra.mrb[0].mxu0 %v1466
        %v1609 = vpop.f32.mrb[0].mxu0
        %v1610 = vadd.f32 0.0, %v1609
        %v1611 = vpop.f32.mrb[0].mxu0
        %v1612 = vpop.f32.mrb[0].mxu0
        %v1613 = vadd.f32 0.0, %v1612
        %v1614 = vpop.f32.mrb[0].mxu0
        %1615 = vmatprep.mubr.bf16.mxu0 0
        %1616 = vmatmul.mubr.bf16.gmra.mrb[0].mxu0 %v1467
        %v1617 = vpop.f32.mrb[0].mxu0
        %v1618 = vadd.f32 0.0, %v1617
        %v1619 = vpop.f32.mrb[0].mxu0
        %v1620 = vpop.f32.mrb[0].mxu0
        %v1621 = vadd.f32 0.0, %v1620
        %v1622 = vpop.f32.mrb[0].mxu0
        %1623 = vmatprep.mubr.bf16.mxu0 0
        %1624 = vmatmul.mubr.bf16.gmra.mrb[0].mxu0 %v1468
        %v1625 = vpop.f32.mrb[0].mxu0
        %v1626 = vadd.f32 0.0, %v1625
        %v1627 = vpop.f32.mrb[0].mxu0
        %v1628 = vpop.f32.mrb[0].mxu0
        %v1629 = vadd.f32 0.0, %v1628
        %v1630 = vpop.f32.mrb[0].mxu0
        %1631 = vmatprep.mubr.bf16.mxu0 0
        %1632 = vmatmul.mubr.bf16.gmra.mrb[0].mxu0 %v1469
        %v1633 = vpop.f32.mrb[0].mxu0
        %v1634 = vadd.f32 0.0, %v1633
        %v1635 = vpop.f32.mrb[0].mxu0
        %v1636 = vpop.f32.mrb[0].mxu0
        %v1637 = vadd.f32 0.0, %v1636
        %v1638 = vpop.f32.mrb[0].mxu0
        %1639 = vmatprep.mubr.bf16.mxu0 0
        %1640 = vmatmul.mubr.bf16.gmra.mrb[0].mxu0 %v1470
        %v1641 = vpop.f32.mrb[0].mxu0
        %v1642 = vadd.f32 0.0, %v1641
        %v1643 = vpop.f32.mrb[0].mxu0
        %v1644 = vpop.f32.mrb[0].mxu0
        %v1645 = vadd.f32 0.0, %v1644
        %v1646 = vpop.f32.mrb[0].mxu0
        %1647 = vmatprep.mubr.bf16.mxu0 0
        %1648 = vmatmul.mubr.bf16.gmra.mrb[0].mxu0 %v1471
        %v1649 = vpop.f32.mrb[0].mxu0
        %v1650 = vadd.f32 0.0, %v1649
        %v1651 = vpop.f32.mrb[0].mxu0
        %v1652 = vpop.f32.mrb[0].mxu0
        %v1653 = vadd.f32 0.0, %v1652
        %v1654 = vpop.f32.mrb[0].mxu0
        %1655 = vmatprep.mubr.bf16.mxu0 0
        %1656 = vmatmul.mubr.bf16.gmra.mrb[0].mxu0 %v1472
        %v1657 = vpop.f32.mrb[0].mxu0
        %v1658 = vadd.f32 0.0, %v1657
        %v1659 = vpop.f32.mrb[0].mxu0
        %v1660 = vpop.f32.mrb[0].mxu0
        %v1661 = vadd.f32 0.0, %v1660
        %v1662 = vpop.f32.mrb[0].mxu0
        %1663 = vmatprep.mubr.bf16.mxu0 0
        %1664 = vmatmul.mubr.bf16.gmra.mrb[0].mxu0 %v1473
        %v1665 = vpop.f32.mrb[0].mxu0
        %v1666 = vadd.f32 0.0, %v1665
        %v1667 = vpop.f32.mrb[0].mxu0
        %v1668 = vpop.f32.mrb[0].mxu0
        %v1669 = vadd.f32 0.0, %v1668
        %v1670 = vpop.f32.mrb[0].mxu0
        %1671 = vmatprep.mubr.bf16.mxu0 0
        %1672 = vmatmul.mubr.bf16.gmra.mrb[0].mxu0 %v1474
        %v1673 = vpop.f32.mrb[0].mxu0
        %v1674 = vadd.f32 0.0, %v1673
        %v1675 = vpop.f32.mrb[0].mxu0
        %v1676 = vpop.f32.mrb[0].mxu0
        %v1677 = vadd.f32 0.0, %v1676
        %v1678 = vpop.f32.mrb[0].mxu0
        %1679 = vmatprep.mubr.bf16.mxu0 0
        %1680 = vmatmul.mubr.bf16.gmra.mrb[0].mxu0 %v1475
        %v1681 = vpop.f32.mrb[0].mxu0
        %v1682 = vadd.f32 0.0, %v1681
        %v1683 = vpop.f32.mrb[0].mxu0
        %v1684 = vpop.f32.mrb[0].mxu0
        %v1685 = vadd.f32 0.0, %v1684
        %v1686 = vpop.f32.mrb[0].mxu0
        %1687 = vmatprep.mubr.bf16.mxu0 0
        %1688 = vmatmul.mubr.bf16.gmra.mrb[0].mxu0 %v1476
        %v1689 = vpop.f32.mrb[0].mxu0
        %v1690 = vadd.f32 0.0, %v1689
        %v1691 = vpop.f32.mrb[0].mxu0
        %v1692 = vpop.f32.mrb[0].mxu0
        %v1693 = vadd.f32 0.0, %v1692
        %v1694 = vpop.f32.mrb[0].mxu0
        %1695 = vmatprep.mubr.bf16.mxu0 0
        %1696 = vmatmul.mubr.bf16.gmra.mrb[0].mxu0 %v1477
        %v1697 = vpop.f32.mrb[0].mxu0
        %v1698 = vadd.f32 0.0, %v1697
        %v1699 = vpop.f32.mrb[0].mxu0
        %v1700 = vpop.f32.mrb[0].mxu0
        %v1701 = vadd.f32 0.0, %v1700
        %v1702 = vpop.f32.mrb[0].mxu0
        %1703 = vdwg.mxu0
        %v1704 = vadd.f32 %v1398, %v1578
        %v1705 = vadd.f32 %v1399, %v1581
        %v1706 = vadd.f32 %v1400, %v1586
        %v1707 = vadd.f32 %v1401, %v1589
        %v1708 = vadd.f32 %v1402, %v1594
        %v1709 = vadd.f32 %v1403, %v1597
        %v1710 = vadd.f32 %v1404, %v1602
        %v1711 = vadd.f32 %v1405, %v1605
        %v1712 = vadd.f32 %v1406, %v1610
        %v1713 = vadd.f32 %v1407, %v1613
        %v1714 = vadd.f32 %v1408, %v1618
        %v1715 = vadd.f32 %v1409, %v1621
        %v1716 = vadd.f32 %v1410, %v1626
        %v1717 = vadd.f32 %v1411, %v1629
        %v1718 = vadd.f32 %v1412, %v1634
        %v1719 = vadd.f32 %v1413, %v1637
        %v1720 = vadd.f32 %v1414, %v1642
        %v1721 = vadd.f32 %v1415, %v1645
        %v1722 = vadd.f32 %v1416, %v1650
        %v1723 = vadd.f32 %v1417, %v1653
        %v1724 = vadd.f32 %v1418, %v1658
        %v1725 = vadd.f32 %v1419, %v1661
        %v1726 = vadd.f32 %v1420, %v1666
        %v1727 = vadd.f32 %v1421, %v1669
        %v1728 = vadd.f32 %v1422, %v1674
        %v1729 = vadd.f32 %v1423, %v1677
        %v1730 = vadd.f32 %v1424, %v1682
        %v1731 = vadd.f32 %v1425, %v1685
        %v1732 = vadd.f32 %v1426, %v1690
        %v1733 = vadd.f32 %v1427, %v1693
        %v1734 = vadd.f32 %v1428, %v1698
        %v1735 = vadd.f32 %v1429, %v1701
        %v1736 = vld [vmem:[%s1123 + $0x2] sm:$0xff]
        %v1737 = vld [vmem:[%s1123 + $0xa] sm:$0xff]
        %v1738 = vld [vmem:[%s1123 + $0x1a] sm:$0xff]
        %v1739 = vld [vmem:[%s1123 + $0x22] sm:$0xff]
        %v1740 = vld [vmem:[%s1123 + $0x32] sm:$0xff]
        %v1741 = vld [vmem:[%s1123 + $0x3a] sm:$0xff]
        %v1742 = vld [vmem:[%s1123 + $0x4a] sm:$0xff]
        %v1743 = vld [vmem:[%s1123 + $0x52] sm:$0xff]
        %v1744 = vld [vmem:[%s1123 + $0x62] sm:$0xff]
        %v1745 = vld [vmem:[%s1123 + $0x6a] sm:$0xff]
        %v1746 = vld [vmem:[%s1123 + $0x7a] sm:$0xff]
        %v1747 = vld [vmem:[%s1123 + $0x82] sm:$0xff]
        %v1748 = vld [vmem:[%s1123 + $0x92] sm:$0xff]
        %v1749 = vld [vmem:[%s1123 + $0x9a] sm:$0xff]
        %v1750 = vld [vmem:[%s1123 + $0xaa] sm:$0xff]
        %v1751 = vld [vmem:[%s1123 + $0xb2] sm:$0xff]
        %v1752 = vld [vmem:[%s1123 + $0xc2] sm:$0xff]
        %v1753 = vld [vmem:[%s1123 + $0xca] sm:$0xff]
        %v1754 = vld [vmem:[%s1123 + $0xda] sm:$0xff]
        %v1755 = vld [vmem:[%s1123 + $0xe2] sm:$0xff]
        %v1756 = vld [vmem:[%s1123 + $0xf2] sm:$0xff]
        %v1757 = vld [vmem:[%s1123 + $0xfa] sm:$0xff]
        %v1758 = vld [vmem:[%s1123 + $0x10a] sm:$0xff]
        %v1759 = vld [vmem:[%s1123 + $0x112] sm:$0xff]
        %v1760 = vld [vmem:[%s1123 + $0x122] sm:$0xff]
        %v1761 = vld [vmem:[%s1123 + $0x12a] sm:$0xff]
        %v1762 = vld [vmem:[%s1123 + $0x13a] sm:$0xff]
        %v1763 = vld [vmem:[%s1123 + $0x142] sm:$0xff]
        %v1764 = vld [vmem:[%s1123 + $0x152] sm:$0xff]
        %v1765 = vld [vmem:[%s1123 + $0x15a] sm:$0xff]
        %v1766 = vld [vmem:[%s1123 + $0x16a] sm:$0xff]
        %v1767 = vld [vmem:[%s1123 + $0x172] sm:$0xff]
        %v1768 = vpack.c.bf16 %v1737, %v1736
        %v1769 = vpack.c.bf16 %v1739, %v1738
        %v1770 = vpack.c.bf16 %v1741, %v1740
        %v1771 = vpack.c.bf16 %v1743, %v1742
        %v1772 = vpack.c.bf16 %v1745, %v1744
        %v1773 = vpack.c.bf16 %v1747, %v1746
        %v1774 = vpack.c.bf16 %v1749, %v1748
        %v1775 = vpack.c.bf16 %v1751, %v1750
        %v1776 = vpack.c.bf16 %v1753, %v1752
        %v1777 = vpack.c.bf16 %v1755, %v1754
        %v1778 = vpack.c.bf16 %v1757, %v1756
        %v1779 = vpack.c.bf16 %v1759, %v1758
        %v1780 = vpack.c.bf16 %v1761, %v1760
        %v1781 = vpack.c.bf16 %v1763, %v1762
        %v1782 = vpack.c.bf16 %v1765, %v1764
        %v1783 = vpack.c.bf16 %v1767, %v1766
        %s1784 = scalar_lea.vmem %s2, 320
        %v1785 = vld [vmem:[%s1784] sm:$0xf]
        %v1786 = vld [vmem:[%s1784 + $0x4] sm:$0xf]
        %v1787 = vld [vmem:[%s1784 + $0x8] sm:$0xf]
        %v1788 = vld [vmem:[%s1784 + $0xc] sm:$0xf]
        %v1789 = vld [vmem:[%s1784 + $0x10] sm:$0xf]
        %v1790 = vld [vmem:[%s1784 + $0x14] sm:$0xf]
        %v1791 = vld [vmem:[%s1784 + $0x18] sm:$0xf]
        %v1792 = vld [vmem:[%s1784 + $0x1c] sm:$0xf]
        %v1793 = vld [vmem:[%s1784 + $0x20] sm:$0xf]
        %v1794 = vld [vmem:[%s1784 + $0x24] sm:$0xf]
        %v1795 = vld [vmem:[%s1784 + $0x28] sm:$0xf]
        %v1796 = vld [vmem:[%s1784 + $0x2c] sm:$0xf]
        %v1797 = vld [vmem:[%s1784 + $0x30] sm:$0xf]
        %v1798 = vld [vmem:[%s1784 + $0x34] sm:$0xf]
        %v1799 = vld [vmem:[%s1784 + $0x38] sm:$0xf]
        %v1800 = vld [vmem:[%s1784 + $0x3c] sm:$0xf]
        %v1817 = vunpack.c.l.b16 %v1785
        %v1818 = vunpack.c.l.b16 %v1786
        %v1819 = vunpack.c.l.b16 %v1787
        %v1820 = vunpack.c.l.b16 %v1788
        %v1821 = vunpack.c.l.b16 %v1789
        %v1822 = vunpack.c.l.b16 %v1790
        %v1823 = vunpack.c.l.b16 %v1791
        %v1824 = vunpack.c.l.b16 %v1792
        %v1825 = vunpack.c.l.b16 %v1793
        %v1826 = vunpack.c.l.b16 %v1794
        %v1827 = vunpack.c.l.b16 %v1795
        %v1828 = vunpack.c.l.b16 %v1796
        %v1829 = vunpack.c.l.b16 %v1797
        %v1830 = vunpack.c.l.b16 %v1798
        %v1831 = vunpack.c.l.b16 %v1799
        %v1832 = vunpack.c.l.b16 %v1800
        %v1833 = vpack.c.b16 %v1818, %v1817
        %v1834 = vpack.c.b16 %v1820, %v1819
        %v1835 = vpack.c.b16 %v1822, %v1821
        %v1836 = vpack.c.b16 %v1824, %v1823
        %v1837 = vpack.c.b16 %v1826, %v1825
        %v1838 = vpack.c.b16 %v1828, %v1827
        %v1839 = vpack.c.b16 %v1830, %v1829
        %v1840 = vpack.c.b16 %v1832, %v1831
        %1849 = vmatprep.subr.bf16.mxu0 0
        %1850 = vmatpush1.bf16.msra.mxu0 %v1833
        %1851 = vmatprep.subr.bf16.mxu0 0
        %1852 = vmatpush1.bf16.msra.mxu0 %v1834
        %1853 = vmatprep.subr.bf16.mxu0 0
        %1854 = vmatpush1.bf16.msra.mxu0 %v1835
        %1855 = vmatprep.subr.bf16.mxu0 0
        %1856 = vmatpush1.bf16.msra.mxu0 %v1836
        %1857 = vmatprep.subr.bf16.mxu0 0
        %1858 = vmatpush1.bf16.msra.mxu0 %v1837
        %1859 = vmatprep.subr.bf16.mxu0 0
        %1860 = vmatpush1.bf16.msra.mxu0 %v1838
        %1861 = vmatprep.subr.bf16.mxu0 0
        %1862 = vmatpush1.bf16.msra.mxu0 %v1839
        %1863 = vmatprep.subr.bf16.mxu0 0
        %1864 = vmatpush1.bf16.msra.mxu0 %v1840
        %1865 = vmatprep.subr.bf16.mxu0 0
        %1866 = vmatpush1.bf16.msra.mxu0 0
        %1867 = vmatprep.subr.bf16.mxu0 0
        %1868 = vmatpush1.bf16.msra.mxu0 0
        %1869 = vmatprep.subr.bf16.mxu0 0
        %1870 = vmatpush1.bf16.msra.mxu0 0
        %1871 = vmatprep.subr.bf16.mxu0 0
        %1872 = vmatpush1.bf16.msra.mxu0 0
        %1873 = vmatprep.subr.bf16.mxu0 0
        %1874 = vmatpush1.bf16.msra.mxu0 0
        %1875 = vmatprep.subr.bf16.mxu0 0
        %1876 = vmatpush1.bf16.msra.mxu0 0
        %1877 = vmatprep.subr.bf16.mxu0 0
        %1878 = vmatpush1.bf16.msra.mxu0 0
        %1879 = vmatprep.subr.bf16.mxu0 0
        %1880 = vmatpush1.bf16.msra.mxu0 0
        %1881 = vmatprep.mubr.bf16.mxu0 0
        %1882 = vmatmul.mubr.bf16.gmra.mrb[0].mxu0 %v1768
        %v1883 = vpop.f32.mrb[0].mxu0
        %v1884 = vadd.f32 0.0, %v1883
        %v1885 = vpop.f32.mrb[0].mxu0
        %v1886 = vpop.f32.mrb[0].mxu0
        %v1887 = vadd.f32 0.0, %v1886
        %v1888 = vpop.f32.mrb[0].mxu0
        %1889 = vmatprep.mubr.bf16.mxu0 0
        %1890 = vmatmul.mubr.bf16.gmra.mrb[0].mxu0 %v1769
        %v1891 = vpop.f32.mrb[0].mxu0
        %v1892 = vadd.f32 0.0, %v1891
        %v1893 = vpop.f32.mrb[0].mxu0
        %v1894 = vpop.f32.mrb[0].mxu0
        %v1895 = vadd.f32 0.0, %v1894
        %v1896 = vpop.f32.mrb[0].mxu0
        %1897 = vmatprep.mubr.bf16.mxu0 0
        %1898 = vmatmul.mubr.bf16.gmra.mrb[0].mxu0 %v1770
        %v1899 = vpop.f32.mrb[0].mxu0
        %v1900 = vadd.f32 0.0, %v1899
        %v1901 = vpop.f32.mrb[0].mxu0
        %v1902 = vpop.f32.mrb[0].mxu0
        %v1903 = vadd.f32 0.0, %v1902
        %v1904 = vpop.f32.mrb[0].mxu0
        %1905 = vmatprep.mubr.bf16.mxu0 0
        %1906 = vmatmul.mubr.bf16.gmra.mrb[0].mxu0 %v1771
        %v1907 = vpop.f32.mrb[0].mxu0
        %v1908 = vadd.f32 0.0, %v1907
        %v1909 = vpop.f32.mrb[0].mxu0
        %v1910 = vpop.f32.mrb[0].mxu0
        %v1911 = vadd.f32 0.0, %v1910
        %v1912 = vpop.f32.mrb[0].mxu0
        %1913 = vmatprep.mubr.bf16.mxu0 0
        %1914 = vmatmul.mubr.bf16.gmra.mrb[0].mxu0 %v1772
        %v1915 = vpop.f32.mrb[0].mxu0
        %v1916 = vadd.f32 0.0, %v1915
        %v1917 = vpop.f32.mrb[0].mxu0
        %v1918 = vpop.f32.mrb[0].mxu0
        %v1919 = vadd.f32 0.0, %v1918
        %v1920 = vpop.f32.mrb[0].mxu0
        %1921 = vmatprep.mubr.bf16.mxu0 0
        %1922 = vmatmul.mubr.bf16.gmra.mrb[0].mxu0 %v1773
        %v1923 = vpop.f32.mrb[0].mxu0
        %v1924 = vadd.f32 0.0, %v1923
        %v1925 = vpop.f32.mrb[0].mxu0
        %v1926 = vpop.f32.mrb[0].mxu0
        %v1927 = vadd.f32 0.0, %v1926
        %v1928 = vpop.f32.mrb[0].mxu0
        %1929 = vmatprep.mubr.bf16.mxu0 0
        %1930 = vmatmul.mubr.bf16.gmra.mrb[0].mxu0 %v1774
        %v1931 = vpop.f32.mrb[0].mxu0
        %v1932 = vadd.f32 0.0, %v1931
        %v1933 = vpop.f32.mrb[0].mxu0
        %v1934 = vpop.f32.mrb[0].mxu0
        %v1935 = vadd.f32 0.0, %v1934
        %v1936 = vpop.f32.mrb[0].mxu0
        %1937 = vmatprep.mubr.bf16.mxu0 0
        %1938 = vmatmul.mubr.bf16.gmra.mrb[0].mxu0 %v1775
        %v1939 = vpop.f32.mrb[0].mxu0
        %v1940 = vadd.f32 0.0, %v1939
        %v1941 = vpop.f32.mrb[0].mxu0
        %v1942 = vpop.f32.mrb[0].mxu0
        %v1943 = vadd.f32 0.0, %v1942
        %v1944 = vpop.f32.mrb[0].mxu0
        %1945 = vmatprep.mubr.bf16.mxu0 0
        %1946 = vmatmul.mubr.bf16.gmra.mrb[0].mxu0 %v1776
        %v1947 = vpop.f32.mrb[0].mxu0
        %v1948 = vadd.f32 0.0, %v1947
        %v1949 = vpop.f32.mrb[0].mxu0
        %v1950 = vpop.f32.mrb[0].mxu0
        %v1951 = vadd.f32 0.0, %v1950
        %v1952 = vpop.f32.mrb[0].mxu0
        %1953 = vmatprep.mubr.bf16.mxu0 0
        %1954 = vmatmul.mubr.bf16.gmra.mrb[0].mxu0 %v1777
        %v1955 = vpop.f32.mrb[0].mxu0
        %v1956 = vadd.f32 0.0, %v1955
        %v1957 = vpop.f32.mrb[0].mxu0
        %v1958 = vpop.f32.mrb[0].mxu0
        %v1959 = vadd.f32 0.0, %v1958
        %v1960 = vpop.f32.mrb[0].mxu0
        %1961 = vmatprep.mubr.bf16.mxu0 0
        %1962 = vmatmul.mubr.bf16.gmra.mrb[0].mxu0 %v1778
        %v1963 = vpop.f32.mrb[0].mxu0
        %v1964 = vadd.f32 0.0, %v1963
        %v1965 = vpop.f32.mrb[0].mxu0
        %v1966 = vpop.f32.mrb[0].mxu0
        %v1967 = vadd.f32 0.0, %v1966
        %v1968 = vpop.f32.mrb[0].mxu0
        %1969 = vmatprep.mubr.bf16.mxu0 0
        %1970 = vmatmul.mubr.bf16.gmra.mrb[0].mxu0 %v1779
        %v1971 = vpop.f32.mrb[0].mxu0
        %v1972 = vadd.f32 0.0, %v1971
        %v1973 = vpop.f32.mrb[0].mxu0
        %v1974 = vpop.f32.mrb[0].mxu0
        %v1975 = vadd.f32 0.0, %v1974
        %v1976 = vpop.f32.mrb[0].mxu0
        %1977 = vmatprep.mubr.bf16.mxu0 0
        %1978 = vmatmul.mubr.bf16.gmra.mrb[0].mxu0 %v1780
        %v1979 = vpop.f32.mrb[0].mxu0
        %v1980 = vadd.f32 0.0, %v1979
        %v1981 = vpop.f32.mrb[0].mxu0
        %v1982 = vpop.f32.mrb[0].mxu0
        %v1983 = vadd.f32 0.0, %v1982
        %v1984 = vpop.f32.mrb[0].mxu0
        %1985 = vmatprep.mubr.bf16.mxu0 0
        %1986 = vmatmul.mubr.bf16.gmra.mrb[0].mxu0 %v1781
        %v1987 = vpop.f32.mrb[0].mxu0
        %v1988 = vadd.f32 0.0, %v1987
        %v1989 = vpop.f32.mrb[0].mxu0
        %v1990 = vpop.f32.mrb[0].mxu0
        %v1991 = vadd.f32 0.0, %v1990
        %v1992 = vpop.f32.mrb[0].mxu0
        %1993 = vmatprep.mubr.bf16.mxu0 0
        %1994 = vmatmul.mubr.bf16.gmra.mrb[0].mxu0 %v1782
        %v1995 = vpop.f32.mrb[0].mxu0
        %v1996 = vadd.f32 0.0, %v1995
        %v1997 = vpop.f32.mrb[0].mxu0
        %v1998 = vpop.f32.mrb[0].mxu0
        %v1999 = vadd.f32 0.0, %v1998
        %v2000 = vpop.f32.mrb[0].mxu0
        %2001 = vmatprep.mubr.bf16.mxu0 0
        %2002 = vmatmul.mubr.bf16.gmra.mrb[0].mxu0 %v1783
        %v2003 = vpop.f32.mrb[0].mxu0
        %v2004 = vadd.f32 0.0, %v2003
        %v2005 = vpop.f32.mrb[0].mxu0
        %v2006 = vpop.f32.mrb[0].mxu0
        %v2007 = vadd.f32 0.0, %v2006
        %v2008 = vpop.f32.mrb[0].mxu0
        %2009 = vdwg.mxu0
        %v2010 = vadd.f32 %v1704, %v1884
        %v2011 = vadd.f32 %v1705, %v1887
        %v2012 = vadd.f32 %v1706, %v1892
        %v2013 = vadd.f32 %v1707, %v1895
        %v2014 = vadd.f32 %v1708, %v1900
        %v2015 = vadd.f32 %v1709, %v1903
        %v2016 = vadd.f32 %v1710, %v1908
        %v2017 = vadd.f32 %v1711, %v1911
        %v2018 = vadd.f32 %v1712, %v1916
        %v2019 = vadd.f32 %v1713, %v1919
        %v2020 = vadd.f32 %v1714, %v1924
        %v2021 = vadd.f32 %v1715, %v1927
        %v2022 = vadd.f32 %v1716, %v1932
        %v2023 = vadd.f32 %v1717, %v1935
        %v2024 = vadd.f32 %v1718, %v1940
        %v2025 = vadd.f32 %v1719, %v1943
        %v2026 = vadd.f32 %v1720, %v1948
        %v2027 = vadd.f32 %v1721, %v1951
        %v2028 = vadd.f32 %v1722, %v1956
        %v2029 = vadd.f32 %v1723, %v1959
        %v2030 = vadd.f32 %v1724, %v1964
        %v2031 = vadd.f32 %v1725, %v1967
        %v2032 = vadd.f32 %v1726, %v1972
        %v2033 = vadd.f32 %v1727, %v1975
        %v2034 = vadd.f32 %v1728, %v1980
        %v2035 = vadd.f32 %v1729, %v1983
        %v2036 = vadd.f32 %v1730, %v1988
        %v2037 = vadd.f32 %v1731, %v1991
        %v2038 = vadd.f32 %v1732, %v1996
        %v2039 = vadd.f32 %v1733, %v1999
        %v2040 = vadd.f32 %v1734, %v2004
        %v2041 = vadd.f32 %v1735, %v2007
        %s2042 = scalar_lea.vmem %s263, 48
        %v2043 = vld [vmem:[%s2042] sm:$0xff]
        %v2044 = vld [vmem:[%s2042 + $0x8] sm:$0xff]
        %v2045 = vld [vmem:[%s2042 + $0x18] sm:$0xff]
        %v2046 = vld [vmem:[%s2042 + $0x20] sm:$0xff]
        %v2047 = vld [vmem:[%s2042 + $0x30] sm:$0xff]
        %v2048 = vld [vmem:[%s2042 + $0x38] sm:$0xff]
        %v2049 = vld [vmem:[%s2042 + $0x48] sm:$0xff]
        %v2050 = vld [vmem:[%s2042 + $0x50] sm:$0xff]
        %v2051 = vld [vmem:[%s2042 + $0x60] sm:$0xff]
        %v2052 = vld [vmem:[%s2042 + $0x68] sm:$0xff]
        %v2053 = vld [vmem:[%s2042 + $0x78] sm:$0xff]
        %v2054 = vld [vmem:[%s2042 + $0x80] sm:$0xff]
        %v2055 = vld [vmem:[%s2042 + $0x90] sm:$0xff]
        %v2056 = vld [vmem:[%s2042 + $0x98] sm:$0xff]
        %v2057 = vld [vmem:[%s2042 + $0xa8] sm:$0xff]
        %v2058 = vld [vmem:[%s2042 + $0xb0] sm:$0xff]
        %v2059 = vld [vmem:[%s2042 + $0xc0] sm:$0xff]
        %v2060 = vld [vmem:[%s2042 + $0xc8] sm:$0xff]
        %v2061 = vld [vmem:[%s2042 + $0xd8] sm:$0xff]
        %v2062 = vld [vmem:[%s2042 + $0xe0] sm:$0xff]
        %v2063 = vld [vmem:[%s2042 + $0xf0] sm:$0xff]
        %v2064 = vld [vmem:[%s2042 + $0xf8] sm:$0xff]
        %v2065 = vld [vmem:[%s2042 + $0x108] sm:$0xff]
        %v2066 = vld [vmem:[%s2042 + $0x110] sm:$0xff]
        %v2067 = vld [vmem:[%s2042 + $0x120] sm:$0xff]
        %v2068 = vld [vmem:[%s2042 + $0x128] sm:$0xff]
        %v2069 = vld [vmem:[%s2042 + $0x138] sm:$0xff]
        %v2070 = vld [vmem:[%s2042 + $0x140] sm:$0xff]
        %v2071 = vld [vmem:[%s2042 + $0x150] sm:$0xff]
        %v2072 = vld [vmem:[%s2042 + $0x158] sm:$0xff]
        %v2073 = vld [vmem:[%s2042 + $0x168] sm:$0xff]
        %v2074 = vld [vmem:[%s2042 + $0x170] sm:$0xff]
        %v2075 = vpack.c.bf16 %v2044, %v2043
        %v2076 = vpack.c.bf16 %v2046, %v2045
        %v2077 = vpack.c.bf16 %v2048, %v2047
        %v2078 = vpack.c.bf16 %v2050, %v2049
        %v2079 = vpack.c.bf16 %v2052, %v2051
        %v2080 = vpack.c.bf16 %v2054, %v2053
        %v2081 = vpack.c.bf16 %v2056, %v2055
        %v2082 = vpack.c.bf16 %v2058, %v2057
        %v2083 = vpack.c.bf16 %v2060, %v2059
        %v2084 = vpack.c.bf16 %v2062, %v2061
        %v2085 = vpack.c.bf16 %v2064, %v2063
        %v2086 = vpack.c.bf16 %v2066, %v2065
        %v2087 = vpack.c.bf16 %v2068, %v2067
        %v2088 = vpack.c.bf16 %v2070, %v2069
        %v2089 = vpack.c.bf16 %v2072, %v2071
        %v2090 = vpack.c.bf16 %v2074, %v2073
        %s2091 = scalar_lea.vmem %s2, 384
        %v2092 = vld [vmem:[%s2091] sm:$0xf]
        %v2093 = vld [vmem:[%s2091 + $0x4] sm:$0xf]
        %v2094 = vld [vmem:[%s2091 + $0x8] sm:$0xf]
        %v2095 = vld [vmem:[%s2091 + $0xc] sm:$0xf]
        %v2096 = vld [vmem:[%s2091 + $0x10] sm:$0xf]
        %v2097 = vld [vmem:[%s2091 + $0x14] sm:$0xf]
        %v2098 = vld [vmem:[%s2091 + $0x18] sm:$0xf]
        %v2099 = vld [vmem:[%s2091 + $0x1c] sm:$0xf]
        %v2100 = vld [vmem:[%s2091 + $0x20] sm:$0xf]
        %v2101 = vld [vmem:[%s2091 + $0x24] sm:$0xf]
        %v2102 = vld [vmem:[%s2091 + $0x28] sm:$0xf]
        %v2103 = vld [vmem:[%s2091 + $0x2c] sm:$0xf]
        %v2104 = vld [vmem:[%s2091 + $0x30] sm:$0xf]
        %v2105 = vld [vmem:[%s2091 + $0x34] sm:$0xf]
        %v2106 = vld [vmem:[%s2091 + $0x38] sm:$0xf]
        %v2107 = vld [vmem:[%s2091 + $0x3c] sm:$0xf]
        %v2124 = vunpack.c.l.b16 %v2092
        %v2125 = vunpack.c.l.b16 %v2093
        %v2126 = vunpack.c.l.b16 %v2094
        %v2127 = vunpack.c.l.b16 %v2095
        %v2128 = vunpack.c.l.b16 %v2096
        %v2129 = vunpack.c.l.b16 %v2097
        %v2130 = vunpack.c.l.b16 %v2098
        %v2131 = vunpack.c.l.b16 %v2099
        %v2132 = vunpack.c.l.b16 %v2100
        %v2133 = vunpack.c.l.b16 %v2101
        %v2134 = vunpack.c.l.b16 %v2102
        %v2135 = vunpack.c.l.b16 %v2103
        %v2136 = vunpack.c.l.b16 %v2104
        %v2137 = vunpack.c.l.b16 %v2105
        %v2138 = vunpack.c.l.b16 %v2106
        %v2139 = vunpack.c.l.b16 %v2107
        %v2140 = vpack.c.b16 %v2125, %v2124
        %v2141 = vpack.c.b16 %v2127, %v2126
        %v2142 = vpack.c.b16 %v2129, %v2128
        %v2143 = vpack.c.b16 %v2131, %v2130
        %v2144 = vpack.c.b16 %v2133, %v2132
        %v2145 = vpack.c.b16 %v2135, %v2134
        %v2146 = vpack.c.b16 %v2137, %v2136
        %v2147 = vpack.c.b16 %v2139, %v2138
        %2156 = vmatprep.subr.bf16.mxu0 0
        %2157 = vmatpush1.bf16.msra.mxu0 %v2140
        %2158 = vmatprep.subr.bf16.mxu0 0
        %2159 = vmatpush1.bf16.msra.mxu0 %v2141
        %2160 = vmatprep.subr.bf16.mxu0 0
        %2161 = vmatpush1.bf16.msra.mxu0 %v2142
        %2162 = vmatprep.subr.bf16.mxu0 0
        %2163 = vmatpush1.bf16.msra.mxu0 %v2143
        %2164 = vmatprep.subr.bf16.mxu0 0
        %2165 = vmatpush1.bf16.msra.mxu0 %v2144
        %2166 = vmatprep.subr.bf16.mxu0 0
        %2167 = vmatpush1.bf16.msra.mxu0 %v2145
        %2168 = vmatprep.subr.bf16.mxu0 0
        %2169 = vmatpush1.bf16.msra.mxu0 %v2146
        %2170 = vmatprep.subr.bf16.mxu0 0
        %2171 = vmatpush1.bf16.msra.mxu0 %v2147
        %2172 = vmatprep.subr.bf16.mxu0 0
        %2173 = vmatpush1.bf16.msra.mxu0 0
        %2174 = vmatprep.subr.bf16.mxu0 0
        %2175 = vmatpush1.bf16.msra.mxu0 0
        %2176 = vmatprep.subr.bf16.mxu0 0
        %2177 = vmatpush1.bf16.msra.mxu0 0
        %2178 = vmatprep.subr.bf16.mxu0 0
        %2179 = vmatpush1.bf16.msra.mxu0 0
        %2180 = vmatprep.subr.bf16.mxu0 0
        %2181 = vmatpush1.bf16.msra.mxu0 0
        %2182 = vmatprep.subr.bf16.mxu0 0
        %2183 = vmatpush1.bf16.msra.mxu0 0
        %2184 = vmatprep.subr.bf16.mxu0 0
        %2185 = vmatpush1.bf16.msra.mxu0 0
        %2186 = vmatprep.subr.bf16.mxu0 0
        %2187 = vmatpush1.bf16.msra.mxu0 0
        %2188 = vmatprep.mubr.bf16.mxu0 0
        %2189 = vmatmul.mubr.bf16.gmra.mrb[0].mxu0 %v2075
        %v2190 = vpop.f32.mrb[0].mxu0
        %v2191 = vadd.f32 0.0, %v2190
        %v2192 = vpop.f32.mrb[0].mxu0
        %v2193 = vpop.f32.mrb[0].mxu0
        %v2194 = vadd.f32 0.0, %v2193
        %v2195 = vpop.f32.mrb[0].mxu0
        %2196 = vmatprep.mubr.bf16.mxu0 0
        %2197 = vmatmul.mubr.bf16.gmra.mrb[0].mxu0 %v2076
        %v2198 = vpop.f32.mrb[0].mxu0
        %v2199 = vadd.f32 0.0, %v2198
        %v2200 = vpop.f32.mrb[0].mxu0
        %v2201 = vpop.f32.mrb[0].mxu0
        %v2202 = vadd.f32 0.0, %v2201
        %v2203 = vpop.f32.mrb[0].mxu0
        %2204 = vmatprep.mubr.bf16.mxu0 0
        %2205 = vmatmul.mubr.bf16.gmra.mrb[0].mxu0 %v2077
        %v2206 = vpop.f32.mrb[0].mxu0
        %v2207 = vadd.f32 0.0, %v2206
        %v2208 = vpop.f32.mrb[0].mxu0
        %v2209 = vpop.f32.mrb[0].mxu0
        %v2210 = vadd.f32 0.0, %v2209
        %v2211 = vpop.f32.mrb[0].mxu0
        %2212 = vmatprep.mubr.bf16.mxu0 0
        %2213 = vmatmul.mubr.bf16.gmra.mrb[0].mxu0 %v2078
        %v2214 = vpop.f32.mrb[0].mxu0
        %v2215 = vadd.f32 0.0, %v2214
        %v2216 = vpop.f32.mrb[0].mxu0
        %v2217 = vpop.f32.mrb[0].mxu0
        %v2218 = vadd.f32 0.0, %v2217
        %v2219 = vpop.f32.mrb[0].mxu0
        %2220 = vmatprep.mubr.bf16.mxu0 0
        %2221 = vmatmul.mubr.bf16.gmra.mrb[0].mxu0 %v2079
        %v2222 = vpop.f32.mrb[0].mxu0
        %v2223 = vadd.f32 0.0, %v2222
        %v2224 = vpop.f32.mrb[0].mxu0
        %v2225 = vpop.f32.mrb[0].mxu0
        %v2226 = vadd.f32 0.0, %v2225
        %v2227 = vpop.f32.mrb[0].mxu0
        %2228 = vmatprep.mubr.bf16.mxu0 0
        %2229 = vmatmul.mubr.bf16.gmra.mrb[0].mxu0 %v2080
        %v2230 = vpop.f32.mrb[0].mxu0
        %v2231 = vadd.f32 0.0, %v2230
        %v2232 = vpop.f32.mrb[0].mxu0
        %v2233 = vpop.f32.mrb[0].mxu0
        %v2234 = vadd.f32 0.0, %v2233
        %v2235 = vpop.f32.mrb[0].mxu0
        %2236 = vmatprep.mubr.bf16.mxu0 0
        %2237 = vmatmul.mubr.bf16.gmra.mrb[0].mxu0 %v2081
        %v2238 = vpop.f32.mrb[0].mxu0
        %v2239 = vadd.f32 0.0, %v2238
        %v2240 = vpop.f32.mrb[0].mxu0
        %v2241 = vpop.f32.mrb[0].mxu0
        %v2242 = vadd.f32 0.0, %v2241
        %v2243 = vpop.f32.mrb[0].mxu0
        %2244 = vmatprep.mubr.bf16.mxu0 0
        %2245 = vmatmul.mubr.bf16.gmra.mrb[0].mxu0 %v2082
        %v2246 = vpop.f32.mrb[0].mxu0
        %v2247 = vadd.f32 0.0, %v2246
        %v2248 = vpop.f32.mrb[0].mxu0
        %v2249 = vpop.f32.mrb[0].mxu0
        %v2250 = vadd.f32 0.0, %v2249
        %v2251 = vpop.f32.mrb[0].mxu0
        %2252 = vmatprep.mubr.bf16.mxu0 0
        %2253 = vmatmul.mubr.bf16.gmra.mrb[0].mxu0 %v2083
        %v2254 = vpop.f32.mrb[0].mxu0
        %v2255 = vadd.f32 0.0, %v2254
        %v2256 = vpop.f32.mrb[0].mxu0
        %v2257 = vpop.f32.mrb[0].mxu0
        %v2258 = vadd.f32 0.0, %v2257
        %v2259 = vpop.f32.mrb[0].mxu0
        %2260 = vmatprep.mubr.bf16.mxu0 0
        %2261 = vmatmul.mubr.bf16.gmra.mrb[0].mxu0 %v2084
        %v2262 = vpop.f32.mrb[0].mxu0
        %v2263 = vadd.f32 0.0, %v2262
        %v2264 = vpop.f32.mrb[0].mxu0
        %v2265 = vpop.f32.mrb[0].mxu0
        %v2266 = vadd.f32 0.0, %v2265
        %v2267 = vpop.f32.mrb[0].mxu0
        %2268 = vmatprep.mubr.bf16.mxu0 0
        %2269 = vmatmul.mubr.bf16.gmra.mrb[0].mxu0 %v2085
        %v2270 = vpop.f32.mrb[0].mxu0
        %v2271 = vadd.f32 0.0, %v2270
        %v2272 = vpop.f32.mrb[0].mxu0
        %v2273 = vpop.f32.mrb[0].mxu0
        %v2274 = vadd.f32 0.0, %v2273
        %v2275 = vpop.f32.mrb[0].mxu0
        %2276 = vmatprep.mubr.bf16.mxu0 0
        %2277 = vmatmul.mubr.bf16.gmra.mrb[0].mxu0 %v2086
        %v2278 = vpop.f32.mrb[0].mxu0
        %v2279 = vadd.f32 0.0, %v2278
        %v2280 = vpop.f32.mrb[0].mxu0
        %v2281 = vpop.f32.mrb[0].mxu0
        %v2282 = vadd.f32 0.0, %v2281
        %v2283 = vpop.f32.mrb[0].mxu0
        %2284 = vmatprep.mubr.bf16.mxu0 0
        %2285 = vmatmul.mubr.bf16.gmra.mrb[0].mxu0 %v2087
        %v2286 = vpop.f32.mrb[0].mxu0
        %v2287 = vadd.f32 0.0, %v2286
        %v2288 = vpop.f32.mrb[0].mxu0
        %v2289 = vpop.f32.mrb[0].mxu0
        %v2290 = vadd.f32 0.0, %v2289
        %v2291 = vpop.f32.mrb[0].mxu0
        %2292 = vmatprep.mubr.bf16.mxu0 0
        %2293 = vmatmul.mubr.bf16.gmra.mrb[0].mxu0 %v2088
        %v2294 = vpop.f32.mrb[0].mxu0
        %v2295 = vadd.f32 0.0, %v2294
        %v2296 = vpop.f32.mrb[0].mxu0
        %v2297 = vpop.f32.mrb[0].mxu0
        %v2298 = vadd.f32 0.0, %v2297
        %v2299 = vpop.f32.mrb[0].mxu0
        %2300 = vmatprep.mubr.bf16.mxu0 0
        %2301 = vmatmul.mubr.bf16.gmra.mrb[0].mxu0 %v2089
        %v2302 = vpop.f32.mrb[0].mxu0
        %v2303 = vadd.f32 0.0, %v2302
        %v2304 = vpop.f32.mrb[0].mxu0
        %v2305 = vpop.f32.mrb[0].mxu0
        %v2306 = vadd.f32 0.0, %v2305
        %v2307 = vpop.f32.mrb[0].mxu0
        %2308 = vmatprep.mubr.bf16.mxu0 0
        %2309 = vmatmul.mubr.bf16.gmra.mrb[0].mxu0 %v2090
        %v2310 = vpop.f32.mrb[0].mxu0
        %v2311 = vadd.f32 0.0, %v2310
        %v2312 = vpop.f32.mrb[0].mxu0
        %v2313 = vpop.f32.mrb[0].mxu0
        %v2314 = vadd.f32 0.0, %v2313
        %v2315 = vpop.f32.mrb[0].mxu0
        %2316 = vdwg.mxu0
        %v2317 = vadd.f32 %v2010, %v2191
        %v2318 = vadd.f32 %v2011, %v2194
        %v2319 = vadd.f32 %v2012, %v2199
        %v2320 = vadd.f32 %v2013, %v2202
        %v2321 = vadd.f32 %v2014, %v2207
        %v2322 = vadd.f32 %v2015, %v2210
        %v2323 = vadd.f32 %v2016, %v2215
        %v2324 = vadd.f32 %v2017, %v2218
        %v2325 = vadd.f32 %v2018, %v2223
        %v2326 = vadd.f32 %v2019, %v2226
        %v2327 = vadd.f32 %v2020, %v2231
        %v2328 = vadd.f32 %v2021, %v2234
        %v2329 = vadd.f32 %v2022, %v2239
        %v2330 = vadd.f32 %v2023, %v2242
        %v2331 = vadd.f32 %v2024, %v2247
        %v2332 = vadd.f32 %v2025, %v2250
        %v2333 = vadd.f32 %v2026, %v2255
        %v2334 = vadd.f32 %v2027, %v2258
        %v2335 = vadd.f32 %v2028, %v2263
        %v2336 = vadd.f32 %v2029, %v2266
        %v2337 = vadd.f32 %v2030, %v2271
        %v2338 = vadd.f32 %v2031, %v2274
        %v2339 = vadd.f32 %v2032, %v2279
        %v2340 = vadd.f32 %v2033, %v2282
        %v2341 = vadd.f32 %v2034, %v2287
        %v2342 = vadd.f32 %v2035, %v2290
        %v2343 = vadd.f32 %v2036, %v2295
        %v2344 = vadd.f32 %v2037, %v2298
        %v2345 = vadd.f32 %v2038, %v2303
        %v2346 = vadd.f32 %v2039, %v2306
        %v2347 = vadd.f32 %v2040, %v2311
        %v2348 = vadd.f32 %v2041, %v2314
        %v2349 = vld [vmem:[%s2042 + $0x1] sm:$0xff]
        %v2350 = vld [vmem:[%s2042 + $0x9] sm:$0xff]
        %v2351 = vld [vmem:[%s2042 + $0x19] sm:$0xff]
        %v2352 = vld [vmem:[%s2042 + $0x21] sm:$0xff]
        %v2353 = vld [vmem:[%s2042 + $0x31] sm:$0xff]
        %v2354 = vld [vmem:[%s2042 + $0x39] sm:$0xff]
        %v2355 = vld [vmem:[%s2042 + $0x49] sm:$0xff]
        %v2356 = vld [vmem:[%s2042 + $0x51] sm:$0xff]
        %v2357 = vld [vmem:[%s2042 + $0x61] sm:$0xff]
        %v2358 = vld [vmem:[%s2042 + $0x69] sm:$0xff]
        %v2359 = vld [vmem:[%s2042 + $0x79] sm:$0xff]
        %v2360 = vld [vmem:[%s2042 + $0x81] sm:$0xff]
        %v2361 = vld [vmem:[%s2042 + $0x91] sm:$0xff]
        %v2362 = vld [vmem:[%s2042 + $0x99] sm:$0xff]
        %v2363 = vld [vmem:[%s2042 + $0xa9] sm:$0xff]
        %v2364 = vld [vmem:[%s2042 + $0xb1] sm:$0xff]
        %v2365 = vld [vmem:[%s2042 + $0xc1] sm:$0xff]
        %v2366 = vld [vmem:[%s2042 + $0xc9] sm:$0xff]
        %v2367 = vld [vmem:[%s2042 + $0xd9] sm:$0xff]
        %v2368 = vld [vmem:[%s2042 + $0xe1] sm:$0xff]
        %v2369 = vld [vmem:[%s2042 + $0xf1] sm:$0xff]
        %v2370 = vld [vmem:[%s2042 + $0xf9] sm:$0xff]
        %v2371 = vld [vmem:[%s2042 + $0x109] sm:$0xff]
        %v2372 = vld [vmem:[%s2042 + $0x111] sm:$0xff]
        %v2373 = vld [vmem:[%s2042 + $0x121] sm:$0xff]
        %v2374 = vld [vmem:[%s2042 + $0x129] sm:$0xff]
        %v2375 = vld [vmem:[%s2042 + $0x139] sm:$0xff]
        %v2376 = vld [vmem:[%s2042 + $0x141] sm:$0xff]
        %v2377 = vld [vmem:[%s2042 + $0x151] sm:$0xff]
        %v2378 = vld [vmem:[%s2042 + $0x159] sm:$0xff]
        %v2379 = vld [vmem:[%s2042 + $0x169] sm:$0xff]
        %v2380 = vld [vmem:[%s2042 + $0x171] sm:$0xff]
        %v2381 = vpack.c.bf16 %v2350, %v2349
        %v2382 = vpack.c.bf16 %v2352, %v2351
        %v2383 = vpack.c.bf16 %v2354, %v2353
        %v2384 = vpack.c.bf16 %v2356, %v2355
        %v2385 = vpack.c.bf16 %v2358, %v2357
        %v2386 = vpack.c.bf16 %v2360, %v2359
        %v2387 = vpack.c.bf16 %v2362, %v2361
        %v2388 = vpack.c.bf16 %v2364, %v2363
        %v2389 = vpack.c.bf16 %v2366, %v2365
        %v2390 = vpack.c.bf16 %v2368, %v2367
        %v2391 = vpack.c.bf16 %v2370, %v2369
        %v2392 = vpack.c.bf16 %v2372, %v2371
        %v2393 = vpack.c.bf16 %v2374, %v2373
        %v2394 = vpack.c.bf16 %v2376, %v2375
        %v2395 = vpack.c.bf16 %v2378, %v2377
        %v2396 = vpack.c.bf16 %v2380, %v2379
        %s2397 = scalar_lea.vmem %s2, 448
        %v2398 = vld [vmem:[%s2397] sm:$0xf]
        %v2399 = vld [vmem:[%s2397 + $0x4] sm:$0xf]
        %v2400 = vld [vmem:[%s2397 + $0x8] sm:$0xf]
        %v2401 = vld [vmem:[%s2397 + $0xc] sm:$0xf]
        %v2402 = vld [vmem:[%s2397 + $0x10] sm:$0xf]
        %v2403 = vld [vmem:[%s2397 + $0x14] sm:$0xf]
        %v2404 = vld [vmem:[%s2397 + $0x18] sm:$0xf]
        %v2405 = vld [vmem:[%s2397 + $0x1c] sm:$0xf]
        %v2406 = vld [vmem:[%s2397 + $0x20] sm:$0xf]
        %v2407 = vld [vmem:[%s2397 + $0x24] sm:$0xf]
        %v2408 = vld [vmem:[%s2397 + $0x28] sm:$0xf]
        %v2409 = vld [vmem:[%s2397 + $0x2c] sm:$0xf]
        %v2410 = vld [vmem:[%s2397 + $0x30] sm:$0xf]
        %v2411 = vld [vmem:[%s2397 + $0x34] sm:$0xf]
        %v2412 = vld [vmem:[%s2397 + $0x38] sm:$0xf]
        %v2413 = vld [vmem:[%s2397 + $0x3c] sm:$0xf]
        %v2430 = vunpack.c.l.b16 %v2398
        %v2431 = vunpack.c.l.b16 %v2399
        %v2432 = vunpack.c.l.b16 %v2400
        %v2433 = vunpack.c.l.b16 %v2401
        %v2434 = vunpack.c.l.b16 %v2402
        %v2435 = vunpack.c.l.b16 %v2403
        %v2436 = vunpack.c.l.b16 %v2404
        %v2437 = vunpack.c.l.b16 %v2405
        %v2438 = vunpack.c.l.b16 %v2406
        %v2439 = vunpack.c.l.b16 %v2407
        %v2440 = vunpack.c.l.b16 %v2408
        %v2441 = vunpack.c.l.b16 %v2409
        %v2442 = vunpack.c.l.b16 %v2410
        %v2443 = vunpack.c.l.b16 %v2411
        %v2444 = vunpack.c.l.b16 %v2412
        %v2445 = vunpack.c.l.b16 %v2413
        %v2446 = vpack.c.b16 %v2431, %v2430
        %v2447 = vpack.c.b16 %v2433, %v2432
        %v2448 = vpack.c.b16 %v2435, %v2434
        %v2449 = vpack.c.b16 %v2437, %v2436
        %v2450 = vpack.c.b16 %v2439, %v2438
        %v2451 = vpack.c.b16 %v2441, %v2440
        %v2452 = vpack.c.b16 %v2443, %v2442
        %v2453 = vpack.c.b16 %v2445, %v2444
        %2462 = vmatprep.subr.bf16.mxu0 0
        %2463 = vmatpush1.bf16.msra.mxu0 %v2446
        %2464 = vmatprep.subr.bf16.mxu0 0
        %2465 = vmatpush1.bf16.msra.mxu0 %v2447
        %2466 = vmatprep.subr.bf16.mxu0 0
        %2467 = vmatpush1.bf16.msra.mxu0 %v2448
        %2468 = vmatprep.subr.bf16.mxu0 0
        %2469 = vmatpush1.bf16.msra.mxu0 %v2449
        %2470 = vmatprep.subr.bf16.mxu0 0
        %2471 = vmatpush1.bf16.msra.mxu0 %v2450
        %2472 = vmatprep.subr.bf16.mxu0 0
        %2473 = vmatpush1.bf16.msra.mxu0 %v2451
        %2474 = vmatprep.subr.bf16.mxu0 0
        %2475 = vmatpush1.bf16.msra.mxu0 %v2452
        %2476 = vmatprep.subr.bf16.mxu0 0
        %2477 = vmatpush1.bf16.msra.mxu0 %v2453
        %2478 = vmatprep.subr.bf16.mxu0 0
        %2479 = vmatpush1.bf16.msra.mxu0 0
        %2480 = vmatprep.subr.bf16.mxu0 0
        %2481 = vmatpush1.bf16.msra.mxu0 0
        %2482 = vmatprep.subr.bf16.mxu0 0
        %2483 = vmatpush1.bf16.msra.mxu0 0
        %2484 = vmatprep.subr.bf16.mxu0 0
        %2485 = vmatpush1.bf16.msra.mxu0 0
        %2486 = vmatprep.subr.bf16.mxu0 0
        %2487 = vmatpush1.bf16.msra.mxu0 0
        %2488 = vmatprep.subr.bf16.mxu0 0
        %2489 = vmatpush1.bf16.msra.mxu0 0
        %2490 = vmatprep.subr.bf16.mxu0 0
        %2491 = vmatpush1.bf16.msra.mxu0 0
        %2492 = vmatprep.subr.bf16.mxu0 0
        %2493 = vmatpush1.bf16.msra.mxu0 0
        %2494 = vmatprep.mubr.bf16.mxu0 0
        %2495 = vmatmul.mubr.bf16.gmra.mrb[0].mxu0 %v2381
        %v2496 = vpop.f32.mrb[0].mxu0
        %v2497 = vadd.f32 0.0, %v2496
        %v2498 = vpop.f32.mrb[0].mxu0
        %v2499 = vpop.f32.mrb[0].mxu0
        %v2500 = vadd.f32 0.0, %v2499
        %v2501 = vpop.f32.mrb[0].mxu0
        %2502 = vmatprep.mubr.bf16.mxu0 0
        %2503 = vmatmul.mubr.bf16.gmra.mrb[0].mxu0 %v2382
        %v2504 = vpop.f32.mrb[0].mxu0
        %v2505 = vadd.f32 0.0, %v2504
        %v2506 = vpop.f32.mrb[0].mxu0
        %v2507 = vpop.f32.mrb[0].mxu0
        %v2508 = vadd.f32 0.0, %v2507
        %v2509 = vpop.f32.mrb[0].mxu0
        %2510 = vmatprep.mubr.bf16.mxu0 0
        %2511 = vmatmul.mubr.bf16.gmra.mrb[0].mxu0 %v2383
        %v2512 = vpop.f32.mrb[0].mxu0
        %v2513 = vadd.f32 0.0, %v2512
        %v2514 = vpop.f32.mrb[0].mxu0
        %v2515 = vpop.f32.mrb[0].mxu0
        %v2516 = vadd.f32 0.0, %v2515
        %v2517 = vpop.f32.mrb[0].mxu0
        %2518 = vmatprep.mubr.bf16.mxu0 0
        %2519 = vmatmul.mubr.bf16.gmra.mrb[0].mxu0 %v2384
        %v2520 = vpop.f32.mrb[0].mxu0
        %v2521 = vadd.f32 0.0, %v2520
        %v2522 = vpop.f32.mrb[0].mxu0
        %v2523 = vpop.f32.mrb[0].mxu0
        %v2524 = vadd.f32 0.0, %v2523
        %v2525 = vpop.f32.mrb[0].mxu0
        %2526 = vmatprep.mubr.bf16.mxu0 0
        %2527 = vmatmul.mubr.bf16.gmra.mrb[0].mxu0 %v2385
        %v2528 = vpop.f32.mrb[0].mxu0
        %v2529 = vadd.f32 0.0, %v2528
        %v2530 = vpop.f32.mrb[0].mxu0
        %v2531 = vpop.f32.mrb[0].mxu0
        %v2532 = vadd.f32 0.0, %v2531
        %v2533 = vpop.f32.mrb[0].mxu0
        %2534 = vmatprep.mubr.bf16.mxu0 0
        %2535 = vmatmul.mubr.bf16.gmra.mrb[0].mxu0 %v2386
        %v2536 = vpop.f32.mrb[0].mxu0
        %v2537 = vadd.f32 0.0, %v2536
        %v2538 = vpop.f32.mrb[0].mxu0
        %v2539 = vpop.f32.mrb[0].mxu0
        %v2540 = vadd.f32 0.0, %v2539
        %v2541 = vpop.f32.mrb[0].mxu0
        %2542 = vmatprep.mubr.bf16.mxu0 0
        %2543 = vmatmul.mubr.bf16.gmra.mrb[0].mxu0 %v2387
        %v2544 = vpop.f32.mrb[0].mxu0
        %v2545 = vadd.f32 0.0, %v2544
        %v2546 = vpop.f32.mrb[0].mxu0
        %v2547 = vpop.f32.mrb[0].mxu0
        %v2548 = vadd.f32 0.0, %v2547
        %v2549 = vpop.f32.mrb[0].mxu0
        %2550 = vmatprep.mubr.bf16.mxu0 0
        %2551 = vmatmul.mubr.bf16.gmra.mrb[0].mxu0 %v2388
        %v2552 = vpop.f32.mrb[0].mxu0
        %v2553 = vadd.f32 0.0, %v2552
        %v2554 = vpop.f32.mrb[0].mxu0
        %v2555 = vpop.f32.mrb[0].mxu0
        %v2556 = vadd.f32 0.0, %v2555
        %v2557 = vpop.f32.mrb[0].mxu0
        %2558 = vmatprep.mubr.bf16.mxu0 0
        %2559 = vmatmul.mubr.bf16.gmra.mrb[0].mxu0 %v2389
        %v2560 = vpop.f32.mrb[0].mxu0
        %v2561 = vadd.f32 0.0, %v2560
        %v2562 = vpop.f32.mrb[0].mxu0
        %v2563 = vpop.f32.mrb[0].mxu0
        %v2564 = vadd.f32 0.0, %v2563
        %v2565 = vpop.f32.mrb[0].mxu0
        %2566 = vmatprep.mubr.bf16.mxu0 0
        %2567 = vmatmul.mubr.bf16.gmra.mrb[0].mxu0 %v2390
        %v2568 = vpop.f32.mrb[0].mxu0
        %v2569 = vadd.f32 0.0, %v2568
        %v2570 = vpop.f32.mrb[0].mxu0
        %v2571 = vpop.f32.mrb[0].mxu0
        %v2572 = vadd.f32 0.0, %v2571
        %v2573 = vpop.f32.mrb[0].mxu0
        %2574 = vmatprep.mubr.bf16.mxu0 0
        %2575 = vmatmul.mubr.bf16.gmra.mrb[0].mxu0 %v2391
        %v2576 = vpop.f32.mrb[0].mxu0
        %v2577 = vadd.f32 0.0, %v2576
        %v2578 = vpop.f32.mrb[0].mxu0
        %v2579 = vpop.f32.mrb[0].mxu0
        %v2580 = vadd.f32 0.0, %v2579
        %v2581 = vpop.f32.mrb[0].mxu0
        %2582 = vmatprep.mubr.bf16.mxu0 0
        %2583 = vmatmul.mubr.bf16.gmra.mrb[0].mxu0 %v2392
        %v2584 = vpop.f32.mrb[0].mxu0
        %v2585 = vadd.f32 0.0, %v2584
        %v2586 = vpop.f32.mrb[0].mxu0
        %v2587 = vpop.f32.mrb[0].mxu0
        %v2588 = vadd.f32 0.0, %v2587
        %v2589 = vpop.f32.mrb[0].mxu0
        %2590 = vmatprep.mubr.bf16.mxu0 0
        %2591 = vmatmul.mubr.bf16.gmra.mrb[0].mxu0 %v2393
        %v2592 = vpop.f32.mrb[0].mxu0
        %v2593 = vadd.f32 0.0, %v2592
        %v2594 = vpop.f32.mrb[0].mxu0
        %v2595 = vpop.f32.mrb[0].mxu0
        %v2596 = vadd.f32 0.0, %v2595
        %v2597 = vpop.f32.mrb[0].mxu0
        %2598 = vmatprep.mubr.bf16.mxu0 0
        %2599 = vmatmul.mubr.bf16.gmra.mrb[0].mxu0 %v2394
        %v2600 = vpop.f32.mrb[0].mxu0
        %v2601 = vadd.f32 0.0, %v2600
        %v2602 = vpop.f32.mrb[0].mxu0
        %v2603 = vpop.f32.mrb[0].mxu0
        %v2604 = vadd.f32 0.0, %v2603
        %v2605 = vpop.f32.mrb[0].mxu0
        %2606 = vmatprep.mubr.bf16.mxu0 0
        %2607 = vmatmul.mubr.bf16.gmra.mrb[0].mxu0 %v2395
        %v2608 = vpop.f32.mrb[0].mxu0
        %v2609 = vadd.f32 0.0, %v2608
        %v2610 = vpop.f32.mrb[0].mxu0
        %v2611 = vpop.f32.mrb[0].mxu0
        %v2612 = vadd.f32 0.0, %v2611
        %v2613 = vpop.f32.mrb[0].mxu0
        %2614 = vmatprep.mubr.bf16.mxu0 0
        %2615 = vmatmul.mubr.bf16.gmra.mrb[0].mxu0 %v2396
        %v2616 = vpop.f32.mrb[0].mxu0
        %v2617 = vadd.f32 0.0, %v2616
        %v2618 = vpop.f32.mrb[0].mxu0
        %v2619 = vpop.f32.mrb[0].mxu0
        %v2620 = vadd.f32 0.0, %v2619
        %v2621 = vpop.f32.mrb[0].mxu0
        %2622 = vdwg.mxu0
        %v2623 = vadd.f32 %v2317, %v2497
        %v2624 = vadd.f32 %v2318, %v2500
        %v2625 = vadd.f32 %v2319, %v2505
        %v2626 = vadd.f32 %v2320, %v2508
        %v2627 = vadd.f32 %v2321, %v2513
        %v2628 = vadd.f32 %v2322, %v2516
        %v2629 = vadd.f32 %v2323, %v2521
        %v2630 = vadd.f32 %v2324, %v2524
        %v2631 = vadd.f32 %v2325, %v2529
        %v2632 = vadd.f32 %v2326, %v2532
        %v2633 = vadd.f32 %v2327, %v2537
        %v2634 = vadd.f32 %v2328, %v2540
        %v2635 = vadd.f32 %v2329, %v2545
        %v2636 = vadd.f32 %v2330, %v2548
        %v2637 = vadd.f32 %v2331, %v2553
        %v2638 = vadd.f32 %v2332, %v2556
        %v2639 = vadd.f32 %v2333, %v2561
        %v2640 = vadd.f32 %v2334, %v2564
        %v2641 = vadd.f32 %v2335, %v2569
        %v2642 = vadd.f32 %v2336, %v2572
        %v2643 = vadd.f32 %v2337, %v2577
        %v2644 = vadd.f32 %v2338, %v2580
        %v2645 = vadd.f32 %v2339, %v2585
        %v2646 = vadd.f32 %v2340, %v2588
        %v2647 = vadd.f32 %v2341, %v2593
        %v2648 = vadd.f32 %v2342, %v2596
        %v2649 = vadd.f32 %v2343, %v2601
        %v2650 = vadd.f32 %v2344, %v2604
        %v2651 = vadd.f32 %v2345, %v2609
        %v2652 = vadd.f32 %v2346, %v2612
        %v2653 = vadd.f32 %v2347, %v2617
        %v2654 = vadd.f32 %v2348, %v2620
        %v2655 = vld [vmem:[%s2042 + $0x2] sm:$0xff]
        %v2656 = vld [vmem:[%s2042 + $0xa] sm:$0xff]
        %v2657 = vld [vmem:[%s2042 + $0x1a] sm:$0xff]
        %v2658 = vld [vmem:[%s2042 + $0x22] sm:$0xff]
        %v2659 = vld [vmem:[%s2042 + $0x32] sm:$0xff]
        %v2660 = vld [vmem:[%s2042 + $0x3a] sm:$0xff]
        %v2661 = vld [vmem:[%s2042 + $0x4a] sm:$0xff]
        %v2662 = vld [vmem:[%s2042 + $0x52] sm:$0xff]
        %v2663 = vld [vmem:[%s2042 + $0x62] sm:$0xff]
        %v2664 = vld [vmem:[%s2042 + $0x6a] sm:$0xff]
        %v2665 = vld [vmem:[%s2042 + $0x7a] sm:$0xff]
        %v2666 = vld [vmem:[%s2042 + $0x82] sm:$0xff]
        %v2667 = vld [vmem:[%s2042 + $0x92] sm:$0xff]
        %v2668 = vld [vmem:[%s2042 + $0x9a] sm:$0xff]
        %v2669 = vld [vmem:[%s2042 + $0xaa] sm:$0xff]
        %v2670 = vld [vmem:[%s2042 + $0xb2] sm:$0xff]
        %v2671 = vld [vmem:[%s2042 + $0xc2] sm:$0xff]
        %v2672 = vld [vmem:[%s2042 + $0xca] sm:$0xff]
        %v2673 = vld [vmem:[%s2042 + $0xda] sm:$0xff]
        %v2674 = vld [vmem:[%s2042 + $0xe2] sm:$0xff]
        %v2675 = vld [vmem:[%s2042 + $0xf2] sm:$0xff]
        %v2676 = vld [vmem:[%s2042 + $0xfa] sm:$0xff]
        %v2677 = vld [vmem:[%s2042 + $0x10a] sm:$0xff]
        %v2678 = vld [vmem:[%s2042 + $0x112] sm:$0xff]
        %v2679 = vld [vmem:[%s2042 + $0x122] sm:$0xff]
        %v2680 = vld [vmem:[%s2042 + $0x12a] sm:$0xff]
        %v2681 = vld [vmem:[%s2042 + $0x13a] sm:$0xff]
        %v2682 = vld [vmem:[%s2042 + $0x142] sm:$0xff]
        %v2683 = vld [vmem:[%s2042 + $0x152] sm:$0xff]
        %v2684 = vld [vmem:[%s2042 + $0x15a] sm:$0xff]
        %v2685 = vld [vmem:[%s2042 + $0x16a] sm:$0xff]
        %v2686 = vld [vmem:[%s2042 + $0x172] sm:$0xff]
        %v2687 = vpack.c.bf16 %v2656, %v2655
        %v2688 = vpack.c.bf16 %v2658, %v2657
        %v2689 = vpack.c.bf16 %v2660, %v2659
        %v2690 = vpack.c.bf16 %v2662, %v2661
        %v2691 = vpack.c.bf16 %v2664, %v2663
        %v2692 = vpack.c.bf16 %v2666, %v2665
        %v2693 = vpack.c.bf16 %v2668, %v2667
        %v2694 = vpack.c.bf16 %v2670, %v2669
        %v2695 = vpack.c.bf16 %v2672, %v2671
        %v2696 = vpack.c.bf16 %v2674, %v2673
        %v2697 = vpack.c.bf16 %v2676, %v2675
        %v2698 = vpack.c.bf16 %v2678, %v2677
        %v2699 = vpack.c.bf16 %v2680, %v2679
        %v2700 = vpack.c.bf16 %v2682, %v2681
        %v2701 = vpack.c.bf16 %v2684, %v2683
        %v2702 = vpack.c.bf16 %v2686, %v2685
        %s2703 = scalar_lea.vmem %s2, 512
        %v2704 = vld [vmem:[%s2703] sm:$0xf]
        %v2705 = vld [vmem:[%s2703 + $0x4] sm:$0xf]
        %v2706 = vld [vmem:[%s2703 + $0x8] sm:$0xf]
        %v2707 = vld [vmem:[%s2703 + $0xc] sm:$0xf]
        %v2708 = vld [vmem:[%s2703 + $0x10] sm:$0xf]
        %v2709 = vld [vmem:[%s2703 + $0x14] sm:$0xf]
        %v2710 = vld [vmem:[%s2703 + $0x18] sm:$0xf]
        %v2711 = vld [vmem:[%s2703 + $0x1c] sm:$0xf]
        %v2712 = vld [vmem:[%s2703 + $0x20] sm:$0xf]
        %v2713 = vld [vmem:[%s2703 + $0x24] sm:$0xf]
        %v2714 = vld [vmem:[%s2703 + $0x28] sm:$0xf]
        %v2715 = vld [vmem:[%s2703 + $0x2c] sm:$0xf]
        %v2716 = vld [vmem:[%s2703 + $0x30] sm:$0xf]
        %v2717 = vld [vmem:[%s2703 + $0x34] sm:$0xf]
        %v2718 = vld [vmem:[%s2703 + $0x38] sm:$0xf]
        %v2719 = vld [vmem:[%s2703 + $0x3c] sm:$0xf]
        %v2736 = vunpack.c.l.b16 %v2704
        %v2737 = vunpack.c.l.b16 %v2705
        %v2738 = vunpack.c.l.b16 %v2706
        %v2739 = vunpack.c.l.b16 %v2707
        %v2740 = vunpack.c.l.b16 %v2708
        %v2741 = vunpack.c.l.b16 %v2709
        %v2742 = vunpack.c.l.b16 %v2710
        %v2743 = vunpack.c.l.b16 %v2711
        %v2744 = vunpack.c.l.b16 %v2712
        %v2745 = vunpack.c.l.b16 %v2713
        %v2746 = vunpack.c.l.b16 %v2714
        %v2747 = vunpack.c.l.b16 %v2715
        %v2748 = vunpack.c.l.b16 %v2716
        %v2749 = vunpack.c.l.b16 %v2717
        %v2750 = vunpack.c.l.b16 %v2718
        %v2751 = vunpack.c.l.b16 %v2719
        %v2752 = vpack.c.b16 %v2737, %v2736
        %v2753 = vpack.c.b16 %v2739, %v2738
        %v2754 = vpack.c.b16 %v2741, %v2740
        %v2755 = vpack.c.b16 %v2743, %v2742
        %v2756 = vpack.c.b16 %v2745, %v2744
        %v2757 = vpack.c.b16 %v2747, %v2746
        %v2758 = vpack.c.b16 %v2749, %v2748
        %v2759 = vpack.c.b16 %v2751, %v2750
        %2768 = vmatprep.subr.bf16.mxu0 0
        %2769 = vmatpush1.bf16.msra.mxu0 %v2752
        %2770 = vmatprep.subr.bf16.mxu0 0
        %2771 = vmatpush1.bf16.msra.mxu0 %v2753
        %2772 = vmatprep.subr.bf16.mxu0 0
        %2773 = vmatpush1.bf16.msra.mxu0 %v2754
        %2774 = vmatprep.subr.bf16.mxu0 0
        %2775 = vmatpush1.bf16.msra.mxu0 %v2755
        %2776 = vmatprep.subr.bf16.mxu0 0
        %2777 = vmatpush1.bf16.msra.mxu0 %v2756
        %2778 = vmatprep.subr.bf16.mxu0 0
        %2779 = vmatpush1.bf16.msra.mxu0 %v2757
        %2780 = vmatprep.subr.bf16.mxu0 0
        %2781 = vmatpush1.bf16.msra.mxu0 %v2758
        %2782 = vmatprep.subr.bf16.mxu0 0
        %2783 = vmatpush1.bf16.msra.mxu0 %v2759
        %2784 = vmatprep.subr.bf16.mxu0 0
        %2785 = vmatpush1.bf16.msra.mxu0 0
        %2786 = vmatprep.subr.bf16.mxu0 0
        %2787 = vmatpush1.bf16.msra.mxu0 0
        %2788 = vmatprep.subr.bf16.mxu0 0
        %2789 = vmatpush1.bf16.msra.mxu0 0
        %2790 = vmatprep.subr.bf16.mxu0 0
        %2791 = vmatpush1.bf16.msra.mxu0 0
        %2792 = vmatprep.subr.bf16.mxu0 0
        %2793 = vmatpush1.bf16.msra.mxu0 0
        %2794 = vmatprep.subr.bf16.mxu0 0
        %2795 = vmatpush1.bf16.msra.mxu0 0
        %2796 = vmatprep.subr.bf16.mxu0 0
        %2797 = vmatpush1.bf16.msra.mxu0 0
        %2798 = vmatprep.subr.bf16.mxu0 0
        %2799 = vmatpush1.bf16.msra.mxu0 0
        %2800 = vmatprep.mubr.bf16.mxu0 0
        %2801 = vmatmul.mubr.bf16.gmra.mrb[0].mxu0 %v2687
        %v2802 = vpop.f32.mrb[0].mxu0
        %v2803 = vadd.f32 0.0, %v2802
        %v2804 = vpop.f32.mrb[0].mxu0
        %v2805 = vpop.f32.mrb[0].mxu0
        %v2806 = vadd.f32 0.0, %v2805
        %v2807 = vpop.f32.mrb[0].mxu0
        %2808 = vmatprep.mubr.bf16.mxu0 0
        %2809 = vmatmul.mubr.bf16.gmra.mrb[0].mxu0 %v2688
        %v2810 = vpop.f32.mrb[0].mxu0
        %v2811 = vadd.f32 0.0, %v2810
        %v2812 = vpop.f32.mrb[0].mxu0
        %v2813 = vpop.f32.mrb[0].mxu0
        %v2814 = vadd.f32 0.0, %v2813
        %v2815 = vpop.f32.mrb[0].mxu0
        %2816 = vmatprep.mubr.bf16.mxu0 0
        %2817 = vmatmul.mubr.bf16.gmra.mrb[0].mxu0 %v2689
        %v2818 = vpop.f32.mrb[0].mxu0
        %v2819 = vadd.f32 0.0, %v2818
        %v2820 = vpop.f32.mrb[0].mxu0
        %v2821 = vpop.f32.mrb[0].mxu0
        %v2822 = vadd.f32 0.0, %v2821
        %v2823 = vpop.f32.mrb[0].mxu0
        %2824 = vmatprep.mubr.bf16.mxu0 0
        %2825 = vmatmul.mubr.bf16.gmra.mrb[0].mxu0 %v2690
        %v2826 = vpop.f32.mrb[0].mxu0
        %v2827 = vadd.f32 0.0, %v2826
        %v2828 = vpop.f32.mrb[0].mxu0
        %v2829 = vpop.f32.mrb[0].mxu0
        %v2830 = vadd.f32 0.0, %v2829
        %v2831 = vpop.f32.mrb[0].mxu0
        %2832 = vmatprep.mubr.bf16.mxu0 0
        %2833 = vmatmul.mubr.bf16.gmra.mrb[0].mxu0 %v2691
        %v2834 = vpop.f32.mrb[0].mxu0
        %v2835 = vadd.f32 0.0, %v2834
        %v2836 = vpop.f32.mrb[0].mxu0
        %v2837 = vpop.f32.mrb[0].mxu0
        %v2838 = vadd.f32 0.0, %v2837
        %v2839 = vpop.f32.mrb[0].mxu0
        %2840 = vmatprep.mubr.bf16.mxu0 0
        %2841 = vmatmul.mubr.bf16.gmra.mrb[0].mxu0 %v2692
        %v2842 = vpop.f32.mrb[0].mxu0
        %v2843 = vadd.f32 0.0, %v2842
        %v2844 = vpop.f32.mrb[0].mxu0
        %v2845 = vpop.f32.mrb[0].mxu0
        %v2846 = vadd.f32 0.0, %v2845
        %v2847 = vpop.f32.mrb[0].mxu0
        %2848 = vmatprep.mubr.bf16.mxu0 0
        %2849 = vmatmul.mubr.bf16.gmra.mrb[0].mxu0 %v2693
        %v2850 = vpop.f32.mrb[0].mxu0
        %v2851 = vadd.f32 0.0, %v2850
        %v2852 = vpop.f32.mrb[0].mxu0
        %v2853 = vpop.f32.mrb[0].mxu0
        %v2854 = vadd.f32 0.0, %v2853
        %v2855 = vpop.f32.mrb[0].mxu0
        %2856 = vmatprep.mubr.bf16.mxu0 0
        %2857 = vmatmul.mubr.bf16.gmra.mrb[0].mxu0 %v2694
        %v2858 = vpop.f32.mrb[0].mxu0
        %v2859 = vadd.f32 0.0, %v2858
        %v2860 = vpop.f32.mrb[0].mxu0
        %v2861 = vpop.f32.mrb[0].mxu0
        %v2862 = vadd.f32 0.0, %v2861
        %v2863 = vpop.f32.mrb[0].mxu0
        %2864 = vmatprep.mubr.bf16.mxu0 0
        %2865 = vmatmul.mubr.bf16.gmra.mrb[0].mxu0 %v2695
        %v2866 = vpop.f32.mrb[0].mxu0
        %v2867 = vadd.f32 0.0, %v2866
        %v2868 = vpop.f32.mrb[0].mxu0
        %v2869 = vpop.f32.mrb[0].mxu0
        %v2870 = vadd.f32 0.0, %v2869
        %v2871 = vpop.f32.mrb[0].mxu0
        %2872 = vmatprep.mubr.bf16.mxu0 0
        %2873 = vmatmul.mubr.bf16.gmra.mrb[0].mxu0 %v2696
        %v2874 = vpop.f32.mrb[0].mxu0
        %v2875 = vadd.f32 0.0, %v2874
        %v2876 = vpop.f32.mrb[0].mxu0
        %v2877 = vpop.f32.mrb[0].mxu0
        %v2878 = vadd.f32 0.0, %v2877
        %v2879 = vpop.f32.mrb[0].mxu0
        %2880 = vmatprep.mubr.bf16.mxu0 0
        %2881 = vmatmul.mubr.bf16.gmra.mrb[0].mxu0 %v2697
        %v2882 = vpop.f32.mrb[0].mxu0
        %v2883 = vadd.f32 0.0, %v2882
        %v2884 = vpop.f32.mrb[0].mxu0
        %v2885 = vpop.f32.mrb[0].mxu0
        %v2886 = vadd.f32 0.0, %v2885
        %v2887 = vpop.f32.mrb[0].mxu0
        %2888 = vmatprep.mubr.bf16.mxu0 0
        %2889 = vmatmul.mubr.bf16.gmra.mrb[0].mxu0 %v2698
        %v2890 = vpop.f32.mrb[0].mxu0
        %v2891 = vadd.f32 0.0, %v2890
        %v2892 = vpop.f32.mrb[0].mxu0
        %v2893 = vpop.f32.mrb[0].mxu0
        %v2894 = vadd.f32 0.0, %v2893
        %v2895 = vpop.f32.mrb[0].mxu0
        %2896 = vmatprep.mubr.bf16.mxu0 0
        %2897 = vmatmul.mubr.bf16.gmra.mrb[0].mxu0 %v2699
        %v2898 = vpop.f32.mrb[0].mxu0
        %v2899 = vadd.f32 0.0, %v2898
        %v2900 = vpop.f32.mrb[0].mxu0
        %v2901 = vpop.f32.mrb[0].mxu0
        %v2902 = vadd.f32 0.0, %v2901
        %v2903 = vpop.f32.mrb[0].mxu0
        %2904 = vmatprep.mubr.bf16.mxu0 0
        %2905 = vmatmul.mubr.bf16.gmra.mrb[0].mxu0 %v2700
        %v2906 = vpop.f32.mrb[0].mxu0
        %v2907 = vadd.f32 0.0, %v2906
        %v2908 = vpop.f32.mrb[0].mxu0
        %v2909 = vpop.f32.mrb[0].mxu0
        %v2910 = vadd.f32 0.0, %v2909
        %v2911 = vpop.f32.mrb[0].mxu0
        %2912 = vmatprep.mubr.bf16.mxu0 0
        %2913 = vmatmul.mubr.bf16.gmra.mrb[0].mxu0 %v2701
        %v2914 = vpop.f32.mrb[0].mxu0
        %v2915 = vadd.f32 0.0, %v2914
        %v2916 = vpop.f32.mrb[0].mxu0
        %v2917 = vpop.f32.mrb[0].mxu0
        %v2918 = vadd.f32 0.0, %v2917
        %v2919 = vpop.f32.mrb[0].mxu0
        %2920 = vmatprep.mubr.bf16.mxu0 0
        %2921 = vmatmul.mubr.bf16.gmra.mrb[0].mxu0 %v2702
        %v2922 = vpop.f32.mrb[0].mxu0
        %v2923 = vadd.f32 0.0, %v2922
        %v2924 = vpop.f32.mrb[0].mxu0
        %v2925 = vpop.f32.mrb[0].mxu0
        %v2926 = vadd.f32 0.0, %v2925
        %v2927 = vpop.f32.mrb[0].mxu0
        %2928 = vdwg.mxu0
        %v2929 = vadd.f32 %v2623, %v2803
        %v2930 = vadd.f32 %v2624, %v2806
        %v2931 = vadd.f32 %v2625, %v2811
        %v2932 = vadd.f32 %v2626, %v2814
        %v2933 = vadd.f32 %v2627, %v2819
        %v2934 = vadd.f32 %v2628, %v2822
        %v2935 = vadd.f32 %v2629, %v2827
        %v2936 = vadd.f32 %v2630, %v2830
        %v2937 = vadd.f32 %v2631, %v2835
        %v2938 = vadd.f32 %v2632, %v2838
        %v2939 = vadd.f32 %v2633, %v2843
        %v2940 = vadd.f32 %v2634, %v2846
        %v2941 = vadd.f32 %v2635, %v2851
        %v2942 = vadd.f32 %v2636, %v2854
        %v2943 = vadd.f32 %v2637, %v2859
        %v2944 = vadd.f32 %v2638, %v2862
        %v2945 = vadd.f32 %v2639, %v2867
        %v2946 = vadd.f32 %v2640, %v2870
        %v2947 = vadd.f32 %v2641, %v2875
        %v2948 = vadd.f32 %v2642, %v2878
        %v2949 = vadd.f32 %v2643, %v2883
        %v2950 = vadd.f32 %v2644, %v2886
        %v2951 = vadd.f32 %v2645, %v2891
        %v2952 = vadd.f32 %v2646, %v2894
        %v2953 = vadd.f32 %v2647, %v2899
        %v2954 = vadd.f32 %v2648, %v2902
        %v2955 = vadd.f32 %v2649, %v2907
        %v2956 = vadd.f32 %v2650, %v2910
        %v2957 = vadd.f32 %v2651, %v2915
        %v2958 = vadd.f32 %v2652, %v2918
        %v2959 = vadd.f32 %v2653, %v2923
        %v2960 = vadd.f32 %v2654, %v2926
        %v2961 = vld [vmem:[%s3] sm:$0x1]
        %v2963 = vlaneseq
        %v2964 = vshrl.u32 %v2963, 7
        %v2965 = vsub.s32 0, %v2964
        %v2966 = vrot.slane %v2961, %v2965
        %v2968 = vadd.f32 %v2929, %v2966
        %v2969 = vadd.f32 %v2930, %v2966
        %v2970 = vadd.f32 %v2931, %v2966
        %v2971 = vadd.f32 %v2932, %v2966
        %v2972 = vadd.f32 %v2933, %v2966
        %v2973 = vadd.f32 %v2934, %v2966
        %v2974 = vadd.f32 %v2935, %v2966
        %v2975 = vadd.f32 %v2936, %v2966
        %v2976 = vadd.f32 %v2937, %v2966
        %v2977 = vadd.f32 %v2938, %v2966
        %v2978 = vadd.f32 %v2939, %v2966
        %v2979 = vadd.f32 %v2940, %v2966
        %v2980 = vadd.f32 %v2941, %v2966
        %v2981 = vadd.f32 %v2942, %v2966
        %v2982 = vadd.f32 %v2943, %v2966
        %v2983 = vadd.f32 %v2944, %v2966
        %v2984 = vadd.f32 %v2945, %v2966
        %v2985 = vadd.f32 %v2946, %v2966
        %v2986 = vadd.f32 %v2947, %v2966
        %v2987 = vadd.f32 %v2948, %v2966
        %v2988 = vadd.f32 %v2949, %v2966
        %v2989 = vadd.f32 %v2950, %v2966
        %v2990 = vadd.f32 %v2951, %v2966
        %v2991 = vadd.f32 %v2952, %v2966
        %v2992 = vadd.f32 %v2953, %v2966
        %v2993 = vadd.f32 %v2954, %v2966
        %v2994 = vadd.f32 %v2955, %v2966
        %v2995 = vadd.f32 %v2956, %v2966
        %v2996 = vadd.f32 %v2957, %v2966
        %v2997 = vadd.f32 %v2958, %v2966
        %v2998 = vadd.f32 %v2959, %v2966
        %v2999 = vadd.f32 %v2960, %v2966
        %v3000 = vld [vmem:[%s268] sm:$0xff]
        %v3001 = vld [vmem:[%s268 + $0x8] sm:$0xff]
        %v3002 = vld [vmem:[%s268 + $0x10] sm:$0xff]
        %v3003 = vld [vmem:[%s268 + $0x18] sm:$0xff]
        %v3004 = vld [vmem:[%s268 + $0x20] sm:$0xff]
        %v3005 = vld [vmem:[%s268 + $0x28] sm:$0xff]
        %v3006 = vld [vmem:[%s268 + $0x30] sm:$0xff]
        %v3007 = vld [vmem:[%s268 + $0x38] sm:$0xff]
        %v3008 = vld [vmem:[%s268 + $0x40] sm:$0xff]
        %v3009 = vld [vmem:[%s268 + $0x48] sm:$0xff]
        %v3010 = vld [vmem:[%s268 + $0x50] sm:$0xff]
        %v3011 = vld [vmem:[%s268 + $0x58] sm:$0xff]
        %v3012 = vld [vmem:[%s268 + $0x60] sm:$0xff]
        %v3013 = vld [vmem:[%s268 + $0x68] sm:$0xff]
        %v3014 = vld [vmem:[%s268 + $0x70] sm:$0xff]
        %v3015 = vld [vmem:[%s268 + $0x78] sm:$0xff]
        %v3016 = vld [vmem:[%s268 + $0x80] sm:$0xff]
        %v3017 = vld [vmem:[%s268 + $0x88] sm:$0xff]
        %v3018 = vld [vmem:[%s268 + $0x90] sm:$0xff]
        %v3019 = vld [vmem:[%s268 + $0x98] sm:$0xff]
        %v3020 = vld [vmem:[%s268 + $0xa0] sm:$0xff]
        %v3021 = vld [vmem:[%s268 + $0xa8] sm:$0xff]
        %v3022 = vld [vmem:[%s268 + $0xb0] sm:$0xff]
        %v3023 = vld [vmem:[%s268 + $0xb8] sm:$0xff]
        %v3024 = vld [vmem:[%s268 + $0xc0] sm:$0xff]
        %v3025 = vld [vmem:[%s268 + $0xc8] sm:$0xff]
        %v3026 = vld [vmem:[%s268 + $0xd0] sm:$0xff]
        %v3027 = vld [vmem:[%s268 + $0xd8] sm:$0xff]
        %v3028 = vld [vmem:[%s268 + $0xe0] sm:$0xff]
        %v3029 = vld [vmem:[%s268 + $0xe8] sm:$0xff]
        %v3030 = vld [vmem:[%s268 + $0xf0] sm:$0xff]
        %v3031 = vld [vmem:[%s268 + $0xf8] sm:$0xff]
        %v3032 = vadd.f32 %v2968, %v3000
        %v3033 = vadd.f32 %v2969, %v3001
        %v3034 = vadd.f32 %v2970, %v3002
        %v3035 = vadd.f32 %v2971, %v3003
        %v3036 = vadd.f32 %v2972, %v3004
        %v3037 = vadd.f32 %v2973, %v3005
        %v3038 = vadd.f32 %v2974, %v3006
        %v3039 = vadd.f32 %v2975, %v3007
        %v3040 = vadd.f32 %v2976, %v3008
        %v3041 = vadd.f32 %v2977, %v3009
        %v3042 = vadd.f32 %v2978, %v3010
        %v3043 = vadd.f32 %v2979, %v3011
        %v3044 = vadd.f32 %v2980, %v3012
        %v3045 = vadd.f32 %v2981, %v3013
        %v3046 = vadd.f32 %v2982, %v3014
        %v3047 = vadd.f32 %v2983, %v3015
        %v3048 = vadd.f32 %v2984, %v3016
        %v3049 = vadd.f32 %v2985, %v3017
        %v3050 = vadd.f32 %v2986, %v3018
        %v3051 = vadd.f32 %v2987, %v3019
        %v3052 = vadd.f32 %v2988, %v3020
        %v3053 = vadd.f32 %v2989, %v3021
        %v3054 = vadd.f32 %v2990, %v3022
        %v3055 = vadd.f32 %v2991, %v3023
        %v3056 = vadd.f32 %v2992, %v3024
        %v3057 = vadd.f32 %v2993, %v3025
        %v3058 = vadd.f32 %v2994, %v3026
        %v3059 = vadd.f32 %v2995, %v3027
        %v3060 = vadd.f32 %v2996, %v3028
        %v3061 = vadd.f32 %v2997, %v3029
        %v3062 = vadd.f32 %v2998, %v3030
        %v3063 = vadd.f32 %v2999, %v3031
        %v3064 = vmax.f32 %v3032, 0.0
        %v3065 = vmax.f32 %v3033, 0.0
        %v3066 = vmax.f32 %v3034, 0.0
        %v3067 = vmax.f32 %v3035, 0.0
        %v3068 = vmax.f32 %v3036, 0.0
        %v3069 = vmax.f32 %v3037, 0.0
        %v3070 = vmax.f32 %v3038, 0.0
        %v3071 = vmax.f32 %v3039, 0.0
        %v3072 = vmax.f32 %v3040, 0.0
        %v3073 = vmax.f32 %v3041, 0.0
        %v3074 = vmax.f32 %v3042, 0.0
        %v3075 = vmax.f32 %v3043, 0.0
        %v3076 = vmax.f32 %v3044, 0.0
        %v3077 = vmax.f32 %v3045, 0.0
        %v3078 = vmax.f32 %v3046, 0.0
        %v3079 = vmax.f32 %v3047, 0.0
        %v3080 = vmax.f32 %v3048, 0.0
        %v3081 = vmax.f32 %v3049, 0.0
        %v3082 = vmax.f32 %v3050, 0.0
        %v3083 = vmax.f32 %v3051, 0.0
        %v3084 = vmax.f32 %v3052, 0.0
        %v3085 = vmax.f32 %v3053, 0.0
        %v3086 = vmax.f32 %v3054, 0.0
        %v3087 = vmax.f32 %v3055, 0.0
        %v3088 = vmax.f32 %v3056, 0.0
        %v3089 = vmax.f32 %v3057, 0.0
        %v3090 = vmax.f32 %v3058, 0.0
        %v3091 = vmax.f32 %v3059, 0.0
        %v3092 = vmax.f32 %v3060, 0.0
        %v3093 = vmax.f32 %v3061, 0.0
        %v3094 = vmax.f32 %v3062, 0.0
        %v3095 = vmax.f32 %v3063, 0.0
        %v3096 = vpack.c.bf16 %v3065, %v3064
        %v3097 = vpack.c.bf16 %v3067, %v3066
        %v3098 = vpack.c.bf16 %v3069, %v3068
        %v3099 = vpack.c.bf16 %v3071, %v3070
        %v3100 = vpack.c.bf16 %v3073, %v3072
        %v3101 = vpack.c.bf16 %v3075, %v3074
        %v3102 = vpack.c.bf16 %v3077, %v3076
        %v3103 = vpack.c.bf16 %v3079, %v3078
        %v3104 = vpack.c.bf16 %v3081, %v3080
        %v3105 = vpack.c.bf16 %v3083, %v3082
        %v3106 = vpack.c.bf16 %v3085, %v3084
        %v3107 = vpack.c.bf16 %v3087, %v3086
        %v3108 = vpack.c.bf16 %v3089, %v3088
        %v3109 = vpack.c.bf16 %v3091, %v3090
        %v3110 = vpack.c.bf16 %v3093, %v3092
        %v3111 = vpack.c.bf16 %v3095, %v3094
        %v3112 = vld [vmem:[%s4] sm:$0xf]
        %v3113 = vld [vmem:[%s4 + $0x4] sm:$0xf]
        %v3114 = vld [vmem:[%s4 + $0x8] sm:$0xf]
        %v3115 = vld [vmem:[%s4 + $0xc] sm:$0xf]
        %v3116 = vld [vmem:[%s4 + $0x10] sm:$0xf]
        %v3117 = vld [vmem:[%s4 + $0x14] sm:$0xf]
        %v3118 = vld [vmem:[%s4 + $0x18] sm:$0xf]
        %v3119 = vld [vmem:[%s4 + $0x1c] sm:$0xf]
        %v3120 = vld [vmem:[%s4 + $0x20] sm:$0xf]
        %v3121 = vld [vmem:[%s4 + $0x24] sm:$0xf]
        %v3122 = vld [vmem:[%s4 + $0x28] sm:$0xf]
        %v3123 = vld [vmem:[%s4 + $0x2c] sm:$0xf]
        %v3124 = vld [vmem:[%s4 + $0x30] sm:$0xf]
        %v3125 = vld [vmem:[%s4 + $0x34] sm:$0xf]
        %v3126 = vld [vmem:[%s4 + $0x38] sm:$0xf]
        %v3127 = vld [vmem:[%s4 + $0x3c] sm:$0xf]
        %v3144 = vunpack.c.l.b16 %v3112
        %v3145 = vunpack.c.l.b16 %v3113
        %v3146 = vunpack.c.l.b16 %v3114
        %v3147 = vunpack.c.l.b16 %v3115
        %v3148 = vunpack.c.l.b16 %v3116
        %v3149 = vunpack.c.l.b16 %v3117
        %v3150 = vunpack.c.l.b16 %v3118
        %v3151 = vunpack.c.l.b16 %v3119
        %v3152 = vunpack.c.l.b16 %v3120
        %v3153 = vunpack.c.l.b16 %v3121
        %v3154 = vunpack.c.l.b16 %v3122
        %v3155 = vunpack.c.l.b16 %v3123
        %v3156 = vunpack.c.l.b16 %v3124
        %v3157 = vunpack.c.l.b16 %v3125
        %v3158 = vunpack.c.l.b16 %v3126
        %v3159 = vunpack.c.l.b16 %v3127
        %v3160 = vpack.c.b16 %v3145, %v3144
        %v3161 = vpack.c.b16 %v3147, %v3146
        %v3162 = vpack.c.b16 %v3149, %v3148
        %v3163 = vpack.c.b16 %v3151, %v3150
        %v3164 = vpack.c.b16 %v3153, %v3152
        %v3165 = vpack.c.b16 %v3155, %v3154
        %v3166 = vpack.c.b16 %v3157, %v3156
        %v3167 = vpack.c.b16 %v3159, %v3158
        %3176 = vmatprep.subr.bf16.mxu0 0
        %3177 = vmatpush1.bf16.msra.mxu0 %v3160
        %3178 = vmatprep.subr.bf16.mxu0 0
        %3179 = vmatpush1.bf16.msra.mxu0 %v3161
        %3180 = vmatprep.subr.bf16.mxu0 0
        %3181 = vmatpush1.bf16.msra.mxu0 %v3162
        %3182 = vmatprep.subr.bf16.mxu0 0
        %3183 = vmatpush1.bf16.msra.mxu0 %v3163
        %3184 = vmatprep.subr.bf16.mxu0 0
        %3185 = vmatpush1.bf16.msra.mxu0 %v3164
        %3186 = vmatprep.subr.bf16.mxu0 0
        %3187 = vmatpush1.bf16.msra.mxu0 %v3165
        %3188 = vmatprep.subr.bf16.mxu0 0
        %3189 = vmatpush1.bf16.msra.mxu0 %v3166
        %3190 = vmatprep.subr.bf16.mxu0 0
        %3191 = vmatpush1.bf16.msra.mxu0 %v3167
        %3192 = vmatprep.subr.bf16.mxu0 0
        %3193 = vmatpush1.bf16.msra.mxu0 0
        %3194 = vmatprep.subr.bf16.mxu0 0
        %3195 = vmatpush1.bf16.msra.mxu0 0
        %3196 = vmatprep.subr.bf16.mxu0 0
        %3197 = vmatpush1.bf16.msra.mxu0 0
        %3198 = vmatprep.subr.bf16.mxu0 0
        %3199 = vmatpush1.bf16.msra.mxu0 0
        %3200 = vmatprep.subr.bf16.mxu0 0
        %3201 = vmatpush1.bf16.msra.mxu0 0
        %3202 = vmatprep.subr.bf16.mxu0 0
        %3203 = vmatpush1.bf16.msra.mxu0 0
        %3204 = vmatprep.subr.bf16.mxu0 0
        %3205 = vmatpush1.bf16.msra.mxu0 0
        %3206 = vmatprep.subr.bf16.mxu0 0
        %3207 = vmatpush1.bf16.msra.mxu0 0
        %3208 = vmatprep.mubr.bf16.mxu0 0
        %3209 = vmatmul.mubr.bf16.gmra.mrb[0].mxu0 %v3096
        %v3210 = vpop.f32.mrb[0].mxu0
        %v3211 = vadd.f32 0.0, %v3210
        %v3212 = vpop.f32.mrb[0].mxu0
        %v3213 = vpop.f32.mrb[0].mxu0
        %v3214 = vadd.f32 0.0, %v3213
        %v3215 = vpop.f32.mrb[0].mxu0
        %3216 = vmatprep.mubr.bf16.mxu0 0
        %3217 = vmatmul.mubr.bf16.gmra.mrb[0].mxu0 %v3097
        %v3218 = vpop.f32.mrb[0].mxu0
        %v3219 = vadd.f32 0.0, %v3218
        %v3220 = vpop.f32.mrb[0].mxu0
        %v3221 = vpop.f32.mrb[0].mxu0
        %v3222 = vadd.f32 0.0, %v3221
        %v3223 = vpop.f32.mrb[0].mxu0
        %3224 = vmatprep.mubr.bf16.mxu0 0
        %3225 = vmatmul.mubr.bf16.gmra.mrb[0].mxu0 %v3098
        %v3226 = vpop.f32.mrb[0].mxu0
        %v3227 = vadd.f32 0.0, %v3226
        %v3228 = vpop.f32.mrb[0].mxu0
        %v3229 = vpop.f32.mrb[0].mxu0
        %v3230 = vadd.f32 0.0, %v3229
        %v3231 = vpop.f32.mrb[0].mxu0
        %3232 = vmatprep.mubr.bf16.mxu0 0
        %3233 = vmatmul.mubr.bf16.gmra.mrb[0].mxu0 %v3099
        %v3234 = vpop.f32.mrb[0].mxu0
        %v3235 = vadd.f32 0.0, %v3234
        %v3236 = vpop.f32.mrb[0].mxu0
        %v3237 = vpop.f32.mrb[0].mxu0
        %v3238 = vadd.f32 0.0, %v3237
        %v3239 = vpop.f32.mrb[0].mxu0
        %3240 = vmatprep.mubr.bf16.mxu0 0
        %3241 = vmatmul.mubr.bf16.gmra.mrb[0].mxu0 %v3100
        %v3242 = vpop.f32.mrb[0].mxu0
        %v3243 = vadd.f32 0.0, %v3242
        %v3244 = vpop.f32.mrb[0].mxu0
        %v3245 = vpop.f32.mrb[0].mxu0
        %v3246 = vadd.f32 0.0, %v3245
        %v3247 = vpop.f32.mrb[0].mxu0
        %3248 = vmatprep.mubr.bf16.mxu0 0
        %3249 = vmatmul.mubr.bf16.gmra.mrb[0].mxu0 %v3101
        %v3250 = vpop.f32.mrb[0].mxu0
        %v3251 = vadd.f32 0.0, %v3250
        %v3252 = vpop.f32.mrb[0].mxu0
        %v3253 = vpop.f32.mrb[0].mxu0
        %v3254 = vadd.f32 0.0, %v3253
        %v3255 = vpop.f32.mrb[0].mxu0
        %3256 = vmatprep.mubr.bf16.mxu0 0
        %3257 = vmatmul.mubr.bf16.gmra.mrb[0].mxu0 %v3102
        %v3258 = vpop.f32.mrb[0].mxu0
        %v3259 = vadd.f32 0.0, %v3258
        %v3260 = vpop.f32.mrb[0].mxu0
        %v3261 = vpop.f32.mrb[0].mxu0
        %v3262 = vadd.f32 0.0, %v3261
        %v3263 = vpop.f32.mrb[0].mxu0
        %3264 = vmatprep.mubr.bf16.mxu0 0
        %3265 = vmatmul.mubr.bf16.gmra.mrb[0].mxu0 %v3103
        %v3266 = vpop.f32.mrb[0].mxu0
        %v3267 = vadd.f32 0.0, %v3266
        %v3268 = vpop.f32.mrb[0].mxu0
        %v3269 = vpop.f32.mrb[0].mxu0
        %v3270 = vadd.f32 0.0, %v3269
        %v3271 = vpop.f32.mrb[0].mxu0
        %3272 = vmatprep.mubr.bf16.mxu0 0
        %3273 = vmatmul.mubr.bf16.gmra.mrb[0].mxu0 %v3104
        %v3274 = vpop.f32.mrb[0].mxu0
        %v3275 = vadd.f32 0.0, %v3274
        %v3276 = vpop.f32.mrb[0].mxu0
        %v3277 = vpop.f32.mrb[0].mxu0
        %v3278 = vadd.f32 0.0, %v3277
        %v3279 = vpop.f32.mrb[0].mxu0
        %3280 = vmatprep.mubr.bf16.mxu0 0
        %3281 = vmatmul.mubr.bf16.gmra.mrb[0].mxu0 %v3105
        %v3282 = vpop.f32.mrb[0].mxu0
        %v3283 = vadd.f32 0.0, %v3282
        %v3284 = vpop.f32.mrb[0].mxu0
        %v3285 = vpop.f32.mrb[0].mxu0
        %v3286 = vadd.f32 0.0, %v3285
        %v3287 = vpop.f32.mrb[0].mxu0
        %3288 = vmatprep.mubr.bf16.mxu0 0
        %3289 = vmatmul.mubr.bf16.gmra.mrb[0].mxu0 %v3106
        %v3290 = vpop.f32.mrb[0].mxu0
        %v3291 = vadd.f32 0.0, %v3290
        %v3292 = vpop.f32.mrb[0].mxu0
        %v3293 = vpop.f32.mrb[0].mxu0
        %v3294 = vadd.f32 0.0, %v3293
        %v3295 = vpop.f32.mrb[0].mxu0
        %3296 = vmatprep.mubr.bf16.mxu0 0
        %3297 = vmatmul.mubr.bf16.gmra.mrb[0].mxu0 %v3107
        %v3298 = vpop.f32.mrb[0].mxu0
        %v3299 = vadd.f32 0.0, %v3298
        %v3300 = vpop.f32.mrb[0].mxu0
        %v3301 = vpop.f32.mrb[0].mxu0
        %v3302 = vadd.f32 0.0, %v3301
        %v3303 = vpop.f32.mrb[0].mxu0
        %3304 = vmatprep.mubr.bf16.mxu0 0
        %3305 = vmatmul.mubr.bf16.gmra.mrb[0].mxu0 %v3108
        %v3306 = vpop.f32.mrb[0].mxu0
        %v3307 = vadd.f32 0.0, %v3306
        %v3308 = vpop.f32.mrb[0].mxu0
        %v3309 = vpop.f32.mrb[0].mxu0
        %v3310 = vadd.f32 0.0, %v3309
        %v3311 = vpop.f32.mrb[0].mxu0
        %3312 = vmatprep.mubr.bf16.mxu0 0
        %3313 = vmatmul.mubr.bf16.gmra.mrb[0].mxu0 %v3109
        %v3314 = vpop.f32.mrb[0].mxu0
        %v3315 = vadd.f32 0.0, %v3314
        %v3316 = vpop.f32.mrb[0].mxu0
        %v3317 = vpop.f32.mrb[0].mxu0
        %v3318 = vadd.f32 0.0, %v3317
        %v3319 = vpop.f32.mrb[0].mxu0
        %3320 = vmatprep.mubr.bf16.mxu0 0
        %3321 = vmatmul.mubr.bf16.gmra.mrb[0].mxu0 %v3110
        %v3322 = vpop.f32.mrb[0].mxu0
        %v3323 = vadd.f32 0.0, %v3322
        %v3324 = vpop.f32.mrb[0].mxu0
        %v3325 = vpop.f32.mrb[0].mxu0
        %v3326 = vadd.f32 0.0, %v3325
        %v3327 = vpop.f32.mrb[0].mxu0
        %3328 = vmatprep.mubr.bf16.mxu0 0
        %3329 = vmatmul.mubr.bf16.gmra.mrb[0].mxu0 %v3111
        %v3330 = vpop.f32.mrb[0].mxu0
        %v3331 = vadd.f32 0.0, %v3330
        %v3332 = vpop.f32.mrb[0].mxu0
        %v3333 = vpop.f32.mrb[0].mxu0
        %v3334 = vadd.f32 0.0, %v3333
        %v3335 = vpop.f32.mrb[0].mxu0
        %3336 = vdwg.mxu0
        %v3337 = vadd.f32 %v3211, %v3214
        %v3338 = vadd.f32 %v3337, %v3219
        %v3339 = vadd.f32 %v3338, %v3222
        %v3340 = vadd.f32 %v3339, %v3227
        %v3341 = vadd.f32 %v3340, %v3230
        %v3342 = vadd.f32 %v3341, %v3235
        %v3343 = vadd.f32 %v3342, %v3238
        %v3344 = vadd.f32 %v3343, %v3243
        %v3345 = vadd.f32 %v3344, %v3246
        %v3346 = vadd.f32 %v3345, %v3251
        %v3347 = vadd.f32 %v3346, %v3254
        %v3348 = vadd.f32 %v3347, %v3259
        %v3349 = vadd.f32 %v3348, %v3262
        %v3350 = vadd.f32 %v3349, %v3267
        %v3351 = vadd.f32 %v3350, %v3270
        %v3352 = vadd.f32 %v3351, %v3275
        %v3353 = vadd.f32 %v3352, %v3278
        %v3354 = vadd.f32 %v3353, %v3283
        %v3355 = vadd.f32 %v3354, %v3286
        %v3356 = vadd.f32 %v3355, %v3291
        %v3357 = vadd.f32 %v3356, %v3294
        %v3358 = vadd.f32 %v3357, %v3299
        %v3359 = vadd.f32 %v3358, %v3302
        %v3360 = vadd.f32 %v3359, %v3307
        %v3361 = vadd.f32 %v3360, %v3310
        %v3362 = vadd.f32 %v3361, %v3315
        %v3363 = vadd.f32 %v3362, %v3318
        %v3364 = vadd.f32 %v3363, %v3323
        %v3365 = vadd.f32 %v3364, %v3326
        %v3366 = vadd.f32 %v3365, %v3331
        %v3367 = vadd.f32 %v3366, %v3334
        %v3368 = vrot.slane %v3367, 4
        %v3369 = vadd.f32 %v3367, %v3368
        %v3370 = vrot.slane %v3369, 2
        %v3371 = vadd.f32 %v3369, %v3370
        %v3372 = vrot.slane %v3371, 1
        %v3373 = vadd.f32 %v3371, %v3372
        %v3374 = vrcp.pop 256.0
        %v3375 = vmul.f32 %v3373, %v3374
        %v3376 = vld [vmem:[%s5] sm:$0x1]
        %v3377 = vadd.f32 %v3375, %v3376
        %3378 = vst [vmem:[%s258] sm:$0x1] %v3377
        %s3379 = sand.u32 %s164, 1
        %s3380 = scalar_lea.sflag [#allocation3], %s3379
        %s3381 = sand.u32 %s164, 1
        %s3382 = scalar_lea.vmem [#allocation2], %s3381
        // Predicated region
        $region45: #{_lambda_.5} parent=43 // pred_check
          %p3383 = pneg %p174
        $region46: #{_lambda_.5} parent=43 // pred_check_branch
          %3385 = sbr.rel (%p3383) target = $region48
        $region47: #{_lambda_.5} parent=43 // pred_region
          %s3387 = ssub.s32 16, 16
          %3388 = vsyncadd %s3380, %s3387
          %s3389 = smul.addr %s20, 16
          %s3390 = scalar_lea.hbm %s6, %s3389
          %s3392 = sshll.u32 %s3382, 4
          %s3393 = int_to_ptr.vmem [resolvable:$true] %s3392
          %3395 = dma.vmem_to_hbm [thread:$0]  %s3393, 16, %s3390, %s3380
        $region48: #{_lambda_.5} parent=43 // pred_fallthru
          _
      $region44: #{_lambda_.5} parent=5 // pred_fallthru
        _
      %p3396 = scmp.le.s32.totalorder 2, %s15
      // Predicated region
      $region49: #{_lambda_.5} parent=5 // pred_check
        %p3397 = pneg %p3396
      $region50: #{_lambda_.5} parent=5 // pred_check_branch
        %3399 = sbr.rel (%p3397) target = $region52
      $region51: #{_lambda_.5} parent=5 // pred_region
        %s3400 = ssub.s32 %s15, 2
        // Predicated region
        $region53: #{_lambda_.5} parent=51 // pred_check
          %p3401 = pneg %p180
        $region54: #{_lambda_.5} parent=51 // pred_check_branch
          %3403 = sbr.rel (%p3401) target = $region56
        $region55: #{_lambda_.5} parent=51 // pred_region
          %s3404 = sand.u32 %s165, 1
          %s3405 = scalar_lea.sflag [#allocation3], %s3404
          %s3406 = sand.u32 %s165, 1
          %s3407 = scalar_lea.vmem [#allocation2], %s3406
          %3408 = dma.done %s3405, 16
        $region56: #{_lambda_.5} parent=51 // pred_fallthru
          _
      $region52: #{_lambda_.5} parent=5 // pred_fallthru
        _
    $region6: #{_lambda_.5} parent=1 // loop_footer
      %s19 = sadd.s32 1, %s15
    $region7: #{_lambda_.5} parent=1 // loop_footer_branch
      %14 = sbr.rel target = $region3
    $region8: #{_lambda_.5} parent=1 // loop_exit
      _
    %3409 = vsyncpa [#allocation3], 1
    %s3410 = scalar_lea.sflag [#allocation3], 1
    %3411 = vsyncpa %s3410, 1

</llo_original>
